<compile_context>
chip_gen: v7x
topology: tpu7x:2x2x1
jax: 0.10.0
libtpu: 0.0.40
codegen_flags: <defaults>
</compile_context>

<pallas_src>
import jax
import jax.numpy as jnp
from jax.experimental import pallas as pl
from jax.experimental.pallas import tpu as pltpu


# ----------------------------------------------------------------------------
# Model dimensions (fixed by the DeepCubeA architecture) + TPU-aligned padding
# ----------------------------------------------------------------------------
IN_FEATURES = 6 * 54          # 324, as in the docstring example
H1, H2 = 5000, 1000
N_RES = 4

def _round_up(n, m):
    return (n + m - 1) // m * m

B_PAD = 8                              # pad batch to a full sublane tile
IN_PAD = _round_up(IN_FEATURES, 128)   # 384
H1_PAD = _round_up(H1, 128)            # 5120
H2_PAD = _round_up(H2, 128)            # 1024


# ----------------------------------------------------------------------------
# Kernel 1: fused linear + ReLU (layers l1, l2).
# Grid = (N_tiles, K_tiles); K (reduction) is the innermost grid axis and
# accumulates directly into the f32 output block (no accumulator scratch).
# ----------------------------------------------------------------------------
def _linear_relu_kernel(x_ref, w_ref, o_ref):
    """o = relu(x @ w), K-reduction accumulated directly in the output block."""
    k = pl.program_id(1)
    acc = jnp.dot(x_ref[...], w_ref[...], preferred_element_type=jnp.float32)

    @pl.when(k == 0)
    def _():
        o_ref[...] = acc.astype(o_ref.dtype)

    @pl.when(k > 0)
    def _():
        o_ref[...] += acc.astype(o_ref.dtype)

    @pl.when(k == pl.num_programs(1) - 1)
    def _():
        o_ref[...] = jnp.maximum(o_ref[...], 0.0)


def _linear_relu(x, w, *, tn, tk):
    """relu(x @ w) via one pipelined pallas_call (weights streamed from HBM)."""
    M, K = x.shape
    Kw, N = w.shape
    assert K == Kw and K % tk == 0 and N % tn == 0, (K, tk, N, tn)
    assert M % 8 == 0 and tk % 128 == 0 and tn % 128 == 0
    assert x.dtype == jnp.float32            # kernel accumulates in o_ref's dtype

    grid = (N // tn, K // tk)
    return pl.pallas_call(
        _linear_relu_kernel,
        out_shape=jax.ShapeDtypeStruct((M, N), x.dtype),
        grid=grid,
        in_specs=[
            pl.BlockSpec((M, tk), lambda i, k: (0, k)),    # activations (tiny)
            pl.BlockSpec((tk, tn), lambda i, k: (k, i)),   # weights (streamed)
        ],
        out_specs=pl.BlockSpec((M, tn), lambda i, k: (0, i)),
        compiler_params=pltpu.CompilerParams(
            dimension_semantics=("parallel", "arbitrary"),
        ),
    )(x, w)


# ----------------------------------------------------------------------------
# Kernel 2: the whole 4-block residual tower (8 matmuls) in ONE call.
# Grid = (layer=8, n_tile=2). Stacked weights (8, 1024, 1024) are streamed as
# 2 MiB blocks; the hidden state stays resident in the output VMEM block.
# ----------------------------------------------------------------------------
def _res_tower_kernel(h0_ref, w_ref, b_ref, o_ref, t_sc):
    """One grid step = one (layer, n_tile) slice of the fused residual tower.

    Even layers:  t[:, n] = relu(h @ Wa[:, n])
    Odd  layers:  h[:, n] = relu(t @ Wb[:, n] + b[n] + h[:, n])
    The hidden state h lives in the resident output block o_ref (f32);
    the intermediate t lives in a VMEM scratch.
    """
    l = pl.program_id(0)
    n = pl.program_id(1)
    tn = w_ref.shape[-1]
    start = pl.multiple_of(n * tn, 128)

    @pl.when((l == 0) & (n == 0))
    def _():                                  # load incoming hidden into resident block
        o_ref[...] = h0_ref[...]

    @pl.when(l % 2 == 0)
    def _():                                  # first linear of the block (no bias)
        t_sc[:, pl.ds(start, tn)] = jnp.maximum(
            jnp.dot(o_ref[...], w_ref[0], preferred_element_type=jnp.float32), 0.0)

    @pl.when(l % 2 == 1)
    def _():                                  # second linear + bias + skip + relu, in place
        r = jnp.dot(t_sc[...], w_ref[0], preferred_element_type=jnp.float32)
        r = r + b_ref[0] + o_ref[:, pl.ds(start, tn)]
        o_ref[:, pl.ds(start, tn)] = jnp.maximum(r, 0.0).astype(o_ref.dtype)


def _res_tower(h0, w_stack, b_stack, *, tn=512):
    M, F = h0.shape
    L = w_stack.shape[0]
    assert w_stack.shape == (L, F, F) and b_stack.shape == (L, 1, F)
    assert F % tn == 0 and M % 8 == 0 and tn % 128 == 0
    assert h0.dtype == jnp.float32

    grid = (L, F // tn)                       # layer outer (sequential), N-tile inner
    return pl.pallas_call(
        _res_tower_kernel,
        out_shape=jax.ShapeDtypeStruct((M, F), h0.dtype),
        grid=grid,
        in_specs=[
            pl.BlockSpec((M, F), lambda l, n: (0, 0)),           # resident initial hidden
            pl.BlockSpec((1, F, tn), lambda l, n: (l, 0, n)),    # streamed stacked weights
            pl.BlockSpec((1, 1, tn), lambda l, n: (l, 0, n)),    # bias (zeros for even layers)
        ],
        out_specs=pl.BlockSpec((M, F), lambda l, n: (0, 0)),     # resident hidden state
        scratch_shapes=[pltpu.VMEM((M, F), jnp.float32)],        # t = relu(h @ Wa)
        compiler_params=pltpu.CompilerParams(
            # Both axes carry a sequential dependency (hidden state is VMEM-resident),
            # so neither may be megacore-parallel.
            # TODO(synk): on v7x this tower runs on one TensorCore; splitting the N dim
            # across cores would require a cross-core hidden exchange every layer.
            dimension_semantics=("arbitrary", "arbitrary"),
        ),
    )(h0, w_stack, b_stack)


# ----------------------------------------------------------------------------
# One-time parameter preparation (OUTSIDE the jitted forward): pad + stack.
# ----------------------------------------------------------------------------
def _pad2(a, rows, cols):
    return jnp.pad(a, ((0, rows - a.shape[0]), (0, cols - a.shape[1])))


def prepare_params(params):
    """Pad / stack weights to TPU-aligned shapes once, off the hot path."""
    w_res, b_res = [], []
    for wa, wb, bb in params["res"]:
        w_res.append(_pad2(wa, H2_PAD, H2_PAD))                    # even layer: no bias
        b_res.append(jnp.zeros((1, H2_PAD), jnp.float32))
        w_res.append(_pad2(wb, H2_PAD, H2_PAD))                    # odd layer: bias
        b_res.append(jnp.pad(bb, (0, H2_PAD - H2)).reshape(1, H2_PAD))
    return {
        "w1": _pad2(params["w1"], IN_PAD, H1_PAD),                 # (384, 5120)
        "w2": _pad2(params["w2"], H1_PAD, H2_PAD),                 # (5120, 1024)
        "w_res": jnp.stack(w_res),                                 # (8, 1024, 1024)
        "b_res": jnp.stack(b_res),                                 # (8, 1, 1024)
        # TODO(synk): optionally cast the weight stream to bfloat16 here for a further
        # ~2x on this bandwidth-bound network (validate against the fp32 reference).
    }


# ----------------------------------------------------------------------------
# Full DeepCubeACore forward (noisy=False, norm=None)
# ----------------------------------------------------------------------------
@jax.jit
def deepcube_a_core(x, prepared):
    """`prepared` must come from prepare_params(params)."""
    B = x.shape[0]
    assert B <= B_PAD
    xp = jnp.pad(x, ((0, B_PAD - B), (0, IN_PAD - IN_FEATURES)))

    # l1 + (Identity norm) + ReLU:   grid (4, 1), ~1.9 MiB weight blocks
    h = _linear_relu(xp, prepared["w1"], tn=1280, tk=IN_PAD)
    # l2 + (Identity norm) + ReLU:   grid (2, 4), ~2.5 MiB weight blocks
    h = _linear_relu(h, prepared["w2"], tn=512, tk=1280)
    # 4 residual blocks (8 matmuls) in ONE weight-streaming call: grid (8, 2)
    h = _res_tower(h, prepared["w_res"], prepared["b_res"], tn=512)

    # TODO(synk): for large deployment batches, tile M (128–256 rows, parallel) instead
    # of padding the whole batch into a single (M, ...) block.
    return h[:B, :H2]


# ----------------------------------------------------------------------------
# Parameters + pure-JAX reference
# ----------------------------------------------------------------------------
def init_params(key):
    # TODO(synk): NoisyLinear (noisy=True) and LayerNorm/BatchNorm variants are not
    # implemented; this covers the default config (noisy=False, norm=None).
    def xavier(k, shape):
        fan_in, fan_out = shape
        lim = (6.0 / (fan_in + fan_out)) ** 0.5
        return jax.random.uniform(k, shape, jnp.float32, -lim, lim)

    keys = jax.random.split(key, 2 + 3 * N_RES)
    params = {
        "w1": xavier(keys[0], (IN_FEATURES, H1)),
        "w2": xavier(keys[1], (H1, H2)),
        "res": [],
    }
    for r in range(N_RES):
        ka, kb, kbias = keys[2 + 3 * r], keys[3 + 3 * r], keys[4 + 3 * r]
        wa = xavier(ka, (H2, H2))
        wb = xavier(kb, (H2, H2))
        bb = 0.01 * jax.random.normal(kbias, (H2,), jnp.float32)
        params["res"].append((wa, wb, bb))
    return params


def ref_forward(x, params):
    h = jnp.maximum(x @ params["w1"], 0.0)
    h = jnp.maximum(h @ params["w2"], 0.0)
    for wa, wb, bb in params["res"]:
        t = jnp.maximum(h @ wa, 0.0)
        h = jnp.maximum(t @ wb + bb + h, 0.0)
    return h


if __name__ == "__main__":
    key = jax.random.PRNGKey(0)
    kx, kp = jax.random.split(key)

    params = init_params(kp)
    prepared = prepare_params(params)          # one-time pad/stack, off the hot path
    x = jax.random.normal(kx, (2, IN_FEATURES), dtype=jnp.float32)

    out = deepcube_a_core(x, prepared)
    jax.block_until_ready(out)

    ref = ref_forward(x, params)
    assert out.shape == (2, H2) and out.dtype == x.dtype
    assert bool(jnp.allclose(out, ref, rtol=2e-3, atol=2e-3)), \
        float(jnp.max(jnp.abs(out - ref)))
    print("KERNEL_OK")
</pallas_src>

<mosaic_0001>
module attributes {stable_mosaic.version = 11 : i64} {
  func.func @_res_tower_kernel(%arg0: i32, %arg1: i32, %arg2: memref<8x1024xf32, #tpu.memory_space<vmem>>, %arg3: memref<1x1024x512xf32, #tpu.memory_space<vmem>>, %arg4: memref<1x1x512xf32, #tpu.memory_space<vmem>>, %arg5: memref<8x1024xf32, #tpu.memory_space<vmem>>, %arg6: memref<8x1024xf32, #tpu.memory_space<vmem>>) attributes {dimension_semantics = [#tpu.dimension_semantics<arbitrary>, #tpu.dimension_semantics<arbitrary>], iteration_bounds = array<i64: 8, 2>, scalar_prefetch = 0 : i64, scratch_operands = 1 : i64, tpu.core_type = #tpu.core_type<tc>, window_params = [{pipeline_mode = #tpu.pipeline_mode<synchronous>, transform_indices = @transform_0, window_bounds = array<i64: 8, 1024>}, {transform_indices = @transform_1, window_bounds = array<i64: 1, 1024, 512>}, {transform_indices = @transform_2, window_bounds = array<i64: 1, 1, 512>}, {pipeline_mode = #tpu.pipeline_mode<synchronous>, transform_indices = @transform_3, window_bounds = array<i64: 8, 1024>}]} {
    %c512_i32 = arith.constant 512 : i32
    %0 = arith.muli %arg1, %c512_i32 : i32
    %1 = tpu.assume_multiple %0, 128 : i32
    %c0_i32 = arith.constant 0 : i32
    %2 = arith.cmpi eq, %arg0, %c0_i32 : i32
    %c0_i32_0 = arith.constant 0 : i32
    %3 = arith.cmpi eq, %arg1, %c0_i32_0 : i32
    %4 = arith.andi %2, %3 : i1
    %5 = arith.extui %4 : i1 to i32
    %c0_i32_1 = arith.constant 0 : i32
    %6 = arith.cmpi ne, %5, %c0_i32_1 : i32
    scf.if %6 {
      %c0 = arith.constant 0 : index
      %c0_16 = arith.constant 0 : index
      %33 = vector.load %arg2[%c0, %c0_16] : memref<8x1024xf32, #tpu.memory_space<vmem>>, vector<8x1024xf32>
      %c0_17 = arith.constant 0 : index
      %c0_18 = arith.constant 0 : index
      %34 = vector.load %arg5[%c0_17, %c0_18] : memref<8x1024xf32, #tpu.memory_space<vmem>>, vector<8x1024xf32>
      tpu.vector_store %arg5[%c0_17, %c0_18], %33 {strides = array<i32>} : memref<8x1024xf32, #tpu.memory_space<vmem>>, vector<8x1024xf32>,
    } else {
    }
    %c2_i32 = arith.constant 2 : i32
    %c0_i32_2 = arith.constant 0 : i32
    %7 = arith.cmpi eq, %c2_i32, %c0_i32_2 : i32
    %c1_i32 = arith.constant 1 : i32
    %8 = arith.select %7, %c1_i32, %c2_i32 : i32
    %9 = arith.remsi %arg0, %8 : i32
    %c0_i32_3 = arith.constant 0 : i32
    %10 = arith.cmpi ne, %9, %c0_i32_3 : i32
    %c0_i32_4 = arith.constant 0 : i32
    %11 = arith.cmpi slt, %9, %c0_i32_4 : i32
    %c0_i32_5 = arith.constant 0 : i32
    %12 = arith.cmpi slt, %8, %c0_i32_5 : i32
    %13 = arith.xori %11, %12 : i1
    %14 = arith.andi %13, %10 : i1
    %15 = arith.addi %9, %8 : i32
    %16 = arith.select %14, %15, %9 : i32
    %c0_i32_6 = arith.constant 0 : i32
    %17 = arith.cmpi eq, %16, %c0_i32_6 : i32
    %18 = arith.extui %17 : i1 to i32
    %c0_i32_7 = arith.constant 0 : i32
    %19 = arith.cmpi ne, %18, %c0_i32_7 : i32
    scf.if %19 {
      %c0 = arith.constant 0 : index
      %c0_16 = arith.constant 0 : index
      %33 = vector.load %arg5[%c0, %c0_16] : memref<8x1024xf32, #tpu.memory_space<vmem>>, vector<8x1024xf32>
      %c0_17 = arith.constant 0 : index
      %c0_18 = arith.constant 0 : index
      %c0_19 = arith.constant 0 : index
      %34 = vector.load %arg3[%c0_17, %c0_18, %c0_19] : memref<1x1024x512xf32, #tpu.memory_space<vmem>>, vector<1x1024x512xf32>
      %35 = vector.shape_cast %34 : vector<1x1024x512xf32> to vector<1024x512xf32>
      %cst = arith.constant dense<0.000000e+00> : vector<8x512xf32>
      %36 = tpu.matmul %33, %35, %cst {dimension_numbers = #tpu.dot_dimension_numbers<[1], [0], [0], [1], [0, 0, 1, 1], [], []>} : vector<8x1024xf32>, vector<1024x512xf32>, vector<8x512xf32> -> vector<8x512xf32>
      %cst_20 = arith.constant 0.000000e+00 : f32
      %37 = vector.broadcast %cst_20 : f32 to vector<8x512xf32>
      %38 = arith.maximumf %36, %37 : vector<8x512xf32>
      %c0_21 = arith.constant 0 : index
      %39 = arith.index_cast %1 : i32 to index
      %40 = vector.load %arg6[%c0_21, %39] : memref<8x1024xf32, #tpu.memory_space<vmem>>, vector<8x512xf32>
      tpu.vector_store %arg6[%c0_21, %39], %38 {strides = array<i32>} : memref<8x1024xf32, #tpu.memory_space<vmem>>, vector<8x512xf32>,
    } else {
    }
    %c2_i32_8 = arith.constant 2 : i32
    %c0_i32_9 = arith.constant 0 : i32
    %20 = arith.cmpi eq, %c2_i32_8, %c0_i32_9 : i32
    %c1_i32_10 = arith.constant 1 : i32
    %21 = arith.select %20, %c1_i32_10, %c2_i32_8 : i32
    %22 = arith.remsi %arg0, %21 : i32
    %c0_i32_11 = arith.constant 0 : i32
    %23 = arith.cmpi ne, %22, %c0_i32_11 : i32
    %c0_i32_12 = arith.constant 0 : i32
    %24 = arith.cmpi slt, %22, %c0_i32_12 : i32
    %c0_i32_13 = arith.constant 0 : i32
    %25 = arith.cmpi slt, %21, %c0_i32_13 : i32
    %26 = arith.xori %24, %25 : i1
    %27 = arith.andi %26, %23 : i1
    %28 = arith.addi %22, %21 : i32
    %29 = arith.select %27, %28, %22 : i32
    %c1_i32_14 = arith.constant 1 : i32
    %30 = arith.cmpi eq, %29, %c1_i32_14 : i32
    %31 = arith.extui %30 : i1 to i32
    %c0_i32_15 = arith.constant 0 : i32
    %32 = arith.cmpi ne, %31, %c0_i32_15 : i32
    scf.if %32 {
      %c0 = arith.constant 0 : index
      %c0_16 = arith.constant 0 : index
      %33 = vector.load %arg6[%c0, %c0_16] : memref<8x1024xf32, #tpu.memory_space<vmem>>, vector<8x1024xf32>
      %c0_17 = arith.constant 0 : index
      %c0_18 = arith.constant 0 : index
      %c0_19 = arith.constant 0 : index
      %34 = vector.load %arg3[%c0_17, %c0_18, %c0_19] : memref<1x1024x512xf32, #tpu.memory_space<vmem>>, vector<1x1024x512xf32>
      %35 = vector.shape_cast %34 : vector<1x1024x512xf32> to vector<1024x512xf32>
      %cst = arith.constant dense<0.000000e+00> : vector<8x512xf32>
      %36 = tpu.matmul %33, %35, %cst {dimension_numbers = #tpu.dot_dimension_numbers<[1], [0], [0], [1], [0, 0, 1, 1], [], []>} : vector<8x1024xf32>, vector<1024x512xf32>, vector<8x512xf32> -> vector<8x512xf32>
      %c0_20 = arith.constant 0 : index
      %c0_21 = arith.constant 0 : index
      %c0_22 = arith.constant 0 : index
      %37 = vector.load %arg4[%c0_20, %c0_21, %c0_22] : memref<1x1x512xf32, #tpu.memory_space<vmem>>, vector<1x1x512xf32>
      %38 = vector.shape_cast %37 : vector<1x1x512xf32> to vector<1x512xf32>
      %39 = vector.broadcast %38 : vector<1x512xf32> to vector<8x512xf32>
      %40 = arith.addf %36, %39 : vector<8x512xf32>
      %c0_23 = arith.constant 0 : index
      %41 = arith.index_cast %1 : i32 to index
      %42 = vector.load %arg5[%c0_23, %41] : memref<8x1024xf32, #tpu.memory_space<vmem>>, vector<8x512xf32>
      %43 = arith.addf %40, %42 : vector<8x512xf32>
      %cst_24 = arith.constant 0.000000e+00 : f32
      %44 = vector.broadcast %cst_24 : f32 to vector<8x512xf32>
      %45 = arith.maximumf %43, %44 : vector<8x512xf32>
      %c0_25 = arith.constant 0 : index
      %46 = arith.index_cast %1 : i32 to index
      %47 = vector.load %arg5[%c0_25, %46] : memref<8x1024xf32, #tpu.memory_space<vmem>>, vector<8x512xf32>
      tpu.vector_store %arg5[%c0_25, %46], %45 {strides = array<i32>} : memref<8x1024xf32, #tpu.memory_space<vmem>>, vector<8x512xf32>,
    } else {
    }
    return
  }
  func.func @transform_0(%arg0: i32, %arg1: i32) -> (i32, i32) {
    %c0_i32 = arith.constant 0 : i32
    %c0_i32_0 = arith.constant 0 : i32
    %c0_i32_1 = arith.constant 0 : i32
    return %c0_i32, %c0_i32_0 : i32, i32
  }
  func.func @transform_1(%arg0: i32, %arg1: i32) -> (i32, i32, i32) {
    %c0_i32 = arith.constant 0 : i32
    %c0_i32_0 = arith.constant 0 : i32
    return %arg0, %c0_i32, %arg1 : i32, i32, i32
  }
  func.func @transform_2(%arg0: i32, %arg1: i32) -> (i32, i32, i32) {
    %c0_i32 = arith.constant 0 : i32
    %c0_i32_0 = arith.constant 0 : i32
    return %arg0, %c0_i32, %arg1 : i32, i32, i32
  }
  func.func @transform_3(%arg0: i32, %arg1: i32) -> (i32, i32) {
    %c0_i32 = arith.constant 0 : i32
    %c0_i32_0 = arith.constant 0 : i32
    %c0_i32_1 = arith.constant 0 : i32
    return %c0_i32, %c0_i32_0 : i32, i32
  }
}

module attributes {stable_mosaic.version = 11 : i64} {
  func.func @_linear_relu_kernel(%arg0: i32, %arg1: i32, %arg2: memref<8x384xf32, #tpu.memory_space<vmem>>, %arg3: memref<384x1280xf32, #tpu.memory_space<vmem>>, %arg4: memref<8x1280xf32, #tpu.memory_space<vmem>>) attributes {dimension_semantics = [#tpu.dimension_semantics<parallel>, #tpu.dimension_semantics<arbitrary>], iteration_bounds = array<i64: 4, 1>, scalar_prefetch = 0 : i64, scratch_operands = 0 : i64, tpu.core_type = #tpu.core_type<tc>, window_params = [{transform_indices = @transform_0, window_bounds = array<i64: 8, 384>}, {transform_indices = @transform_1, window_bounds = array<i64: 384, 1280>}, {transform_indices = @transform_2, window_bounds = array<i64: 8, 1280>}]} {
    %c0 = arith.constant 0 : index
    %c0_0 = arith.constant 0 : index
    %0 = vector.load %arg2[%c0, %c0_0] : memref<8x384xf32, #tpu.memory_space<vmem>>, vector<8x384xf32>
    %c0_1 = arith.constant 0 : index
    %c0_2 = arith.constant 0 : index
    %1 = vector.load %arg3[%c0_1, %c0_2] : memref<384x1280xf32, #tpu.memory_space<vmem>>, vector<384x1280xf32>
    %cst = arith.constant dense<0.000000e+00> : vector<8x1280xf32>
    %2 = tpu.matmul %0, %1, %cst {dimension_numbers = #tpu.dot_dimension_numbers<[1], [0], [0], [1], [0, 0, 1, 1], [], []>} : vector<8x384xf32>, vector<384x1280xf32>, vector<8x1280xf32> -> vector<8x1280xf32>
    %c0_i32 = arith.constant 0 : i32
    %3 = arith.cmpi eq, %arg1, %c0_i32 : i32
    %4 = arith.extui %3 : i1 to i32
    %c0_i32_3 = arith.constant 0 : i32
    %5 = arith.cmpi ne, %4, %c0_i32_3 : i32
    scf.if %5 {
      %c0_8 = arith.constant 0 : index
      %c0_9 = arith.constant 0 : index
      %12 = vector.load %arg4[%c0_8, %c0_9] : memref<8x1280xf32, #tpu.memory_space<vmem>>, vector<8x1280xf32>
      tpu.vector_store %arg4[%c0_8, %c0_9], %2 {strides = array<i32>} : memref<8x1280xf32, #tpu.memory_space<vmem>>, vector<8x1280xf32>,
    } else {
    }
    %c0_i32_4 = arith.constant 0 : i32
    %6 = arith.cmpi sgt, %arg1, %c0_i32_4 : i32
    %7 = arith.extui %6 : i1 to i32
    %c0_i32_5 = arith.constant 0 : i32
    %8 = arith.cmpi ne, %7, %c0_i32_5 : i32
    scf.if %8 {
      %c0_8 = arith.constant 0 : index
      %c0_9 = arith.constant 0 : index
      %12 = vector.load %arg4[%c0_8, %c0_9] : memref<8x1280xf32, #tpu.memory_space<vmem>>, vector<8x1280xf32>
      %13 = arith.addf %12, %2 : vector<8x1280xf32>
      %c0_10 = arith.constant 0 : index
      %c0_11 = arith.constant 0 : index
      %14 = vector.load %arg4[%c0_10, %c0_11] : memref<8x1280xf32, #tpu.memory_space<vmem>>, vector<8x1280xf32>
      tpu.vector_store %arg4[%c0_10, %c0_11], %13 {strides = array<i32>} : memref<8x1280xf32, #tpu.memory_space<vmem>>, vector<8x1280xf32>,
    } else {
    }
    %c0_i32_6 = arith.constant 0 : i32
    %9 = arith.cmpi eq, %arg1, %c0_i32_6 : i32
    %10 = arith.extui %9 : i1 to i32
    %c0_i32_7 = arith.constant 0 : i32
    %11 = arith.cmpi ne, %10, %c0_i32_7 : i32
    scf.if %11 {
      %c0_8 = arith.constant 0 : index
      %c0_9 = arith.constant 0 : index
      %12 = vector.load %arg4[%c0_8, %c0_9] : memref<8x1280xf32, #tpu.memory_space<vmem>>, vector<8x1280xf32>
      %cst_10 = arith.constant 0.000000e+00 : f32
      %13 = vector.broadcast %cst_10 : f32 to vector<8x1280xf32>
      %14 = arith.maximumf %12, %13 : vector<8x1280xf32>
      %c0_11 = arith.constant 0 : index
      %c0_12 = arith.constant 0 : index
      %15 = vector.load %arg4[%c0_11, %c0_12] : memref<8x1280xf32, #tpu.memory_space<vmem>>, vector<8x1280xf32>
      tpu.vector_store %arg4[%c0_11, %c0_12], %14 {strides = array<i32>} : memref<8x1280xf32, #tpu.memory_space<vmem>>, vector<8x1280xf32>,
    } else {
    }
    return
  }
  func.func @transform_0(%arg0: i32, %arg1: i32) -> (i32, i32) {
    %c0_i32 = arith.constant 0 : i32
    %c0_i32_0 = arith.constant 0 : i32
    return %c0_i32, %arg1 : i32, i32
  }
  func.func @transform_1(%arg0: i32, %arg1: i32) -> (i32, i32) {
    %c0_i32 = arith.constant 0 : i32
    return %arg1, %arg0 : i32, i32
  }
  func.func @transform_2(%arg0: i32, %arg1: i32) -> (i32, i32) {
    %c0_i32 = arith.constant 0 : i32
    %c0_i32_0 = arith.constant 0 : i32
    return %c0_i32, %arg0 : i32, i32
  }
}

module attributes {stable_mosaic.version = 11 : i64} {
  func.func @_linear_relu_kernel(%arg0: i32, %arg1: i32, %arg2: memref<8x1280xf32, #tpu.memory_space<vmem>>, %arg3: memref<1280x512xf32, #tpu.memory_space<vmem>>, %arg4: memref<8x512xf32, #tpu.memory_space<vmem>>) attributes {dimension_semantics = [#tpu.dimension_semantics<parallel>, #tpu.dimension_semantics<arbitrary>], iteration_bounds = array<i64: 2, 4>, scalar_prefetch = 0 : i64, scratch_operands = 0 : i64, tpu.core_type = #tpu.core_type<tc>, window_params = [{transform_indices = @transform_0, window_bounds = array<i64: 8, 1280>}, {transform_indices = @transform_1, window_bounds = array<i64: 1280, 512>}, {transform_indices = @transform_2, window_bounds = array<i64: 8, 512>}]} {
    %c0 = arith.constant 0 : index
    %c0_0 = arith.constant 0 : index
    %0 = vector.load %arg2[%c0, %c0_0] : memref<8x1280xf32, #tpu.memory_space<vmem>>, vector<8x1280xf32>
    %c0_1 = arith.constant 0 : index
    %c0_2 = arith.constant 0 : index
    %1 = vector.load %arg3[%c0_1, %c0_2] : memref<1280x512xf32, #tpu.memory_space<vmem>>, vector<1280x512xf32>
    %cst = arith.constant dense<0.000000e+00> : vector<8x512xf32>
    %2 = tpu.matmul %0, %1, %cst {dimension_numbers = #tpu.dot_dimension_numbers<[1], [0], [0], [1], [0, 0, 1, 1], [], []>} : vector<8x1280xf32>, vector<1280x512xf32>, vector<8x512xf32> -> vector<8x512xf32>
    %c0_i32 = arith.constant 0 : i32
    %3 = arith.cmpi eq, %arg1, %c0_i32 : i32
    %4 = arith.extui %3 : i1 to i32
    %c0_i32_3 = arith.constant 0 : i32
    %5 = arith.cmpi ne, %4, %c0_i32_3 : i32
    scf.if %5 {
      %c0_7 = arith.constant 0 : index
      %c0_8 = arith.constant 0 : index
      %12 = vector.load %arg4[%c0_7, %c0_8] : memref<8x512xf32, #tpu.memory_space<vmem>>, vector<8x512xf32>
      tpu.vector_store %arg4[%c0_7, %c0_8], %2 {strides = array<i32>} : memref<8x512xf32, #tpu.memory_space<vmem>>, vector<8x512xf32>,
    } else {
    }
    %c0_i32_4 = arith.constant 0 : i32
    %6 = arith.cmpi sgt, %arg1, %c0_i32_4 : i32
    %7 = arith.extui %6 : i1 to i32
    %c0_i32_5 = arith.constant 0 : i32
    %8 = arith.cmpi ne, %7, %c0_i32_5 : i32
    scf.if %8 {
      %c0_7 = arith.constant 0 : index
      %c0_8 = arith.constant 0 : index
      %12 = vector.load %arg4[%c0_7, %c0_8] : memref<8x512xf32, #tpu.memory_space<vmem>>, vector<8x512xf32>
      %13 = arith.addf %12, %2 : vector<8x512xf32>
      %c0_9 = arith.constant 0 : index
      %c0_10 = arith.constant 0 : index
      %14 = vector.load %arg4[%c0_9, %c0_10] : memref<8x512xf32, #tpu.memory_space<vmem>>, vector<8x512xf32>
      tpu.vector_store %arg4[%c0_9, %c0_10], %13 {strides = array<i32>} : memref<8x512xf32, #tpu.memory_space<vmem>>, vector<8x512xf32>,
    } else {
    }
    %c3_i32 = arith.constant 3 : i32
    %9 = arith.cmpi eq, %arg1, %c3_i32 : i32
    %10 = arith.extui %9 : i1 to i32
    %c0_i32_6 = arith.constant 0 : i32
    %11 = arith.cmpi ne, %10, %c0_i32_6 : i32
    scf.if %11 {
      %c0_7 = arith.constant 0 : index
      %c0_8 = arith.constant 0 : index
      %12 = vector.load %arg4[%c0_7, %c0_8] : memref<8x512xf32, #tpu.memory_space<vmem>>, vector<8x512xf32>
      %cst_9 = arith.constant 0.000000e+00 : f32
      %13 = vector.broadcast %cst_9 : f32 to vector<8x512xf32>
      %14 = arith.maximumf %12, %13 : vector<8x512xf32>
      %c0_10 = arith.constant 0 : index
      %c0_11 = arith.constant 0 : index
      %15 = vector.load %arg4[%c0_10, %c0_11] : memref<8x512xf32, #tpu.memory_space<vmem>>, vector<8x512xf32>
      tpu.vector_store %arg4[%c0_10, %c0_11], %14 {strides = array<i32>} : memref<8x512xf32, #tpu.memory_space<vmem>>, vector<8x512xf32>,
    } else {
    }
    return
  }
  func.func @transform_0(%arg0: i32, %arg1: i32) -> (i32, i32) {
    %c0_i32 = arith.constant 0 : i32
    %c0_i32_0 = arith.constant 0 : i32
    return %c0_i32, %arg1 : i32, i32
  }
  func.func @transform_1(%arg0: i32, %arg1: i32) -> (i32, i32) {
    %c0_i32 = arith.constant 0 : i32
    return %arg1, %arg0 : i32, i32
  }
  func.func @transform_2(%arg0: i32, %arg1: i32) -> (i32, i32) {
    %c0_i32 = arith.constant 0 : i32
    %c0_i32_0 = arith.constant 0 : i32
    return %c0_i32, %arg0 : i32, i32
  }
}

</mosaic_0001>

<llo_original>
// kernel: deepcube_a_core.5
$region0: #{deepcube_a_core.5}
  #allocation0 [shape = 'u32[]', space=smem, size = 0x4, offset = 0x4, fixed_abs, tag = 'smem constant byte address 0x4 - core index']
  #allocation1 [shape = 'u32[144,128]{1,0:T(1,128)}', space=vmem, size = 0x12000, scoped, tag = 'internal scratch']
  #allocation2 [shape = 'f32[8,1024]{1,0:T(8,128)}', space=vmem, size = 0x8000, scoped, tag = 'scratch operand']
  %s0 = inlined_call_operand.vmem [shape: f32[8,1024], index: 0, kind: input, shape index: {}]
  %s1 = inlined_call_operand.hbm [shape: f32[8,1024,1024], index: 1, kind: input, shape index: {}]
  %s2 = inlined_call_operand.vmem [shape: f32[8,1,1024], index: 2, kind: input, shape index: {}]
  %s3 = inlined_call_operand.vmem [shape: f32[8,1024], index: 3, kind: output, shape index: {}]
  %s4 = sld [smem:[#allocation0]]
  $region61: #{deepcube_a_core.5} parent=0
    _
  %s6 = ssub.s32 1, %s4
  %s7 = scalar_select 0, %s6, %s4
  $region1: #{deepcube_a_core.5} parent=0
    #allocation3 [shape = 'u8[4194304]{0}', space=vmem, size = 0x400000, scoped, tag = 'input window, operand 1']
    #allocation4 [shape = 's32[2]{0}', space=sflag, size = 0x8, scoped, tag = 'scoped memory for deepcube_a_core.5']
    %8 = vsyncpa [#allocation4], 0
    %s9 = scalar_lea.sflag [#allocation4], 1
    %10 = vsyncpa %s9, 0
    loop: start=0, step=1, limit=18
    $region2: #{deepcube_a_core.5} parent=1 // loop_pre_header
      _
    $region3: #{deepcube_a_core.5} parent=1 // loop_header
      %s12 = sphi 0, %s16
      %p13 = scmp.ge.s32.totalorder %s12, 18
      %s19 = sphi 0, %s31
      %s20 = sphi 0, %s27
      %s21 = sphi 0, %s19
      %s22 = sphi 0, %s20
      %s23 = sphi 0, %s21
      %s24 = sphi 0, %s22
      %s32 = sphi 0, %s32
      %s34 = sphi 0, %s32
      %s35 = sphi 0, %s34
      %s49 = sphi 0, %s35
      %s57 = sphi 0, %s59
      %s60 = sphi 0, %s57
      %s61 = sphi 0, %s60
      %s77 = sphi 0, %s61
      %s85 = sphi 0, %s87
      %s88 = sphi 0, %s85
      %s89 = sphi 0, %s88
      %s105 = sphi 0, %s89
      %s109 = sphi 0, %s109
      %s111 = sphi 0, %s109
      %s112 = sphi 0, %s111
      %s126 = sphi 0, %s112
    $region4: #{deepcube_a_core.5} parent=1 // loop_header_branch
      %15 = sbr.rel (%p13) target = $region8
    $region5: #{deepcube_a_core.5} parent=1 // loop_body
      %s17 = ssub.s32 %s12, 1
      %s18 = ssub.s32 %s12, 2
      %s25 = sadd.s32 1, %s20
      %p26 = scmp.ge.s32.totalorder %s25, 2
      %s27 = scalar_select %p26, 0, %s25
      %s28 = sadd.s32 1, %s19
      %s29 = scalar_select %p26, %s28, %s19
      %p30 = scmp.ge.s32.totalorder %s29, 8
      %s31 = scalar_select %p30, 0, %s29
      %s33 = sadd.s32 %s32, 1
      %p36 = scmp.eq.s32.totalorder %s12, 15
      %p37 = scmp.ne.s32.totalorder %s32, %s34
      %p38 = scmp.eq.s32.totalorder %s12, 0
      %p39 = por %p37, %p38
      %p40 = scmp.ne.s32.totalorder %s32, %s34
      %p41 = scmp.eq.s32.totalorder %s17, 15
      %p42 = por %p40, %p41
      %p43 = scmp.ne.s32.totalorder %s34, %s35
      %p44 = scmp.eq.s32.totalorder %s17, 0
      %p45 = por %p43, %p44
      %p46 = scmp.ne.s32.totalorder %s34, %s35
      %p47 = scmp.eq.s32.totalorder %s18, 15
      %p48 = por %p46, %p47
      %p50 = scmp.ne.s32.totalorder %s35, %s49
      %p51 = scmp.eq.s32.totalorder %s18, 0
      %p52 = por %p50, %p51
      %s53 = ssub.s32 %s19, %s31
      %s54 = ssub.s32 %s20, %s27
      %s55 = sor.u32 %s53, %s54
      %p56 = scmp.eq.s32.totalorder %s55, 0
      %s58 = sadd.s32 %s57, 1
      %s59 = scalar_select %p56, %s57, %s58
      %p62 = pneg %p56
      %p63 = scmp.eq.s32.totalorder %s12, 15
      %p64 = por %p62, %p63
      %p65 = scmp.ne.s32.totalorder %s57, %s60
      %p66 = scmp.eq.s32.totalorder %s12, 0
      %p67 = por %p65, %p66
      %p68 = scmp.ne.s32.totalorder %s57, %s60
      %p69 = scmp.eq.s32.totalorder %s17, 15
      %p70 = por %p68, %p69
      %p71 = scmp.ne.s32.totalorder %s60, %s61
      %p72 = scmp.eq.s32.totalorder %s17, 0
      %p73 = por %p71, %p72
      %p74 = scmp.ne.s32.totalorder %s60, %s61
      %p75 = scmp.eq.s32.totalorder %s18, 15
      %p76 = por %p74, %p75
      %p78 = scmp.ne.s32.totalorder %s61, %s77
      %p79 = scmp.eq.s32.totalorder %s18, 0
      %p80 = por %p78, %p79
      %s81 = ssub.s32 %s19, %s31
      %s82 = ssub.s32 %s20, %s27
      %s83 = sor.u32 %s81, %s82
      %p84 = scmp.eq.s32.totalorder %s83, 0
      %s86 = sadd.s32 %s85, 1
      %s87 = scalar_select %p84, %s85, %s86
      %p90 = pneg %p84
      %p91 = scmp.eq.s32.totalorder %s12, 15
      %p92 = por %p90, %p91
      %p93 = scmp.ne.s32.totalorder %s85, %s88
      %p94 = scmp.eq.s32.totalorder %s12, 0
      %p95 = por %p93, %p94
      %p96 = scmp.ne.s32.totalorder %s85, %s88
      %p97 = scmp.eq.s32.totalorder %s17, 15
      %p98 = por %p96, %p97
      %p99 = scmp.ne.s32.totalorder %s88, %s89
      %p100 = scmp.eq.s32.totalorder %s17, 0
      %p101 = por %p99, %p100
      %p102 = scmp.ne.s32.totalorder %s88, %s89
      %p103 = scmp.eq.s32.totalorder %s18, 15
      %p104 = por %p102, %p103
      %p106 = scmp.ne.s32.totalorder %s89, %s105
      %p107 = scmp.eq.s32.totalorder %s18, 0
      %p108 = por %p106, %p107
      %s110 = sadd.s32 %s109, 1
      %p113 = scmp.eq.s32.totalorder %s12, 15
      %p114 = scmp.ne.s32.totalorder %s109, %s111
      %p115 = scmp.eq.s32.totalorder %s12, 0
      %p116 = por %p114, %p115
      %p117 = scmp.ne.s32.totalorder %s109, %s111
      %p118 = scmp.eq.s32.totalorder %s17, 15
      %p119 = por %p117, %p118
      %p120 = scmp.ne.s32.totalorder %s111, %s112
      %p121 = scmp.eq.s32.totalorder %s17, 0
      %p122 = por %p120, %p121
      %p123 = scmp.ne.s32.totalorder %s111, %s112
      %p124 = scmp.eq.s32.totalorder %s18, 15
      %p125 = por %p123, %p124
      %p127 = scmp.ne.s32.totalorder %s112, %s126
      %p128 = scmp.eq.s32.totalorder %s18, 0
      %p129 = por %p127, %p128
      %p130 = scmp.le.s32.totalorder 1, %s12
      %p131 = scmp.lt.s32.totalorder %s12, 17
      %p132 = pnand %p130, %p131
      %p133 = pneg %p132
      // Predicated region
      $region9: #{deepcube_a_core.5} parent=5 // pred_check
        _
      $region10: #{deepcube_a_core.5} parent=5 // pred_check_branch
        %135 = sbr.rel (%p132) target = $region12
      $region11: #{deepcube_a_core.5} parent=5 // pred_region
        %s136 = ssub.s32 %s12, 1
        // Predicated region
        $region13: #{deepcube_a_core.5} parent=11 // pred_check
          %p137 = pneg %p45
        $region14: #{deepcube_a_core.5} parent=11 // pred_check_branch
          %139 = sbr.rel (%p137) target = $region16
        $region15: #{deepcube_a_core.5} parent=11 // pred_region
          _
        $region16: #{deepcube_a_core.5} parent=11 // pred_fallthru
          _
      $region12: #{deepcube_a_core.5} parent=5 // pred_fallthru
        _
      %p140 = scmp.lt.s32.totalorder %s12, 16
      // Predicated region
      $region17: #{deepcube_a_core.5} parent=5 // pred_check
        %p141 = pneg %p140
      $region18: #{deepcube_a_core.5} parent=5 // pred_check_branch
        %143 = sbr.rel (%p141) target = $region20
      $region19: #{deepcube_a_core.5} parent=5 // pred_region
        // Predicated region
        $region21: #{deepcube_a_core.5} parent=19 // pred_check
          %p144 = pneg %p67
        $region22: #{deepcube_a_core.5} parent=19 // pred_check_branch
          %146 = sbr.rel (%p144) target = $region24
        $region23: #{deepcube_a_core.5} parent=19 // pred_region
          %s147 = sand.u32 %s57, 1
          %s148 = scalar_lea.sflag [#allocation4], %s147
          %s149 = sand.u32 %s57, 1
          %s150 = smul.addr %s149, 4096
          %s151 = scalar_lea.vmem [#allocation3], %s150
          %s152 = smul.u32 4, %s20
          %s154 = ssub.s32 65536, 65536
          %155 = vsyncadd %s148, %s154
          %s156 = smul.addr %s19, 1024
          %s157 = sadd.s32 %s152, %s156
          %s158 = smul.addr %s157, 128
          %s159 = scalar_lea.hbm %s1, %s158
          %s160 = sshll.u32 %s151, 4
          %s161 = int_to_ptr.vmem [resolvable:$true] %s160
          %166 = dma.hbm_to_vmem [thread:$0]  %s159, 65536, %s161, %s148, 1024, 512, 32
        $region24: #{deepcube_a_core.5} parent=19 // pred_fallthru
          _
        // Predicated region
        $region25: #{deepcube_a_core.5} parent=19 // pred_check
          %p167 = pneg %p95
        $region26: #{deepcube_a_core.5} parent=19 // pred_check_branch
          %169 = sbr.rel (%p167) target = $region28
        $region27: #{deepcube_a_core.5} parent=19 // pred_region
          %s170 = smul.u32 4, %s20
          %p171 = scmp.lt.s32.totalorder %s19, 7
          %s172 = scalar_select %p171, %s19, 7
          %p173 = scmp.lt.s32.totalorder %s170, 7
          %s174 = scalar_select %p173, %s170, 7
          %s175 = smul.addr %s172, 8
          %s176 = sadd.s32 %s174, %s175
          %s177 = scalar_lea.vmem %s2, %s176
          %s178 = smul.u32 4, %s20
        $region28: #{deepcube_a_core.5} parent=19 // pred_fallthru
          _
      $region20: #{deepcube_a_core.5} parent=5 // pred_fallthru
        _
      %p179 = scmp.le.s32.totalorder 1, %s12
      %p180 = scmp.lt.s32.totalorder %s12, 17
      %p181 = pnand %p179, %p180
      %p182 = pneg %p181
      // Predicated region
      $region29: #{deepcube_a_core.5} parent=5 // pred_check
        _
      $region30: #{deepcube_a_core.5} parent=5 // pred_check_branch
        %184 = sbr.rel (%p181) target = $region32
      $region31: #{deepcube_a_core.5} parent=5 // pred_region
        %s185 = ssub.s32 %s12, 1
        %s186 = sand.u32 %s60, 1
        %s187 = scalar_lea.sflag [#allocation4], %s186
        %s188 = sand.u32 %s60, 1
        %s189 = smul.addr %s188, 4096
        %s190 = scalar_lea.vmem [#allocation3], %s189
        // Predicated region
        $region33: #{deepcube_a_core.5} parent=31 // pred_check
          %p191 = pneg %p73
        $region34: #{deepcube_a_core.5} parent=31 // pred_check_branch
          %193 = sbr.rel (%p191) target = $region36
        $region35: #{deepcube_a_core.5} parent=31 // pred_region
          %194 = dma.done %s187, 65536
        $region36: #{deepcube_a_core.5} parent=31 // pred_fallthru
          _
        %p195 = pneg %p45
        %p196 = pneg %p42
        %s197 = sand.u32 %s60, 1
        %s198 = scalar_lea.sflag [#allocation4], %s197
        %s199 = sand.u32 %s60, 1
        %s200 = smul.addr %s199, 4096
        %s201 = scalar_lea.vmem [#allocation3], %s200
        %p202 = pneg %p73
        %p203 = pneg %p70
        %s204 = smul.u32 4, %s22
        %p205 = scmp.lt.s32.totalorder %s21, 7
        %s206 = scalar_select %p205, %s21, 7
        %p207 = scmp.lt.s32.totalorder %s204, 7
        %s208 = scalar_select %p207, %s204, 7
        %s209 = smul.addr %s206, 8
        %s210 = sadd.s32 %s208, %s209
        %s211 = scalar_lea.vmem %s2, %s210
        %p212 = pneg %p101
        %p213 = pneg %p98
        %p214 = pneg %p122
        %p215 = pneg %p119
        %s216 = smul.u32 4, %s22
        %s217 = smul.u32 4, %s22
        %p218 = scmp.lt.s32.totalorder %s21, 7
        %s219 = scalar_select %p218, %s21, 7
        %p220 = scmp.lt.s32.totalorder %s217, 7
        %s221 = scalar_select %p220, %s217, 7
        %s222 = smul.addr %s219, 8
        %s223 = sadd.s32 %s221, %s222
        %s224 = scalar_lea.vmem %s2, %s223
        %s225 = smul.u32 4, %s22
        %s226 = smul.u32 %s22, 512
        %p227 = scmp.eq.s32.totalorder %s21, 0
        %p228 = scmp.eq.s32.totalorder %s22, 0
        %p229 = pnand %p227, %p228
        %p230 = pneg %p229
        // Predicated region
        $region37: #{deepcube_a_core.5} parent=31 // pred_check
          _
        $region38: #{deepcube_a_core.5} parent=31 // pred_check_branch
          %232 = sbr.rel (%p229) target = $region40
        $region39: #{deepcube_a_core.5} parent=31 // pred_region
          %v233 = vld [vmem:[%s0] sm:$0xff]
          %v234 = vld [vmem:[%s0 + $0x8] sm:$0xff]
          %v235 = vld [vmem:[%s0 + $0x10] sm:$0xff]
          %v236 = vld [vmem:[%s0 + $0x18] sm:$0xff]
          %v237 = vld [vmem:[%s0 + $0x20] sm:$0xff]
          %v238 = vld [vmem:[%s0 + $0x28] sm:$0xff]
          %v239 = vld [vmem:[%s0 + $0x30] sm:$0xff]
          %v240 = vld [vmem:[%s0 + $0x38] sm:$0xff]
          %241 = vst [vmem:[%s3] sm:$0xff] %v233
          %242 = vst [vmem:[%s3 + $0x8] sm:$0xff] %v234
          %243 = vst [vmem:[%s3 + $0x10] sm:$0xff] %v235
          %244 = vst [vmem:[%s3 + $0x18] sm:$0xff] %v236
          %245 = vst [vmem:[%s3 + $0x20] sm:$0xff] %v237
          %246 = vst [vmem:[%s3 + $0x28] sm:$0xff] %v238
          %247 = vst [vmem:[%s3 + $0x30] sm:$0xff] %v239
          %248 = vst [vmem:[%s3 + $0x38] sm:$0xff] %v240
        $region40: #{deepcube_a_core.5} parent=31 // pred_fallthru
          _
        %p249 = scmp.lt.s32.totalorder %s21, 0
        %s250 = ssub.s32 0, %s21
        %s251 = scalar_select %p249, %s250, %s21
        %s252 = sand.u32 %s251, 1
        %s253 = ssub.s32 0, %s252
        %s254 = scalar_select %p249, %s253, %s252
        %p255 = scmp.ne.s32.totalorder %s254, 0
        %p256 = scmp.lt.s32.totalorder %s254, 0
        %p257 = pnand %p256, %p255
        %p258 = pneg %p257
        %s259 = sadd.s32 %s254, 2
        %s260 = scalar_select %p258, %s259, %s254
        %p261 = scmp.eq.s32.totalorder %s260, 0
        // Predicated region
        $region41: #{deepcube_a_core.5} parent=31 // pred_check
          %p262 = pneg %p261
        $region42: #{deepcube_a_core.5} parent=31 // pred_check_branch
          %264 = sbr.rel (%p262) target = $region44
        $region43: #{deepcube_a_core.5} parent=31 // pred_region
          %v265 = vld [vmem:[%s3] sm:$0xff]
          %v266 = vld [vmem:[%s3 + $0x8] sm:$0xff]
          %v267 = vld [vmem:[%s3 + $0x10] sm:$0xff]
          %v268 = vld [vmem:[%s3 + $0x18] sm:$0xff]
          %v269 = vld [vmem:[%s3 + $0x20] sm:$0xff]
          %v270 = vld [vmem:[%s3 + $0x28] sm:$0xff]
          %v271 = vld [vmem:[%s3 + $0x30] sm:$0xff]
          %v272 = vld [vmem:[%s3 + $0x38] sm:$0xff]
          %v273 = vld [vmem:[%s190] sm:$0xff]
          %v274 = vld [vmem:[%s190 + $0x8] sm:$0xff]
          %v275 = vld [vmem:[%s190 + $0x10] sm:$0xff]
          %v276 = vld [vmem:[%s190 + $0x18] sm:$0xff]
          %v277 = vld [vmem:[%s190 + $0x20] sm:$0xff]
          %v278 = vld [vmem:[%s190 + $0x28] sm:$0xff]
          %v279 = vld [vmem:[%s190 + $0x30] sm:$0xff]
          %v280 = vld [vmem:[%s190 + $0x38] sm:$0xff]
          %v281 = vld [vmem:[%s190 + $0x40] sm:$0xff]
          %v282 = vld [vmem:[%s190 + $0x48] sm:$0xff]
          %v283 = vld [vmem:[%s190 + $0x50] sm:$0xff]
          %v284 = vld [vmem:[%s190 + $0x58] sm:$0xff]
          %v285 = vld [vmem:[%s190 + $0x60] sm:$0xff]
          %v286 = vld [vmem:[%s190 + $0x68] sm:$0xff]
          %v287 = vld [vmem:[%s190 + $0x70] sm:$0xff]
          %v288 = vld [vmem:[%s190 + $0x78] sm:$0xff]
          %v289 = vld [vmem:[%s190 + $0x80] sm:$0xff]
          %v290 = vld [vmem:[%s190 + $0x88] sm:$0xff]
          %v291 = vld [vmem:[%s190 + $0x90] sm:$0xff]
          %v292 = vld [vmem:[%s190 + $0x98] sm:$0xff]
          %v293 = vld [vmem:[%s190 + $0xa0] sm:$0xff]
          %v294 = vld [vmem:[%s190 + $0xa8] sm:$0xff]
          %v295 = vld [vmem:[%s190 + $0xb0] sm:$0xff]
          %v296 = vld [vmem:[%s190 + $0xb8] sm:$0xff]
          %v297 = vld [vmem:[%s190 + $0xc0] sm:$0xff]
          %v298 = vld [vmem:[%s190 + $0xc8] sm:$0xff]
          %v299 = vld [vmem:[%s190 + $0xd0] sm:$0xff]
          %v300 = vld [vmem:[%s190 + $0xd8] sm:$0xff]
          %v301 = vld [vmem:[%s190 + $0xe0] sm:$0xff]
          %v302 = vld [vmem:[%s190 + $0xe8] sm:$0xff]
          %v303 = vld [vmem:[%s190 + $0xf0] sm:$0xff]
          %v304 = vld [vmem:[%s190 + $0xf8] sm:$0xff]
          %v305 = vld [vmem:[%s190 + $0x100] sm:$0xff]
          %v306 = vld [vmem:[%s190 + $0x108] sm:$0xff]
          %v307 = vld [vmem:[%s190 + $0x110] sm:$0xff]
          %v308 = vld [vmem:[%s190 + $0x118] sm:$0xff]
          %v309 = vld [vmem:[%s190 + $0x120] sm:$0xff]
          %v310 = vld [vmem:[%s190 + $0x128] sm:$0xff]
          %v311 = vld [vmem:[%s190 + $0x130] sm:$0xff]
          %v312 = vld [vmem:[%s190 + $0x138] sm:$0xff]
          %v313 = vld [vmem:[%s190 + $0x140] sm:$0xff]
          %v314 = vld [vmem:[%s190 + $0x148] sm:$0xff]
          %v315 = vld [vmem:[%s190 + $0x150] sm:$0xff]
          %v316 = vld [vmem:[%s190 + $0x158] sm:$0xff]
          %v317 = vld [vmem:[%s190 + $0x160] sm:$0xff]
          %v318 = vld [vmem:[%s190 + $0x168] sm:$0xff]
          %v319 = vld [vmem:[%s190 + $0x170] sm:$0xff]
          %v320 = vld [vmem:[%s190 + $0x178] sm:$0xff]
          %v321 = vld [vmem:[%s190 + $0x180] sm:$0xff]
          %v322 = vld [vmem:[%s190 + $0x188] sm:$0xff]
          %v323 = vld [vmem:[%s190 + $0x190] sm:$0xff]
          %v324 = vld [vmem:[%s190 + $0x198] sm:$0xff]
          %v325 = vld [vmem:[%s190 + $0x1a0] sm:$0xff]
          %v326 = vld [vmem:[%s190 + $0x1a8] sm:$0xff]
          %v327 = vld [vmem:[%s190 + $0x1b0] sm:$0xff]
          %v328 = vld [vmem:[%s190 + $0x1b8] sm:$0xff]
          %v329 = vld [vmem:[%s190 + $0x1c0] sm:$0xff]
          %v330 = vld [vmem:[%s190 + $0x1c8] sm:$0xff]
          %v331 = vld [vmem:[%s190 + $0x1d0] sm:$0xff]
          %v332 = vld [vmem:[%s190 + $0x1d8] sm:$0xff]
          %v333 = vld [vmem:[%s190 + $0x1e0] sm:$0xff]
          %v334 = vld [vmem:[%s190 + $0x1e8] sm:$0xff]
          %v335 = vld [vmem:[%s190 + $0x1f0] sm:$0xff]
          %v336 = vld [vmem:[%s190 + $0x1f8] sm:$0xff]
          %v337 = vld [vmem:[%s190 + $0x200] sm:$0xff]
          %v338 = vld [vmem:[%s190 + $0x208] sm:$0xff]
          %v339 = vld [vmem:[%s190 + $0x210] sm:$0xff]
          %v340 = vld [vmem:[%s190 + $0x218] sm:$0xff]
          %v341 = vld [vmem:[%s190 + $0x220] sm:$0xff]
          %v342 = vld [vmem:[%s190 + $0x228] sm:$0xff]
          %v343 = vld [vmem:[%s190 + $0x230] sm:$0xff]
          %v344 = vld [vmem:[%s190 + $0x238] sm:$0xff]
          %v345 = vld [vmem:[%s190 + $0x240] sm:$0xff]
          %v346 = vld [vmem:[%s190 + $0x248] sm:$0xff]
          %v347 = vld [vmem:[%s190 + $0x250] sm:$0xff]
          %v348 = vld [vmem:[%s190 + $0x258] sm:$0xff]
          %v349 = vld [vmem:[%s190 + $0x260] sm:$0xff]
          %v350 = vld [vmem:[%s190 + $0x268] sm:$0xff]
          %v351 = vld [vmem:[%s190 + $0x270] sm:$0xff]
          %v352 = vld [vmem:[%s190 + $0x278] sm:$0xff]
          %v353 = vld [vmem:[%s190 + $0x280] sm:$0xff]
          %v354 = vld [vmem:[%s190 + $0x288] sm:$0xff]
          %v355 = vld [vmem:[%s190 + $0x290] sm:$0xff]
          %v356 = vld [vmem:[%s190 + $0x298] sm:$0xff]
          %v357 = vld [vmem:[%s190 + $0x2a0] sm:$0xff]
          %v358 = vld [vmem:[%s190 + $0x2a8] sm:$0xff]
          %v359 = vld [vmem:[%s190 + $0x2b0] sm:$0xff]
          %v360 = vld [vmem:[%s190 + $0x2b8] sm:$0xff]
          %v361 = vld [vmem:[%s190 + $0x2c0] sm:$0xff]
          %v362 = vld [vmem:[%s190 + $0x2c8] sm:$0xff]
          %v363 = vld [vmem:[%s190 + $0x2d0] sm:$0xff]
          %v364 = vld [vmem:[%s190 + $0x2d8] sm:$0xff]
          %v365 = vld [vmem:[%s190 + $0x2e0] sm:$0xff]
          %v366 = vld [vmem:[%s190 + $0x2e8] sm:$0xff]
          %v367 = vld [vmem:[%s190 + $0x2f0] sm:$0xff]
          %v368 = vld [vmem:[%s190 + $0x2f8] sm:$0xff]
          %v369 = vld [vmem:[%s190 + $0x300] sm:$0xff]
          %v370 = vld [vmem:[%s190 + $0x308] sm:$0xff]
          %v371 = vld [vmem:[%s190 + $0x310] sm:$0xff]
          %v372 = vld [vmem:[%s190 + $0x318] sm:$0xff]
          %v373 = vld [vmem:[%s190 + $0x320] sm:$0xff]
          %v374 = vld [vmem:[%s190 + $0x328] sm:$0xff]
          %v375 = vld [vmem:[%s190 + $0x330] sm:$0xff]
          %v376 = vld [vmem:[%s190 + $0x338] sm:$0xff]
          %v377 = vld [vmem:[%s190 + $0x340] sm:$0xff]
          %v378 = vld [vmem:[%s190 + $0x348] sm:$0xff]
          %v379 = vld [vmem:[%s190 + $0x350] sm:$0xff]
          %v380 = vld [vmem:[%s190 + $0x358] sm:$0xff]
          %v381 = vld [vmem:[%s190 + $0x360] sm:$0xff]
          %v382 = vld [vmem:[%s190 + $0x368] sm:$0xff]
          %v383 = vld [vmem:[%s190 + $0x370] sm:$0xff]
          %v384 = vld [vmem:[%s190 + $0x378] sm:$0xff]
          %v385 = vld [vmem:[%s190 + $0x380] sm:$0xff]
          %v386 = vld [vmem:[%s190 + $0x388] sm:$0xff]
          %v387 = vld [vmem:[%s190 + $0x390] sm:$0xff]
          %v388 = vld [vmem:[%s190 + $0x398] sm:$0xff]
          %v389 = vld [vmem:[%s190 + $0x3a0] sm:$0xff]
          %v390 = vld [vmem:[%s190 + $0x3a8] sm:$0xff]
          %v391 = vld [vmem:[%s190 + $0x3b0] sm:$0xff]
          %v392 = vld [vmem:[%s190 + $0x3b8] sm:$0xff]
          %v393 = vld [vmem:[%s190 + $0x3c0] sm:$0xff]
          %v394 = vld [vmem:[%s190 + $0x3c8] sm:$0xff]
          %v395 = vld [vmem:[%s190 + $0x3d0] sm:$0xff]
          %v396 = vld [vmem:[%s190 + $0x3d8] sm:$0xff]
          %v397 = vld [vmem:[%s190 + $0x3e0] sm:$0xff]
          %v398 = vld [vmem:[%s190 + $0x3e8] sm:$0xff]
          %v399 = vld [vmem:[%s190 + $0x3f0] sm:$0xff]
          %v400 = vld [vmem:[%s190 + $0x3f8] sm:$0xff]
          %v401 = vld [vmem:[%s190 + $0x400] sm:$0xff]
          %v402 = vld [vmem:[%s190 + $0x408] sm:$0xff]
          %v403 = vld [vmem:[%s190 + $0x410] sm:$0xff]
          %v404 = vld [vmem:[%s190 + $0x418] sm:$0xff]
          %v405 = vld [vmem:[%s190 + $0x420] sm:$0xff]
          %v406 = vld [vmem:[%s190 + $0x428] sm:$0xff]
          %v407 = vld [vmem:[%s190 + $0x430] sm:$0xff]
          %v408 = vld [vmem:[%s190 + $0x438] sm:$0xff]
          %v409 = vld [vmem:[%s190 + $0x440] sm:$0xff]
          %v410 = vld [vmem:[%s190 + $0x448] sm:$0xff]
          %v411 = vld [vmem:[%s190 + $0x450] sm:$0xff]
          %v412 = vld [vmem:[%s190 + $0x458] sm:$0xff]
          %v413 = vld [vmem:[%s190 + $0x460] sm:$0xff]
          %v414 = vld [vmem:[%s190 + $0x468] sm:$0xff]
          %v415 = vld [vmem:[%s190 + $0x470] sm:$0xff]
          %v416 = vld [vmem:[%s190 + $0x478] sm:$0xff]
          %v417 = vld [vmem:[%s190 + $0x480] sm:$0xff]
          %v418 = vld [vmem:[%s190 + $0x488] sm:$0xff]
          %v419 = vld [vmem:[%s190 + $0x490] sm:$0xff]
          %v420 = vld [vmem:[%s190 + $0x498] sm:$0xff]
          %v421 = vld [vmem:[%s190 + $0x4a0] sm:$0xff]
          %v422 = vld [vmem:[%s190 + $0x4a8] sm:$0xff]
          %v423 = vld [vmem:[%s190 + $0x4b0] sm:$0xff]
          %v424 = vld [vmem:[%s190 + $0x4b8] sm:$0xff]
          %v425 = vld [vmem:[%s190 + $0x4c0] sm:$0xff]
          %v426 = vld [vmem:[%s190 + $0x4c8] sm:$0xff]
          %v427 = vld [vmem:[%s190 + $0x4d0] sm:$0xff]
          %v428 = vld [vmem:[%s190 + $0x4d8] sm:$0xff]
          %v429 = vld [vmem:[%s190 + $0x4e0] sm:$0xff]
          %v430 = vld [vmem:[%s190 + $0x4e8] sm:$0xff]
          %v431 = vld [vmem:[%s190 + $0x4f0] sm:$0xff]
          %v432 = vld [vmem:[%s190 + $0x4f8] sm:$0xff]
          %v433 = vld [vmem:[%s190 + $0x500] sm:$0xff]
          %v434 = vld [vmem:[%s190 + $0x508] sm:$0xff]
          %v435 = vld [vmem:[%s190 + $0x510] sm:$0xff]
          %v436 = vld [vmem:[%s190 + $0x518] sm:$0xff]
          %v437 = vld [vmem:[%s190 + $0x520] sm:$0xff]
          %v438 = vld [vmem:[%s190 + $0x528] sm:$0xff]
          %v439 = vld [vmem:[%s190 + $0x530] sm:$0xff]
          %v440 = vld [vmem:[%s190 + $0x538] sm:$0xff]
          %v441 = vld [vmem:[%s190 + $0x540] sm:$0xff]
          %v442 = vld [vmem:[%s190 + $0x548] sm:$0xff]
          %v443 = vld [vmem:[%s190 + $0x550] sm:$0xff]
          %v444 = vld [vmem:[%s190 + $0x558] sm:$0xff]
          %v445 = vld [vmem:[%s190 + $0x560] sm:$0xff]
          %v446 = vld [vmem:[%s190 + $0x568] sm:$0xff]
          %v447 = vld [vmem:[%s190 + $0x570] sm:$0xff]
          %v448 = vld [vmem:[%s190 + $0x578] sm:$0xff]
          %v449 = vld [vmem:[%s190 + $0x580] sm:$0xff]
          %v450 = vld [vmem:[%s190 + $0x588] sm:$0xff]
          %v451 = vld [vmem:[%s190 + $0x590] sm:$0xff]
          %v452 = vld [vmem:[%s190 + $0x598] sm:$0xff]
          %v453 = vld [vmem:[%s190 + $0x5a0] sm:$0xff]
          %v454 = vld [vmem:[%s190 + $0x5a8] sm:$0xff]
          %v455 = vld [vmem:[%s190 + $0x5b0] sm:$0xff]
          %v456 = vld [vmem:[%s190 + $0x5b8] sm:$0xff]
          %v457 = vld [vmem:[%s190 + $0x5c0] sm:$0xff]
          %v458 = vld [vmem:[%s190 + $0x5c8] sm:$0xff]
          %v459 = vld [vmem:[%s190 + $0x5d0] sm:$0xff]
          %v460 = vld [vmem:[%s190 + $0x5d8] sm:$0xff]
          %v461 = vld [vmem:[%s190 + $0x5e0] sm:$0xff]
          %v462 = vld [vmem:[%s190 + $0x5e8] sm:$0xff]
          %v463 = vld [vmem:[%s190 + $0x5f0] sm:$0xff]
          %v464 = vld [vmem:[%s190 + $0x5f8] sm:$0xff]
          %v465 = vld [vmem:[%s190 + $0x600] sm:$0xff]
          %v466 = vld [vmem:[%s190 + $0x608] sm:$0xff]
          %v467 = vld [vmem:[%s190 + $0x610] sm:$0xff]
          %v468 = vld [vmem:[%s190 + $0x618] sm:$0xff]
          %v469 = vld [vmem:[%s190 + $0x620] sm:$0xff]
          %v470 = vld [vmem:[%s190 + $0x628] sm:$0xff]
          %v471 = vld [vmem:[%s190 + $0x630] sm:$0xff]
          %v472 = vld [vmem:[%s190 + $0x638] sm:$0xff]
          %v473 = vld [vmem:[%s190 + $0x640] sm:$0xff]
          %v474 = vld [vmem:[%s190 + $0x648] sm:$0xff]
          %v475 = vld [vmem:[%s190 + $0x650] sm:$0xff]
          %v476 = vld [vmem:[%s190 + $0x658] sm:$0xff]
          %v477 = vld [vmem:[%s190 + $0x660] sm:$0xff]
          %v478 = vld [vmem:[%s190 + $0x668] sm:$0xff]
          %v479 = vld [vmem:[%s190 + $0x670] sm:$0xff]
          %v480 = vld [vmem:[%s190 + $0x678] sm:$0xff]
          %v481 = vld [vmem:[%s190 + $0x680] sm:$0xff]
          %v482 = vld [vmem:[%s190 + $0x688] sm:$0xff]
          %v483 = vld [vmem:[%s190 + $0x690] sm:$0xff]
          %v484 = vld [vmem:[%s190 + $0x698] sm:$0xff]
          %v485 = vld [vmem:[%s190 + $0x6a0] sm:$0xff]
          %v486 = vld [vmem:[%s190 + $0x6a8] sm:$0xff]
          %v487 = vld [vmem:[%s190 + $0x6b0] sm:$0xff]
          %v488 = vld [vmem:[%s190 + $0x6b8] sm:$0xff]
          %v489 = vld [vmem:[%s190 + $0x6c0] sm:$0xff]
          %v490 = vld [vmem:[%s190 + $0x6c8] sm:$0xff]
          %v491 = vld [vmem:[%s190 + $0x6d0] sm:$0xff]
          %v492 = vld [vmem:[%s190 + $0x6d8] sm:$0xff]
          %v493 = vld [vmem:[%s190 + $0x6e0] sm:$0xff]
          %v494 = vld [vmem:[%s190 + $0x6e8] sm:$0xff]
          %v495 = vld [vmem:[%s190 + $0x6f0] sm:$0xff]
          %v496 = vld [vmem:[%s190 + $0x6f8] sm:$0xff]
          %v497 = vld [vmem:[%s190 + $0x700] sm:$0xff]
          %v498 = vld [vmem:[%s190 + $0x708] sm:$0xff]
          %v499 = vld [vmem:[%s190 + $0x710] sm:$0xff]
          %v500 = vld [vmem:[%s190 + $0x718] sm:$0xff]
          %v501 = vld [vmem:[%s190 + $0x720] sm:$0xff]
          %v502 = vld [vmem:[%s190 + $0x728] sm:$0xff]
          %v503 = vld [vmem:[%s190 + $0x730] sm:$0xff]
          %v504 = vld [vmem:[%s190 + $0x738] sm:$0xff]
          %v505 = vld [vmem:[%s190 + $0x740] sm:$0xff]
          %v506 = vld [vmem:[%s190 + $0x748] sm:$0xff]
          %v507 = vld [vmem:[%s190 + $0x750] sm:$0xff]
          %v508 = vld [vmem:[%s190 + $0x758] sm:$0xff]
          %v509 = vld [vmem:[%s190 + $0x760] sm:$0xff]
          %v510 = vld [vmem:[%s190 + $0x768] sm:$0xff]
          %v511 = vld [vmem:[%s190 + $0x770] sm:$0xff]
          %v512 = vld [vmem:[%s190 + $0x778] sm:$0xff]
          %v513 = vld [vmem:[%s190 + $0x780] sm:$0xff]
          %v514 = vld [vmem:[%s190 + $0x788] sm:$0xff]
          %v515 = vld [vmem:[%s190 + $0x790] sm:$0xff]
          %v516 = vld [vmem:[%s190 + $0x798] sm:$0xff]
          %v517 = vld [vmem:[%s190 + $0x7a0] sm:$0xff]
          %v518 = vld [vmem:[%s190 + $0x7a8] sm:$0xff]
          %v519 = vld [vmem:[%s190 + $0x7b0] sm:$0xff]
          %v520 = vld [vmem:[%s190 + $0x7b8] sm:$0xff]
          %v521 = vld [vmem:[%s190 + $0x7c0] sm:$0xff]
          %v522 = vld [vmem:[%s190 + $0x7c8] sm:$0xff]
          %v523 = vld [vmem:[%s190 + $0x7d0] sm:$0xff]
          %v524 = vld [vmem:[%s190 + $0x7d8] sm:$0xff]
          %v525 = vld [vmem:[%s190 + $0x7e0] sm:$0xff]
          %v526 = vld [vmem:[%s190 + $0x7e8] sm:$0xff]
          %v527 = vld [vmem:[%s190 + $0x7f0] sm:$0xff]
          %v528 = vld [vmem:[%s190 + $0x7f8] sm:$0xff]
          %v529 = vld [vmem:[%s190 + $0x800] sm:$0xff]
          %v530 = vld [vmem:[%s190 + $0x808] sm:$0xff]
          %v531 = vld [vmem:[%s190 + $0x810] sm:$0xff]
          %v532 = vld [vmem:[%s190 + $0x818] sm:$0xff]
          %v533 = vld [vmem:[%s190 + $0x820] sm:$0xff]
          %v534 = vld [vmem:[%s190 + $0x828] sm:$0xff]
          %v535 = vld [vmem:[%s190 + $0x830] sm:$0xff]
          %v536 = vld [vmem:[%s190 + $0x838] sm:$0xff]
          %v537 = vld [vmem:[%s190 + $0x840] sm:$0xff]
          %v538 = vld [vmem:[%s190 + $0x848] sm:$0xff]
          %v539 = vld [vmem:[%s190 + $0x850] sm:$0xff]
          %v540 = vld [vmem:[%s190 + $0x858] sm:$0xff]
          %v541 = vld [vmem:[%s190 + $0x860] sm:$0xff]
          %v542 = vld [vmem:[%s190 + $0x868] sm:$0xff]
          %v543 = vld [vmem:[%s190 + $0x870] sm:$0xff]
          %v544 = vld [vmem:[%s190 + $0x878] sm:$0xff]
          %v545 = vld [vmem:[%s190 + $0x880] sm:$0xff]
          %v546 = vld [vmem:[%s190 + $0x888] sm:$0xff]
          %v547 = vld [vmem:[%s190 + $0x890] sm:$0xff]
          %v548 = vld [vmem:[%s190 + $0x898] sm:$0xff]
          %v549 = vld [vmem:[%s190 + $0x8a0] sm:$0xff]
          %v550 = vld [vmem:[%s190 + $0x8a8] sm:$0xff]
          %v551 = vld [vmem:[%s190 + $0x8b0] sm:$0xff]
          %v552 = vld [vmem:[%s190 + $0x8b8] sm:$0xff]
          %v553 = vld [vmem:[%s190 + $0x8c0] sm:$0xff]
          %v554 = vld [vmem:[%s190 + $0x8c8] sm:$0xff]
          %v555 = vld [vmem:[%s190 + $0x8d0] sm:$0xff]
          %v556 = vld [vmem:[%s190 + $0x8d8] sm:$0xff]
          %v557 = vld [vmem:[%s190 + $0x8e0] sm:$0xff]
          %v558 = vld [vmem:[%s190 + $0x8e8] sm:$0xff]
          %v559 = vld [vmem:[%s190 + $0x8f0] sm:$0xff]
          %v560 = vld [vmem:[%s190 + $0x8f8] sm:$0xff]
          %v561 = vld [vmem:[%s190 + $0x900] sm:$0xff]
          %v562 = vld [vmem:[%s190 + $0x908] sm:$0xff]
          %v563 = vld [vmem:[%s190 + $0x910] sm:$0xff]
          %v564 = vld [vmem:[%s190 + $0x918] sm:$0xff]
          %v565 = vld [vmem:[%s190 + $0x920] sm:$0xff]
          %v566 = vld [vmem:[%s190 + $0x928] sm:$0xff]
          %v567 = vld [vmem:[%s190 + $0x930] sm:$0xff]
          %v568 = vld [vmem:[%s190 + $0x938] sm:$0xff]
          %v569 = vld [vmem:[%s190 + $0x940] sm:$0xff]
          %v570 = vld [vmem:[%s190 + $0x948] sm:$0xff]
          %v571 = vld [vmem:[%s190 + $0x950] sm:$0xff]
          %v572 = vld [vmem:[%s190 + $0x958] sm:$0xff]
          %v573 = vld [vmem:[%s190 + $0x960] sm:$0xff]
          %v574 = vld [vmem:[%s190 + $0x968] sm:$0xff]
          %v575 = vld [vmem:[%s190 + $0x970] sm:$0xff]
          %v576 = vld [vmem:[%s190 + $0x978] sm:$0xff]
          %v577 = vld [vmem:[%s190 + $0x980] sm:$0xff]
          %v578 = vld [vmem:[%s190 + $0x988] sm:$0xff]
          %v579 = vld [vmem:[%s190 + $0x990] sm:$0xff]
          %v580 = vld [vmem:[%s190 + $0x998] sm:$0xff]
          %v581 = vld [vmem:[%s190 + $0x9a0] sm:$0xff]
          %v582 = vld [vmem:[%s190 + $0x9a8] sm:$0xff]
          %v583 = vld [vmem:[%s190 + $0x9b0] sm:$0xff]
          %v584 = vld [vmem:[%s190 + $0x9b8] sm:$0xff]
          %v585 = vld [vmem:[%s190 + $0x9c0] sm:$0xff]
          %v586 = vld [vmem:[%s190 + $0x9c8] sm:$0xff]
          %v587 = vld [vmem:[%s190 + $0x9d0] sm:$0xff]
          %v588 = vld [vmem:[%s190 + $0x9d8] sm:$0xff]
          %v589 = vld [vmem:[%s190 + $0x9e0] sm:$0xff]
          %v590 = vld [vmem:[%s190 + $0x9e8] sm:$0xff]
          %v591 = vld [vmem:[%s190 + $0x9f0] sm:$0xff]
          %v592 = vld [vmem:[%s190 + $0x9f8] sm:$0xff]
          %v593 = vld [vmem:[%s190 + $0xa00] sm:$0xff]
          %v594 = vld [vmem:[%s190 + $0xa08] sm:$0xff]
          %v595 = vld [vmem:[%s190 + $0xa10] sm:$0xff]
          %v596 = vld [vmem:[%s190 + $0xa18] sm:$0xff]
          %v597 = vld [vmem:[%s190 + $0xa20] sm:$0xff]
          %v598 = vld [vmem:[%s190 + $0xa28] sm:$0xff]
          %v599 = vld [vmem:[%s190 + $0xa30] sm:$0xff]
          %v600 = vld [vmem:[%s190 + $0xa38] sm:$0xff]
          %v601 = vld [vmem:[%s190 + $0xa40] sm:$0xff]
          %v602 = vld [vmem:[%s190 + $0xa48] sm:$0xff]
          %v603 = vld [vmem:[%s190 + $0xa50] sm:$0xff]
          %v604 = vld [vmem:[%s190 + $0xa58] sm:$0xff]
          %v605 = vld [vmem:[%s190 + $0xa60] sm:$0xff]
          %v606 = vld [vmem:[%s190 + $0xa68] sm:$0xff]
          %v607 = vld [vmem:[%s190 + $0xa70] sm:$0xff]
          %v608 = vld [vmem:[%s190 + $0xa78] sm:$0xff]
          %v609 = vld [vmem:[%s190 + $0xa80] sm:$0xff]
          %v610 = vld [vmem:[%s190 + $0xa88] sm:$0xff]
          %v611 = vld [vmem:[%s190 + $0xa90] sm:$0xff]
          %v612 = vld [vmem:[%s190 + $0xa98] sm:$0xff]
          %v613 = vld [vmem:[%s190 + $0xaa0] sm:$0xff]
          %v614 = vld [vmem:[%s190 + $0xaa8] sm:$0xff]
          %v615 = vld [vmem:[%s190 + $0xab0] sm:$0xff]
          %v616 = vld [vmem:[%s190 + $0xab8] sm:$0xff]
          %v617 = vld [vmem:[%s190 + $0xac0] sm:$0xff]
          %v618 = vld [vmem:[%s190 + $0xac8] sm:$0xff]
          %v619 = vld [vmem:[%s190 + $0xad0] sm:$0xff]
          %v620 = vld [vmem:[%s190 + $0xad8] sm:$0xff]
          %v621 = vld [vmem:[%s190 + $0xae0] sm:$0xff]
          %v622 = vld [vmem:[%s190 + $0xae8] sm:$0xff]
          %v623 = vld [vmem:[%s190 + $0xaf0] sm:$0xff]
          %v624 = vld [vmem:[%s190 + $0xaf8] sm:$0xff]
          %v625 = vld [vmem:[%s190 + $0xb00] sm:$0xff]
          %v626 = vld [vmem:[%s190 + $0xb08] sm:$0xff]
          %v627 = vld [vmem:[%s190 + $0xb10] sm:$0xff]
          %v628 = vld [vmem:[%s190 + $0xb18] sm:$0xff]
          %v629 = vld [vmem:[%s190 + $0xb20] sm:$0xff]
          %v630 = vld [vmem:[%s190 + $0xb28] sm:$0xff]
          %v631 = vld [vmem:[%s190 + $0xb30] sm:$0xff]
          %v632 = vld [vmem:[%s190 + $0xb38] sm:$0xff]
          %v633 = vld [vmem:[%s190 + $0xb40] sm:$0xff]
          %v634 = vld [vmem:[%s190 + $0xb48] sm:$0xff]
          %v635 = vld [vmem:[%s190 + $0xb50] sm:$0xff]
          %v636 = vld [vmem:[%s190 + $0xb58] sm:$0xff]
          %v637 = vld [vmem:[%s190 + $0xb60] sm:$0xff]
          %v638 = vld [vmem:[%s190 + $0xb68] sm:$0xff]
          %v639 = vld [vmem:[%s190 + $0xb70] sm:$0xff]
          %v640 = vld [vmem:[%s190 + $0xb78] sm:$0xff]
          %v641 = vld [vmem:[%s190 + $0xb80] sm:$0xff]
          %v642 = vld [vmem:[%s190 + $0xb88] sm:$0xff]
          %v643 = vld [vmem:[%s190 + $0xb90] sm:$0xff]
          %v644 = vld [vmem:[%s190 + $0xb98] sm:$0xff]
          %v645 = vld [vmem:[%s190 + $0xba0] sm:$0xff]
          %v646 = vld [vmem:[%s190 + $0xba8] sm:$0xff]
          %v647 = vld [vmem:[%s190 + $0xbb0] sm:$0xff]
          %v648 = vld [vmem:[%s190 + $0xbb8] sm:$0xff]
          %v649 = vld [vmem:[%s190 + $0xbc0] sm:$0xff]
          %v650 = vld [vmem:[%s190 + $0xbc8] sm:$0xff]
          %v651 = vld [vmem:[%s190 + $0xbd0] sm:$0xff]
          %v652 = vld [vmem:[%s190 + $0xbd8] sm:$0xff]
          %v653 = vld [vmem:[%s190 + $0xbe0] sm:$0xff]
          %v654 = vld [vmem:[%s190 + $0xbe8] sm:$0xff]
          %v655 = vld [vmem:[%s190 + $0xbf0] sm:$0xff]
          %v656 = vld [vmem:[%s190 + $0xbf8] sm:$0xff]
          %v657 = vld [vmem:[%s190 + $0xc00] sm:$0xff]
          %v658 = vld [vmem:[%s190 + $0xc08] sm:$0xff]
          %v659 = vld [vmem:[%s190 + $0xc10] sm:$0xff]
          %v660 = vld [vmem:[%s190 + $0xc18] sm:$0xff]
          %v661 = vld [vmem:[%s190 + $0xc20] sm:$0xff]
          %v662 = vld [vmem:[%s190 + $0xc28] sm:$0xff]
          %v663 = vld [vmem:[%s190 + $0xc30] sm:$0xff]
          %v664 = vld [vmem:[%s190 + $0xc38] sm:$0xff]
          %v665 = vld [vmem:[%s190 + $0xc40] sm:$0xff]
          %v666 = vld [vmem:[%s190 + $0xc48] sm:$0xff]
          %v667 = vld [vmem:[%s190 + $0xc50] sm:$0xff]
          %v668 = vld [vmem:[%s190 + $0xc58] sm:$0xff]
          %v669 = vld [vmem:[%s190 + $0xc60] sm:$0xff]
          %v670 = vld [vmem:[%s190 + $0xc68] sm:$0xff]
          %v671 = vld [vmem:[%s190 + $0xc70] sm:$0xff]
          %v672 = vld [vmem:[%s190 + $0xc78] sm:$0xff]
          %v673 = vld [vmem:[%s190 + $0xc80] sm:$0xff]
          %v674 = vld [vmem:[%s190 + $0xc88] sm:$0xff]
          %v675 = vld [vmem:[%s190 + $0xc90] sm:$0xff]
          %v676 = vld [vmem:[%s190 + $0xc98] sm:$0xff]
          %v677 = vld [vmem:[%s190 + $0xca0] sm:$0xff]
          %v678 = vld [vmem:[%s190 + $0xca8] sm:$0xff]
          %v679 = vld [vmem:[%s190 + $0xcb0] sm:$0xff]
          %v680 = vld [vmem:[%s190 + $0xcb8] sm:$0xff]
          %v681 = vld [vmem:[%s190 + $0xcc0] sm:$0xff]
          %v682 = vld [vmem:[%s190 + $0xcc8] sm:$0xff]
          %v683 = vld [vmem:[%s190 + $0xcd0] sm:$0xff]
          %v684 = vld [vmem:[%s190 + $0xcd8] sm:$0xff]
          %v685 = vld [vmem:[%s190 + $0xce0] sm:$0xff]
          %v686 = vld [vmem:[%s190 + $0xce8] sm:$0xff]
          %v687 = vld [vmem:[%s190 + $0xcf0] sm:$0xff]
          %v688 = vld [vmem:[%s190 + $0xcf8] sm:$0xff]
          %v689 = vld [vmem:[%s190 + $0xd00] sm:$0xff]
          %v690 = vld [vmem:[%s190 + $0xd08] sm:$0xff]
          %v691 = vld [vmem:[%s190 + $0xd10] sm:$0xff]
          %v692 = vld [vmem:[%s190 + $0xd18] sm:$0xff]
          %v693 = vld [vmem:[%s190 + $0xd20] sm:$0xff]
          %v694 = vld [vmem:[%s190 + $0xd28] sm:$0xff]
          %v695 = vld [vmem:[%s190 + $0xd30] sm:$0xff]
          %v696 = vld [vmem:[%s190 + $0xd38] sm:$0xff]
          %v697 = vld [vmem:[%s190 + $0xd40] sm:$0xff]
          %v698 = vld [vmem:[%s190 + $0xd48] sm:$0xff]
          %v699 = vld [vmem:[%s190 + $0xd50] sm:$0xff]
          %v700 = vld [vmem:[%s190 + $0xd58] sm:$0xff]
          %v701 = vld [vmem:[%s190 + $0xd60] sm:$0xff]
          %v702 = vld [vmem:[%s190 + $0xd68] sm:$0xff]
          %v703 = vld [vmem:[%s190 + $0xd70] sm:$0xff]
          %v704 = vld [vmem:[%s190 + $0xd78] sm:$0xff]
          %v705 = vld [vmem:[%s190 + $0xd80] sm:$0xff]
          %v706 = vld [vmem:[%s190 + $0xd88] sm:$0xff]
          %v707 = vld [vmem:[%s190 + $0xd90] sm:$0xff]
          %v708 = vld [vmem:[%s190 + $0xd98] sm:$0xff]
          %v709 = vld [vmem:[%s190 + $0xda0] sm:$0xff]
          %v710 = vld [vmem:[%s190 + $0xda8] sm:$0xff]
          %v711 = vld [vmem:[%s190 + $0xdb0] sm:$0xff]
          %v712 = vld [vmem:[%s190 + $0xdb8] sm:$0xff]
          %v713 = vld [vmem:[%s190 + $0xdc0] sm:$0xff]
          %v714 = vld [vmem:[%s190 + $0xdc8] sm:$0xff]
          %v715 = vld [vmem:[%s190 + $0xdd0] sm:$0xff]
          %v716 = vld [vmem:[%s190 + $0xdd8] sm:$0xff]
          %v717 = vld [vmem:[%s190 + $0xde0] sm:$0xff]
          %v718 = vld [vmem:[%s190 + $0xde8] sm:$0xff]
          %v719 = vld [vmem:[%s190 + $0xdf0] sm:$0xff]
          %v720 = vld [vmem:[%s190 + $0xdf8] sm:$0xff]
          %v721 = vld [vmem:[%s190 + $0xe00] sm:$0xff]
          %v722 = vld [vmem:[%s190 + $0xe08] sm:$0xff]
          %v723 = vld [vmem:[%s190 + $0xe10] sm:$0xff]
          %v724 = vld [vmem:[%s190 + $0xe18] sm:$0xff]
          %v725 = vld [vmem:[%s190 + $0xe20] sm:$0xff]
          %v726 = vld [vmem:[%s190 + $0xe28] sm:$0xff]
          %v727 = vld [vmem:[%s190 + $0xe30] sm:$0xff]
          %v728 = vld [vmem:[%s190 + $0xe38] sm:$0xff]
          %v729 = vld [vmem:[%s190 + $0xe40] sm:$0xff]
          %v730 = vld [vmem:[%s190 + $0xe48] sm:$0xff]
          %v731 = vld [vmem:[%s190 + $0xe50] sm:$0xff]
          %v732 = vld [vmem:[%s190 + $0xe58] sm:$0xff]
          %v733 = vld [vmem:[%s190 + $0xe60] sm:$0xff]
          %v734 = vld [vmem:[%s190 + $0xe68] sm:$0xff]
          %v735 = vld [vmem:[%s190 + $0xe70] sm:$0xff]
          %v736 = vld [vmem:[%s190 + $0xe78] sm:$0xff]
          %v737 = vld [vmem:[%s190 + $0xe80] sm:$0xff]
          %v738 = vld [vmem:[%s190 + $0xe88] sm:$0xff]
          %v739 = vld [vmem:[%s190 + $0xe90] sm:$0xff]
          %v740 = vld [vmem:[%s190 + $0xe98] sm:$0xff]
          %v741 = vld [vmem:[%s190 + $0xea0] sm:$0xff]
          %v742 = vld [vmem:[%s190 + $0xea8] sm:$0xff]
          %v743 = vld [vmem:[%s190 + $0xeb0] sm:$0xff]
          %v744 = vld [vmem:[%s190 + $0xeb8] sm:$0xff]
          %v745 = vld [vmem:[%s190 + $0xec0] sm:$0xff]
          %v746 = vld [vmem:[%s190 + $0xec8] sm:$0xff]
          %v747 = vld [vmem:[%s190 + $0xed0] sm:$0xff]
          %v748 = vld [vmem:[%s190 + $0xed8] sm:$0xff]
          %v749 = vld [vmem:[%s190 + $0xee0] sm:$0xff]
          %v750 = vld [vmem:[%s190 + $0xee8] sm:$0xff]
          %v751 = vld [vmem:[%s190 + $0xef0] sm:$0xff]
          %v752 = vld [vmem:[%s190 + $0xef8] sm:$0xff]
          %v753 = vld [vmem:[%s190 + $0xf00] sm:$0xff]
          %v754 = vld [vmem:[%s190 + $0xf08] sm:$0xff]
          %v755 = vld [vmem:[%s190 + $0xf10] sm:$0xff]
          %v756 = vld [vmem:[%s190 + $0xf18] sm:$0xff]
          %v757 = vld [vmem:[%s190 + $0xf20] sm:$0xff]
          %v758 = vld [vmem:[%s190 + $0xf28] sm:$0xff]
          %v759 = vld [vmem:[%s190 + $0xf30] sm:$0xff]
          %v760 = vld [vmem:[%s190 + $0xf38] sm:$0xff]
          %v761 = vld [vmem:[%s190 + $0xf40] sm:$0xff]
          %v762 = vld [vmem:[%s190 + $0xf48] sm:$0xff]
          %v763 = vld [vmem:[%s190 + $0xf50] sm:$0xff]
          %v764 = vld [vmem:[%s190 + $0xf58] sm:$0xff]
          %v765 = vld [vmem:[%s190 + $0xf60] sm:$0xff]
          %v766 = vld [vmem:[%s190 + $0xf68] sm:$0xff]
          %v767 = vld [vmem:[%s190 + $0xf70] sm:$0xff]
          %v768 = vld [vmem:[%s190 + $0xf78] sm:$0xff]
          %v769 = vld [vmem:[%s190 + $0xf80] sm:$0xff]
          %v770 = vld [vmem:[%s190 + $0xf88] sm:$0xff]
          %v771 = vld [vmem:[%s190 + $0xf90] sm:$0xff]
          %v772 = vld [vmem:[%s190 + $0xf98] sm:$0xff]
          %v773 = vld [vmem:[%s190 + $0xfa0] sm:$0xff]
          %v774 = vld [vmem:[%s190 + $0xfa8] sm:$0xff]
          %v775 = vld [vmem:[%s190 + $0xfb0] sm:$0xff]
          %v776 = vld [vmem:[%s190 + $0xfb8] sm:$0xff]
          %v777 = vld [vmem:[%s190 + $0xfc0] sm:$0xff]
          %v778 = vld [vmem:[%s190 + $0xfc8] sm:$0xff]
          %v779 = vld [vmem:[%s190 + $0xfd0] sm:$0xff]
          %v780 = vld [vmem:[%s190 + $0xfd8] sm:$0xff]
          %v781 = vld [vmem:[%s190 + $0xfe0] sm:$0xff]
          %v782 = vld [vmem:[%s190 + $0xfe8] sm:$0xff]
          %v783 = vld [vmem:[%s190 + $0xff0] sm:$0xff]
          %v784 = vld [vmem:[%s190 + $0xff8] sm:$0xff]
          %785 = vmatprep.subr.mxu0 %v274
          %786 = vmatpush1.msra.mxu0 %v273
          %787 = vmatprep.subr.mxu0 %v278
          %788 = vmatpush1.msra.mxu0 %v277
          %789 = vmatprep.subr.mxu0 %v282
          %790 = vmatpush1.msra.mxu0 %v281
          %791 = vmatprep.subr.mxu0 %v286
          %792 = vmatpush1.msra.mxu0 %v285
          %793 = vmatprep.subr.mxu0 %v290
          %794 = vmatpush1.msra.mxu0 %v289
          %795 = vmatprep.subr.mxu0 %v294
          %796 = vmatpush1.msra.mxu0 %v293
          %797 = vmatprep.subr.mxu0 %v298
          %798 = vmatpush1.msra.mxu0 %v297
          %799 = vmatprep.subr.mxu0 %v302
          %800 = vmatpush1.msra.mxu0 %v301
          %801 = vmatprep.subr.mxu0 %v306
          %802 = vmatpush1.msra.mxu0 %v305
          %803 = vmatprep.subr.mxu0 %v310
          %804 = vmatpush1.msra.mxu0 %v309
          %805 = vmatprep.subr.mxu0 %v314
          %806 = vmatpush1.msra.mxu0 %v313
          %807 = vmatprep.subr.mxu0 %v318
          %808 = vmatpush1.msra.mxu0 %v317
          %809 = vmatprep.subr.mxu0 %v322
          %810 = vmatpush1.msra.mxu0 %v321
          %811 = vmatprep.subr.mxu0 %v326
          %812 = vmatpush1.msra.mxu0 %v325
          %813 = vmatprep.subr.mxu0 %v330
          %814 = vmatpush1.msra.mxu0 %v329
          %815 = vmatprep.subr.mxu0 %v334
          %816 = vmatpush1.msra.mxu0 %v333
          %817 = vmatprep.subr.mxu0 %v338
          %818 = vmatpush1.msra.mxu0 %v337
          %819 = vmatprep.subr.mxu0 %v342
          %820 = vmatpush1.msra.mxu0 %v341
          %821 = vmatprep.subr.mxu0 %v346
          %822 = vmatpush1.msra.mxu0 %v345
          %823 = vmatprep.subr.mxu0 %v350
          %824 = vmatpush1.msra.mxu0 %v349
          %825 = vmatprep.subr.mxu0 %v354
          %826 = vmatpush1.msra.mxu0 %v353
          %827 = vmatprep.subr.mxu0 %v358
          %828 = vmatpush1.msra.mxu0 %v357
          %829 = vmatprep.subr.mxu0 %v362
          %830 = vmatpush1.msra.mxu0 %v361
          %831 = vmatprep.subr.mxu0 %v366
          %832 = vmatpush1.msra.mxu0 %v365
          %833 = vmatprep.subr.mxu0 %v370
          %834 = vmatpush1.msra.mxu0 %v369
          %835 = vmatprep.subr.mxu0 %v374
          %836 = vmatpush1.msra.mxu0 %v373
          %837 = vmatprep.subr.mxu0 %v378
          %838 = vmatpush1.msra.mxu0 %v377
          %839 = vmatprep.subr.mxu0 %v382
          %840 = vmatpush1.msra.mxu0 %v381
          %841 = vmatprep.subr.mxu0 %v386
          %842 = vmatpush1.msra.mxu0 %v385
          %843 = vmatprep.subr.mxu0 %v390
          %844 = vmatpush1.msra.mxu0 %v389
          %845 = vmatprep.subr.mxu0 %v394
          %846 = vmatpush1.msra.mxu0 %v393
          %847 = vmatprep.subr.mxu0 %v398
          %848 = vmatpush1.msra.mxu0 %v397
          %849 = vmatprep.mubr.f32.mxu0 %v266
          %850 = vmatmul.mubr.f32.gmra.mrb[0].mxu0 %v265
          %v851 = vpop.f32.mrb[0].mxu0
          %v852 = vadd.f32 0.0, %v851
          %v853 = vpop.f32.mrb[0].mxu0
          %v854 = vadd.f32 0.0, %v853
          %855 = vdwg.mxu0
          %856 = vmatprep.subr.mxu0 %v402
          %857 = vmatpush1.msra.mxu0 %v401
          %858 = vmatprep.subr.mxu0 %v406
          %859 = vmatpush1.msra.mxu0 %v405
          %860 = vmatprep.subr.mxu0 %v410
          %861 = vmatpush1.msra.mxu0 %v409
          %862 = vmatprep.subr.mxu0 %v414
          %863 = vmatpush1.msra.mxu0 %v413
          %864 = vmatprep.subr.mxu0 %v418
          %865 = vmatpush1.msra.mxu0 %v417
          %866 = vmatprep.subr.mxu0 %v422
          %867 = vmatpush1.msra.mxu0 %v421
          %868 = vmatprep.subr.mxu0 %v426
          %869 = vmatpush1.msra.mxu0 %v425
          %870 = vmatprep.subr.mxu0 %v430
          %871 = vmatpush1.msra.mxu0 %v429
          %872 = vmatprep.subr.mxu0 %v434
          %873 = vmatpush1.msra.mxu0 %v433
          %874 = vmatprep.subr.mxu0 %v438
          %875 = vmatpush1.msra.mxu0 %v437
          %876 = vmatprep.subr.mxu0 %v442
          %877 = vmatpush1.msra.mxu0 %v441
          %878 = vmatprep.subr.mxu0 %v446
          %879 = vmatpush1.msra.mxu0 %v445
          %880 = vmatprep.subr.mxu0 %v450
          %881 = vmatpush1.msra.mxu0 %v449
          %882 = vmatprep.subr.mxu0 %v454
          %883 = vmatpush1.msra.mxu0 %v453
          %884 = vmatprep.subr.mxu0 %v458
          %885 = vmatpush1.msra.mxu0 %v457
          %886 = vmatprep.subr.mxu0 %v462
          %887 = vmatpush1.msra.mxu0 %v461
          %888 = vmatprep.subr.mxu0 %v466
          %889 = vmatpush1.msra.mxu0 %v465
          %890 = vmatprep.subr.mxu0 %v470
          %891 = vmatpush1.msra.mxu0 %v469
          %892 = vmatprep.subr.mxu0 %v474
          %893 = vmatpush1.msra.mxu0 %v473
          %894 = vmatprep.subr.mxu0 %v478
          %895 = vmatpush1.msra.mxu0 %v477
          %896 = vmatprep.subr.mxu0 %v482
          %897 = vmatpush1.msra.mxu0 %v481
          %898 = vmatprep.subr.mxu0 %v486
          %899 = vmatpush1.msra.mxu0 %v485
          %900 = vmatprep.subr.mxu0 %v490
          %901 = vmatpush1.msra.mxu0 %v489
          %902 = vmatprep.subr.mxu0 %v494
          %903 = vmatpush1.msra.mxu0 %v493
          %904 = vmatprep.subr.mxu0 %v498
          %905 = vmatpush1.msra.mxu0 %v497
          %906 = vmatprep.subr.mxu0 %v502
          %907 = vmatpush1.msra.mxu0 %v501
          %908 = vmatprep.subr.mxu0 %v506
          %909 = vmatpush1.msra.mxu0 %v505
          %910 = vmatprep.subr.mxu0 %v510
          %911 = vmatpush1.msra.mxu0 %v509
          %912 = vmatprep.subr.mxu0 %v514
          %913 = vmatpush1.msra.mxu0 %v513
          %914 = vmatprep.subr.mxu0 %v518
          %915 = vmatpush1.msra.mxu0 %v517
          %916 = vmatprep.subr.mxu0 %v522
          %917 = vmatpush1.msra.mxu0 %v521
          %918 = vmatprep.subr.mxu0 %v526
          %919 = vmatpush1.msra.mxu0 %v525
          %920 = vmatprep.mubr.f32.mxu0 %v268
          %921 = vmatmul.mubr.f32.gmra.mrb[0].mxu0 %v267
          %v922 = vpop.f32.mrb[0].mxu0
          %v923 = vadd.f32 %v852, %v922
          %v924 = vpop.f32.mrb[0].mxu0
          %v925 = vadd.f32 %v854, %v924
          %926 = vdwg.mxu0
          %927 = vmatprep.subr.mxu0 %v530
          %928 = vmatpush1.msra.mxu0 %v529
          %929 = vmatprep.subr.mxu0 %v534
          %930 = vmatpush1.msra.mxu0 %v533
          %931 = vmatprep.subr.mxu0 %v538
          %932 = vmatpush1.msra.mxu0 %v537
          %933 = vmatprep.subr.mxu0 %v542
          %934 = vmatpush1.msra.mxu0 %v541
          %935 = vmatprep.subr.mxu0 %v546
          %936 = vmatpush1.msra.mxu0 %v545
          %937 = vmatprep.subr.mxu0 %v550
          %938 = vmatpush1.msra.mxu0 %v549
          %939 = vmatprep.subr.mxu0 %v554
          %940 = vmatpush1.msra.mxu0 %v553
          %941 = vmatprep.subr.mxu0 %v558
          %942 = vmatpush1.msra.mxu0 %v557
          %943 = vmatprep.subr.mxu0 %v562
          %944 = vmatpush1.msra.mxu0 %v561
          %945 = vmatprep.subr.mxu0 %v566
          %946 = vmatpush1.msra.mxu0 %v565
          %947 = vmatprep.subr.mxu0 %v570
          %948 = vmatpush1.msra.mxu0 %v569
          %949 = vmatprep.subr.mxu0 %v574
          %950 = vmatpush1.msra.mxu0 %v573
          %951 = vmatprep.subr.mxu0 %v578
          %952 = vmatpush1.msra.mxu0 %v577
          %953 = vmatprep.subr.mxu0 %v582
          %954 = vmatpush1.msra.mxu0 %v581
          %955 = vmatprep.subr.mxu0 %v586
          %956 = vmatpush1.msra.mxu0 %v585
          %957 = vmatprep.subr.mxu0 %v590
          %958 = vmatpush1.msra.mxu0 %v589
          %959 = vmatprep.subr.mxu0 %v594
          %960 = vmatpush1.msra.mxu0 %v593
          %961 = vmatprep.subr.mxu0 %v598
          %962 = vmatpush1.msra.mxu0 %v597
          %963 = vmatprep.subr.mxu0 %v602
          %964 = vmatpush1.msra.mxu0 %v601
          %965 = vmatprep.subr.mxu0 %v606
          %966 = vmatpush1.msra.mxu0 %v605
          %967 = vmatprep.subr.mxu0 %v610
          %968 = vmatpush1.msra.mxu0 %v609
          %969 = vmatprep.subr.mxu0 %v614
          %970 = vmatpush1.msra.mxu0 %v613
          %971 = vmatprep.subr.mxu0 %v618
          %972 = vmatpush1.msra.mxu0 %v617
          %973 = vmatprep.subr.mxu0 %v622
          %974 = vmatpush1.msra.mxu0 %v621
          %975 = vmatprep.subr.mxu0 %v626
          %976 = vmatpush1.msra.mxu0 %v625
          %977 = vmatprep.subr.mxu0 %v630
          %978 = vmatpush1.msra.mxu0 %v629
          %979 = vmatprep.subr.mxu0 %v634
          %980 = vmatpush1.msra.mxu0 %v633
          %981 = vmatprep.subr.mxu0 %v638
          %982 = vmatpush1.msra.mxu0 %v637
          %983 = vmatprep.subr.mxu0 %v642
          %984 = vmatpush1.msra.mxu0 %v641
          %985 = vmatprep.subr.mxu0 %v646
          %986 = vmatpush1.msra.mxu0 %v645
          %987 = vmatprep.subr.mxu0 %v650
          %988 = vmatpush1.msra.mxu0 %v649
          %989 = vmatprep.subr.mxu0 %v654
          %990 = vmatpush1.msra.mxu0 %v653
          %991 = vmatprep.mubr.f32.mxu0 %v270
          %992 = vmatmul.mubr.f32.gmra.mrb[0].mxu0 %v269
          %v993 = vpop.f32.mrb[0].mxu0
          %v994 = vadd.f32 %v923, %v993
          %v995 = vpop.f32.mrb[0].mxu0
          %v996 = vadd.f32 %v925, %v995
          %997 = vdwg.mxu0
          %998 = vmatprep.subr.mxu0 %v658
          %999 = vmatpush1.msra.mxu0 %v657
          %1000 = vmatprep.subr.mxu0 %v662
          %1001 = vmatpush1.msra.mxu0 %v661
          %1002 = vmatprep.subr.mxu0 %v666
          %1003 = vmatpush1.msra.mxu0 %v665
          %1004 = vmatprep.subr.mxu0 %v670
          %1005 = vmatpush1.msra.mxu0 %v669
          %1006 = vmatprep.subr.mxu0 %v674
          %1007 = vmatpush1.msra.mxu0 %v673
          %1008 = vmatprep.subr.mxu0 %v678
          %1009 = vmatpush1.msra.mxu0 %v677
          %1010 = vmatprep.subr.mxu0 %v682
          %1011 = vmatpush1.msra.mxu0 %v681
          %1012 = vmatprep.subr.mxu0 %v686
          %1013 = vmatpush1.msra.mxu0 %v685
          %1014 = vmatprep.subr.mxu0 %v690
          %1015 = vmatpush1.msra.mxu0 %v689
          %1016 = vmatprep.subr.mxu0 %v694
          %1017 = vmatpush1.msra.mxu0 %v693
          %1018 = vmatprep.subr.mxu0 %v698
          %1019 = vmatpush1.msra.mxu0 %v697
          %1020 = vmatprep.subr.mxu0 %v702
          %1021 = vmatpush1.msra.mxu0 %v701
          %1022 = vmatprep.subr.mxu0 %v706
          %1023 = vmatpush1.msra.mxu0 %v705
          %1024 = vmatprep.subr.mxu0 %v710
          %1025 = vmatpush1.msra.mxu0 %v709
          %1026 = vmatprep.subr.mxu0 %v714
          %1027 = vmatpush1.msra.mxu0 %v713
          %1028 = vmatprep.subr.mxu0 %v718
          %1029 = vmatpush1.msra.mxu0 %v717
          %1030 = vmatprep.subr.mxu0 %v722
          %1031 = vmatpush1.msra.mxu0 %v721
          %1032 = vmatprep.subr.mxu0 %v726
          %1033 = vmatpush1.msra.mxu0 %v725
          %1034 = vmatprep.subr.mxu0 %v730
          %1035 = vmatpush1.msra.mxu0 %v729
          %1036 = vmatprep.subr.mxu0 %v734
          %1037 = vmatpush1.msra.mxu0 %v733
          %1038 = vmatprep.subr.mxu0 %v738
          %1039 = vmatpush1.msra.mxu0 %v737
          %1040 = vmatprep.subr.mxu0 %v742
          %1041 = vmatpush1.msra.mxu0 %v741
          %1042 = vmatprep.subr.mxu0 %v746
          %1043 = vmatpush1.msra.mxu0 %v745
          %1044 = vmatprep.subr.mxu0 %v750
          %1045 = vmatpush1.msra.mxu0 %v749
          %1046 = vmatprep.subr.mxu0 %v754
          %1047 = vmatpush1.msra.mxu0 %v753
          %1048 = vmatprep.subr.mxu0 %v758
          %1049 = vmatpush1.msra.mxu0 %v757
          %1050 = vmatprep.subr.mxu0 %v762
          %1051 = vmatpush1.msra.mxu0 %v761
          %1052 = vmatprep.subr.mxu0 %v766
          %1053 = vmatpush1.msra.mxu0 %v765
          %1054 = vmatprep.subr.mxu0 %v770
          %1055 = vmatpush1.msra.mxu0 %v769
          %1056 = vmatprep.subr.mxu0 %v774
          %1057 = vmatpush1.msra.mxu0 %v773
          %1058 = vmatprep.subr.mxu0 %v778
          %1059 = vmatpush1.msra.mxu0 %v777
          %1060 = vmatprep.subr.mxu0 %v782
          %1061 = vmatpush1.msra.mxu0 %v781
          %1062 = vmatprep.mubr.f32.mxu0 %v272
          %1063 = vmatmul.mubr.f32.gmra.mrb[0].mxu0 %v271
          %v1064 = vpop.f32.mrb[0].mxu0
          %v1065 = vadd.f32 %v994, %v1064
          %v1066 = vpop.f32.mrb[0].mxu0
          %v1067 = vadd.f32 %v996, %v1066
          %1068 = vdwg.mxu0
          %1069 = vmatprep.subr.mxu0 %v276
          %1070 = vmatpush1.msra.mxu0 %v275
          %1071 = vmatprep.subr.mxu0 %v280
          %1072 = vmatpush1.msra.mxu0 %v279
          %1073 = vmatprep.subr.mxu0 %v284
          %1074 = vmatpush1.msra.mxu0 %v283
          %1075 = vmatprep.subr.mxu0 %v288
          %1076 = vmatpush1.msra.mxu0 %v287
          %1077 = vmatprep.subr.mxu0 %v292
          %1078 = vmatpush1.msra.mxu0 %v291
          %1079 = vmatprep.subr.mxu0 %v296
          %1080 = vmatpush1.msra.mxu0 %v295
          %1081 = vmatprep.subr.mxu0 %v300
          %1082 = vmatpush1.msra.mxu0 %v299
          %1083 = vmatprep.subr.mxu0 %v304
          %1084 = vmatpush1.msra.mxu0 %v303
          %1085 = vmatprep.subr.mxu0 %v308
          %1086 = vmatpush1.msra.mxu0 %v307
          %1087 = vmatprep.subr.mxu0 %v312
          %1088 = vmatpush1.msra.mxu0 %v311
          %1089 = vmatprep.subr.mxu0 %v316
          %1090 = vmatpush1.msra.mxu0 %v315
          %1091 = vmatprep.subr.mxu0 %v320
          %1092 = vmatpush1.msra.mxu0 %v319
          %1093 = vmatprep.subr.mxu0 %v324
          %1094 = vmatpush1.msra.mxu0 %v323
          %1095 = vmatprep.subr.mxu0 %v328
          %1096 = vmatpush1.msra.mxu0 %v327
          %1097 = vmatprep.subr.mxu0 %v332
          %1098 = vmatpush1.msra.mxu0 %v331
          %1099 = vmatprep.subr.mxu0 %v336
          %1100 = vmatpush1.msra.mxu0 %v335
          %1101 = vmatprep.subr.mxu0 %v340
          %1102 = vmatpush1.msra.mxu0 %v339
          %1103 = vmatprep.subr.mxu0 %v344
          %1104 = vmatpush1.msra.mxu0 %v343
          %1105 = vmatprep.subr.mxu0 %v348
          %1106 = vmatpush1.msra.mxu0 %v347
          %1107 = vmatprep.subr.mxu0 %v352
          %1108 = vmatpush1.msra.mxu0 %v351
          %1109 = vmatprep.subr.mxu0 %v356
          %1110 = vmatpush1.msra.mxu0 %v355
          %1111 = vmatprep.subr.mxu0 %v360
          %1112 = vmatpush1.msra.mxu0 %v359
          %1113 = vmatprep.subr.mxu0 %v364
          %1114 = vmatpush1.msra.mxu0 %v363
          %1115 = vmatprep.subr.mxu0 %v368
          %1116 = vmatpush1.msra.mxu0 %v367
          %1117 = vmatprep.subr.mxu0 %v372
          %1118 = vmatpush1.msra.mxu0 %v371
          %1119 = vmatprep.subr.mxu0 %v376
          %1120 = vmatpush1.msra.mxu0 %v375
          %1121 = vmatprep.subr.mxu0 %v380
          %1122 = vmatpush1.msra.mxu0 %v379
          %1123 = vmatprep.subr.mxu0 %v384
          %1124 = vmatpush1.msra.mxu0 %v383
          %1125 = vmatprep.subr.mxu0 %v388
          %1126 = vmatpush1.msra.mxu0 %v387
          %1127 = vmatprep.subr.mxu0 %v392
          %1128 = vmatpush1.msra.mxu0 %v391
          %1129 = vmatprep.subr.mxu0 %v396
          %1130 = vmatpush1.msra.mxu0 %v395
          %1131 = vmatprep.subr.mxu0 %v400
          %1132 = vmatpush1.msra.mxu0 %v399
          %1133 = vmatprep.mubr.f32.mxu0 %v266
          %1134 = vmatmul.mubr.f32.gmra.mrb[0].mxu0 %v265
          %v1135 = vpop.f32.mrb[0].mxu0
          %v1136 = vadd.f32 0.0, %v1135
          %v1137 = vpop.f32.mrb[0].mxu0
          %v1138 = vadd.f32 0.0, %v1137
          %1139 = vdwg.mxu0
          %1140 = vmatprep.subr.mxu0 %v404
          %1141 = vmatpush1.msra.mxu0 %v403
          %1142 = vmatprep.subr.mxu0 %v408
          %1143 = vmatpush1.msra.mxu0 %v407
          %1144 = vmatprep.subr.mxu0 %v412
          %1145 = vmatpush1.msra.mxu0 %v411
          %1146 = vmatprep.subr.mxu0 %v416
          %1147 = vmatpush1.msra.mxu0 %v415
          %1148 = vmatprep.subr.mxu0 %v420
          %1149 = vmatpush1.msra.mxu0 %v419
          %1150 = vmatprep.subr.mxu0 %v424
          %1151 = vmatpush1.msra.mxu0 %v423
          %1152 = vmatprep.subr.mxu0 %v428
          %1153 = vmatpush1.msra.mxu0 %v427
          %1154 = vmatprep.subr.mxu0 %v432
          %1155 = vmatpush1.msra.mxu0 %v431
          %1156 = vmatprep.subr.mxu0 %v436
          %1157 = vmatpush1.msra.mxu0 %v435
          %1158 = vmatprep.subr.mxu0 %v440
          %1159 = vmatpush1.msra.mxu0 %v439
          %1160 = vmatprep.subr.mxu0 %v444
          %1161 = vmatpush1.msra.mxu0 %v443
          %1162 = vmatprep.subr.mxu0 %v448
          %1163 = vmatpush1.msra.mxu0 %v447
          %1164 = vmatprep.subr.mxu0 %v452
          %1165 = vmatpush1.msra.mxu0 %v451
          %1166 = vmatprep.subr.mxu0 %v456
          %1167 = vmatpush1.msra.mxu0 %v455
          %1168 = vmatprep.subr.mxu0 %v460
          %1169 = vmatpush1.msra.mxu0 %v459
          %1170 = vmatprep.subr.mxu0 %v464
          %1171 = vmatpush1.msra.mxu0 %v463
          %1172 = vmatprep.subr.mxu0 %v468
          %1173 = vmatpush1.msra.mxu0 %v467
          %1174 = vmatprep.subr.mxu0 %v472
          %1175 = vmatpush1.msra.mxu0 %v471
          %1176 = vmatprep.subr.mxu0 %v476
          %1177 = vmatpush1.msra.mxu0 %v475
          %1178 = vmatprep.subr.mxu0 %v480
          %1179 = vmatpush1.msra.mxu0 %v479
          %1180 = vmatprep.subr.mxu0 %v484
          %1181 = vmatpush1.msra.mxu0 %v483
          %1182 = vmatprep.subr.mxu0 %v488
          %1183 = vmatpush1.msra.mxu0 %v487
          %1184 = vmatprep.subr.mxu0 %v492
          %1185 = vmatpush1.msra.mxu0 %v491
          %1186 = vmatprep.subr.mxu0 %v496
          %1187 = vmatpush1.msra.mxu0 %v495
          %1188 = vmatprep.subr.mxu0 %v500
          %1189 = vmatpush1.msra.mxu0 %v499
          %1190 = vmatprep.subr.mxu0 %v504
          %1191 = vmatpush1.msra.mxu0 %v503
          %1192 = vmatprep.subr.mxu0 %v508
          %1193 = vmatpush1.msra.mxu0 %v507
          %1194 = vmatprep.subr.mxu0 %v512
          %1195 = vmatpush1.msra.mxu0 %v511
          %1196 = vmatprep.subr.mxu0 %v516
          %1197 = vmatpush1.msra.mxu0 %v515
          %1198 = vmatprep.subr.mxu0 %v520
          %1199 = vmatpush1.msra.mxu0 %v519
          %1200 = vmatprep.subr.mxu0 %v524
          %1201 = vmatpush1.msra.mxu0 %v523
          %1202 = vmatprep.subr.mxu0 %v528
          %1203 = vmatpush1.msra.mxu0 %v527
          %1204 = vmatprep.mubr.f32.mxu0 %v268
          %1205 = vmatmul.mubr.f32.gmra.mrb[0].mxu0 %v267
          %v1206 = vpop.f32.mrb[0].mxu0
          %v1207 = vadd.f32 %v1136, %v1206
          %v1208 = vpop.f32.mrb[0].mxu0
          %v1209 = vadd.f32 %v1138, %v1208
          %1210 = vdwg.mxu0
          %1211 = vmatprep.subr.mxu0 %v532
          %1212 = vmatpush1.msra.mxu0 %v531
          %1213 = vmatprep.subr.mxu0 %v536
          %1214 = vmatpush1.msra.mxu0 %v535
          %1215 = vmatprep.subr.mxu0 %v540
          %1216 = vmatpush1.msra.mxu0 %v539
          %1217 = vmatprep.subr.mxu0 %v544
          %1218 = vmatpush1.msra.mxu0 %v543
          %1219 = vmatprep.subr.mxu0 %v548
          %1220 = vmatpush1.msra.mxu0 %v547
          %1221 = vmatprep.subr.mxu0 %v552
          %1222 = vmatpush1.msra.mxu0 %v551
          %1223 = vmatprep.subr.mxu0 %v556
          %1224 = vmatpush1.msra.mxu0 %v555
          %1225 = vmatprep.subr.mxu0 %v560
          %1226 = vmatpush1.msra.mxu0 %v559
          %1227 = vmatprep.subr.mxu0 %v564
          %1228 = vmatpush1.msra.mxu0 %v563
          %1229 = vmatprep.subr.mxu0 %v568
          %1230 = vmatpush1.msra.mxu0 %v567
          %1231 = vmatprep.subr.mxu0 %v572
          %1232 = vmatpush1.msra.mxu0 %v571
          %1233 = vmatprep.subr.mxu0 %v576
          %1234 = vmatpush1.msra.mxu0 %v575
          %1235 = vmatprep.subr.mxu0 %v580
          %1236 = vmatpush1.msra.mxu0 %v579
          %1237 = vmatprep.subr.mxu0 %v584
          %1238 = vmatpush1.msra.mxu0 %v583
          %1239 = vmatprep.subr.mxu0 %v588
          %1240 = vmatpush1.msra.mxu0 %v587
          %1241 = vmatprep.subr.mxu0 %v592
          %1242 = vmatpush1.msra.mxu0 %v591
          %1243 = vmatprep.subr.mxu0 %v596
          %1244 = vmatpush1.msra.mxu0 %v595
          %1245 = vmatprep.subr.mxu0 %v600
          %1246 = vmatpush1.msra.mxu0 %v599
          %1247 = vmatprep.subr.mxu0 %v604
          %1248 = vmatpush1.msra.mxu0 %v603
          %1249 = vmatprep.subr.mxu0 %v608
          %1250 = vmatpush1.msra.mxu0 %v607
          %1251 = vmatprep.subr.mxu0 %v612
          %1252 = vmatpush1.msra.mxu0 %v611
          %1253 = vmatprep.subr.mxu0 %v616
          %1254 = vmatpush1.msra.mxu0 %v615
          %1255 = vmatprep.subr.mxu0 %v620
          %1256 = vmatpush1.msra.mxu0 %v619
          %1257 = vmatprep.subr.mxu0 %v624
          %1258 = vmatpush1.msra.mxu0 %v623
          %1259 = vmatprep.subr.mxu0 %v628
          %1260 = vmatpush1.msra.mxu0 %v627
          %1261 = vmatprep.subr.mxu0 %v632
          %1262 = vmatpush1.msra.mxu0 %v631
          %1263 = vmatprep.subr.mxu0 %v636
          %1264 = vmatpush1.msra.mxu0 %v635
          %1265 = vmatprep.subr.mxu0 %v640
          %1266 = vmatpush1.msra.mxu0 %v639
          %1267 = vmatprep.subr.mxu0 %v644
          %1268 = vmatpush1.msra.mxu0 %v643
          %1269 = vmatprep.subr.mxu0 %v648
          %1270 = vmatpush1.msra.mxu0 %v647
          %1271 = vmatprep.subr.mxu0 %v652
          %1272 = vmatpush1.msra.mxu0 %v651
          %1273 = vmatprep.subr.mxu0 %v656
          %1274 = vmatpush1.msra.mxu0 %v655
          %1275 = vmatprep.mubr.f32.mxu0 %v270
          %1276 = vmatmul.mubr.f32.gmra.mrb[0].mxu0 %v269
          %v1277 = vpop.f32.mrb[0].mxu0
          %v1278 = vadd.f32 %v1207, %v1277
          %v1279 = vpop.f32.mrb[0].mxu0
          %v1280 = vadd.f32 %v1209, %v1279
          %1281 = vdwg.mxu0
          %1282 = vmatprep.subr.mxu0 %v660
          %1283 = vmatpush1.msra.mxu0 %v659
          %1284 = vmatprep.subr.mxu0 %v664
          %1285 = vmatpush1.msra.mxu0 %v663
          %1286 = vmatprep.subr.mxu0 %v668
          %1287 = vmatpush1.msra.mxu0 %v667
          %1288 = vmatprep.subr.mxu0 %v672
          %1289 = vmatpush1.msra.mxu0 %v671
          %1290 = vmatprep.subr.mxu0 %v676
          %1291 = vmatpush1.msra.mxu0 %v675
          %1292 = vmatprep.subr.mxu0 %v680
          %1293 = vmatpush1.msra.mxu0 %v679
          %1294 = vmatprep.subr.mxu0 %v684
          %1295 = vmatpush1.msra.mxu0 %v683
          %1296 = vmatprep.subr.mxu0 %v688
          %1297 = vmatpush1.msra.mxu0 %v687
          %1298 = vmatprep.subr.mxu0 %v692
          %1299 = vmatpush1.msra.mxu0 %v691
          %1300 = vmatprep.subr.mxu0 %v696
          %1301 = vmatpush1.msra.mxu0 %v695
          %1302 = vmatprep.subr.mxu0 %v700
          %1303 = vmatpush1.msra.mxu0 %v699
          %1304 = vmatprep.subr.mxu0 %v704
          %1305 = vmatpush1.msra.mxu0 %v703
          %1306 = vmatprep.subr.mxu0 %v708
          %1307 = vmatpush1.msra.mxu0 %v707
          %1308 = vmatprep.subr.mxu0 %v712
          %1309 = vmatpush1.msra.mxu0 %v711
          %1310 = vmatprep.subr.mxu0 %v716
          %1311 = vmatpush1.msra.mxu0 %v715
          %1312 = vmatprep.subr.mxu0 %v720
          %1313 = vmatpush1.msra.mxu0 %v719
          %1314 = vmatprep.subr.mxu0 %v724
          %1315 = vmatpush1.msra.mxu0 %v723
          %1316 = vmatprep.subr.mxu0 %v728
          %1317 = vmatpush1.msra.mxu0 %v727
          %1318 = vmatprep.subr.mxu0 %v732
          %1319 = vmatpush1.msra.mxu0 %v731
          %1320 = vmatprep.subr.mxu0 %v736
          %1321 = vmatpush1.msra.mxu0 %v735
          %1322 = vmatprep.subr.mxu0 %v740
          %1323 = vmatpush1.msra.mxu0 %v739
          %1324 = vmatprep.subr.mxu0 %v744
          %1325 = vmatpush1.msra.mxu0 %v743
          %1326 = vmatprep.subr.mxu0 %v748
          %1327 = vmatpush1.msra.mxu0 %v747
          %1328 = vmatprep.subr.mxu0 %v752
          %1329 = vmatpush1.msra.mxu0 %v751
          %1330 = vmatprep.subr.mxu0 %v756
          %1331 = vmatpush1.msra.mxu0 %v755
          %1332 = vmatprep.subr.mxu0 %v760
          %1333 = vmatpush1.msra.mxu0 %v759
          %1334 = vmatprep.subr.mxu0 %v764
          %1335 = vmatpush1.msra.mxu0 %v763
          %1336 = vmatprep.subr.mxu0 %v768
          %1337 = vmatpush1.msra.mxu0 %v767
          %1338 = vmatprep.subr.mxu0 %v772
          %1339 = vmatpush1.msra.mxu0 %v771
          %1340 = vmatprep.subr.mxu0 %v776
          %1341 = vmatpush1.msra.mxu0 %v775
          %1342 = vmatprep.subr.mxu0 %v780
          %1343 = vmatpush1.msra.mxu0 %v779
          %1344 = vmatprep.subr.mxu0 %v784
          %1345 = vmatpush1.msra.mxu0 %v783
          %1346 = vmatprep.mubr.f32.mxu0 %v272
          %1347 = vmatmul.mubr.f32.gmra.mrb[0].mxu0 %v271
          %v1348 = vpop.f32.mrb[0].mxu0
          %v1349 = vadd.f32 %v1278, %v1348
          %v1350 = vpop.f32.mrb[0].mxu0
          %v1351 = vadd.f32 %v1280, %v1350
          %1352 = vdwg.mxu0
          %v1353 = vmax.f32 %v1065, 0.0
          %v1354 = vmax.f32 %v1067, 0.0
          %v1355 = vmax.f32 %v1349, 0.0
          %v1356 = vmax.f32 %v1351, 0.0
          %s1357 = sshra.s32 %s226, 7
          %s1358 = sand.u32 %s226, 127
          %s1359 = smul.addr %s1357, 8
          %s1360 = scalar_lea.vmem [#allocation2], %s1359
          %1361 = vst [vmem:[%s1360] sm:$0xff] %v1353
          %1362 = vst [vmem:[%s1360 + $0x8] sm:$0xff] %v1354
          %1363 = vst [vmem:[%s1360 + $0x10] sm:$0xff] %v1355
          %1364 = vst [vmem:[%s1360 + $0x18] sm:$0xff] %v1356
        $region44: #{deepcube_a_core.5} parent=31 // pred_fallthru
          _
        %p1365 = scmp.eq.s32.totalorder %s260, 1
        // Predicated region
        $region45: #{deepcube_a_core.5} parent=31 // pred_check
          %p1366 = pneg %p1365
        $region46: #{deepcube_a_core.5} parent=31 // pred_check_branch
          %1368 = sbr.rel (%p1366) target = $region48
        $region47: #{deepcube_a_core.5} parent=31 // pred_region
          %v1369 = vld [vmem:[#allocation2] sm:$0xff]
          %v1370 = vld [vmem:[#allocation2 + $0x8] sm:$0xff]
          %v1371 = vld [vmem:[#allocation2 + $0x10] sm:$0xff]
          %v1372 = vld [vmem:[#allocation2 + $0x18] sm:$0xff]
          %v1373 = vld [vmem:[#allocation2 + $0x20] sm:$0xff]
          %v1374 = vld [vmem:[#allocation2 + $0x28] sm:$0xff]
          %v1375 = vld [vmem:[#allocation2 + $0x30] sm:$0xff]
          %v1376 = vld [vmem:[#allocation2 + $0x38] sm:$0xff]
          %v1377 = vld [vmem:[%s190] sm:$0xff]
          %v1378 = vld [vmem:[%s190 + $0x8] sm:$0xff]
          %v1379 = vld [vmem:[%s190 + $0x10] sm:$0xff]
          %v1380 = vld [vmem:[%s190 + $0x18] sm:$0xff]
          %v1381 = vld [vmem:[%s190 + $0x20] sm:$0xff]
          %v1382 = vld [vmem:[%s190 + $0x28] sm:$0xff]
          %v1383 = vld [vmem:[%s190 + $0x30] sm:$0xff]
          %v1384 = vld [vmem:[%s190 + $0x38] sm:$0xff]
          %v1385 = vld [vmem:[%s190 + $0x40] sm:$0xff]
          %v1386 = vld [vmem:[%s190 + $0x48] sm:$0xff]
          %v1387 = vld [vmem:[%s190 + $0x50] sm:$0xff]
          %v1388 = vld [vmem:[%s190 + $0x58] sm:$0xff]
          %v1389 = vld [vmem:[%s190 + $0x60] sm:$0xff]
          %v1390 = vld [vmem:[%s190 + $0x68] sm:$0xff]
          %v1391 = vld [vmem:[%s190 + $0x70] sm:$0xff]
          %v1392 = vld [vmem:[%s190 + $0x78] sm:$0xff]
          %v1393 = vld [vmem:[%s190 + $0x80] sm:$0xff]
          %v1394 = vld [vmem:[%s190 + $0x88] sm:$0xff]
          %v1395 = vld [vmem:[%s190 + $0x90] sm:$0xff]
          %v1396 = vld [vmem:[%s190 + $0x98] sm:$0xff]
          %v1397 = vld [vmem:[%s190 + $0xa0] sm:$0xff]
          %v1398 = vld [vmem:[%s190 + $0xa8] sm:$0xff]
          %v1399 = vld [vmem:[%s190 + $0xb0] sm:$0xff]
          %v1400 = vld [vmem:[%s190 + $0xb8] sm:$0xff]
          %v1401 = vld [vmem:[%s190 + $0xc0] sm:$0xff]
          %v1402 = vld [vmem:[%s190 + $0xc8] sm:$0xff]
          %v1403 = vld [vmem:[%s190 + $0xd0] sm:$0xff]
          %v1404 = vld [vmem:[%s190 + $0xd8] sm:$0xff]
          %v1405 = vld [vmem:[%s190 + $0xe0] sm:$0xff]
          %v1406 = vld [vmem:[%s190 + $0xe8] sm:$0xff]
          %v1407 = vld [vmem:[%s190 + $0xf0] sm:$0xff]
          %v1408 = vld [vmem:[%s190 + $0xf8] sm:$0xff]
          %v1409 = vld [vmem:[%s190 + $0x100] sm:$0xff]
          %v1410 = vld [vmem:[%s190 + $0x108] sm:$0xff]
          %v1411 = vld [vmem:[%s190 + $0x110] sm:$0xff]
          %v1412 = vld [vmem:[%s190 + $0x118] sm:$0xff]
          %v1413 = vld [vmem:[%s190 + $0x120] sm:$0xff]
          %v1414 = vld [vmem:[%s190 + $0x128] sm:$0xff]
          %v1415 = vld [vmem:[%s190 + $0x130] sm:$0xff]
          %v1416 = vld [vmem:[%s190 + $0x138] sm:$0xff]
          %v1417 = vld [vmem:[%s190 + $0x140] sm:$0xff]
          %v1418 = vld [vmem:[%s190 + $0x148] sm:$0xff]
          %v1419 = vld [vmem:[%s190 + $0x150] sm:$0xff]
          %v1420 = vld [vmem:[%s190 + $0x158] sm:$0xff]
          %v1421 = vld [vmem:[%s190 + $0x160] sm:$0xff]
          %v1422 = vld [vmem:[%s190 + $0x168] sm:$0xff]
          %v1423 = vld [vmem:[%s190 + $0x170] sm:$0xff]
          %v1424 = vld [vmem:[%s190 + $0x178] sm:$0xff]
          %v1425 = vld [vmem:[%s190 + $0x180] sm:$0xff]
          %v1426 = vld [vmem:[%s190 + $0x188] sm:$0xff]
          %v1427 = vld [vmem:[%s190 + $0x190] sm:$0xff]
          %v1428 = vld [vmem:[%s190 + $0x198] sm:$0xff]
          %v1429 = vld [vmem:[%s190 + $0x1a0] sm:$0xff]
          %v1430 = vld [vmem:[%s190 + $0x1a8] sm:$0xff]
          %v1431 = vld [vmem:[%s190 + $0x1b0] sm:$0xff]
          %v1432 = vld [vmem:[%s190 + $0x1b8] sm:$0xff]
          %v1433 = vld [vmem:[%s190 + $0x1c0] sm:$0xff]
          %v1434 = vld [vmem:[%s190 + $0x1c8] sm:$0xff]
          %v1435 = vld [vmem:[%s190 + $0x1d0] sm:$0xff]
          %v1436 = vld [vmem:[%s190 + $0x1d8] sm:$0xff]
          %v1437 = vld [vmem:[%s190 + $0x1e0] sm:$0xff]
          %v1438 = vld [vmem:[%s190 + $0x1e8] sm:$0xff]
          %v1439 = vld [vmem:[%s190 + $0x1f0] sm:$0xff]
          %v1440 = vld [vmem:[%s190 + $0x1f8] sm:$0xff]
          %v1441 = vld [vmem:[%s190 + $0x200] sm:$0xff]
          %v1442 = vld [vmem:[%s190 + $0x208] sm:$0xff]
          %v1443 = vld [vmem:[%s190 + $0x210] sm:$0xff]
          %v1444 = vld [vmem:[%s190 + $0x218] sm:$0xff]
          %v1445 = vld [vmem:[%s190 + $0x220] sm:$0xff]
          %v1446 = vld [vmem:[%s190 + $0x228] sm:$0xff]
          %v1447 = vld [vmem:[%s190 + $0x230] sm:$0xff]
          %v1448 = vld [vmem:[%s190 + $0x238] sm:$0xff]
          %v1449 = vld [vmem:[%s190 + $0x240] sm:$0xff]
          %v1450 = vld [vmem:[%s190 + $0x248] sm:$0xff]
          %v1451 = vld [vmem:[%s190 + $0x250] sm:$0xff]
          %v1452 = vld [vmem:[%s190 + $0x258] sm:$0xff]
          %v1453 = vld [vmem:[%s190 + $0x260] sm:$0xff]
          %v1454 = vld [vmem:[%s190 + $0x268] sm:$0xff]
          %v1455 = vld [vmem:[%s190 + $0x270] sm:$0xff]
          %v1456 = vld [vmem:[%s190 + $0x278] sm:$0xff]
          %v1457 = vld [vmem:[%s190 + $0x280] sm:$0xff]
          %v1458 = vld [vmem:[%s190 + $0x288] sm:$0xff]
          %v1459 = vld [vmem:[%s190 + $0x290] sm:$0xff]
          %v1460 = vld [vmem:[%s190 + $0x298] sm:$0xff]
          %v1461 = vld [vmem:[%s190 + $0x2a0] sm:$0xff]
          %v1462 = vld [vmem:[%s190 + $0x2a8] sm:$0xff]
          %v1463 = vld [vmem:[%s190 + $0x2b0] sm:$0xff]
          %v1464 = vld [vmem:[%s190 + $0x2b8] sm:$0xff]
          %v1465 = vld [vmem:[%s190 + $0x2c0] sm:$0xff]
          %v1466 = vld [vmem:[%s190 + $0x2c8] sm:$0xff]
          %v1467 = vld [vmem:[%s190 + $0x2d0] sm:$0xff]
          %v1468 = vld [vmem:[%s190 + $0x2d8] sm:$0xff]
          %v1469 = vld [vmem:[%s190 + $0x2e0] sm:$0xff]
          %v1470 = vld [vmem:[%s190 + $0x2e8] sm:$0xff]
          %v1471 = vld [vmem:[%s190 + $0x2f0] sm:$0xff]
          %v1472 = vld [vmem:[%s190 + $0x2f8] sm:$0xff]
          %v1473 = vld [vmem:[%s190 + $0x300] sm:$0xff]
          %v1474 = vld [vmem:[%s190 + $0x308] sm:$0xff]
          %v1475 = vld [vmem:[%s190 + $0x310] sm:$0xff]
          %v1476 = vld [vmem:[%s190 + $0x318] sm:$0xff]
          %v1477 = vld [vmem:[%s190 + $0x320] sm:$0xff]
          %v1478 = vld [vmem:[%s190 + $0x328] sm:$0xff]
          %v1479 = vld [vmem:[%s190 + $0x330] sm:$0xff]
          %v1480 = vld [vmem:[%s190 + $0x338] sm:$0xff]
          %v1481 = vld [vmem:[%s190 + $0x340] sm:$0xff]
          %v1482 = vld [vmem:[%s190 + $0x348] sm:$0xff]
          %v1483 = vld [vmem:[%s190 + $0x350] sm:$0xff]
          %v1484 = vld [vmem:[%s190 + $0x358] sm:$0xff]
          %v1485 = vld [vmem:[%s190 + $0x360] sm:$0xff]
          %v1486 = vld [vmem:[%s190 + $0x368] sm:$0xff]
          %v1487 = vld [vmem:[%s190 + $0x370] sm:$0xff]
          %v1488 = vld [vmem:[%s190 + $0x378] sm:$0xff]
          %v1489 = vld [vmem:[%s190 + $0x380] sm:$0xff]
          %v1490 = vld [vmem:[%s190 + $0x388] sm:$0xff]
          %v1491 = vld [vmem:[%s190 + $0x390] sm:$0xff]
          %v1492 = vld [vmem:[%s190 + $0x398] sm:$0xff]
          %v1493 = vld [vmem:[%s190 + $0x3a0] sm:$0xff]
          %v1494 = vld [vmem:[%s190 + $0x3a8] sm:$0xff]
          %v1495 = vld [vmem:[%s190 + $0x3b0] sm:$0xff]
          %v1496 = vld [vmem:[%s190 + $0x3b8] sm:$0xff]
          %v1497 = vld [vmem:[%s190 + $0x3c0] sm:$0xff]
          %v1498 = vld [vmem:[%s190 + $0x3c8] sm:$0xff]
          %v1499 = vld [vmem:[%s190 + $0x3d0] sm:$0xff]
          %v1500 = vld [vmem:[%s190 + $0x3d8] sm:$0xff]
          %v1501 = vld [vmem:[%s190 + $0x3e0] sm:$0xff]
          %v1502 = vld [vmem:[%s190 + $0x3e8] sm:$0xff]
          %v1503 = vld [vmem:[%s190 + $0x3f0] sm:$0xff]
          %v1504 = vld [vmem:[%s190 + $0x3f8] sm:$0xff]
          %v1505 = vld [vmem:[%s190 + $0x400] sm:$0xff]
          %v1506 = vld [vmem:[%s190 + $0x408] sm:$0xff]
          %v1507 = vld [vmem:[%s190 + $0x410] sm:$0xff]
          %v1508 = vld [vmem:[%s190 + $0x418] sm:$0xff]
          %v1509 = vld [vmem:[%s190 + $0x420] sm:$0xff]
          %v1510 = vld [vmem:[%s190 + $0x428] sm:$0xff]
          %v1511 = vld [vmem:[%s190 + $0x430] sm:$0xff]
          %v1512 = vld [vmem:[%s190 + $0x438] sm:$0xff]
          %v1513 = vld [vmem:[%s190 + $0x440] sm:$0xff]
          %v1514 = vld [vmem:[%s190 + $0x448] sm:$0xff]
          %v1515 = vld [vmem:[%s190 + $0x450] sm:$0xff]
          %v1516 = vld [vmem:[%s190 + $0x458] sm:$0xff]
          %v1517 = vld [vmem:[%s190 + $0x460] sm:$0xff]
          %v1518 = vld [vmem:[%s190 + $0x468] sm:$0xff]
          %v1519 = vld [vmem:[%s190 + $0x470] sm:$0xff]
          %v1520 = vld [vmem:[%s190 + $0x478] sm:$0xff]
          %v1521 = vld [vmem:[%s190 + $0x480] sm:$0xff]
          %v1522 = vld [vmem:[%s190 + $0x488] sm:$0xff]
          %v1523 = vld [vmem:[%s190 + $0x490] sm:$0xff]
          %v1524 = vld [vmem:[%s190 + $0x498] sm:$0xff]
          %v1525 = vld [vmem:[%s190 + $0x4a0] sm:$0xff]
          %v1526 = vld [vmem:[%s190 + $0x4a8] sm:$0xff]
          %v1527 = vld [vmem:[%s190 + $0x4b0] sm:$0xff]
          %v1528 = vld [vmem:[%s190 + $0x4b8] sm:$0xff]
          %v1529 = vld [vmem:[%s190 + $0x4c0] sm:$0xff]
          %v1530 = vld [vmem:[%s190 + $0x4c8] sm:$0xff]
          %v1531 = vld [vmem:[%s190 + $0x4d0] sm:$0xff]
          %v1532 = vld [vmem:[%s190 + $0x4d8] sm:$0xff]
          %v1533 = vld [vmem:[%s190 + $0x4e0] sm:$0xff]
          %v1534 = vld [vmem:[%s190 + $0x4e8] sm:$0xff]
          %v1535 = vld [vmem:[%s190 + $0x4f0] sm:$0xff]
          %v1536 = vld [vmem:[%s190 + $0x4f8] sm:$0xff]
          %v1537 = vld [vmem:[%s190 + $0x500] sm:$0xff]
          %v1538 = vld [vmem:[%s190 + $0x508] sm:$0xff]
          %v1539 = vld [vmem:[%s190 + $0x510] sm:$0xff]
          %v1540 = vld [vmem:[%s190 + $0x518] sm:$0xff]
          %v1541 = vld [vmem:[%s190 + $0x520] sm:$0xff]
          %v1542 = vld [vmem:[%s190 + $0x528] sm:$0xff]
          %v1543 = vld [vmem:[%s190 + $0x530] sm:$0xff]
          %v1544 = vld [vmem:[%s190 + $0x538] sm:$0xff]
          %v1545 = vld [vmem:[%s190 + $0x540] sm:$0xff]
          %v1546 = vld [vmem:[%s190 + $0x548] sm:$0xff]
          %v1547 = vld [vmem:[%s190 + $0x550] sm:$0xff]
          %v1548 = vld [vmem:[%s190 + $0x558] sm:$0xff]
          %v1549 = vld [vmem:[%s190 + $0x560] sm:$0xff]
          %v1550 = vld [vmem:[%s190 + $0x568] sm:$0xff]
          %v1551 = vld [vmem:[%s190 + $0x570] sm:$0xff]
          %v1552 = vld [vmem:[%s190 + $0x578] sm:$0xff]
          %v1553 = vld [vmem:[%s190 + $0x580] sm:$0xff]
          %v1554 = vld [vmem:[%s190 + $0x588] sm:$0xff]
          %v1555 = vld [vmem:[%s190 + $0x590] sm:$0xff]
          %v1556 = vld [vmem:[%s190 + $0x598] sm:$0xff]
          %v1557 = vld [vmem:[%s190 + $0x5a0] sm:$0xff]
          %v1558 = vld [vmem:[%s190 + $0x5a8] sm:$0xff]
          %v1559 = vld [vmem:[%s190 + $0x5b0] sm:$0xff]
          %v1560 = vld [vmem:[%s190 + $0x5b8] sm:$0xff]
          %v1561 = vld [vmem:[%s190 + $0x5c0] sm:$0xff]
          %v1562 = vld [vmem:[%s190 + $0x5c8] sm:$0xff]
          %v1563 = vld [vmem:[%s190 + $0x5d0] sm:$0xff]
          %v1564 = vld [vmem:[%s190 + $0x5d8] sm:$0xff]
          %v1565 = vld [vmem:[%s190 + $0x5e0] sm:$0xff]
          %v1566 = vld [vmem:[%s190 + $0x5e8] sm:$0xff]
          %v1567 = vld [vmem:[%s190 + $0x5f0] sm:$0xff]
          %v1568 = vld [vmem:[%s190 + $0x5f8] sm:$0xff]
          %v1569 = vld [vmem:[%s190 + $0x600] sm:$0xff]
          %v1570 = vld [vmem:[%s190 + $0x608] sm:$0xff]
          %v1571 = vld [vmem:[%s190 + $0x610] sm:$0xff]
          %v1572 = vld [vmem:[%s190 + $0x618] sm:$0xff]
          %v1573 = vld [vmem:[%s190 + $0x620] sm:$0xff]
          %v1574 = vld [vmem:[%s190 + $0x628] sm:$0xff]
          %v1575 = vld [vmem:[%s190 + $0x630] sm:$0xff]
          %v1576 = vld [vmem:[%s190 + $0x638] sm:$0xff]
          %v1577 = vld [vmem:[%s190 + $0x640] sm:$0xff]
          %v1578 = vld [vmem:[%s190 + $0x648] sm:$0xff]
          %v1579 = vld [vmem:[%s190 + $0x650] sm:$0xff]
          %v1580 = vld [vmem:[%s190 + $0x658] sm:$0xff]
          %v1581 = vld [vmem:[%s190 + $0x660] sm:$0xff]
          %v1582 = vld [vmem:[%s190 + $0x668] sm:$0xff]
          %v1583 = vld [vmem:[%s190 + $0x670] sm:$0xff]
          %v1584 = vld [vmem:[%s190 + $0x678] sm:$0xff]
          %v1585 = vld [vmem:[%s190 + $0x680] sm:$0xff]
          %v1586 = vld [vmem:[%s190 + $0x688] sm:$0xff]
          %v1587 = vld [vmem:[%s190 + $0x690] sm:$0xff]
          %v1588 = vld [vmem:[%s190 + $0x698] sm:$0xff]
          %v1589 = vld [vmem:[%s190 + $0x6a0] sm:$0xff]
          %v1590 = vld [vmem:[%s190 + $0x6a8] sm:$0xff]
          %v1591 = vld [vmem:[%s190 + $0x6b0] sm:$0xff]
          %v1592 = vld [vmem:[%s190 + $0x6b8] sm:$0xff]
          %v1593 = vld [vmem:[%s190 + $0x6c0] sm:$0xff]
          %v1594 = vld [vmem:[%s190 + $0x6c8] sm:$0xff]
          %v1595 = vld [vmem:[%s190 + $0x6d0] sm:$0xff]
          %v1596 = vld [vmem:[%s190 + $0x6d8] sm:$0xff]
          %v1597 = vld [vmem:[%s190 + $0x6e0] sm:$0xff]
          %v1598 = vld [vmem:[%s190 + $0x6e8] sm:$0xff]
          %v1599 = vld [vmem:[%s190 + $0x6f0] sm:$0xff]
          %v1600 = vld [vmem:[%s190 + $0x6f8] sm:$0xff]
          %v1601 = vld [vmem:[%s190 + $0x700] sm:$0xff]
          %v1602 = vld [vmem:[%s190 + $0x708] sm:$0xff]
          %v1603 = vld [vmem:[%s190 + $0x710] sm:$0xff]
          %v1604 = vld [vmem:[%s190 + $0x718] sm:$0xff]
          %v1605 = vld [vmem:[%s190 + $0x720] sm:$0xff]
          %v1606 = vld [vmem:[%s190 + $0x728] sm:$0xff]
          %v1607 = vld [vmem:[%s190 + $0x730] sm:$0xff]
          %v1608 = vld [vmem:[%s190 + $0x738] sm:$0xff]
          %v1609 = vld [vmem:[%s190 + $0x740] sm:$0xff]
          %v1610 = vld [vmem:[%s190 + $0x748] sm:$0xff]
          %v1611 = vld [vmem:[%s190 + $0x750] sm:$0xff]
          %v1612 = vld [vmem:[%s190 + $0x758] sm:$0xff]
          %v1613 = vld [vmem:[%s190 + $0x760] sm:$0xff]
          %v1614 = vld [vmem:[%s190 + $0x768] sm:$0xff]
          %v1615 = vld [vmem:[%s190 + $0x770] sm:$0xff]
          %v1616 = vld [vmem:[%s190 + $0x778] sm:$0xff]
          %v1617 = vld [vmem:[%s190 + $0x780] sm:$0xff]
          %v1618 = vld [vmem:[%s190 + $0x788] sm:$0xff]
          %v1619 = vld [vmem:[%s190 + $0x790] sm:$0xff]
          %v1620 = vld [vmem:[%s190 + $0x798] sm:$0xff]
          %v1621 = vld [vmem:[%s190 + $0x7a0] sm:$0xff]
          %v1622 = vld [vmem:[%s190 + $0x7a8] sm:$0xff]
          %v1623 = vld [vmem:[%s190 + $0x7b0] sm:$0xff]
          %v1624 = vld [vmem:[%s190 + $0x7b8] sm:$0xff]
          %v1625 = vld [vmem:[%s190 + $0x7c0] sm:$0xff]
          %v1626 = vld [vmem:[%s190 + $0x7c8] sm:$0xff]
          %v1627 = vld [vmem:[%s190 + $0x7d0] sm:$0xff]
          %v1628 = vld [vmem:[%s190 + $0x7d8] sm:$0xff]
          %v1629 = vld [vmem:[%s190 + $0x7e0] sm:$0xff]
          %v1630 = vld [vmem:[%s190 + $0x7e8] sm:$0xff]
          %v1631 = vld [vmem:[%s190 + $0x7f0] sm:$0xff]
          %v1632 = vld [vmem:[%s190 + $0x7f8] sm:$0xff]
          %v1633 = vld [vmem:[%s190 + $0x800] sm:$0xff]
          %v1634 = vld [vmem:[%s190 + $0x808] sm:$0xff]
          %v1635 = vld [vmem:[%s190 + $0x810] sm:$0xff]
          %v1636 = vld [vmem:[%s190 + $0x818] sm:$0xff]
          %v1637 = vld [vmem:[%s190 + $0x820] sm:$0xff]
          %v1638 = vld [vmem:[%s190 + $0x828] sm:$0xff]
          %v1639 = vld [vmem:[%s190 + $0x830] sm:$0xff]
          %v1640 = vld [vmem:[%s190 + $0x838] sm:$0xff]
          %v1641 = vld [vmem:[%s190 + $0x840] sm:$0xff]
          %v1642 = vld [vmem:[%s190 + $0x848] sm:$0xff]
          %v1643 = vld [vmem:[%s190 + $0x850] sm:$0xff]
          %v1644 = vld [vmem:[%s190 + $0x858] sm:$0xff]
          %v1645 = vld [vmem:[%s190 + $0x860] sm:$0xff]
          %v1646 = vld [vmem:[%s190 + $0x868] sm:$0xff]
          %v1647 = vld [vmem:[%s190 + $0x870] sm:$0xff]
          %v1648 = vld [vmem:[%s190 + $0x878] sm:$0xff]
          %v1649 = vld [vmem:[%s190 + $0x880] sm:$0xff]
          %v1650 = vld [vmem:[%s190 + $0x888] sm:$0xff]
          %v1651 = vld [vmem:[%s190 + $0x890] sm:$0xff]
          %v1652 = vld [vmem:[%s190 + $0x898] sm:$0xff]
          %v1653 = vld [vmem:[%s190 + $0x8a0] sm:$0xff]
          %v1654 = vld [vmem:[%s190 + $0x8a8] sm:$0xff]
          %v1655 = vld [vmem:[%s190 + $0x8b0] sm:$0xff]
          %v1656 = vld [vmem:[%s190 + $0x8b8] sm:$0xff]
          %v1657 = vld [vmem:[%s190 + $0x8c0] sm:$0xff]
          %v1658 = vld [vmem:[%s190 + $0x8c8] sm:$0xff]
          %v1659 = vld [vmem:[%s190 + $0x8d0] sm:$0xff]
          %v1660 = vld [vmem:[%s190 + $0x8d8] sm:$0xff]
          %v1661 = vld [vmem:[%s190 + $0x8e0] sm:$0xff]
          %v1662 = vld [vmem:[%s190 + $0x8e8] sm:$0xff]
          %v1663 = vld [vmem:[%s190 + $0x8f0] sm:$0xff]
          %v1664 = vld [vmem:[%s190 + $0x8f8] sm:$0xff]
          %v1665 = vld [vmem:[%s190 + $0x900] sm:$0xff]
          %v1666 = vld [vmem:[%s190 + $0x908] sm:$0xff]
          %v1667 = vld [vmem:[%s190 + $0x910] sm:$0xff]
          %v1668 = vld [vmem:[%s190 + $0x918] sm:$0xff]
          %v1669 = vld [vmem:[%s190 + $0x920] sm:$0xff]
          %v1670 = vld [vmem:[%s190 + $0x928] sm:$0xff]
          %v1671 = vld [vmem:[%s190 + $0x930] sm:$0xff]
          %v1672 = vld [vmem:[%s190 + $0x938] sm:$0xff]
          %v1673 = vld [vmem:[%s190 + $0x940] sm:$0xff]
          %v1674 = vld [vmem:[%s190 + $0x948] sm:$0xff]
          %v1675 = vld [vmem:[%s190 + $0x950] sm:$0xff]
          %v1676 = vld [vmem:[%s190 + $0x958] sm:$0xff]
          %v1677 = vld [vmem:[%s190 + $0x960] sm:$0xff]
          %v1678 = vld [vmem:[%s190 + $0x968] sm:$0xff]
          %v1679 = vld [vmem:[%s190 + $0x970] sm:$0xff]
          %v1680 = vld [vmem:[%s190 + $0x978] sm:$0xff]
          %v1681 = vld [vmem:[%s190 + $0x980] sm:$0xff]
          %v1682 = vld [vmem:[%s190 + $0x988] sm:$0xff]
          %v1683 = vld [vmem:[%s190 + $0x990] sm:$0xff]
          %v1684 = vld [vmem:[%s190 + $0x998] sm:$0xff]
          %v1685 = vld [vmem:[%s190 + $0x9a0] sm:$0xff]
          %v1686 = vld [vmem:[%s190 + $0x9a8] sm:$0xff]
          %v1687 = vld [vmem:[%s190 + $0x9b0] sm:$0xff]
          %v1688 = vld [vmem:[%s190 + $0x9b8] sm:$0xff]
          %v1689 = vld [vmem:[%s190 + $0x9c0] sm:$0xff]
          %v1690 = vld [vmem:[%s190 + $0x9c8] sm:$0xff]
          %v1691 = vld [vmem:[%s190 + $0x9d0] sm:$0xff]
          %v1692 = vld [vmem:[%s190 + $0x9d8] sm:$0xff]
          %v1693 = vld [vmem:[%s190 + $0x9e0] sm:$0xff]
          %v1694 = vld [vmem:[%s190 + $0x9e8] sm:$0xff]
          %v1695 = vld [vmem:[%s190 + $0x9f0] sm:$0xff]
          %v1696 = vld [vmem:[%s190 + $0x9f8] sm:$0xff]
          %v1697 = vld [vmem:[%s190 + $0xa00] sm:$0xff]
          %v1698 = vld [vmem:[%s190 + $0xa08] sm:$0xff]
          %v1699 = vld [vmem:[%s190 + $0xa10] sm:$0xff]
          %v1700 = vld [vmem:[%s190 + $0xa18] sm:$0xff]
          %v1701 = vld [vmem:[%s190 + $0xa20] sm:$0xff]
          %v1702 = vld [vmem:[%s190 + $0xa28] sm:$0xff]
          %v1703 = vld [vmem:[%s190 + $0xa30] sm:$0xff]
          %v1704 = vld [vmem:[%s190 + $0xa38] sm:$0xff]
          %v1705 = vld [vmem:[%s190 + $0xa40] sm:$0xff]
          %v1706 = vld [vmem:[%s190 + $0xa48] sm:$0xff]
          %v1707 = vld [vmem:[%s190 + $0xa50] sm:$0xff]
          %v1708 = vld [vmem:[%s190 + $0xa58] sm:$0xff]
          %v1709 = vld [vmem:[%s190 + $0xa60] sm:$0xff]
          %v1710 = vld [vmem:[%s190 + $0xa68] sm:$0xff]
          %v1711 = vld [vmem:[%s190 + $0xa70] sm:$0xff]
          %v1712 = vld [vmem:[%s190 + $0xa78] sm:$0xff]
          %v1713 = vld [vmem:[%s190 + $0xa80] sm:$0xff]
          %v1714 = vld [vmem:[%s190 + $0xa88] sm:$0xff]
          %v1715 = vld [vmem:[%s190 + $0xa90] sm:$0xff]
          %v1716 = vld [vmem:[%s190 + $0xa98] sm:$0xff]
          %v1717 = vld [vmem:[%s190 + $0xaa0] sm:$0xff]
          %v1718 = vld [vmem:[%s190 + $0xaa8] sm:$0xff]
          %v1719 = vld [vmem:[%s190 + $0xab0] sm:$0xff]
          %v1720 = vld [vmem:[%s190 + $0xab8] sm:$0xff]
          %v1721 = vld [vmem:[%s190 + $0xac0] sm:$0xff]
          %v1722 = vld [vmem:[%s190 + $0xac8] sm:$0xff]
          %v1723 = vld [vmem:[%s190 + $0xad0] sm:$0xff]
          %v1724 = vld [vmem:[%s190 + $0xad8] sm:$0xff]
          %v1725 = vld [vmem:[%s190 + $0xae0] sm:$0xff]
          %v1726 = vld [vmem:[%s190 + $0xae8] sm:$0xff]
          %v1727 = vld [vmem:[%s190 + $0xaf0] sm:$0xff]
          %v1728 = vld [vmem:[%s190 + $0xaf8] sm:$0xff]
          %v1729 = vld [vmem:[%s190 + $0xb00] sm:$0xff]
          %v1730 = vld [vmem:[%s190 + $0xb08] sm:$0xff]
          %v1731 = vld [vmem:[%s190 + $0xb10] sm:$0xff]
          %v1732 = vld [vmem:[%s190 + $0xb18] sm:$0xff]
          %v1733 = vld [vmem:[%s190 + $0xb20] sm:$0xff]
          %v1734 = vld [vmem:[%s190 + $0xb28] sm:$0xff]
          %v1735 = vld [vmem:[%s190 + $0xb30] sm:$0xff]
          %v1736 = vld [vmem:[%s190 + $0xb38] sm:$0xff]
          %v1737 = vld [vmem:[%s190 + $0xb40] sm:$0xff]
          %v1738 = vld [vmem:[%s190 + $0xb48] sm:$0xff]
          %v1739 = vld [vmem:[%s190 + $0xb50] sm:$0xff]
          %v1740 = vld [vmem:[%s190 + $0xb58] sm:$0xff]
          %v1741 = vld [vmem:[%s190 + $0xb60] sm:$0xff]
          %v1742 = vld [vmem:[%s190 + $0xb68] sm:$0xff]
          %v1743 = vld [vmem:[%s190 + $0xb70] sm:$0xff]
          %v1744 = vld [vmem:[%s190 + $0xb78] sm:$0xff]
          %v1745 = vld [vmem:[%s190 + $0xb80] sm:$0xff]
          %v1746 = vld [vmem:[%s190 + $0xb88] sm:$0xff]
          %v1747 = vld [vmem:[%s190 + $0xb90] sm:$0xff]
          %v1748 = vld [vmem:[%s190 + $0xb98] sm:$0xff]
          %v1749 = vld [vmem:[%s190 + $0xba0] sm:$0xff]
          %v1750 = vld [vmem:[%s190 + $0xba8] sm:$0xff]
          %v1751 = vld [vmem:[%s190 + $0xbb0] sm:$0xff]
          %v1752 = vld [vmem:[%s190 + $0xbb8] sm:$0xff]
          %v1753 = vld [vmem:[%s190 + $0xbc0] sm:$0xff]
          %v1754 = vld [vmem:[%s190 + $0xbc8] sm:$0xff]
          %v1755 = vld [vmem:[%s190 + $0xbd0] sm:$0xff]
          %v1756 = vld [vmem:[%s190 + $0xbd8] sm:$0xff]
          %v1757 = vld [vmem:[%s190 + $0xbe0] sm:$0xff]
          %v1758 = vld [vmem:[%s190 + $0xbe8] sm:$0xff]
          %v1759 = vld [vmem:[%s190 + $0xbf0] sm:$0xff]
          %v1760 = vld [vmem:[%s190 + $0xbf8] sm:$0xff]
          %v1761 = vld [vmem:[%s190 + $0xc00] sm:$0xff]
          %v1762 = vld [vmem:[%s190 + $0xc08] sm:$0xff]
          %v1763 = vld [vmem:[%s190 + $0xc10] sm:$0xff]
          %v1764 = vld [vmem:[%s190 + $0xc18] sm:$0xff]
          %v1765 = vld [vmem:[%s190 + $0xc20] sm:$0xff]
          %v1766 = vld [vmem:[%s190 + $0xc28] sm:$0xff]
          %v1767 = vld [vmem:[%s190 + $0xc30] sm:$0xff]
          %v1768 = vld [vmem:[%s190 + $0xc38] sm:$0xff]
          %v1769 = vld [vmem:[%s190 + $0xc40] sm:$0xff]
          %v1770 = vld [vmem:[%s190 + $0xc48] sm:$0xff]
          %v1771 = vld [vmem:[%s190 + $0xc50] sm:$0xff]
          %v1772 = vld [vmem:[%s190 + $0xc58] sm:$0xff]
          %v1773 = vld [vmem:[%s190 + $0xc60] sm:$0xff]
          %v1774 = vld [vmem:[%s190 + $0xc68] sm:$0xff]
          %v1775 = vld [vmem:[%s190 + $0xc70] sm:$0xff]
          %v1776 = vld [vmem:[%s190 + $0xc78] sm:$0xff]
          %v1777 = vld [vmem:[%s190 + $0xc80] sm:$0xff]
          %v1778 = vld [vmem:[%s190 + $0xc88] sm:$0xff]
          %v1779 = vld [vmem:[%s190 + $0xc90] sm:$0xff]
          %v1780 = vld [vmem:[%s190 + $0xc98] sm:$0xff]
          %v1781 = vld [vmem:[%s190 + $0xca0] sm:$0xff]
          %v1782 = vld [vmem:[%s190 + $0xca8] sm:$0xff]
          %v1783 = vld [vmem:[%s190 + $0xcb0] sm:$0xff]
          %v1784 = vld [vmem:[%s190 + $0xcb8] sm:$0xff]
          %v1785 = vld [vmem:[%s190 + $0xcc0] sm:$0xff]
          %v1786 = vld [vmem:[%s190 + $0xcc8] sm:$0xff]
          %v1787 = vld [vmem:[%s190 + $0xcd0] sm:$0xff]
          %v1788 = vld [vmem:[%s190 + $0xcd8] sm:$0xff]
          %v1789 = vld [vmem:[%s190 + $0xce0] sm:$0xff]
          %v1790 = vld [vmem:[%s190 + $0xce8] sm:$0xff]
          %v1791 = vld [vmem:[%s190 + $0xcf0] sm:$0xff]
          %v1792 = vld [vmem:[%s190 + $0xcf8] sm:$0xff]
          %v1793 = vld [vmem:[%s190 + $0xd00] sm:$0xff]
          %v1794 = vld [vmem:[%s190 + $0xd08] sm:$0xff]
          %v1795 = vld [vmem:[%s190 + $0xd10] sm:$0xff]
          %v1796 = vld [vmem:[%s190 + $0xd18] sm:$0xff]
          %v1797 = vld [vmem:[%s190 + $0xd20] sm:$0xff]
          %v1798 = vld [vmem:[%s190 + $0xd28] sm:$0xff]
          %v1799 = vld [vmem:[%s190 + $0xd30] sm:$0xff]
          %v1800 = vld [vmem:[%s190 + $0xd38] sm:$0xff]
          %v1801 = vld [vmem:[%s190 + $0xd40] sm:$0xff]
          %v1802 = vld [vmem:[%s190 + $0xd48] sm:$0xff]
          %v1803 = vld [vmem:[%s190 + $0xd50] sm:$0xff]
          %v1804 = vld [vmem:[%s190 + $0xd58] sm:$0xff]
          %v1805 = vld [vmem:[%s190 + $0xd60] sm:$0xff]
          %v1806 = vld [vmem:[%s190 + $0xd68] sm:$0xff]
          %v1807 = vld [vmem:[%s190 + $0xd70] sm:$0xff]
          %v1808 = vld [vmem:[%s190 + $0xd78] sm:$0xff]
          %v1809 = vld [vmem:[%s190 + $0xd80] sm:$0xff]
          %v1810 = vld [vmem:[%s190 + $0xd88] sm:$0xff]
          %v1811 = vld [vmem:[%s190 + $0xd90] sm:$0xff]
          %v1812 = vld [vmem:[%s190 + $0xd98] sm:$0xff]
          %v1813 = vld [vmem:[%s190 + $0xda0] sm:$0xff]
          %v1814 = vld [vmem:[%s190 + $0xda8] sm:$0xff]
          %v1815 = vld [vmem:[%s190 + $0xdb0] sm:$0xff]
          %v1816 = vld [vmem:[%s190 + $0xdb8] sm:$0xff]
          %v1817 = vld [vmem:[%s190 + $0xdc0] sm:$0xff]
          %v1818 = vld [vmem:[%s190 + $0xdc8] sm:$0xff]
          %v1819 = vld [vmem:[%s190 + $0xdd0] sm:$0xff]
          %v1820 = vld [vmem:[%s190 + $0xdd8] sm:$0xff]
          %v1821 = vld [vmem:[%s190 + $0xde0] sm:$0xff]
          %v1822 = vld [vmem:[%s190 + $0xde8] sm:$0xff]
          %v1823 = vld [vmem:[%s190 + $0xdf0] sm:$0xff]
          %v1824 = vld [vmem:[%s190 + $0xdf8] sm:$0xff]
          %v1825 = vld [vmem:[%s190 + $0xe00] sm:$0xff]
          %v1826 = vld [vmem:[%s190 + $0xe08] sm:$0xff]
          %v1827 = vld [vmem:[%s190 + $0xe10] sm:$0xff]
          %v1828 = vld [vmem:[%s190 + $0xe18] sm:$0xff]
          %v1829 = vld [vmem:[%s190 + $0xe20] sm:$0xff]
          %v1830 = vld [vmem:[%s190 + $0xe28] sm:$0xff]
          %v1831 = vld [vmem:[%s190 + $0xe30] sm:$0xff]
          %v1832 = vld [vmem:[%s190 + $0xe38] sm:$0xff]
          %v1833 = vld [vmem:[%s190 + $0xe40] sm:$0xff]
          %v1834 = vld [vmem:[%s190 + $0xe48] sm:$0xff]
          %v1835 = vld [vmem:[%s190 + $0xe50] sm:$0xff]
          %v1836 = vld [vmem:[%s190 + $0xe58] sm:$0xff]
          %v1837 = vld [vmem:[%s190 + $0xe60] sm:$0xff]
          %v1838 = vld [vmem:[%s190 + $0xe68] sm:$0xff]
          %v1839 = vld [vmem:[%s190 + $0xe70] sm:$0xff]
          %v1840 = vld [vmem:[%s190 + $0xe78] sm:$0xff]
          %v1841 = vld [vmem:[%s190 + $0xe80] sm:$0xff]
          %v1842 = vld [vmem:[%s190 + $0xe88] sm:$0xff]
          %v1843 = vld [vmem:[%s190 + $0xe90] sm:$0xff]
          %v1844 = vld [vmem:[%s190 + $0xe98] sm:$0xff]
          %v1845 = vld [vmem:[%s190 + $0xea0] sm:$0xff]
          %v1846 = vld [vmem:[%s190 + $0xea8] sm:$0xff]
          %v1847 = vld [vmem:[%s190 + $0xeb0] sm:$0xff]
          %v1848 = vld [vmem:[%s190 + $0xeb8] sm:$0xff]
          %v1849 = vld [vmem:[%s190 + $0xec0] sm:$0xff]
          %v1850 = vld [vmem:[%s190 + $0xec8] sm:$0xff]
          %v1851 = vld [vmem:[%s190 + $0xed0] sm:$0xff]
          %v1852 = vld [vmem:[%s190 + $0xed8] sm:$0xff]
          %v1853 = vld [vmem:[%s190 + $0xee0] sm:$0xff]
          %v1854 = vld [vmem:[%s190 + $0xee8] sm:$0xff]
          %v1855 = vld [vmem:[%s190 + $0xef0] sm:$0xff]
          %v1856 = vld [vmem:[%s190 + $0xef8] sm:$0xff]
          %v1857 = vld [vmem:[%s190 + $0xf00] sm:$0xff]
          %v1858 = vld [vmem:[%s190 + $0xf08] sm:$0xff]
          %v1859 = vld [vmem:[%s190 + $0xf10] sm:$0xff]
          %v1860 = vld [vmem:[%s190 + $0xf18] sm:$0xff]
          %v1861 = vld [vmem:[%s190 + $0xf20] sm:$0xff]
          %v1862 = vld [vmem:[%s190 + $0xf28] sm:$0xff]
          %v1863 = vld [vmem:[%s190 + $0xf30] sm:$0xff]
          %v1864 = vld [vmem:[%s190 + $0xf38] sm:$0xff]
          %v1865 = vld [vmem:[%s190 + $0xf40] sm:$0xff]
          %v1866 = vld [vmem:[%s190 + $0xf48] sm:$0xff]
          %v1867 = vld [vmem:[%s190 + $0xf50] sm:$0xff]
          %v1868 = vld [vmem:[%s190 + $0xf58] sm:$0xff]
          %v1869 = vld [vmem:[%s190 + $0xf60] sm:$0xff]
          %v1870 = vld [vmem:[%s190 + $0xf68] sm:$0xff]
          %v1871 = vld [vmem:[%s190 + $0xf70] sm:$0xff]
          %v1872 = vld [vmem:[%s190 + $0xf78] sm:$0xff]
          %v1873 = vld [vmem:[%s190 + $0xf80] sm:$0xff]
          %v1874 = vld [vmem:[%s190 + $0xf88] sm:$0xff]
          %v1875 = vld [vmem:[%s190 + $0xf90] sm:$0xff]
          %v1876 = vld [vmem:[%s190 + $0xf98] sm:$0xff]
          %v1877 = vld [vmem:[%s190 + $0xfa0] sm:$0xff]
          %v1878 = vld [vmem:[%s190 + $0xfa8] sm:$0xff]
          %v1879 = vld [vmem:[%s190 + $0xfb0] sm:$0xff]
          %v1880 = vld [vmem:[%s190 + $0xfb8] sm:$0xff]
          %v1881 = vld [vmem:[%s190 + $0xfc0] sm:$0xff]
          %v1882 = vld [vmem:[%s190 + $0xfc8] sm:$0xff]
          %v1883 = vld [vmem:[%s190 + $0xfd0] sm:$0xff]
          %v1884 = vld [vmem:[%s190 + $0xfd8] sm:$0xff]
          %v1885 = vld [vmem:[%s190 + $0xfe0] sm:$0xff]
          %v1886 = vld [vmem:[%s190 + $0xfe8] sm:$0xff]
          %v1887 = vld [vmem:[%s190 + $0xff0] sm:$0xff]
          %v1888 = vld [vmem:[%s190 + $0xff8] sm:$0xff]
          %v1889 = vld [vmem:[%s224] sm:$0xf]
          %v1891 = vlaneseq
          %v1892 = vshrl.u32 %v1891, 7
          %v1893 = vsub.s32 0, %v1892
          %v1894 = vrot.slane %v1889, %v1893
          %v1895 = vlaneseq
          %v1896 = vshrl.u32 %v1895, 7
          %v1897 = vsub.s32 1, %v1896
          %v1898 = vrot.slane %v1889, %v1897
          %v1899 = vlaneseq
          %v1900 = vshrl.u32 %v1899, 7
          %v1901 = vsub.s32 2, %v1900
          %v1902 = vrot.slane %v1889, %v1901
          %v1903 = vlaneseq
          %v1904 = vshrl.u32 %v1903, 7
          %v1905 = vsub.s32 3, %v1904
          %v1906 = vrot.slane %v1889, %v1905
          %1911 = vmatprep.subr.mxu0 %v1378
          %1912 = vmatpush1.msra.mxu0 %v1377
          %1913 = vmatprep.subr.mxu0 %v1382
          %1914 = vmatpush1.msra.mxu0 %v1381
          %1915 = vmatprep.subr.mxu0 %v1386
          %1916 = vmatpush1.msra.mxu0 %v1385
          %1917 = vmatprep.subr.mxu0 %v1390
          %1918 = vmatpush1.msra.mxu0 %v1389
          %1919 = vmatprep.subr.mxu0 %v1394
          %1920 = vmatpush1.msra.mxu0 %v1393
          %1921 = vmatprep.subr.mxu0 %v1398
          %1922 = vmatpush1.msra.mxu0 %v1397
          %1923 = vmatprep.subr.mxu0 %v1402
          %1924 = vmatpush1.msra.mxu0 %v1401
          %1925 = vmatprep.subr.mxu0 %v1406
          %1926 = vmatpush1.msra.mxu0 %v1405
          %1927 = vmatprep.subr.mxu0 %v1410
          %1928 = vmatpush1.msra.mxu0 %v1409
          %1929 = vmatprep.subr.mxu0 %v1414
          %1930 = vmatpush1.msra.mxu0 %v1413
          %1931 = vmatprep.subr.mxu0 %v1418
          %1932 = vmatpush1.msra.mxu0 %v1417
          %1933 = vmatprep.subr.mxu0 %v1422
          %1934 = vmatpush1.msra.mxu0 %v1421
          %1935 = vmatprep.subr.mxu0 %v1426
          %1936 = vmatpush1.msra.mxu0 %v1425
          %1937 = vmatprep.subr.mxu0 %v1430
          %1938 = vmatpush1.msra.mxu0 %v1429
          %1939 = vmatprep.subr.mxu0 %v1434
          %1940 = vmatpush1.msra.mxu0 %v1433
          %1941 = vmatprep.subr.mxu0 %v1438
          %1942 = vmatpush1.msra.mxu0 %v1437
          %1943 = vmatprep.subr.mxu0 %v1442
          %1944 = vmatpush1.msra.mxu0 %v1441
          %1945 = vmatprep.subr.mxu0 %v1446
          %1946 = vmatpush1.msra.mxu0 %v1445
          %1947 = vmatprep.subr.mxu0 %v1450
          %1948 = vmatpush1.msra.mxu0 %v1449
          %1949 = vmatprep.subr.mxu0 %v1454
          %1950 = vmatpush1.msra.mxu0 %v1453
          %1951 = vmatprep.subr.mxu0 %v1458
          %1952 = vmatpush1.msra.mxu0 %v1457
          %1953 = vmatprep.subr.mxu0 %v1462
          %1954 = vmatpush1.msra.mxu0 %v1461
          %1955 = vmatprep.subr.mxu0 %v1466
          %1956 = vmatpush1.msra.mxu0 %v1465
          %1957 = vmatprep.subr.mxu0 %v1470
          %1958 = vmatpush1.msra.mxu0 %v1469
          %1959 = vmatprep.subr.mxu0 %v1474
          %1960 = vmatpush1.msra.mxu0 %v1473
          %1961 = vmatprep.subr.mxu0 %v1478
          %1962 = vmatpush1.msra.mxu0 %v1477
          %1963 = vmatprep.subr.mxu0 %v1482
          %1964 = vmatpush1.msra.mxu0 %v1481
          %1965 = vmatprep.subr.mxu0 %v1486
          %1966 = vmatpush1.msra.mxu0 %v1485
          %1967 = vmatprep.subr.mxu0 %v1490
          %1968 = vmatpush1.msra.mxu0 %v1489
          %1969 = vmatprep.subr.mxu0 %v1494
          %1970 = vmatpush1.msra.mxu0 %v1493
          %1971 = vmatprep.subr.mxu0 %v1498
          %1972 = vmatpush1.msra.mxu0 %v1497
          %1973 = vmatprep.subr.mxu0 %v1502
          %1974 = vmatpush1.msra.mxu0 %v1501
          %1975 = vmatprep.mubr.f32.mxu0 %v1370
          %1976 = vmatmul.mubr.f32.gmra.mrb[0].mxu0 %v1369
          %v1977 = vpop.f32.mrb[0].mxu0
          %v1978 = vadd.f32 %v1894, %v1977
          %v1979 = vpop.f32.mrb[0].mxu0
          %v1980 = vadd.f32 %v1898, %v1979
          %1981 = vdwg.mxu0
          %1982 = vmatprep.subr.mxu0 %v1506
          %1983 = vmatpush1.msra.mxu0 %v1505
          %1984 = vmatprep.subr.mxu0 %v1510
          %1985 = vmatpush1.msra.mxu0 %v1509
          %1986 = vmatprep.subr.mxu0 %v1514
          %1987 = vmatpush1.msra.mxu0 %v1513
          %1988 = vmatprep.subr.mxu0 %v1518
          %1989 = vmatpush1.msra.mxu0 %v1517
          %1990 = vmatprep.subr.mxu0 %v1522
          %1991 = vmatpush1.msra.mxu0 %v1521
          %1992 = vmatprep.subr.mxu0 %v1526
          %1993 = vmatpush1.msra.mxu0 %v1525
          %1994 = vmatprep.subr.mxu0 %v1530
          %1995 = vmatpush1.msra.mxu0 %v1529
          %1996 = vmatprep.subr.mxu0 %v1534
          %1997 = vmatpush1.msra.mxu0 %v1533
          %1998 = vmatprep.subr.mxu0 %v1538
          %1999 = vmatpush1.msra.mxu0 %v1537
          %2000 = vmatprep.subr.mxu0 %v1542
          %2001 = vmatpush1.msra.mxu0 %v1541
          %2002 = vmatprep.subr.mxu0 %v1546
          %2003 = vmatpush1.msra.mxu0 %v1545
          %2004 = vmatprep.subr.mxu0 %v1550
          %2005 = vmatpush1.msra.mxu0 %v1549
          %2006 = vmatprep.subr.mxu0 %v1554
          %2007 = vmatpush1.msra.mxu0 %v1553
          %2008 = vmatprep.subr.mxu0 %v1558
          %2009 = vmatpush1.msra.mxu0 %v1557
          %2010 = vmatprep.subr.mxu0 %v1562
          %2011 = vmatpush1.msra.mxu0 %v1561
          %2012 = vmatprep.subr.mxu0 %v1566
          %2013 = vmatpush1.msra.mxu0 %v1565
          %2014 = vmatprep.subr.mxu0 %v1570
          %2015 = vmatpush1.msra.mxu0 %v1569
          %2016 = vmatprep.subr.mxu0 %v1574
          %2017 = vmatpush1.msra.mxu0 %v1573
          %2018 = vmatprep.subr.mxu0 %v1578
          %2019 = vmatpush1.msra.mxu0 %v1577
          %2020 = vmatprep.subr.mxu0 %v1582
          %2021 = vmatpush1.msra.mxu0 %v1581
          %2022 = vmatprep.subr.mxu0 %v1586
          %2023 = vmatpush1.msra.mxu0 %v1585
          %2024 = vmatprep.subr.mxu0 %v1590
          %2025 = vmatpush1.msra.mxu0 %v1589
          %2026 = vmatprep.subr.mxu0 %v1594
          %2027 = vmatpush1.msra.mxu0 %v1593
          %2028 = vmatprep.subr.mxu0 %v1598
          %2029 = vmatpush1.msra.mxu0 %v1597
          %2030 = vmatprep.subr.mxu0 %v1602
          %2031 = vmatpush1.msra.mxu0 %v1601
          %2032 = vmatprep.subr.mxu0 %v1606
          %2033 = vmatpush1.msra.mxu0 %v1605
          %2034 = vmatprep.subr.mxu0 %v1610
          %2035 = vmatpush1.msra.mxu0 %v1609
          %2036 = vmatprep.subr.mxu0 %v1614
          %2037 = vmatpush1.msra.mxu0 %v1613
          %2038 = vmatprep.subr.mxu0 %v1618
          %2039 = vmatpush1.msra.mxu0 %v1617
          %2040 = vmatprep.subr.mxu0 %v1622
          %2041 = vmatpush1.msra.mxu0 %v1621
          %2042 = vmatprep.subr.mxu0 %v1626
          %2043 = vmatpush1.msra.mxu0 %v1625
          %2044 = vmatprep.subr.mxu0 %v1630
          %2045 = vmatpush1.msra.mxu0 %v1629
          %2046 = vmatprep.mubr.f32.mxu0 %v1372
          %2047 = vmatmul.mubr.f32.gmra.mrb[0].mxu0 %v1371
          %v2048 = vpop.f32.mrb[0].mxu0
          %v2049 = vadd.f32 %v1978, %v2048
          %v2050 = vpop.f32.mrb[0].mxu0
          %v2051 = vadd.f32 %v1980, %v2050
          %2052 = vdwg.mxu0
          %2053 = vmatprep.subr.mxu0 %v1634
          %2054 = vmatpush1.msra.mxu0 %v1633
          %2055 = vmatprep.subr.mxu0 %v1638
          %2056 = vmatpush1.msra.mxu0 %v1637
          %2057 = vmatprep.subr.mxu0 %v1642
          %2058 = vmatpush1.msra.mxu0 %v1641
          %2059 = vmatprep.subr.mxu0 %v1646
          %2060 = vmatpush1.msra.mxu0 %v1645
          %2061 = vmatprep.subr.mxu0 %v1650
          %2062 = vmatpush1.msra.mxu0 %v1649
          %2063 = vmatprep.subr.mxu0 %v1654
          %2064 = vmatpush1.msra.mxu0 %v1653
          %2065 = vmatprep.subr.mxu0 %v1658
          %2066 = vmatpush1.msra.mxu0 %v1657
          %2067 = vmatprep.subr.mxu0 %v1662
          %2068 = vmatpush1.msra.mxu0 %v1661
          %2069 = vmatprep.subr.mxu0 %v1666
          %2070 = vmatpush1.msra.mxu0 %v1665
          %2071 = vmatprep.subr.mxu0 %v1670
          %2072 = vmatpush1.msra.mxu0 %v1669
          %2073 = vmatprep.subr.mxu0 %v1674
          %2074 = vmatpush1.msra.mxu0 %v1673
          %2075 = vmatprep.subr.mxu0 %v1678
          %2076 = vmatpush1.msra.mxu0 %v1677
          %2077 = vmatprep.subr.mxu0 %v1682
          %2078 = vmatpush1.msra.mxu0 %v1681
          %2079 = vmatprep.subr.mxu0 %v1686
          %2080 = vmatpush1.msra.mxu0 %v1685
          %2081 = vmatprep.subr.mxu0 %v1690
          %2082 = vmatpush1.msra.mxu0 %v1689
          %2083 = vmatprep.subr.mxu0 %v1694
          %2084 = vmatpush1.msra.mxu0 %v1693
          %2085 = vmatprep.subr.mxu0 %v1698
          %2086 = vmatpush1.msra.mxu0 %v1697
          %2087 = vmatprep.subr.mxu0 %v1702
          %2088 = vmatpush1.msra.mxu0 %v1701
          %2089 = vmatprep.subr.mxu0 %v1706
          %2090 = vmatpush1.msra.mxu0 %v1705
          %2091 = vmatprep.subr.mxu0 %v1710
          %2092 = vmatpush1.msra.mxu0 %v1709
          %2093 = vmatprep.subr.mxu0 %v1714
          %2094 = vmatpush1.msra.mxu0 %v1713
          %2095 = vmatprep.subr.mxu0 %v1718
          %2096 = vmatpush1.msra.mxu0 %v1717
          %2097 = vmatprep.subr.mxu0 %v1722
          %2098 = vmatpush1.msra.mxu0 %v1721
          %2099 = vmatprep.subr.mxu0 %v1726
          %2100 = vmatpush1.msra.mxu0 %v1725
          %2101 = vmatprep.subr.mxu0 %v1730
          %2102 = vmatpush1.msra.mxu0 %v1729
          %2103 = vmatprep.subr.mxu0 %v1734
          %2104 = vmatpush1.msra.mxu0 %v1733
          %2105 = vmatprep.subr.mxu0 %v1738
          %2106 = vmatpush1.msra.mxu0 %v1737
          %2107 = vmatprep.subr.mxu0 %v1742
          %2108 = vmatpush1.msra.mxu0 %v1741
          %2109 = vmatprep.subr.mxu0 %v1746
          %2110 = vmatpush1.msra.mxu0 %v1745
          %2111 = vmatprep.subr.mxu0 %v1750
          %2112 = vmatpush1.msra.mxu0 %v1749
          %2113 = vmatprep.subr.mxu0 %v1754
          %2114 = vmatpush1.msra.mxu0 %v1753
          %2115 = vmatprep.subr.mxu0 %v1758
          %2116 = vmatpush1.msra.mxu0 %v1757
          %2117 = vmatprep.mubr.f32.mxu0 %v1374
          %2118 = vmatmul.mubr.f32.gmra.mrb[0].mxu0 %v1373
          %v2119 = vpop.f32.mrb[0].mxu0
          %v2120 = vadd.f32 %v2049, %v2119
          %v2121 = vpop.f32.mrb[0].mxu0
          %v2122 = vadd.f32 %v2051, %v2121
          %2123 = vdwg.mxu0
          %2124 = vmatprep.subr.mxu0 %v1762
          %2125 = vmatpush1.msra.mxu0 %v1761
          %2126 = vmatprep.subr.mxu0 %v1766
          %2127 = vmatpush1.msra.mxu0 %v1765
          %2128 = vmatprep.subr.mxu0 %v1770
          %2129 = vmatpush1.msra.mxu0 %v1769
          %2130 = vmatprep.subr.mxu0 %v1774
          %2131 = vmatpush1.msra.mxu0 %v1773
          %2132 = vmatprep.subr.mxu0 %v1778
          %2133 = vmatpush1.msra.mxu0 %v1777
          %2134 = vmatprep.subr.mxu0 %v1782
          %2135 = vmatpush1.msra.mxu0 %v1781
          %2136 = vmatprep.subr.mxu0 %v1786
          %2137 = vmatpush1.msra.mxu0 %v1785
          %2138 = vmatprep.subr.mxu0 %v1790
          %2139 = vmatpush1.msra.mxu0 %v1789
          %2140 = vmatprep.subr.mxu0 %v1794
          %2141 = vmatpush1.msra.mxu0 %v1793
          %2142 = vmatprep.subr.mxu0 %v1798
          %2143 = vmatpush1.msra.mxu0 %v1797
          %2144 = vmatprep.subr.mxu0 %v1802
          %2145 = vmatpush1.msra.mxu0 %v1801
          %2146 = vmatprep.subr.mxu0 %v1806
          %2147 = vmatpush1.msra.mxu0 %v1805
          %2148 = vmatprep.subr.mxu0 %v1810
          %2149 = vmatpush1.msra.mxu0 %v1809
          %2150 = vmatprep.subr.mxu0 %v1814
          %2151 = vmatpush1.msra.mxu0 %v1813
          %2152 = vmatprep.subr.mxu0 %v1818
          %2153 = vmatpush1.msra.mxu0 %v1817
          %2154 = vmatprep.subr.mxu0 %v1822
          %2155 = vmatpush1.msra.mxu0 %v1821
          %2156 = vmatprep.subr.mxu0 %v1826
          %2157 = vmatpush1.msra.mxu0 %v1825
          %2158 = vmatprep.subr.mxu0 %v1830
          %2159 = vmatpush1.msra.mxu0 %v1829
          %2160 = vmatprep.subr.mxu0 %v1834
          %2161 = vmatpush1.msra.mxu0 %v1833
          %2162 = vmatprep.subr.mxu0 %v1838
          %2163 = vmatpush1.msra.mxu0 %v1837
          %2164 = vmatprep.subr.mxu0 %v1842
          %2165 = vmatpush1.msra.mxu0 %v1841
          %2166 = vmatprep.subr.mxu0 %v1846
          %2167 = vmatpush1.msra.mxu0 %v1845
          %2168 = vmatprep.subr.mxu0 %v1850
          %2169 = vmatpush1.msra.mxu0 %v1849
          %2170 = vmatprep.subr.mxu0 %v1854
          %2171 = vmatpush1.msra.mxu0 %v1853
          %2172 = vmatprep.subr.mxu0 %v1858
          %2173 = vmatpush1.msra.mxu0 %v1857
          %2174 = vmatprep.subr.mxu0 %v1862
          %2175 = vmatpush1.msra.mxu0 %v1861
          %2176 = vmatprep.subr.mxu0 %v1866
          %2177 = vmatpush1.msra.mxu0 %v1865
          %2178 = vmatprep.subr.mxu0 %v1870
          %2179 = vmatpush1.msra.mxu0 %v1869
          %2180 = vmatprep.subr.mxu0 %v1874
          %2181 = vmatpush1.msra.mxu0 %v1873
          %2182 = vmatprep.subr.mxu0 %v1878
          %2183 = vmatpush1.msra.mxu0 %v1877
          %2184 = vmatprep.subr.mxu0 %v1882
          %2185 = vmatpush1.msra.mxu0 %v1881
          %2186 = vmatprep.subr.mxu0 %v1886
          %2187 = vmatpush1.msra.mxu0 %v1885
          %2188 = vmatprep.mubr.f32.mxu0 %v1376
          %2189 = vmatmul.mubr.f32.gmra.mrb[0].mxu0 %v1375
          %v2190 = vpop.f32.mrb[0].mxu0
          %v2191 = vadd.f32 %v2120, %v2190
          %v2192 = vpop.f32.mrb[0].mxu0
          %v2193 = vadd.f32 %v2122, %v2192
          %2194 = vdwg.mxu0
          %2195 = vmatprep.subr.mxu0 %v1380
          %2196 = vmatpush1.msra.mxu0 %v1379
          %2197 = vmatprep.subr.mxu0 %v1384
          %2198 = vmatpush1.msra.mxu0 %v1383
          %2199 = vmatprep.subr.mxu0 %v1388
          %2200 = vmatpush1.msra.mxu0 %v1387
          %2201 = vmatprep.subr.mxu0 %v1392
          %2202 = vmatpush1.msra.mxu0 %v1391
          %2203 = vmatprep.subr.mxu0 %v1396
          %2204 = vmatpush1.msra.mxu0 %v1395
          %2205 = vmatprep.subr.mxu0 %v1400
          %2206 = vmatpush1.msra.mxu0 %v1399
          %2207 = vmatprep.subr.mxu0 %v1404
          %2208 = vmatpush1.msra.mxu0 %v1403
          %2209 = vmatprep.subr.mxu0 %v1408
          %2210 = vmatpush1.msra.mxu0 %v1407
          %2211 = vmatprep.subr.mxu0 %v1412
          %2212 = vmatpush1.msra.mxu0 %v1411
          %2213 = vmatprep.subr.mxu0 %v1416
          %2214 = vmatpush1.msra.mxu0 %v1415
          %2215 = vmatprep.subr.mxu0 %v1420
          %2216 = vmatpush1.msra.mxu0 %v1419
          %2217 = vmatprep.subr.mxu0 %v1424
          %2218 = vmatpush1.msra.mxu0 %v1423
          %2219 = vmatprep.subr.mxu0 %v1428
          %2220 = vmatpush1.msra.mxu0 %v1427
          %2221 = vmatprep.subr.mxu0 %v1432
          %2222 = vmatpush1.msra.mxu0 %v1431
          %2223 = vmatprep.subr.mxu0 %v1436
          %2224 = vmatpush1.msra.mxu0 %v1435
          %2225 = vmatprep.subr.mxu0 %v1440
          %2226 = vmatpush1.msra.mxu0 %v1439
          %2227 = vmatprep.subr.mxu0 %v1444
          %2228 = vmatpush1.msra.mxu0 %v1443
          %2229 = vmatprep.subr.mxu0 %v1448
          %2230 = vmatpush1.msra.mxu0 %v1447
          %2231 = vmatprep.subr.mxu0 %v1452
          %2232 = vmatpush1.msra.mxu0 %v1451
          %2233 = vmatprep.subr.mxu0 %v1456
          %2234 = vmatpush1.msra.mxu0 %v1455
          %2235 = vmatprep.subr.mxu0 %v1460
          %2236 = vmatpush1.msra.mxu0 %v1459
          %2237 = vmatprep.subr.mxu0 %v1464
          %2238 = vmatpush1.msra.mxu0 %v1463
          %2239 = vmatprep.subr.mxu0 %v1468
          %2240 = vmatpush1.msra.mxu0 %v1467
          %2241 = vmatprep.subr.mxu0 %v1472
          %2242 = vmatpush1.msra.mxu0 %v1471
          %2243 = vmatprep.subr.mxu0 %v1476
          %2244 = vmatpush1.msra.mxu0 %v1475
          %2245 = vmatprep.subr.mxu0 %v1480
          %2246 = vmatpush1.msra.mxu0 %v1479
          %2247 = vmatprep.subr.mxu0 %v1484
          %2248 = vmatpush1.msra.mxu0 %v1483
          %2249 = vmatprep.subr.mxu0 %v1488
          %2250 = vmatpush1.msra.mxu0 %v1487
          %2251 = vmatprep.subr.mxu0 %v1492
          %2252 = vmatpush1.msra.mxu0 %v1491
          %2253 = vmatprep.subr.mxu0 %v1496
          %2254 = vmatpush1.msra.mxu0 %v1495
          %2255 = vmatprep.subr.mxu0 %v1500
          %2256 = vmatpush1.msra.mxu0 %v1499
          %2257 = vmatprep.subr.mxu0 %v1504
          %2258 = vmatpush1.msra.mxu0 %v1503
          %2259 = vmatprep.mubr.f32.mxu0 %v1370
          %2260 = vmatmul.mubr.f32.gmra.mrb[0].mxu0 %v1369
          %v2261 = vpop.f32.mrb[0].mxu0
          %v2262 = vadd.f32 %v1902, %v2261
          %v2263 = vpop.f32.mrb[0].mxu0
          %v2264 = vadd.f32 %v1906, %v2263
          %2265 = vdwg.mxu0
          %2266 = vmatprep.subr.mxu0 %v1508
          %2267 = vmatpush1.msra.mxu0 %v1507
          %2268 = vmatprep.subr.mxu0 %v1512
          %2269 = vmatpush1.msra.mxu0 %v1511
          %2270 = vmatprep.subr.mxu0 %v1516
          %2271 = vmatpush1.msra.mxu0 %v1515
          %2272 = vmatprep.subr.mxu0 %v1520
          %2273 = vmatpush1.msra.mxu0 %v1519
          %2274 = vmatprep.subr.mxu0 %v1524
          %2275 = vmatpush1.msra.mxu0 %v1523
          %2276 = vmatprep.subr.mxu0 %v1528
          %2277 = vmatpush1.msra.mxu0 %v1527
          %2278 = vmatprep.subr.mxu0 %v1532
          %2279 = vmatpush1.msra.mxu0 %v1531
          %2280 = vmatprep.subr.mxu0 %v1536
          %2281 = vmatpush1.msra.mxu0 %v1535
          %2282 = vmatprep.subr.mxu0 %v1540
          %2283 = vmatpush1.msra.mxu0 %v1539
          %2284 = vmatprep.subr.mxu0 %v1544
          %2285 = vmatpush1.msra.mxu0 %v1543
          %2286 = vmatprep.subr.mxu0 %v1548
          %2287 = vmatpush1.msra.mxu0 %v1547
          %2288 = vmatprep.subr.mxu0 %v1552
          %2289 = vmatpush1.msra.mxu0 %v1551
          %2290 = vmatprep.subr.mxu0 %v1556
          %2291 = vmatpush1.msra.mxu0 %v1555
          %2292 = vmatprep.subr.mxu0 %v1560
          %2293 = vmatpush1.msra.mxu0 %v1559
          %2294 = vmatprep.subr.mxu0 %v1564
          %2295 = vmatpush1.msra.mxu0 %v1563
          %2296 = vmatprep.subr.mxu0 %v1568
          %2297 = vmatpush1.msra.mxu0 %v1567
          %2298 = vmatprep.subr.mxu0 %v1572
          %2299 = vmatpush1.msra.mxu0 %v1571
          %2300 = vmatprep.subr.mxu0 %v1576
          %2301 = vmatpush1.msra.mxu0 %v1575
          %2302 = vmatprep.subr.mxu0 %v1580
          %2303 = vmatpush1.msra.mxu0 %v1579
          %2304 = vmatprep.subr.mxu0 %v1584
          %2305 = vmatpush1.msra.mxu0 %v1583
          %2306 = vmatprep.subr.mxu0 %v1588
          %2307 = vmatpush1.msra.mxu0 %v1587
          %2308 = vmatprep.subr.mxu0 %v1592
          %2309 = vmatpush1.msra.mxu0 %v1591
          %2310 = vmatprep.subr.mxu0 %v1596
          %2311 = vmatpush1.msra.mxu0 %v1595
          %2312 = vmatprep.subr.mxu0 %v1600
          %2313 = vmatpush1.msra.mxu0 %v1599
          %2314 = vmatprep.subr.mxu0 %v1604
          %2315 = vmatpush1.msra.mxu0 %v1603
          %2316 = vmatprep.subr.mxu0 %v1608
          %2317 = vmatpush1.msra.mxu0 %v1607
          %2318 = vmatprep.subr.mxu0 %v1612
          %2319 = vmatpush1.msra.mxu0 %v1611
          %2320 = vmatprep.subr.mxu0 %v1616
          %2321 = vmatpush1.msra.mxu0 %v1615
          %2322 = vmatprep.subr.mxu0 %v1620
          %2323 = vmatpush1.msra.mxu0 %v1619
          %2324 = vmatprep.subr.mxu0 %v1624
          %2325 = vmatpush1.msra.mxu0 %v1623
          %2326 = vmatprep.subr.mxu0 %v1628
          %2327 = vmatpush1.msra.mxu0 %v1627
          %2328 = vmatprep.subr.mxu0 %v1632
          %2329 = vmatpush1.msra.mxu0 %v1631
          %2330 = vmatprep.mubr.f32.mxu0 %v1372
          %2331 = vmatmul.mubr.f32.gmra.mrb[0].mxu0 %v1371
          %v2332 = vpop.f32.mrb[0].mxu0
          %v2333 = vadd.f32 %v2262, %v2332
          %v2334 = vpop.f32.mrb[0].mxu0
          %v2335 = vadd.f32 %v2264, %v2334
          %2336 = vdwg.mxu0
          %2337 = vmatprep.subr.mxu0 %v1636
          %2338 = vmatpush1.msra.mxu0 %v1635
          %2339 = vmatprep.subr.mxu0 %v1640
          %2340 = vmatpush1.msra.mxu0 %v1639
          %2341 = vmatprep.subr.mxu0 %v1644
          %2342 = vmatpush1.msra.mxu0 %v1643
          %2343 = vmatprep.subr.mxu0 %v1648
          %2344 = vmatpush1.msra.mxu0 %v1647
          %2345 = vmatprep.subr.mxu0 %v1652
          %2346 = vmatpush1.msra.mxu0 %v1651
          %2347 = vmatprep.subr.mxu0 %v1656
          %2348 = vmatpush1.msra.mxu0 %v1655
          %2349 = vmatprep.subr.mxu0 %v1660
          %2350 = vmatpush1.msra.mxu0 %v1659
          %2351 = vmatprep.subr.mxu0 %v1664
          %2352 = vmatpush1.msra.mxu0 %v1663
          %2353 = vmatprep.subr.mxu0 %v1668
          %2354 = vmatpush1.msra.mxu0 %v1667
          %2355 = vmatprep.subr.mxu0 %v1672
          %2356 = vmatpush1.msra.mxu0 %v1671
          %2357 = vmatprep.subr.mxu0 %v1676
          %2358 = vmatpush1.msra.mxu0 %v1675
          %2359 = vmatprep.subr.mxu0 %v1680
          %2360 = vmatpush1.msra.mxu0 %v1679
          %2361 = vmatprep.subr.mxu0 %v1684
          %2362 = vmatpush1.msra.mxu0 %v1683
          %2363 = vmatprep.subr.mxu0 %v1688
          %2364 = vmatpush1.msra.mxu0 %v1687
          %2365 = vmatprep.subr.mxu0 %v1692
          %2366 = vmatpush1.msra.mxu0 %v1691
          %2367 = vmatprep.subr.mxu0 %v1696
          %2368 = vmatpush1.msra.mxu0 %v1695
          %2369 = vmatprep.subr.mxu0 %v1700
          %2370 = vmatpush1.msra.mxu0 %v1699
          %2371 = vmatprep.subr.mxu0 %v1704
          %2372 = vmatpush1.msra.mxu0 %v1703
          %2373 = vmatprep.subr.mxu0 %v1708
          %2374 = vmatpush1.msra.mxu0 %v1707
          %2375 = vmatprep.subr.mxu0 %v1712
          %2376 = vmatpush1.msra.mxu0 %v1711
          %2377 = vmatprep.subr.mxu0 %v1716
          %2378 = vmatpush1.msra.mxu0 %v1715
          %2379 = vmatprep.subr.mxu0 %v1720
          %2380 = vmatpush1.msra.mxu0 %v1719
          %2381 = vmatprep.subr.mxu0 %v1724
          %2382 = vmatpush1.msra.mxu0 %v1723
          %2383 = vmatprep.subr.mxu0 %v1728
          %2384 = vmatpush1.msra.mxu0 %v1727
          %2385 = vmatprep.subr.mxu0 %v1732
          %2386 = vmatpush1.msra.mxu0 %v1731
          %2387 = vmatprep.subr.mxu0 %v1736
          %2388 = vmatpush1.msra.mxu0 %v1735
          %2389 = vmatprep.subr.mxu0 %v1740
          %2390 = vmatpush1.msra.mxu0 %v1739
          %2391 = vmatprep.subr.mxu0 %v1744
          %2392 = vmatpush1.msra.mxu0 %v1743
          %2393 = vmatprep.subr.mxu0 %v1748
          %2394 = vmatpush1.msra.mxu0 %v1747
          %2395 = vmatprep.subr.mxu0 %v1752
          %2396 = vmatpush1.msra.mxu0 %v1751
          %2397 = vmatprep.subr.mxu0 %v1756
          %2398 = vmatpush1.msra.mxu0 %v1755
          %2399 = vmatprep.subr.mxu0 %v1760
          %2400 = vmatpush1.msra.mxu0 %v1759
          %2401 = vmatprep.mubr.f32.mxu0 %v1374
          %2402 = vmatmul.mubr.f32.gmra.mrb[0].mxu0 %v1373
          %v2403 = vpop.f32.mrb[0].mxu0
          %v2404 = vadd.f32 %v2333, %v2403
          %v2405 = vpop.f32.mrb[0].mxu0
          %v2406 = vadd.f32 %v2335, %v2405
          %2407 = vdwg.mxu0
          %2408 = vmatprep.subr.mxu0 %v1764
          %2409 = vmatpush1.msra.mxu0 %v1763
          %2410 = vmatprep.subr.mxu0 %v1768
          %2411 = vmatpush1.msra.mxu0 %v1767
          %2412 = vmatprep.subr.mxu0 %v1772
          %2413 = vmatpush1.msra.mxu0 %v1771
          %2414 = vmatprep.subr.mxu0 %v1776
          %2415 = vmatpush1.msra.mxu0 %v1775
          %2416 = vmatprep.subr.mxu0 %v1780
          %2417 = vmatpush1.msra.mxu0 %v1779
          %2418 = vmatprep.subr.mxu0 %v1784
          %2419 = vmatpush1.msra.mxu0 %v1783
          %2420 = vmatprep.subr.mxu0 %v1788
          %2421 = vmatpush1.msra.mxu0 %v1787
          %2422 = vmatprep.subr.mxu0 %v1792
          %2423 = vmatpush1.msra.mxu0 %v1791
          %2424 = vmatprep.subr.mxu0 %v1796
          %2425 = vmatpush1.msra.mxu0 %v1795
          %2426 = vmatprep.subr.mxu0 %v1800
          %2427 = vmatpush1.msra.mxu0 %v1799
          %2428 = vmatprep.subr.mxu0 %v1804
          %2429 = vmatpush1.msra.mxu0 %v1803
          %2430 = vmatprep.subr.mxu0 %v1808
          %2431 = vmatpush1.msra.mxu0 %v1807
          %2432 = vmatprep.subr.mxu0 %v1812
          %2433 = vmatpush1.msra.mxu0 %v1811
          %2434 = vmatprep.subr.mxu0 %v1816
          %2435 = vmatpush1.msra.mxu0 %v1815
          %2436 = vmatprep.subr.mxu0 %v1820
          %2437 = vmatpush1.msra.mxu0 %v1819
          %2438 = vmatprep.subr.mxu0 %v1824
          %2439 = vmatpush1.msra.mxu0 %v1823
          %2440 = vmatprep.subr.mxu0 %v1828
          %2441 = vmatpush1.msra.mxu0 %v1827
          %2442 = vmatprep.subr.mxu0 %v1832
          %2443 = vmatpush1.msra.mxu0 %v1831
          %2444 = vmatprep.subr.mxu0 %v1836
          %2445 = vmatpush1.msra.mxu0 %v1835
          %2446 = vmatprep.subr.mxu0 %v1840
          %2447 = vmatpush1.msra.mxu0 %v1839
          %2448 = vmatprep.subr.mxu0 %v1844
          %2449 = vmatpush1.msra.mxu0 %v1843
          %2450 = vmatprep.subr.mxu0 %v1848
          %2451 = vmatpush1.msra.mxu0 %v1847
          %2452 = vmatprep.subr.mxu0 %v1852
          %2453 = vmatpush1.msra.mxu0 %v1851
          %2454 = vmatprep.subr.mxu0 %v1856
          %2455 = vmatpush1.msra.mxu0 %v1855
          %2456 = vmatprep.subr.mxu0 %v1860
          %2457 = vmatpush1.msra.mxu0 %v1859
          %2458 = vmatprep.subr.mxu0 %v1864
          %2459 = vmatpush1.msra.mxu0 %v1863
          %2460 = vmatprep.subr.mxu0 %v1868
          %2461 = vmatpush1.msra.mxu0 %v1867
          %2462 = vmatprep.subr.mxu0 %v1872
          %2463 = vmatpush1.msra.mxu0 %v1871
          %2464 = vmatprep.subr.mxu0 %v1876
          %2465 = vmatpush1.msra.mxu0 %v1875
          %2466 = vmatprep.subr.mxu0 %v1880
          %2467 = vmatpush1.msra.mxu0 %v1879
          %2468 = vmatprep.subr.mxu0 %v1884
          %2469 = vmatpush1.msra.mxu0 %v1883
          %2470 = vmatprep.subr.mxu0 %v1888
          %2471 = vmatpush1.msra.mxu0 %v1887
          %2472 = vmatprep.mubr.f32.mxu0 %v1376
          %2473 = vmatmul.mubr.f32.gmra.mrb[0].mxu0 %v1375
          %v2474 = vpop.f32.mrb[0].mxu0
          %v2475 = vadd.f32 %v2404, %v2474
          %v2476 = vpop.f32.mrb[0].mxu0
          %v2477 = vadd.f32 %v2406, %v2476
          %2478 = vdwg.mxu0
          %s2479 = sshra.s32 %s226, 7
          %s2480 = sand.u32 %s226, 127
          %s2481 = smul.addr %s2479, 8
          %s2482 = scalar_lea.vmem %s3, %s2481
          %v2483 = vld [vmem:[%s2482] sm:$0xff]
          %v2484 = vld [vmem:[%s2482 + $0x8] sm:$0xff]
          %v2485 = vld [vmem:[%s2482 + $0x10] sm:$0xff]
          %v2486 = vld [vmem:[%s2482 + $0x18] sm:$0xff]
          %v2487 = vadd.f32 %v2191, %v2483
          %v2488 = vadd.f32 %v2193, %v2484
          %v2489 = vadd.f32 %v2475, %v2485
          %v2490 = vadd.f32 %v2477, %v2486
          %v2491 = vmax.f32 %v2487, 0.0
          %v2492 = vmax.f32 %v2488, 0.0
          %v2493 = vmax.f32 %v2489, 0.0
          %v2494 = vmax.f32 %v2490, 0.0
          %2495 = vst [vmem:[%s2482] sm:$0xff] %v2491
          %2496 = vst [vmem:[%s2482 + $0x8] sm:$0xff] %v2492
          %2497 = vst [vmem:[%s2482 + $0x10] sm:$0xff] %v2493
          %2498 = vst [vmem:[%s2482 + $0x18] sm:$0xff] %v2494
        $region48: #{deepcube_a_core.5} parent=31 // pred_fallthru
          _
        // Predicated region
        $region49: #{deepcube_a_core.5} parent=31 // pred_check
          %p2499 = pneg %p119
        $region50: #{deepcube_a_core.5} parent=31 // pred_check_branch
          %2501 = sbr.rel (%p2499) target = $region52
        $region51: #{deepcube_a_core.5} parent=31 // pred_region
          _
        $region52: #{deepcube_a_core.5} parent=31 // pred_fallthru
          _
        // Predicated region
        $region53: #{deepcube_a_core.5} parent=31 // pred_check
          %p2502 = pneg %p119
        $region54: #{deepcube_a_core.5} parent=31 // pred_check_branch
          %2504 = sbr.rel (%p2502) target = $region56
        $region55: #{deepcube_a_core.5} parent=31 // pred_region
          _
        $region56: #{deepcube_a_core.5} parent=31 // pred_fallthru
          _
      $region32: #{deepcube_a_core.5} parent=5 // pred_fallthru
        _
      %p2505 = scmp.le.s32.totalorder 2, %s12
      // Predicated region
      $region57: #{deepcube_a_core.5} parent=5 // pred_check
        %p2506 = pneg %p2505
      $region58: #{deepcube_a_core.5} parent=5 // pred_check_branch
        %2508 = sbr.rel (%p2506) target = $region60
      $region59: #{deepcube_a_core.5} parent=5 // pred_region
        %s2509 = ssub.s32 %s12, 2
      $region60: #{deepcube_a_core.5} parent=5 // pred_fallthru
        _
    $region6: #{deepcube_a_core.5} parent=1 // loop_footer
      %s16 = sadd.s32 1, %s12
    $region7: #{deepcube_a_core.5} parent=1 // loop_footer_branch
      %11 = sbr.rel target = $region3
    $region8: #{deepcube_a_core.5} parent=1 // loop_exit
      _
    %2510 = vsyncpa [#allocation4], 1
    %s2511 = scalar_lea.sflag [#allocation4], 1
    %2512 = vsyncpa %s2511, 1

// kernel: deepcube_a_core.3
$region0: #{deepcube_a_core.3}
  #allocation0 [shape = 'u32[]', space=smem, size = 0x4, offset = 0x4, fixed_abs, tag = 'smem constant byte address 0x4 - core index']
  #allocation1 [shape = 'u32[144,128]{1,0:T(1,128)}', space=vmem, size = 0x12000, scoped, tag = 'internal scratch']
  %s0 = inlined_call_operand.vmem [shape: f32[8,384], index: 0, kind: input, shape index: {}]
  %s1 = inlined_call_operand.hbm [shape: f32[384,5120], index: 1, kind: input, shape index: {}]
  %s2 = inlined_call_operand.vmem [shape: f32[8,5120], index: 2, kind: output, shape index: {}]
  %s3 = sld [smem:[#allocation0]]
  $region57: #{deepcube_a_core.3} parent=0
    _
  %s5 = ssub.s32 1, %s3
  %s6 = scalar_select 0, %s5, %s3
  $region1: #{deepcube_a_core.3} parent=0
    #allocation2 [shape = 'u8[3932160]{0}', space=vmem, size = 0x3c0000, scoped, tag = 'input window, operand 1']
    #allocation3 [shape = 's32[2]{0}', space=sflag, size = 0x8, scoped, tag = 'scoped memory for deepcube_a_core.3']
    %7 = vsyncpa [#allocation3], 0
    %s8 = scalar_lea.sflag [#allocation3], 1
    %9 = vsyncpa %s8, 0
    loop: start=0, step=1, limit=6
    $region2: #{deepcube_a_core.3} parent=1 // loop_pre_header
      _
    $region3: #{deepcube_a_core.3} parent=1 // loop_header
      %s11 = sphi 0, %s15
      %p12 = scmp.ge.s32.totalorder %s11, 6
      %s18 = sphi 0, %s30
      %s19 = sphi 0, %s26
      %s20 = sphi 0, %s18
      %s21 = sphi 0, %s19
      %s22 = sphi 0, %s20
      %s23 = sphi 0, %s21
      %s33 = sphi 0, %s35
      %s36 = sphi 0, %s33
      %s37 = sphi 0, %s36
      %s53 = sphi 0, %s37
      %s61 = sphi 0, %s63
      %s64 = sphi 0, %s61
      %s65 = sphi 0, %s64
      %s81 = sphi 0, %s65
      %s87 = sphi 0, %s89
      %s90 = sphi 0, %s87
      %s91 = sphi 0, %s90
      %s107 = sphi 0, %s91
    $region4: #{deepcube_a_core.3} parent=1 // loop_header_branch
      %14 = sbr.rel (%p12) target = $region8
    $region5: #{deepcube_a_core.3} parent=1 // loop_body
      %s16 = ssub.s32 %s11, 1
      %s17 = ssub.s32 %s11, 2
      %s24 = sadd.s32 1, %s19
      %p25 = scmp.ge.s32.totalorder %s24, 1
      %s26 = scalar_select %p25, 0, %s24
      %s27 = sadd.s32 1, %s18
      %s28 = scalar_select %p25, %s27, %s18
      %p29 = scmp.ge.s32.totalorder %s28, 4
      %s30 = scalar_select %p29, 0, %s28
      %s31 = ssub.s32 %s19, %s26
      %p32 = scmp.eq.s32.totalorder %s31, 0
      %s34 = sadd.s32 %s33, 1
      %s35 = scalar_select %p32, %s33, %s34
      %p38 = pneg %p32
      %p39 = scmp.eq.s32.totalorder %s11, 3
      %p40 = por %p38, %p39
      %p41 = scmp.ne.s32.totalorder %s33, %s36
      %p42 = scmp.eq.s32.totalorder %s11, 0
      %p43 = por %p41, %p42
      %p44 = scmp.ne.s32.totalorder %s33, %s36
      %p45 = scmp.eq.s32.totalorder %s16, 3
      %p46 = por %p44, %p45
      %p47 = scmp.ne.s32.totalorder %s36, %s37
      %p48 = scmp.eq.s32.totalorder %s16, 0
      %p49 = por %p47, %p48
      %p50 = scmp.ne.s32.totalorder %s36, %s37
      %p51 = scmp.eq.s32.totalorder %s17, 3
      %p52 = por %p50, %p51
      %p54 = scmp.ne.s32.totalorder %s37, %s53
      %p55 = scmp.eq.s32.totalorder %s17, 0
      %p56 = por %p54, %p55
      %s57 = ssub.s32 %s19, %s26
      %s58 = ssub.s32 %s18, %s30
      %s59 = sor.u32 %s57, %s58
      %p60 = scmp.eq.s32.totalorder %s59, 0
      %s62 = sadd.s32 %s61, 1
      %s63 = scalar_select %p60, %s61, %s62
      %p66 = pneg %p60
      %p67 = scmp.eq.s32.totalorder %s11, 3
      %p68 = por %p66, %p67
      %p69 = scmp.ne.s32.totalorder %s61, %s64
      %p70 = scmp.eq.s32.totalorder %s11, 0
      %p71 = por %p69, %p70
      %p72 = scmp.ne.s32.totalorder %s61, %s64
      %p73 = scmp.eq.s32.totalorder %s16, 3
      %p74 = por %p72, %p73
      %p75 = scmp.ne.s32.totalorder %s64, %s65
      %p76 = scmp.eq.s32.totalorder %s16, 0
      %p77 = por %p75, %p76
      %p78 = scmp.ne.s32.totalorder %s64, %s65
      %p79 = scmp.eq.s32.totalorder %s17, 3
      %p80 = por %p78, %p79
      %p82 = scmp.ne.s32.totalorder %s65, %s81
      %p83 = scmp.eq.s32.totalorder %s17, 0
      %p84 = por %p82, %p83
      %s85 = ssub.s32 %s18, %s30
      %p86 = scmp.eq.s32.totalorder %s85, 0
      %s88 = sadd.s32 %s87, 1
      %s89 = scalar_select %p86, %s87, %s88
      %p92 = pneg %p86
      %p93 = scmp.eq.s32.totalorder %s11, 3
      %p94 = por %p92, %p93
      %p95 = scmp.ne.s32.totalorder %s87, %s90
      %p96 = scmp.eq.s32.totalorder %s11, 0
      %p97 = por %p95, %p96
      %p98 = scmp.ne.s32.totalorder %s87, %s90
      %p99 = scmp.eq.s32.totalorder %s16, 3
      %p100 = por %p98, %p99
      %p101 = scmp.ne.s32.totalorder %s90, %s91
      %p102 = scmp.eq.s32.totalorder %s16, 0
      %p103 = por %p101, %p102
      %p104 = scmp.ne.s32.totalorder %s90, %s91
      %p105 = scmp.eq.s32.totalorder %s17, 3
      %p106 = por %p104, %p105
      %p108 = scmp.ne.s32.totalorder %s91, %s107
      %p109 = scmp.eq.s32.totalorder %s17, 0
      %p110 = por %p108, %p109
      %p111 = scmp.le.s32.totalorder 1, %s11
      %p112 = scmp.lt.s32.totalorder %s11, 5
      %p113 = pnand %p111, %p112
      %p114 = pneg %p113
      // Predicated region
      $region9: #{deepcube_a_core.3} parent=5 // pred_check
        _
      $region10: #{deepcube_a_core.3} parent=5 // pred_check_branch
        %116 = sbr.rel (%p113) target = $region12
      $region11: #{deepcube_a_core.3} parent=5 // pred_region
        %s117 = ssub.s32 %s11, 1
        // Predicated region
        $region13: #{deepcube_a_core.3} parent=11 // pred_check
          %p118 = pneg %p49
        $region14: #{deepcube_a_core.3} parent=11 // pred_check_branch
          %120 = sbr.rel (%p118) target = $region16
        $region15: #{deepcube_a_core.3} parent=11 // pred_region
          %s121 = smul.u32 3, %s21
          %p122 = scmp.lt.s32.totalorder %s121, 2
          %s123 = scalar_select %p122, %s121, 2
          %s124 = smul.addr %s123, 8
          %s125 = scalar_lea.vmem %s0, %s124
          %s126 = smul.u32 3, %s21
        $region16: #{deepcube_a_core.3} parent=11 // pred_fallthru
          _
      $region12: #{deepcube_a_core.3} parent=5 // pred_fallthru
        _
      %p127 = scmp.lt.s32.totalorder %s11, 4
      // Predicated region
      $region17: #{deepcube_a_core.3} parent=5 // pred_check
        %p128 = pneg %p127
      $region18: #{deepcube_a_core.3} parent=5 // pred_check_branch
        %130 = sbr.rel (%p128) target = $region20
      $region19: #{deepcube_a_core.3} parent=5 // pred_region
        // Predicated region
        $region21: #{deepcube_a_core.3} parent=19 // pred_check
          %p131 = pneg %p71
        $region22: #{deepcube_a_core.3} parent=19 // pred_check_branch
          %133 = sbr.rel (%p131) target = $region24
        $region23: #{deepcube_a_core.3} parent=19 // pred_region
          %s134 = sand.u32 %s61, 1
          %s135 = scalar_lea.sflag [#allocation3], %s134
          %s136 = sand.u32 %s61, 1
          %s137 = smul.addr %s136, 3840
          %s138 = scalar_lea.vmem [#allocation2], %s137
          %s139 = smul.u32 48, %s19
          %s140 = smul.u32 10, %s18
          %s142 = ssub.s32 61440, 61440
          %143 = vsyncadd %s135, %s142
          %s144 = smul.addr %s139, 40
          %s145 = sadd.s32 %s140, %s144
          %s146 = smul.addr %s145, 128
          %s147 = scalar_lea.hbm %s1, %s146
          %s148 = sshll.u32 %s138, 4
          %s149 = int_to_ptr.vmem [resolvable:$true] %s148
          %154 = dma.hbm_to_vmem [thread:$0]  %s147, 61440, %s149, %s135, 5120, 1280, 80
        $region24: #{deepcube_a_core.3} parent=19 // pred_fallthru
          _
      $region20: #{deepcube_a_core.3} parent=5 // pred_fallthru
        _
      %p155 = scmp.le.s32.totalorder 1, %s11
      %p156 = scmp.lt.s32.totalorder %s11, 5
      %p157 = pnand %p155, %p156
      %p158 = pneg %p157
      // Predicated region
      $region25: #{deepcube_a_core.3} parent=5 // pred_check
        _
      $region26: #{deepcube_a_core.3} parent=5 // pred_check_branch
        %160 = sbr.rel (%p157) target = $region28
      $region27: #{deepcube_a_core.3} parent=5 // pred_region
        %s161 = ssub.s32 %s11, 1
        %s162 = sand.u32 %s64, 1
        %s163 = scalar_lea.sflag [#allocation3], %s162
        %s164 = sand.u32 %s64, 1
        %s165 = smul.addr %s164, 3840
        %s166 = scalar_lea.vmem [#allocation2], %s165
        // Predicated region
        $region29: #{deepcube_a_core.3} parent=27 // pred_check
          %p167 = pneg %p77
        $region30: #{deepcube_a_core.3} parent=27 // pred_check_branch
          %169 = sbr.rel (%p167) target = $region32
        $region31: #{deepcube_a_core.3} parent=27 // pred_region
          %170 = dma.done %s163, 61440
        $region32: #{deepcube_a_core.3} parent=27 // pred_fallthru
          _
        %s171 = smul.u32 3, %s21
        %p172 = scmp.lt.s32.totalorder %s171, 2
        %s173 = scalar_select %p172, %s171, 2
        %s174 = smul.addr %s173, 8
        %s175 = scalar_lea.vmem %s0, %s174
        %p176 = pneg %p49
        %p177 = pneg %p46
        %s178 = sand.u32 %s64, 1
        %s179 = scalar_lea.sflag [#allocation3], %s178
        %s180 = sand.u32 %s64, 1
        %s181 = smul.addr %s180, 3840
        %s182 = scalar_lea.vmem [#allocation2], %s181
        %p183 = pneg %p77
        %p184 = pneg %p74
        %p185 = pneg %p103
        %p186 = pneg %p100
        %s187 = smul.u32 10, %s20
        %p188 = scmp.lt.s32.totalorder %s187, 39
        %s189 = scalar_select %p188, %s187, 39
        %s190 = smul.addr %s189, 8
        %s191 = scalar_lea.vmem %s2, %s190
        %s192 = smul.u32 3, %s21
        %p193 = scmp.lt.s32.totalorder %s192, 2
        %s194 = scalar_select %p193, %s192, 2
        %s195 = smul.addr %s194, 8
        %s196 = scalar_lea.vmem %s0, %s195
        %s197 = smul.u32 3, %s21
        %s198 = smul.u32 48, %s21
        %s199 = smul.u32 10, %s20
        %s200 = smul.u32 10, %s20
        %p201 = scmp.lt.s32.totalorder %s200, 39
        %s202 = scalar_select %p201, %s200, 39
        %s203 = smul.addr %s202, 8
        %s204 = scalar_lea.vmem %s2, %s203
        %s205 = smul.u32 10, %s20
        %v206 = vld [vmem:[%s196] sm:$0xff]
        %v207 = vld [vmem:[%s196 + $0x8] sm:$0xff]
        %v208 = vld [vmem:[%s196 + $0x10] sm:$0xff]
        %v209 = vld [vmem:[%s166] sm:$0xff]
        %v210 = vld [vmem:[%s166 + $0x8] sm:$0xff]
        %v211 = vld [vmem:[%s166 + $0x10] sm:$0xff]
        %v212 = vld [vmem:[%s166 + $0x18] sm:$0xff]
        %v213 = vld [vmem:[%s166 + $0x20] sm:$0xff]
        %v214 = vld [vmem:[%s166 + $0x28] sm:$0xff]
        %v215 = vld [vmem:[%s166 + $0x30] sm:$0xff]
        %v216 = vld [vmem:[%s166 + $0x38] sm:$0xff]
        %v217 = vld [vmem:[%s166 + $0x40] sm:$0xff]
        %v218 = vld [vmem:[%s166 + $0x48] sm:$0xff]
        %v219 = vld [vmem:[%s166 + $0x50] sm:$0xff]
        %v220 = vld [vmem:[%s166 + $0x58] sm:$0xff]
        %v221 = vld [vmem:[%s166 + $0x60] sm:$0xff]
        %v222 = vld [vmem:[%s166 + $0x68] sm:$0xff]
        %v223 = vld [vmem:[%s166 + $0x70] sm:$0xff]
        %v224 = vld [vmem:[%s166 + $0x78] sm:$0xff]
        %v225 = vld [vmem:[%s166 + $0x80] sm:$0xff]
        %v226 = vld [vmem:[%s166 + $0x88] sm:$0xff]
        %v227 = vld [vmem:[%s166 + $0x90] sm:$0xff]
        %v228 = vld [vmem:[%s166 + $0x98] sm:$0xff]
        %v229 = vld [vmem:[%s166 + $0xa0] sm:$0xff]
        %v230 = vld [vmem:[%s166 + $0xa8] sm:$0xff]
        %v231 = vld [vmem:[%s166 + $0xb0] sm:$0xff]
        %v232 = vld [vmem:[%s166 + $0xb8] sm:$0xff]
        %v233 = vld [vmem:[%s166 + $0xc0] sm:$0xff]
        %v234 = vld [vmem:[%s166 + $0xc8] sm:$0xff]
        %v235 = vld [vmem:[%s166 + $0xd0] sm:$0xff]
        %v236 = vld [vmem:[%s166 + $0xd8] sm:$0xff]
        %v237 = vld [vmem:[%s166 + $0xe0] sm:$0xff]
        %v238 = vld [vmem:[%s166 + $0xe8] sm:$0xff]
        %v239 = vld [vmem:[%s166 + $0xf0] sm:$0xff]
        %v240 = vld [vmem:[%s166 + $0xf8] sm:$0xff]
        %v241 = vld [vmem:[%s166 + $0x100] sm:$0xff]
        %v242 = vld [vmem:[%s166 + $0x108] sm:$0xff]
        %v243 = vld [vmem:[%s166 + $0x110] sm:$0xff]
        %v244 = vld [vmem:[%s166 + $0x118] sm:$0xff]
        %v245 = vld [vmem:[%s166 + $0x120] sm:$0xff]
        %v246 = vld [vmem:[%s166 + $0x128] sm:$0xff]
        %v247 = vld [vmem:[%s166 + $0x130] sm:$0xff]
        %v248 = vld [vmem:[%s166 + $0x138] sm:$0xff]
        %v249 = vld [vmem:[%s166 + $0x140] sm:$0xff]
        %v250 = vld [vmem:[%s166 + $0x148] sm:$0xff]
        %v251 = vld [vmem:[%s166 + $0x150] sm:$0xff]
        %v252 = vld [vmem:[%s166 + $0x158] sm:$0xff]
        %v253 = vld [vmem:[%s166 + $0x160] sm:$0xff]
        %v254 = vld [vmem:[%s166 + $0x168] sm:$0xff]
        %v255 = vld [vmem:[%s166 + $0x170] sm:$0xff]
        %v256 = vld [vmem:[%s166 + $0x178] sm:$0xff]
        %v257 = vld [vmem:[%s166 + $0x180] sm:$0xff]
        %v258 = vld [vmem:[%s166 + $0x188] sm:$0xff]
        %v259 = vld [vmem:[%s166 + $0x190] sm:$0xff]
        %v260 = vld [vmem:[%s166 + $0x198] sm:$0xff]
        %v261 = vld [vmem:[%s166 + $0x1a0] sm:$0xff]
        %v262 = vld [vmem:[%s166 + $0x1a8] sm:$0xff]
        %v263 = vld [vmem:[%s166 + $0x1b0] sm:$0xff]
        %v264 = vld [vmem:[%s166 + $0x1b8] sm:$0xff]
        %v265 = vld [vmem:[%s166 + $0x1c0] sm:$0xff]
        %v266 = vld [vmem:[%s166 + $0x1c8] sm:$0xff]
        %v267 = vld [vmem:[%s166 + $0x1d0] sm:$0xff]
        %v268 = vld [vmem:[%s166 + $0x1d8] sm:$0xff]
        %v269 = vld [vmem:[%s166 + $0x1e0] sm:$0xff]
        %v270 = vld [vmem:[%s166 + $0x1e8] sm:$0xff]
        %v271 = vld [vmem:[%s166 + $0x1f0] sm:$0xff]
        %v272 = vld [vmem:[%s166 + $0x1f8] sm:$0xff]
        %v273 = vld [vmem:[%s166 + $0x200] sm:$0xff]
        %v274 = vld [vmem:[%s166 + $0x208] sm:$0xff]
        %v275 = vld [vmem:[%s166 + $0x210] sm:$0xff]
        %v276 = vld [vmem:[%s166 + $0x218] sm:$0xff]
        %v277 = vld [vmem:[%s166 + $0x220] sm:$0xff]
        %v278 = vld [vmem:[%s166 + $0x228] sm:$0xff]
        %v279 = vld [vmem:[%s166 + $0x230] sm:$0xff]
        %v280 = vld [vmem:[%s166 + $0x238] sm:$0xff]
        %v281 = vld [vmem:[%s166 + $0x240] sm:$0xff]
        %v282 = vld [vmem:[%s166 + $0x248] sm:$0xff]
        %v283 = vld [vmem:[%s166 + $0x250] sm:$0xff]
        %v284 = vld [vmem:[%s166 + $0x258] sm:$0xff]
        %v285 = vld [vmem:[%s166 + $0x260] sm:$0xff]
        %v286 = vld [vmem:[%s166 + $0x268] sm:$0xff]
        %v287 = vld [vmem:[%s166 + $0x270] sm:$0xff]
        %v288 = vld [vmem:[%s166 + $0x278] sm:$0xff]
        %v289 = vld [vmem:[%s166 + $0x280] sm:$0xff]
        %v290 = vld [vmem:[%s166 + $0x288] sm:$0xff]
        %v291 = vld [vmem:[%s166 + $0x290] sm:$0xff]
        %v292 = vld [vmem:[%s166 + $0x298] sm:$0xff]
        %v293 = vld [vmem:[%s166 + $0x2a0] sm:$0xff]
        %v294 = vld [vmem:[%s166 + $0x2a8] sm:$0xff]
        %v295 = vld [vmem:[%s166 + $0x2b0] sm:$0xff]
        %v296 = vld [vmem:[%s166 + $0x2b8] sm:$0xff]
        %v297 = vld [vmem:[%s166 + $0x2c0] sm:$0xff]
        %v298 = vld [vmem:[%s166 + $0x2c8] sm:$0xff]
        %v299 = vld [vmem:[%s166 + $0x2d0] sm:$0xff]
        %v300 = vld [vmem:[%s166 + $0x2d8] sm:$0xff]
        %v301 = vld [vmem:[%s166 + $0x2e0] sm:$0xff]
        %v302 = vld [vmem:[%s166 + $0x2e8] sm:$0xff]
        %v303 = vld [vmem:[%s166 + $0x2f0] sm:$0xff]
        %v304 = vld [vmem:[%s166 + $0x2f8] sm:$0xff]
        %v305 = vld [vmem:[%s166 + $0x300] sm:$0xff]
        %v306 = vld [vmem:[%s166 + $0x308] sm:$0xff]
        %v307 = vld [vmem:[%s166 + $0x310] sm:$0xff]
        %v308 = vld [vmem:[%s166 + $0x318] sm:$0xff]
        %v309 = vld [vmem:[%s166 + $0x320] sm:$0xff]
        %v310 = vld [vmem:[%s166 + $0x328] sm:$0xff]
        %v311 = vld [vmem:[%s166 + $0x330] sm:$0xff]
        %v312 = vld [vmem:[%s166 + $0x338] sm:$0xff]
        %v313 = vld [vmem:[%s166 + $0x340] sm:$0xff]
        %v314 = vld [vmem:[%s166 + $0x348] sm:$0xff]
        %v315 = vld [vmem:[%s166 + $0x350] sm:$0xff]
        %v316 = vld [vmem:[%s166 + $0x358] sm:$0xff]
        %v317 = vld [vmem:[%s166 + $0x360] sm:$0xff]
        %v318 = vld [vmem:[%s166 + $0x368] sm:$0xff]
        %v319 = vld [vmem:[%s166 + $0x370] sm:$0xff]
        %v320 = vld [vmem:[%s166 + $0x378] sm:$0xff]
        %v321 = vld [vmem:[%s166 + $0x380] sm:$0xff]
        %v322 = vld [vmem:[%s166 + $0x388] sm:$0xff]
        %v323 = vld [vmem:[%s166 + $0x390] sm:$0xff]
        %v324 = vld [vmem:[%s166 + $0x398] sm:$0xff]
        %v325 = vld [vmem:[%s166 + $0x3a0] sm:$0xff]
        %v326 = vld [vmem:[%s166 + $0x3a8] sm:$0xff]
        %v327 = vld [vmem:[%s166 + $0x3b0] sm:$0xff]
        %v328 = vld [vmem:[%s166 + $0x3b8] sm:$0xff]
        %v329 = vld [vmem:[%s166 + $0x3c0] sm:$0xff]
        %v330 = vld [vmem:[%s166 + $0x3c8] sm:$0xff]
        %v331 = vld [vmem:[%s166 + $0x3d0] sm:$0xff]
        %v332 = vld [vmem:[%s166 + $0x3d8] sm:$0xff]
        %v333 = vld [vmem:[%s166 + $0x3e0] sm:$0xff]
        %v334 = vld [vmem:[%s166 + $0x3e8] sm:$0xff]
        %v335 = vld [vmem:[%s166 + $0x3f0] sm:$0xff]
        %v336 = vld [vmem:[%s166 + $0x3f8] sm:$0xff]
        %v337 = vld [vmem:[%s166 + $0x400] sm:$0xff]
        %v338 = vld [vmem:[%s166 + $0x408] sm:$0xff]
        %v339 = vld [vmem:[%s166 + $0x410] sm:$0xff]
        %v340 = vld [vmem:[%s166 + $0x418] sm:$0xff]
        %v341 = vld [vmem:[%s166 + $0x420] sm:$0xff]
        %v342 = vld [vmem:[%s166 + $0x428] sm:$0xff]
        %v343 = vld [vmem:[%s166 + $0x430] sm:$0xff]
        %v344 = vld [vmem:[%s166 + $0x438] sm:$0xff]
        %v345 = vld [vmem:[%s166 + $0x440] sm:$0xff]
        %v346 = vld [vmem:[%s166 + $0x448] sm:$0xff]
        %v347 = vld [vmem:[%s166 + $0x450] sm:$0xff]
        %v348 = vld [vmem:[%s166 + $0x458] sm:$0xff]
        %v349 = vld [vmem:[%s166 + $0x460] sm:$0xff]
        %v350 = vld [vmem:[%s166 + $0x468] sm:$0xff]
        %v351 = vld [vmem:[%s166 + $0x470] sm:$0xff]
        %v352 = vld [vmem:[%s166 + $0x478] sm:$0xff]
        %v353 = vld [vmem:[%s166 + $0x480] sm:$0xff]
        %v354 = vld [vmem:[%s166 + $0x488] sm:$0xff]
        %v355 = vld [vmem:[%s166 + $0x490] sm:$0xff]
        %v356 = vld [vmem:[%s166 + $0x498] sm:$0xff]
        %v357 = vld [vmem:[%s166 + $0x4a0] sm:$0xff]
        %v358 = vld [vmem:[%s166 + $0x4a8] sm:$0xff]
        %v359 = vld [vmem:[%s166 + $0x4b0] sm:$0xff]
        %v360 = vld [vmem:[%s166 + $0x4b8] sm:$0xff]
        %v361 = vld [vmem:[%s166 + $0x4c0] sm:$0xff]
        %v362 = vld [vmem:[%s166 + $0x4c8] sm:$0xff]
        %v363 = vld [vmem:[%s166 + $0x4d0] sm:$0xff]
        %v364 = vld [vmem:[%s166 + $0x4d8] sm:$0xff]
        %v365 = vld [vmem:[%s166 + $0x4e0] sm:$0xff]
        %v366 = vld [vmem:[%s166 + $0x4e8] sm:$0xff]
        %v367 = vld [vmem:[%s166 + $0x4f0] sm:$0xff]
        %v368 = vld [vmem:[%s166 + $0x4f8] sm:$0xff]
        %v369 = vld [vmem:[%s166 + $0x500] sm:$0xff]
        %v370 = vld [vmem:[%s166 + $0x508] sm:$0xff]
        %v371 = vld [vmem:[%s166 + $0x510] sm:$0xff]
        %v372 = vld [vmem:[%s166 + $0x518] sm:$0xff]
        %v373 = vld [vmem:[%s166 + $0x520] sm:$0xff]
        %v374 = vld [vmem:[%s166 + $0x528] sm:$0xff]
        %v375 = vld [vmem:[%s166 + $0x530] sm:$0xff]
        %v376 = vld [vmem:[%s166 + $0x538] sm:$0xff]
        %v377 = vld [vmem:[%s166 + $0x540] sm:$0xff]
        %v378 = vld [vmem:[%s166 + $0x548] sm:$0xff]
        %v379 = vld [vmem:[%s166 + $0x550] sm:$0xff]
        %v380 = vld [vmem:[%s166 + $0x558] sm:$0xff]
        %v381 = vld [vmem:[%s166 + $0x560] sm:$0xff]
        %v382 = vld [vmem:[%s166 + $0x568] sm:$0xff]
        %v383 = vld [vmem:[%s166 + $0x570] sm:$0xff]
        %v384 = vld [vmem:[%s166 + $0x578] sm:$0xff]
        %v385 = vld [vmem:[%s166 + $0x580] sm:$0xff]
        %v386 = vld [vmem:[%s166 + $0x588] sm:$0xff]
        %v387 = vld [vmem:[%s166 + $0x590] sm:$0xff]
        %v388 = vld [vmem:[%s166 + $0x598] sm:$0xff]
        %v389 = vld [vmem:[%s166 + $0x5a0] sm:$0xff]
        %v390 = vld [vmem:[%s166 + $0x5a8] sm:$0xff]
        %v391 = vld [vmem:[%s166 + $0x5b0] sm:$0xff]
        %v392 = vld [vmem:[%s166 + $0x5b8] sm:$0xff]
        %v393 = vld [vmem:[%s166 + $0x5c0] sm:$0xff]
        %v394 = vld [vmem:[%s166 + $0x5c8] sm:$0xff]
        %v395 = vld [vmem:[%s166 + $0x5d0] sm:$0xff]
        %v396 = vld [vmem:[%s166 + $0x5d8] sm:$0xff]
        %v397 = vld [vmem:[%s166 + $0x5e0] sm:$0xff]
        %v398 = vld [vmem:[%s166 + $0x5e8] sm:$0xff]
        %v399 = vld [vmem:[%s166 + $0x5f0] sm:$0xff]
        %v400 = vld [vmem:[%s166 + $0x5f8] sm:$0xff]
        %v401 = vld [vmem:[%s166 + $0x600] sm:$0xff]
        %v402 = vld [vmem:[%s166 + $0x608] sm:$0xff]
        %v403 = vld [vmem:[%s166 + $0x610] sm:$0xff]
        %v404 = vld [vmem:[%s166 + $0x618] sm:$0xff]
        %v405 = vld [vmem:[%s166 + $0x620] sm:$0xff]
        %v406 = vld [vmem:[%s166 + $0x628] sm:$0xff]
        %v407 = vld [vmem:[%s166 + $0x630] sm:$0xff]
        %v408 = vld [vmem:[%s166 + $0x638] sm:$0xff]
        %v409 = vld [vmem:[%s166 + $0x640] sm:$0xff]
        %v410 = vld [vmem:[%s166 + $0x648] sm:$0xff]
        %v411 = vld [vmem:[%s166 + $0x650] sm:$0xff]
        %v412 = vld [vmem:[%s166 + $0x658] sm:$0xff]
        %v413 = vld [vmem:[%s166 + $0x660] sm:$0xff]
        %v414 = vld [vmem:[%s166 + $0x668] sm:$0xff]
        %v415 = vld [vmem:[%s166 + $0x670] sm:$0xff]
        %v416 = vld [vmem:[%s166 + $0x678] sm:$0xff]
        %v417 = vld [vmem:[%s166 + $0x680] sm:$0xff]
        %v418 = vld [vmem:[%s166 + $0x688] sm:$0xff]
        %v419 = vld [vmem:[%s166 + $0x690] sm:$0xff]
        %v420 = vld [vmem:[%s166 + $0x698] sm:$0xff]
        %v421 = vld [vmem:[%s166 + $0x6a0] sm:$0xff]
        %v422 = vld [vmem:[%s166 + $0x6a8] sm:$0xff]
        %v423 = vld [vmem:[%s166 + $0x6b0] sm:$0xff]
        %v424 = vld [vmem:[%s166 + $0x6b8] sm:$0xff]
        %v425 = vld [vmem:[%s166 + $0x6c0] sm:$0xff]
        %v426 = vld [vmem:[%s166 + $0x6c8] sm:$0xff]
        %v427 = vld [vmem:[%s166 + $0x6d0] sm:$0xff]
        %v428 = vld [vmem:[%s166 + $0x6d8] sm:$0xff]
        %v429 = vld [vmem:[%s166 + $0x6e0] sm:$0xff]
        %v430 = vld [vmem:[%s166 + $0x6e8] sm:$0xff]
        %v431 = vld [vmem:[%s166 + $0x6f0] sm:$0xff]
        %v432 = vld [vmem:[%s166 + $0x6f8] sm:$0xff]
        %v433 = vld [vmem:[%s166 + $0x700] sm:$0xff]
        %v434 = vld [vmem:[%s166 + $0x708] sm:$0xff]
        %v435 = vld [vmem:[%s166 + $0x710] sm:$0xff]
        %v436 = vld [vmem:[%s166 + $0x718] sm:$0xff]
        %v437 = vld [vmem:[%s166 + $0x720] sm:$0xff]
        %v438 = vld [vmem:[%s166 + $0x728] sm:$0xff]
        %v439 = vld [vmem:[%s166 + $0x730] sm:$0xff]
        %v440 = vld [vmem:[%s166 + $0x738] sm:$0xff]
        %v441 = vld [vmem:[%s166 + $0x740] sm:$0xff]
        %v442 = vld [vmem:[%s166 + $0x748] sm:$0xff]
        %v443 = vld [vmem:[%s166 + $0x750] sm:$0xff]
        %v444 = vld [vmem:[%s166 + $0x758] sm:$0xff]
        %v445 = vld [vmem:[%s166 + $0x760] sm:$0xff]
        %v446 = vld [vmem:[%s166 + $0x768] sm:$0xff]
        %v447 = vld [vmem:[%s166 + $0x770] sm:$0xff]
        %v448 = vld [vmem:[%s166 + $0x778] sm:$0xff]
        %v449 = vld [vmem:[%s166 + $0x780] sm:$0xff]
        %v450 = vld [vmem:[%s166 + $0x788] sm:$0xff]
        %v451 = vld [vmem:[%s166 + $0x790] sm:$0xff]
        %v452 = vld [vmem:[%s166 + $0x798] sm:$0xff]
        %v453 = vld [vmem:[%s166 + $0x7a0] sm:$0xff]
        %v454 = vld [vmem:[%s166 + $0x7a8] sm:$0xff]
        %v455 = vld [vmem:[%s166 + $0x7b0] sm:$0xff]
        %v456 = vld [vmem:[%s166 + $0x7b8] sm:$0xff]
        %v457 = vld [vmem:[%s166 + $0x7c0] sm:$0xff]
        %v458 = vld [vmem:[%s166 + $0x7c8] sm:$0xff]
        %v459 = vld [vmem:[%s166 + $0x7d0] sm:$0xff]
        %v460 = vld [vmem:[%s166 + $0x7d8] sm:$0xff]
        %v461 = vld [vmem:[%s166 + $0x7e0] sm:$0xff]
        %v462 = vld [vmem:[%s166 + $0x7e8] sm:$0xff]
        %v463 = vld [vmem:[%s166 + $0x7f0] sm:$0xff]
        %v464 = vld [vmem:[%s166 + $0x7f8] sm:$0xff]
        %v465 = vld [vmem:[%s166 + $0x800] sm:$0xff]
        %v466 = vld [vmem:[%s166 + $0x808] sm:$0xff]
        %v467 = vld [vmem:[%s166 + $0x810] sm:$0xff]
        %v468 = vld [vmem:[%s166 + $0x818] sm:$0xff]
        %v469 = vld [vmem:[%s166 + $0x820] sm:$0xff]
        %v470 = vld [vmem:[%s166 + $0x828] sm:$0xff]
        %v471 = vld [vmem:[%s166 + $0x830] sm:$0xff]
        %v472 = vld [vmem:[%s166 + $0x838] sm:$0xff]
        %v473 = vld [vmem:[%s166 + $0x840] sm:$0xff]
        %v474 = vld [vmem:[%s166 + $0x848] sm:$0xff]
        %v475 = vld [vmem:[%s166 + $0x850] sm:$0xff]
        %v476 = vld [vmem:[%s166 + $0x858] sm:$0xff]
        %v477 = vld [vmem:[%s166 + $0x860] sm:$0xff]
        %v478 = vld [vmem:[%s166 + $0x868] sm:$0xff]
        %v479 = vld [vmem:[%s166 + $0x870] sm:$0xff]
        %v480 = vld [vmem:[%s166 + $0x878] sm:$0xff]
        %v481 = vld [vmem:[%s166 + $0x880] sm:$0xff]
        %v482 = vld [vmem:[%s166 + $0x888] sm:$0xff]
        %v483 = vld [vmem:[%s166 + $0x890] sm:$0xff]
        %v484 = vld [vmem:[%s166 + $0x898] sm:$0xff]
        %v485 = vld [vmem:[%s166 + $0x8a0] sm:$0xff]
        %v486 = vld [vmem:[%s166 + $0x8a8] sm:$0xff]
        %v487 = vld [vmem:[%s166 + $0x8b0] sm:$0xff]
        %v488 = vld [vmem:[%s166 + $0x8b8] sm:$0xff]
        %v489 = vld [vmem:[%s166 + $0x8c0] sm:$0xff]
        %v490 = vld [vmem:[%s166 + $0x8c8] sm:$0xff]
        %v491 = vld [vmem:[%s166 + $0x8d0] sm:$0xff]
        %v492 = vld [vmem:[%s166 + $0x8d8] sm:$0xff]
        %v493 = vld [vmem:[%s166 + $0x8e0] sm:$0xff]
        %v494 = vld [vmem:[%s166 + $0x8e8] sm:$0xff]
        %v495 = vld [vmem:[%s166 + $0x8f0] sm:$0xff]
        %v496 = vld [vmem:[%s166 + $0x8f8] sm:$0xff]
        %v497 = vld [vmem:[%s166 + $0x900] sm:$0xff]
        %v498 = vld [vmem:[%s166 + $0x908] sm:$0xff]
        %v499 = vld [vmem:[%s166 + $0x910] sm:$0xff]
        %v500 = vld [vmem:[%s166 + $0x918] sm:$0xff]
        %v501 = vld [vmem:[%s166 + $0x920] sm:$0xff]
        %v502 = vld [vmem:[%s166 + $0x928] sm:$0xff]
        %v503 = vld [vmem:[%s166 + $0x930] sm:$0xff]
        %v504 = vld [vmem:[%s166 + $0x938] sm:$0xff]
        %v505 = vld [vmem:[%s166 + $0x940] sm:$0xff]
        %v506 = vld [vmem:[%s166 + $0x948] sm:$0xff]
        %v507 = vld [vmem:[%s166 + $0x950] sm:$0xff]
        %v508 = vld [vmem:[%s166 + $0x958] sm:$0xff]
        %v509 = vld [vmem:[%s166 + $0x960] sm:$0xff]
        %v510 = vld [vmem:[%s166 + $0x968] sm:$0xff]
        %v511 = vld [vmem:[%s166 + $0x970] sm:$0xff]
        %v512 = vld [vmem:[%s166 + $0x978] sm:$0xff]
        %v513 = vld [vmem:[%s166 + $0x980] sm:$0xff]
        %v514 = vld [vmem:[%s166 + $0x988] sm:$0xff]
        %v515 = vld [vmem:[%s166 + $0x990] sm:$0xff]
        %v516 = vld [vmem:[%s166 + $0x998] sm:$0xff]
        %v517 = vld [vmem:[%s166 + $0x9a0] sm:$0xff]
        %v518 = vld [vmem:[%s166 + $0x9a8] sm:$0xff]
        %v519 = vld [vmem:[%s166 + $0x9b0] sm:$0xff]
        %v520 = vld [vmem:[%s166 + $0x9b8] sm:$0xff]
        %v521 = vld [vmem:[%s166 + $0x9c0] sm:$0xff]
        %v522 = vld [vmem:[%s166 + $0x9c8] sm:$0xff]
        %v523 = vld [vmem:[%s166 + $0x9d0] sm:$0xff]
        %v524 = vld [vmem:[%s166 + $0x9d8] sm:$0xff]
        %v525 = vld [vmem:[%s166 + $0x9e0] sm:$0xff]
        %v526 = vld [vmem:[%s166 + $0x9e8] sm:$0xff]
        %v527 = vld [vmem:[%s166 + $0x9f0] sm:$0xff]
        %v528 = vld [vmem:[%s166 + $0x9f8] sm:$0xff]
        %v529 = vld [vmem:[%s166 + $0xa00] sm:$0xff]
        %v530 = vld [vmem:[%s166 + $0xa08] sm:$0xff]
        %v531 = vld [vmem:[%s166 + $0xa10] sm:$0xff]
        %v532 = vld [vmem:[%s166 + $0xa18] sm:$0xff]
        %v533 = vld [vmem:[%s166 + $0xa20] sm:$0xff]
        %v534 = vld [vmem:[%s166 + $0xa28] sm:$0xff]
        %v535 = vld [vmem:[%s166 + $0xa30] sm:$0xff]
        %v536 = vld [vmem:[%s166 + $0xa38] sm:$0xff]
        %v537 = vld [vmem:[%s166 + $0xa40] sm:$0xff]
        %v538 = vld [vmem:[%s166 + $0xa48] sm:$0xff]
        %v539 = vld [vmem:[%s166 + $0xa50] sm:$0xff]
        %v540 = vld [vmem:[%s166 + $0xa58] sm:$0xff]
        %v541 = vld [vmem:[%s166 + $0xa60] sm:$0xff]
        %v542 = vld [vmem:[%s166 + $0xa68] sm:$0xff]
        %v543 = vld [vmem:[%s166 + $0xa70] sm:$0xff]
        %v544 = vld [vmem:[%s166 + $0xa78] sm:$0xff]
        %v545 = vld [vmem:[%s166 + $0xa80] sm:$0xff]
        %v546 = vld [vmem:[%s166 + $0xa88] sm:$0xff]
        %v547 = vld [vmem:[%s166 + $0xa90] sm:$0xff]
        %v548 = vld [vmem:[%s166 + $0xa98] sm:$0xff]
        %v549 = vld [vmem:[%s166 + $0xaa0] sm:$0xff]
        %v550 = vld [vmem:[%s166 + $0xaa8] sm:$0xff]
        %v551 = vld [vmem:[%s166 + $0xab0] sm:$0xff]
        %v552 = vld [vmem:[%s166 + $0xab8] sm:$0xff]
        %v553 = vld [vmem:[%s166 + $0xac0] sm:$0xff]
        %v554 = vld [vmem:[%s166 + $0xac8] sm:$0xff]
        %v555 = vld [vmem:[%s166 + $0xad0] sm:$0xff]
        %v556 = vld [vmem:[%s166 + $0xad8] sm:$0xff]
        %v557 = vld [vmem:[%s166 + $0xae0] sm:$0xff]
        %v558 = vld [vmem:[%s166 + $0xae8] sm:$0xff]
        %v559 = vld [vmem:[%s166 + $0xaf0] sm:$0xff]
        %v560 = vld [vmem:[%s166 + $0xaf8] sm:$0xff]
        %v561 = vld [vmem:[%s166 + $0xb00] sm:$0xff]
        %v562 = vld [vmem:[%s166 + $0xb08] sm:$0xff]
        %v563 = vld [vmem:[%s166 + $0xb10] sm:$0xff]
        %v564 = vld [vmem:[%s166 + $0xb18] sm:$0xff]
        %v565 = vld [vmem:[%s166 + $0xb20] sm:$0xff]
        %v566 = vld [vmem:[%s166 + $0xb28] sm:$0xff]
        %v567 = vld [vmem:[%s166 + $0xb30] sm:$0xff]
        %v568 = vld [vmem:[%s166 + $0xb38] sm:$0xff]
        %v569 = vld [vmem:[%s166 + $0xb40] sm:$0xff]
        %v570 = vld [vmem:[%s166 + $0xb48] sm:$0xff]
        %v571 = vld [vmem:[%s166 + $0xb50] sm:$0xff]
        %v572 = vld [vmem:[%s166 + $0xb58] sm:$0xff]
        %v573 = vld [vmem:[%s166 + $0xb60] sm:$0xff]
        %v574 = vld [vmem:[%s166 + $0xb68] sm:$0xff]
        %v575 = vld [vmem:[%s166 + $0xb70] sm:$0xff]
        %v576 = vld [vmem:[%s166 + $0xb78] sm:$0xff]
        %v577 = vld [vmem:[%s166 + $0xb80] sm:$0xff]
        %v578 = vld [vmem:[%s166 + $0xb88] sm:$0xff]
        %v579 = vld [vmem:[%s166 + $0xb90] sm:$0xff]
        %v580 = vld [vmem:[%s166 + $0xb98] sm:$0xff]
        %v581 = vld [vmem:[%s166 + $0xba0] sm:$0xff]
        %v582 = vld [vmem:[%s166 + $0xba8] sm:$0xff]
        %v583 = vld [vmem:[%s166 + $0xbb0] sm:$0xff]
        %v584 = vld [vmem:[%s166 + $0xbb8] sm:$0xff]
        %v585 = vld [vmem:[%s166 + $0xbc0] sm:$0xff]
        %v586 = vld [vmem:[%s166 + $0xbc8] sm:$0xff]
        %v587 = vld [vmem:[%s166 + $0xbd0] sm:$0xff]
        %v588 = vld [vmem:[%s166 + $0xbd8] sm:$0xff]
        %v589 = vld [vmem:[%s166 + $0xbe0] sm:$0xff]
        %v590 = vld [vmem:[%s166 + $0xbe8] sm:$0xff]
        %v591 = vld [vmem:[%s166 + $0xbf0] sm:$0xff]
        %v592 = vld [vmem:[%s166 + $0xbf8] sm:$0xff]
        %v593 = vld [vmem:[%s166 + $0xc00] sm:$0xff]
        %v594 = vld [vmem:[%s166 + $0xc08] sm:$0xff]
        %v595 = vld [vmem:[%s166 + $0xc10] sm:$0xff]
        %v596 = vld [vmem:[%s166 + $0xc18] sm:$0xff]
        %v597 = vld [vmem:[%s166 + $0xc20] sm:$0xff]
        %v598 = vld [vmem:[%s166 + $0xc28] sm:$0xff]
        %v599 = vld [vmem:[%s166 + $0xc30] sm:$0xff]
        %v600 = vld [vmem:[%s166 + $0xc38] sm:$0xff]
        %v601 = vld [vmem:[%s166 + $0xc40] sm:$0xff]
        %v602 = vld [vmem:[%s166 + $0xc48] sm:$0xff]
        %v603 = vld [vmem:[%s166 + $0xc50] sm:$0xff]
        %v604 = vld [vmem:[%s166 + $0xc58] sm:$0xff]
        %v605 = vld [vmem:[%s166 + $0xc60] sm:$0xff]
        %v606 = vld [vmem:[%s166 + $0xc68] sm:$0xff]
        %v607 = vld [vmem:[%s166 + $0xc70] sm:$0xff]
        %v608 = vld [vmem:[%s166 + $0xc78] sm:$0xff]
        %v609 = vld [vmem:[%s166 + $0xc80] sm:$0xff]
        %v610 = vld [vmem:[%s166 + $0xc88] sm:$0xff]
        %v611 = vld [vmem:[%s166 + $0xc90] sm:$0xff]
        %v612 = vld [vmem:[%s166 + $0xc98] sm:$0xff]
        %v613 = vld [vmem:[%s166 + $0xca0] sm:$0xff]
        %v614 = vld [vmem:[%s166 + $0xca8] sm:$0xff]
        %v615 = vld [vmem:[%s166 + $0xcb0] sm:$0xff]
        %v616 = vld [vmem:[%s166 + $0xcb8] sm:$0xff]
        %v617 = vld [vmem:[%s166 + $0xcc0] sm:$0xff]
        %v618 = vld [vmem:[%s166 + $0xcc8] sm:$0xff]
        %v619 = vld [vmem:[%s166 + $0xcd0] sm:$0xff]
        %v620 = vld [vmem:[%s166 + $0xcd8] sm:$0xff]
        %v621 = vld [vmem:[%s166 + $0xce0] sm:$0xff]
        %v622 = vld [vmem:[%s166 + $0xce8] sm:$0xff]
        %v623 = vld [vmem:[%s166 + $0xcf0] sm:$0xff]
        %v624 = vld [vmem:[%s166 + $0xcf8] sm:$0xff]
        %v625 = vld [vmem:[%s166 + $0xd00] sm:$0xff]
        %v626 = vld [vmem:[%s166 + $0xd08] sm:$0xff]
        %v627 = vld [vmem:[%s166 + $0xd10] sm:$0xff]
        %v628 = vld [vmem:[%s166 + $0xd18] sm:$0xff]
        %v629 = vld [vmem:[%s166 + $0xd20] sm:$0xff]
        %v630 = vld [vmem:[%s166 + $0xd28] sm:$0xff]
        %v631 = vld [vmem:[%s166 + $0xd30] sm:$0xff]
        %v632 = vld [vmem:[%s166 + $0xd38] sm:$0xff]
        %v633 = vld [vmem:[%s166 + $0xd40] sm:$0xff]
        %v634 = vld [vmem:[%s166 + $0xd48] sm:$0xff]
        %v635 = vld [vmem:[%s166 + $0xd50] sm:$0xff]
        %v636 = vld [vmem:[%s166 + $0xd58] sm:$0xff]
        %v637 = vld [vmem:[%s166 + $0xd60] sm:$0xff]
        %v638 = vld [vmem:[%s166 + $0xd68] sm:$0xff]
        %v639 = vld [vmem:[%s166 + $0xd70] sm:$0xff]
        %v640 = vld [vmem:[%s166 + $0xd78] sm:$0xff]
        %v641 = vld [vmem:[%s166 + $0xd80] sm:$0xff]
        %v642 = vld [vmem:[%s166 + $0xd88] sm:$0xff]
        %v643 = vld [vmem:[%s166 + $0xd90] sm:$0xff]
        %v644 = vld [vmem:[%s166 + $0xd98] sm:$0xff]
        %v645 = vld [vmem:[%s166 + $0xda0] sm:$0xff]
        %v646 = vld [vmem:[%s166 + $0xda8] sm:$0xff]
        %v647 = vld [vmem:[%s166 + $0xdb0] sm:$0xff]
        %v648 = vld [vmem:[%s166 + $0xdb8] sm:$0xff]
        %v649 = vld [vmem:[%s166 + $0xdc0] sm:$0xff]
        %v650 = vld [vmem:[%s166 + $0xdc8] sm:$0xff]
        %v651 = vld [vmem:[%s166 + $0xdd0] sm:$0xff]
        %v652 = vld [vmem:[%s166 + $0xdd8] sm:$0xff]
        %v653 = vld [vmem:[%s166 + $0xde0] sm:$0xff]
        %v654 = vld [vmem:[%s166 + $0xde8] sm:$0xff]
        %v655 = vld [vmem:[%s166 + $0xdf0] sm:$0xff]
        %v656 = vld [vmem:[%s166 + $0xdf8] sm:$0xff]
        %v657 = vld [vmem:[%s166 + $0xe00] sm:$0xff]
        %v658 = vld [vmem:[%s166 + $0xe08] sm:$0xff]
        %v659 = vld [vmem:[%s166 + $0xe10] sm:$0xff]
        %v660 = vld [vmem:[%s166 + $0xe18] sm:$0xff]
        %v661 = vld [vmem:[%s166 + $0xe20] sm:$0xff]
        %v662 = vld [vmem:[%s166 + $0xe28] sm:$0xff]
        %v663 = vld [vmem:[%s166 + $0xe30] sm:$0xff]
        %v664 = vld [vmem:[%s166 + $0xe38] sm:$0xff]
        %v665 = vld [vmem:[%s166 + $0xe40] sm:$0xff]
        %v666 = vld [vmem:[%s166 + $0xe48] sm:$0xff]
        %v667 = vld [vmem:[%s166 + $0xe50] sm:$0xff]
        %v668 = vld [vmem:[%s166 + $0xe58] sm:$0xff]
        %v669 = vld [vmem:[%s166 + $0xe60] sm:$0xff]
        %v670 = vld [vmem:[%s166 + $0xe68] sm:$0xff]
        %v671 = vld [vmem:[%s166 + $0xe70] sm:$0xff]
        %v672 = vld [vmem:[%s166 + $0xe78] sm:$0xff]
        %v673 = vld [vmem:[%s166 + $0xe80] sm:$0xff]
        %v674 = vld [vmem:[%s166 + $0xe88] sm:$0xff]
        %v675 = vld [vmem:[%s166 + $0xe90] sm:$0xff]
        %v676 = vld [vmem:[%s166 + $0xe98] sm:$0xff]
        %v677 = vld [vmem:[%s166 + $0xea0] sm:$0xff]
        %v678 = vld [vmem:[%s166 + $0xea8] sm:$0xff]
        %v679 = vld [vmem:[%s166 + $0xeb0] sm:$0xff]
        %v680 = vld [vmem:[%s166 + $0xeb8] sm:$0xff]
        %v681 = vld [vmem:[%s166 + $0xec0] sm:$0xff]
        %v682 = vld [vmem:[%s166 + $0xec8] sm:$0xff]
        %v683 = vld [vmem:[%s166 + $0xed0] sm:$0xff]
        %v684 = vld [vmem:[%s166 + $0xed8] sm:$0xff]
        %v685 = vld [vmem:[%s166 + $0xee0] sm:$0xff]
        %v686 = vld [vmem:[%s166 + $0xee8] sm:$0xff]
        %v687 = vld [vmem:[%s166 + $0xef0] sm:$0xff]
        %v688 = vld [vmem:[%s166 + $0xef8] sm:$0xff]
        %689 = vmatprep.subr.mxu0 %v210
        %690 = vmatpush1.msra.mxu0 %v209
        %691 = vmatprep.subr.mxu0 %v220
        %692 = vmatpush1.msra.mxu0 %v219
        %693 = vmatprep.subr.mxu0 %v230
        %694 = vmatpush1.msra.mxu0 %v229
        %695 = vmatprep.subr.mxu0 %v240
        %696 = vmatpush1.msra.mxu0 %v239
        %697 = vmatprep.subr.mxu0 %v250
        %698 = vmatpush1.msra.mxu0 %v249
        %699 = vmatprep.subr.mxu0 %v260
        %700 = vmatpush1.msra.mxu0 %v259
        %701 = vmatprep.subr.mxu0 %v270
        %702 = vmatpush1.msra.mxu0 %v269
        %703 = vmatprep.subr.mxu0 %v280
        %704 = vmatpush1.msra.mxu0 %v279
        %705 = vmatprep.subr.mxu0 %v290
        %706 = vmatpush1.msra.mxu0 %v289
        %707 = vmatprep.subr.mxu0 %v300
        %708 = vmatpush1.msra.mxu0 %v299
        %709 = vmatprep.subr.mxu0 %v310
        %710 = vmatpush1.msra.mxu0 %v309
        %711 = vmatprep.subr.mxu0 %v320
        %712 = vmatpush1.msra.mxu0 %v319
        %713 = vmatprep.subr.mxu0 %v330
        %714 = vmatpush1.msra.mxu0 %v329
        %715 = vmatprep.subr.mxu0 %v340
        %716 = vmatpush1.msra.mxu0 %v339
        %717 = vmatprep.subr.mxu0 %v350
        %718 = vmatpush1.msra.mxu0 %v349
        %719 = vmatprep.subr.mxu0 %v360
        %720 = vmatpush1.msra.mxu0 %v359
        %721 = vmatprep.subr.mxu0 %v370
        %722 = vmatpush1.msra.mxu0 %v369
        %723 = vmatprep.subr.mxu0 %v380
        %724 = vmatpush1.msra.mxu0 %v379
        %725 = vmatprep.subr.mxu0 %v390
        %726 = vmatpush1.msra.mxu0 %v389
        %727 = vmatprep.subr.mxu0 %v400
        %728 = vmatpush1.msra.mxu0 %v399
        %729 = vmatprep.subr.mxu0 %v410
        %730 = vmatpush1.msra.mxu0 %v409
        %731 = vmatprep.subr.mxu0 %v420
        %732 = vmatpush1.msra.mxu0 %v419
        %733 = vmatprep.subr.mxu0 %v430
        %734 = vmatpush1.msra.mxu0 %v429
        %735 = vmatprep.subr.mxu0 %v440
        %736 = vmatpush1.msra.mxu0 %v439
        %737 = vmatprep.subr.mxu0 %v450
        %738 = vmatpush1.msra.mxu0 %v449
        %739 = vmatprep.subr.mxu0 %v460
        %740 = vmatpush1.msra.mxu0 %v459
        %741 = vmatprep.subr.mxu0 %v470
        %742 = vmatpush1.msra.mxu0 %v469
        %743 = vmatprep.subr.mxu0 %v480
        %744 = vmatpush1.msra.mxu0 %v479
        %745 = vmatprep.subr.mxu0 %v490
        %746 = vmatpush1.msra.mxu0 %v489
        %747 = vmatprep.subr.mxu0 %v500
        %748 = vmatpush1.msra.mxu0 %v499
        %749 = vmatprep.subr.mxu0 %v510
        %750 = vmatpush1.msra.mxu0 %v509
        %751 = vmatprep.subr.mxu0 %v520
        %752 = vmatpush1.msra.mxu0 %v519
        %753 = vmatprep.mubr.f32.mxu0 %v207
        %754 = vmatmul.mubr.f32.gmra.mrb[0].mxu0 %v206
        %v755 = vpop.f32.mrb[0].mxu0
        %v756 = vadd.f32 0.0, %v755
        %v757 = vpop.f32.mrb[0].mxu0
        %v758 = vadd.f32 0.0, %v757
        %759 = vdwg.mxu0
        %760 = vmatprep.subr.mxu0 %v530
        %761 = vmatpush1.msra.mxu0 %v529
        %762 = vmatprep.subr.mxu0 %v540
        %763 = vmatpush1.msra.mxu0 %v539
        %764 = vmatprep.subr.mxu0 %v550
        %765 = vmatpush1.msra.mxu0 %v549
        %766 = vmatprep.subr.mxu0 %v560
        %767 = vmatpush1.msra.mxu0 %v559
        %768 = vmatprep.subr.mxu0 %v570
        %769 = vmatpush1.msra.mxu0 %v569
        %770 = vmatprep.subr.mxu0 %v580
        %771 = vmatpush1.msra.mxu0 %v579
        %772 = vmatprep.subr.mxu0 %v590
        %773 = vmatpush1.msra.mxu0 %v589
        %774 = vmatprep.subr.mxu0 %v600
        %775 = vmatpush1.msra.mxu0 %v599
        %776 = vmatprep.subr.mxu0 %v610
        %777 = vmatpush1.msra.mxu0 %v609
        %778 = vmatprep.subr.mxu0 %v620
        %779 = vmatpush1.msra.mxu0 %v619
        %780 = vmatprep.subr.mxu0 %v630
        %781 = vmatpush1.msra.mxu0 %v629
        %782 = vmatprep.subr.mxu0 %v640
        %783 = vmatpush1.msra.mxu0 %v639
        %784 = vmatprep.subr.mxu0 %v650
        %785 = vmatpush1.msra.mxu0 %v649
        %786 = vmatprep.subr.mxu0 %v660
        %787 = vmatpush1.msra.mxu0 %v659
        %788 = vmatprep.subr.mxu0 %v670
        %789 = vmatpush1.msra.mxu0 %v669
        %790 = vmatprep.subr.mxu0 %v680
        %791 = vmatpush1.msra.mxu0 %v679
        %792 = vmatprep.subr.mxu0 0.0
        %793 = vmatpush1.msra.mxu0 0.0
        %794 = vmatprep.subr.mxu0 0.0
        %795 = vmatpush1.msra.mxu0 0.0
        %796 = vmatprep.subr.mxu0 0.0
        %797 = vmatpush1.msra.mxu0 0.0
        %798 = vmatprep.subr.mxu0 0.0
        %799 = vmatpush1.msra.mxu0 0.0
        %800 = vmatprep.subr.mxu0 0.0
        %801 = vmatpush1.msra.mxu0 0.0
        %802 = vmatprep.subr.mxu0 0.0
        %803 = vmatpush1.msra.mxu0 0.0
        %804 = vmatprep.subr.mxu0 0.0
        %805 = vmatpush1.msra.mxu0 0.0
        %806 = vmatprep.subr.mxu0 0.0
        %807 = vmatpush1.msra.mxu0 0.0
        %808 = vmatprep.subr.mxu0 0.0
        %809 = vmatpush1.msra.mxu0 0.0
        %810 = vmatprep.subr.mxu0 0.0
        %811 = vmatpush1.msra.mxu0 0.0
        %812 = vmatprep.subr.mxu0 0.0
        %813 = vmatpush1.msra.mxu0 0.0
        %814 = vmatprep.subr.mxu0 0.0
        %815 = vmatpush1.msra.mxu0 0.0
        %816 = vmatprep.subr.mxu0 0.0
        %817 = vmatpush1.msra.mxu0 0.0
        %818 = vmatprep.subr.mxu0 0.0
        %819 = vmatpush1.msra.mxu0 0.0
        %820 = vmatprep.subr.mxu0 0.0
        %821 = vmatpush1.msra.mxu0 0.0
        %822 = vmatprep.subr.mxu0 0.0
        %823 = vmatpush1.msra.mxu0 0.0
        %824 = vmatprep.mubr.f32.mxu0 0.0
        %825 = vmatmul.mubr.f32.gmra.mrb[0].mxu0 %v208
        %v826 = vpop.f32.mrb[0].mxu0
        %v827 = vadd.f32 %v756, %v826
        %v828 = vpop.f32.mrb[0].mxu0
        %v829 = vadd.f32 %v758, %v828
        %830 = vdwg.mxu0
        %831 = vmatprep.subr.mxu0 %v212
        %832 = vmatpush1.msra.mxu0 %v211
        %833 = vmatprep.subr.mxu0 %v222
        %834 = vmatpush1.msra.mxu0 %v221
        %835 = vmatprep.subr.mxu0 %v232
        %836 = vmatpush1.msra.mxu0 %v231
        %837 = vmatprep.subr.mxu0 %v242
        %838 = vmatpush1.msra.mxu0 %v241
        %839 = vmatprep.subr.mxu0 %v252
        %840 = vmatpush1.msra.mxu0 %v251
        %841 = vmatprep.subr.mxu0 %v262
        %842 = vmatpush1.msra.mxu0 %v261
        %843 = vmatprep.subr.mxu0 %v272
        %844 = vmatpush1.msra.mxu0 %v271
        %845 = vmatprep.subr.mxu0 %v282
        %846 = vmatpush1.msra.mxu0 %v281
        %847 = vmatprep.subr.mxu0 %v292
        %848 = vmatpush1.msra.mxu0 %v291
        %849 = vmatprep.subr.mxu0 %v302
        %850 = vmatpush1.msra.mxu0 %v301
        %851 = vmatprep.subr.mxu0 %v312
        %852 = vmatpush1.msra.mxu0 %v311
        %853 = vmatprep.subr.mxu0 %v322
        %854 = vmatpush1.msra.mxu0 %v321
        %855 = vmatprep.subr.mxu0 %v332
        %856 = vmatpush1.msra.mxu0 %v331
        %857 = vmatprep.subr.mxu0 %v342
        %858 = vmatpush1.msra.mxu0 %v341
        %859 = vmatprep.subr.mxu0 %v352
        %860 = vmatpush1.msra.mxu0 %v351
        %861 = vmatprep.subr.mxu0 %v362
        %862 = vmatpush1.msra.mxu0 %v361
        %863 = vmatprep.subr.mxu0 %v372
        %864 = vmatpush1.msra.mxu0 %v371
        %865 = vmatprep.subr.mxu0 %v382
        %866 = vmatpush1.msra.mxu0 %v381
        %867 = vmatprep.subr.mxu0 %v392
        %868 = vmatpush1.msra.mxu0 %v391
        %869 = vmatprep.subr.mxu0 %v402
        %870 = vmatpush1.msra.mxu0 %v401
        %871 = vmatprep.subr.mxu0 %v412
        %872 = vmatpush1.msra.mxu0 %v411
        %873 = vmatprep.subr.mxu0 %v422
        %874 = vmatpush1.msra.mxu0 %v421
        %875 = vmatprep.subr.mxu0 %v432
        %876 = vmatpush1.msra.mxu0 %v431
        %877 = vmatprep.subr.mxu0 %v442
        %878 = vmatpush1.msra.mxu0 %v441
        %879 = vmatprep.subr.mxu0 %v452
        %880 = vmatpush1.msra.mxu0 %v451
        %881 = vmatprep.subr.mxu0 %v462
        %882 = vmatpush1.msra.mxu0 %v461
        %883 = vmatprep.subr.mxu0 %v472
        %884 = vmatpush1.msra.mxu0 %v471
        %885 = vmatprep.subr.mxu0 %v482
        %886 = vmatpush1.msra.mxu0 %v481
        %887 = vmatprep.subr.mxu0 %v492
        %888 = vmatpush1.msra.mxu0 %v491
        %889 = vmatprep.subr.mxu0 %v502
        %890 = vmatpush1.msra.mxu0 %v501
        %891 = vmatprep.subr.mxu0 %v512
        %892 = vmatpush1.msra.mxu0 %v511
        %893 = vmatprep.subr.mxu0 %v522
        %894 = vmatpush1.msra.mxu0 %v521
        %895 = vmatprep.mubr.f32.mxu0 %v207
        %896 = vmatmul.mubr.f32.gmra.mrb[0].mxu0 %v206
        %v897 = vpop.f32.mrb[0].mxu0
        %v898 = vadd.f32 0.0, %v897
        %v899 = vpop.f32.mrb[0].mxu0
        %v900 = vadd.f32 0.0, %v899
        %901 = vdwg.mxu0
        %902 = vmatprep.subr.mxu0 %v532
        %903 = vmatpush1.msra.mxu0 %v531
        %904 = vmatprep.subr.mxu0 %v542
        %905 = vmatpush1.msra.mxu0 %v541
        %906 = vmatprep.subr.mxu0 %v552
        %907 = vmatpush1.msra.mxu0 %v551
        %908 = vmatprep.subr.mxu0 %v562
        %909 = vmatpush1.msra.mxu0 %v561
        %910 = vmatprep.subr.mxu0 %v572
        %911 = vmatpush1.msra.mxu0 %v571
        %912 = vmatprep.subr.mxu0 %v582
        %913 = vmatpush1.msra.mxu0 %v581
        %914 = vmatprep.subr.mxu0 %v592
        %915 = vmatpush1.msra.mxu0 %v591
        %916 = vmatprep.subr.mxu0 %v602
        %917 = vmatpush1.msra.mxu0 %v601
        %918 = vmatprep.subr.mxu0 %v612
        %919 = vmatpush1.msra.mxu0 %v611
        %920 = vmatprep.subr.mxu0 %v622
        %921 = vmatpush1.msra.mxu0 %v621
        %922 = vmatprep.subr.mxu0 %v632
        %923 = vmatpush1.msra.mxu0 %v631
        %924 = vmatprep.subr.mxu0 %v642
        %925 = vmatpush1.msra.mxu0 %v641
        %926 = vmatprep.subr.mxu0 %v652
        %927 = vmatpush1.msra.mxu0 %v651
        %928 = vmatprep.subr.mxu0 %v662
        %929 = vmatpush1.msra.mxu0 %v661
        %930 = vmatprep.subr.mxu0 %v672
        %931 = vmatpush1.msra.mxu0 %v671
        %932 = vmatprep.subr.mxu0 %v682
        %933 = vmatpush1.msra.mxu0 %v681
        %934 = vmatprep.subr.mxu0 0.0
        %935 = vmatpush1.msra.mxu0 0.0
        %936 = vmatprep.subr.mxu0 0.0
        %937 = vmatpush1.msra.mxu0 0.0
        %938 = vmatprep.subr.mxu0 0.0
        %939 = vmatpush1.msra.mxu0 0.0
        %940 = vmatprep.subr.mxu0 0.0
        %941 = vmatpush1.msra.mxu0 0.0
        %942 = vmatprep.subr.mxu0 0.0
        %943 = vmatpush1.msra.mxu0 0.0
        %944 = vmatprep.subr.mxu0 0.0
        %945 = vmatpush1.msra.mxu0 0.0
        %946 = vmatprep.subr.mxu0 0.0
        %947 = vmatpush1.msra.mxu0 0.0
        %948 = vmatprep.subr.mxu0 0.0
        %949 = vmatpush1.msra.mxu0 0.0
        %950 = vmatprep.subr.mxu0 0.0
        %951 = vmatpush1.msra.mxu0 0.0
        %952 = vmatprep.subr.mxu0 0.0
        %953 = vmatpush1.msra.mxu0 0.0
        %954 = vmatprep.subr.mxu0 0.0
        %955 = vmatpush1.msra.mxu0 0.0
        %956 = vmatprep.subr.mxu0 0.0
        %957 = vmatpush1.msra.mxu0 0.0
        %958 = vmatprep.subr.mxu0 0.0
        %959 = vmatpush1.msra.mxu0 0.0
        %960 = vmatprep.subr.mxu0 0.0
        %961 = vmatpush1.msra.mxu0 0.0
        %962 = vmatprep.subr.mxu0 0.0
        %963 = vmatpush1.msra.mxu0 0.0
        %964 = vmatprep.subr.mxu0 0.0
        %965 = vmatpush1.msra.mxu0 0.0
        %966 = vmatprep.mubr.f32.mxu0 0.0
        %967 = vmatmul.mubr.f32.gmra.mrb[0].mxu0 %v208
        %v968 = vpop.f32.mrb[0].mxu0
        %v969 = vadd.f32 %v898, %v968
        %v970 = vpop.f32.mrb[0].mxu0
        %v971 = vadd.f32 %v900, %v970
        %972 = vdwg.mxu0
        %973 = vmatprep.subr.mxu0 %v214
        %974 = vmatpush1.msra.mxu0 %v213
        %975 = vmatprep.subr.mxu0 %v224
        %976 = vmatpush1.msra.mxu0 %v223
        %977 = vmatprep.subr.mxu0 %v234
        %978 = vmatpush1.msra.mxu0 %v233
        %979 = vmatprep.subr.mxu0 %v244
        %980 = vmatpush1.msra.mxu0 %v243
        %981 = vmatprep.subr.mxu0 %v254
        %982 = vmatpush1.msra.mxu0 %v253
        %983 = vmatprep.subr.mxu0 %v264
        %984 = vmatpush1.msra.mxu0 %v263
        %985 = vmatprep.subr.mxu0 %v274
        %986 = vmatpush1.msra.mxu0 %v273
        %987 = vmatprep.subr.mxu0 %v284
        %988 = vmatpush1.msra.mxu0 %v283
        %989 = vmatprep.subr.mxu0 %v294
        %990 = vmatpush1.msra.mxu0 %v293
        %991 = vmatprep.subr.mxu0 %v304
        %992 = vmatpush1.msra.mxu0 %v303
        %993 = vmatprep.subr.mxu0 %v314
        %994 = vmatpush1.msra.mxu0 %v313
        %995 = vmatprep.subr.mxu0 %v324
        %996 = vmatpush1.msra.mxu0 %v323
        %997 = vmatprep.subr.mxu0 %v334
        %998 = vmatpush1.msra.mxu0 %v333
        %999 = vmatprep.subr.mxu0 %v344
        %1000 = vmatpush1.msra.mxu0 %v343
        %1001 = vmatprep.subr.mxu0 %v354
        %1002 = vmatpush1.msra.mxu0 %v353
        %1003 = vmatprep.subr.mxu0 %v364
        %1004 = vmatpush1.msra.mxu0 %v363
        %1005 = vmatprep.subr.mxu0 %v374
        %1006 = vmatpush1.msra.mxu0 %v373
        %1007 = vmatprep.subr.mxu0 %v384
        %1008 = vmatpush1.msra.mxu0 %v383
        %1009 = vmatprep.subr.mxu0 %v394
        %1010 = vmatpush1.msra.mxu0 %v393
        %1011 = vmatprep.subr.mxu0 %v404
        %1012 = vmatpush1.msra.mxu0 %v403
        %1013 = vmatprep.subr.mxu0 %v414
        %1014 = vmatpush1.msra.mxu0 %v413
        %1015 = vmatprep.subr.mxu0 %v424
        %1016 = vmatpush1.msra.mxu0 %v423
        %1017 = vmatprep.subr.mxu0 %v434
        %1018 = vmatpush1.msra.mxu0 %v433
        %1019 = vmatprep.subr.mxu0 %v444
        %1020 = vmatpush1.msra.mxu0 %v443
        %1021 = vmatprep.subr.mxu0 %v454
        %1022 = vmatpush1.msra.mxu0 %v453
        %1023 = vmatprep.subr.mxu0 %v464
        %1024 = vmatpush1.msra.mxu0 %v463
        %1025 = vmatprep.subr.mxu0 %v474
        %1026 = vmatpush1.msra.mxu0 %v473
        %1027 = vmatprep.subr.mxu0 %v484
        %1028 = vmatpush1.msra.mxu0 %v483
        %1029 = vmatprep.subr.mxu0 %v494
        %1030 = vmatpush1.msra.mxu0 %v493
        %1031 = vmatprep.subr.mxu0 %v504
        %1032 = vmatpush1.msra.mxu0 %v503
        %1033 = vmatprep.subr.mxu0 %v514
        %1034 = vmatpush1.msra.mxu0 %v513
        %1035 = vmatprep.subr.mxu0 %v524
        %1036 = vmatpush1.msra.mxu0 %v523
        %1037 = vmatprep.mubr.f32.mxu0 %v207
        %1038 = vmatmul.mubr.f32.gmra.mrb[0].mxu0 %v206
        %v1039 = vpop.f32.mrb[0].mxu0
        %v1040 = vadd.f32 0.0, %v1039
        %v1041 = vpop.f32.mrb[0].mxu0
        %v1042 = vadd.f32 0.0, %v1041
        %1043 = vdwg.mxu0
        %1044 = vmatprep.subr.mxu0 %v534
        %1045 = vmatpush1.msra.mxu0 %v533
        %1046 = vmatprep.subr.mxu0 %v544
        %1047 = vmatpush1.msra.mxu0 %v543
        %1048 = vmatprep.subr.mxu0 %v554
        %1049 = vmatpush1.msra.mxu0 %v553
        %1050 = vmatprep.subr.mxu0 %v564
        %1051 = vmatpush1.msra.mxu0 %v563
        %1052 = vmatprep.subr.mxu0 %v574
        %1053 = vmatpush1.msra.mxu0 %v573
        %1054 = vmatprep.subr.mxu0 %v584
        %1055 = vmatpush1.msra.mxu0 %v583
        %1056 = vmatprep.subr.mxu0 %v594
        %1057 = vmatpush1.msra.mxu0 %v593
        %1058 = vmatprep.subr.mxu0 %v604
        %1059 = vmatpush1.msra.mxu0 %v603
        %1060 = vmatprep.subr.mxu0 %v614
        %1061 = vmatpush1.msra.mxu0 %v613
        %1062 = vmatprep.subr.mxu0 %v624
        %1063 = vmatpush1.msra.mxu0 %v623
        %1064 = vmatprep.subr.mxu0 %v634
        %1065 = vmatpush1.msra.mxu0 %v633
        %1066 = vmatprep.subr.mxu0 %v644
        %1067 = vmatpush1.msra.mxu0 %v643
        %1068 = vmatprep.subr.mxu0 %v654
        %1069 = vmatpush1.msra.mxu0 %v653
        %1070 = vmatprep.subr.mxu0 %v664
        %1071 = vmatpush1.msra.mxu0 %v663
        %1072 = vmatprep.subr.mxu0 %v674
        %1073 = vmatpush1.msra.mxu0 %v673
        %1074 = vmatprep.subr.mxu0 %v684
        %1075 = vmatpush1.msra.mxu0 %v683
        %1076 = vmatprep.subr.mxu0 0.0
        %1077 = vmatpush1.msra.mxu0 0.0
        %1078 = vmatprep.subr.mxu0 0.0
        %1079 = vmatpush1.msra.mxu0 0.0
        %1080 = vmatprep.subr.mxu0 0.0
        %1081 = vmatpush1.msra.mxu0 0.0
        %1082 = vmatprep.subr.mxu0 0.0
        %1083 = vmatpush1.msra.mxu0 0.0
        %1084 = vmatprep.subr.mxu0 0.0
        %1085 = vmatpush1.msra.mxu0 0.0
        %1086 = vmatprep.subr.mxu0 0.0
        %1087 = vmatpush1.msra.mxu0 0.0
        %1088 = vmatprep.subr.mxu0 0.0
        %1089 = vmatpush1.msra.mxu0 0.0
        %1090 = vmatprep.subr.mxu0 0.0
        %1091 = vmatpush1.msra.mxu0 0.0
        %1092 = vmatprep.subr.mxu0 0.0
        %1093 = vmatpush1.msra.mxu0 0.0
        %1094 = vmatprep.subr.mxu0 0.0
        %1095 = vmatpush1.msra.mxu0 0.0
        %1096 = vmatprep.subr.mxu0 0.0
        %1097 = vmatpush1.msra.mxu0 0.0
        %1098 = vmatprep.subr.mxu0 0.0
        %1099 = vmatpush1.msra.mxu0 0.0
        %1100 = vmatprep.subr.mxu0 0.0
        %1101 = vmatpush1.msra.mxu0 0.0
        %1102 = vmatprep.subr.mxu0 0.0
        %1103 = vmatpush1.msra.mxu0 0.0
        %1104 = vmatprep.subr.mxu0 0.0
        %1105 = vmatpush1.msra.mxu0 0.0
        %1106 = vmatprep.subr.mxu0 0.0
        %1107 = vmatpush1.msra.mxu0 0.0
        %1108 = vmatprep.mubr.f32.mxu0 0.0
        %1109 = vmatmul.mubr.f32.gmra.mrb[0].mxu0 %v208
        %v1110 = vpop.f32.mrb[0].mxu0
        %v1111 = vadd.f32 %v1040, %v1110
        %v1112 = vpop.f32.mrb[0].mxu0
        %v1113 = vadd.f32 %v1042, %v1112
        %1114 = vdwg.mxu0
        %1115 = vmatprep.subr.mxu0 %v216
        %1116 = vmatpush1.msra.mxu0 %v215
        %1117 = vmatprep.subr.mxu0 %v226
        %1118 = vmatpush1.msra.mxu0 %v225
        %1119 = vmatprep.subr.mxu0 %v236
        %1120 = vmatpush1.msra.mxu0 %v235
        %1121 = vmatprep.subr.mxu0 %v246
        %1122 = vmatpush1.msra.mxu0 %v245
        %1123 = vmatprep.subr.mxu0 %v256
        %1124 = vmatpush1.msra.mxu0 %v255
        %1125 = vmatprep.subr.mxu0 %v266
        %1126 = vmatpush1.msra.mxu0 %v265
        %1127 = vmatprep.subr.mxu0 %v276
        %1128 = vmatpush1.msra.mxu0 %v275
        %1129 = vmatprep.subr.mxu0 %v286
        %1130 = vmatpush1.msra.mxu0 %v285
        %1131 = vmatprep.subr.mxu0 %v296
        %1132 = vmatpush1.msra.mxu0 %v295
        %1133 = vmatprep.subr.mxu0 %v306
        %1134 = vmatpush1.msra.mxu0 %v305
        %1135 = vmatprep.subr.mxu0 %v316
        %1136 = vmatpush1.msra.mxu0 %v315
        %1137 = vmatprep.subr.mxu0 %v326
        %1138 = vmatpush1.msra.mxu0 %v325
        %1139 = vmatprep.subr.mxu0 %v336
        %1140 = vmatpush1.msra.mxu0 %v335
        %1141 = vmatprep.subr.mxu0 %v346
        %1142 = vmatpush1.msra.mxu0 %v345
        %1143 = vmatprep.subr.mxu0 %v356
        %1144 = vmatpush1.msra.mxu0 %v355
        %1145 = vmatprep.subr.mxu0 %v366
        %1146 = vmatpush1.msra.mxu0 %v365
        %1147 = vmatprep.subr.mxu0 %v376
        %1148 = vmatpush1.msra.mxu0 %v375
        %1149 = vmatprep.subr.mxu0 %v386
        %1150 = vmatpush1.msra.mxu0 %v385
        %1151 = vmatprep.subr.mxu0 %v396
        %1152 = vmatpush1.msra.mxu0 %v395
        %1153 = vmatprep.subr.mxu0 %v406
        %1154 = vmatpush1.msra.mxu0 %v405
        %1155 = vmatprep.subr.mxu0 %v416
        %1156 = vmatpush1.msra.mxu0 %v415
        %1157 = vmatprep.subr.mxu0 %v426
        %1158 = vmatpush1.msra.mxu0 %v425
        %1159 = vmatprep.subr.mxu0 %v436
        %1160 = vmatpush1.msra.mxu0 %v435
        %1161 = vmatprep.subr.mxu0 %v446
        %1162 = vmatpush1.msra.mxu0 %v445
        %1163 = vmatprep.subr.mxu0 %v456
        %1164 = vmatpush1.msra.mxu0 %v455
        %1165 = vmatprep.subr.mxu0 %v466
        %1166 = vmatpush1.msra.mxu0 %v465
        %1167 = vmatprep.subr.mxu0 %v476
        %1168 = vmatpush1.msra.mxu0 %v475
        %1169 = vmatprep.subr.mxu0 %v486
        %1170 = vmatpush1.msra.mxu0 %v485
        %1171 = vmatprep.subr.mxu0 %v496
        %1172 = vmatpush1.msra.mxu0 %v495
        %1173 = vmatprep.subr.mxu0 %v506
        %1174 = vmatpush1.msra.mxu0 %v505
        %1175 = vmatprep.subr.mxu0 %v516
        %1176 = vmatpush1.msra.mxu0 %v515
        %1177 = vmatprep.subr.mxu0 %v526
        %1178 = vmatpush1.msra.mxu0 %v525
        %1179 = vmatprep.mubr.f32.mxu0 %v207
        %1180 = vmatmul.mubr.f32.gmra.mrb[0].mxu0 %v206
        %v1181 = vpop.f32.mrb[0].mxu0
        %v1182 = vadd.f32 0.0, %v1181
        %v1183 = vpop.f32.mrb[0].mxu0
        %v1184 = vadd.f32 0.0, %v1183
        %1185 = vdwg.mxu0
        %1186 = vmatprep.subr.mxu0 %v536
        %1187 = vmatpush1.msra.mxu0 %v535
        %1188 = vmatprep.subr.mxu0 %v546
        %1189 = vmatpush1.msra.mxu0 %v545
        %1190 = vmatprep.subr.mxu0 %v556
        %1191 = vmatpush1.msra.mxu0 %v555
        %1192 = vmatprep.subr.mxu0 %v566
        %1193 = vmatpush1.msra.mxu0 %v565
        %1194 = vmatprep.subr.mxu0 %v576
        %1195 = vmatpush1.msra.mxu0 %v575
        %1196 = vmatprep.subr.mxu0 %v586
        %1197 = vmatpush1.msra.mxu0 %v585
        %1198 = vmatprep.subr.mxu0 %v596
        %1199 = vmatpush1.msra.mxu0 %v595
        %1200 = vmatprep.subr.mxu0 %v606
        %1201 = vmatpush1.msra.mxu0 %v605
        %1202 = vmatprep.subr.mxu0 %v616
        %1203 = vmatpush1.msra.mxu0 %v615
        %1204 = vmatprep.subr.mxu0 %v626
        %1205 = vmatpush1.msra.mxu0 %v625
        %1206 = vmatprep.subr.mxu0 %v636
        %1207 = vmatpush1.msra.mxu0 %v635
        %1208 = vmatprep.subr.mxu0 %v646
        %1209 = vmatpush1.msra.mxu0 %v645
        %1210 = vmatprep.subr.mxu0 %v656
        %1211 = vmatpush1.msra.mxu0 %v655
        %1212 = vmatprep.subr.mxu0 %v666
        %1213 = vmatpush1.msra.mxu0 %v665
        %1214 = vmatprep.subr.mxu0 %v676
        %1215 = vmatpush1.msra.mxu0 %v675
        %1216 = vmatprep.subr.mxu0 %v686
        %1217 = vmatpush1.msra.mxu0 %v685
        %1218 = vmatprep.subr.mxu0 0.0
        %1219 = vmatpush1.msra.mxu0 0.0
        %1220 = vmatprep.subr.mxu0 0.0
        %1221 = vmatpush1.msra.mxu0 0.0
        %1222 = vmatprep.subr.mxu0 0.0
        %1223 = vmatpush1.msra.mxu0 0.0
        %1224 = vmatprep.subr.mxu0 0.0
        %1225 = vmatpush1.msra.mxu0 0.0
        %1226 = vmatprep.subr.mxu0 0.0
        %1227 = vmatpush1.msra.mxu0 0.0
        %1228 = vmatprep.subr.mxu0 0.0
        %1229 = vmatpush1.msra.mxu0 0.0
        %1230 = vmatprep.subr.mxu0 0.0
        %1231 = vmatpush1.msra.mxu0 0.0
        %1232 = vmatprep.subr.mxu0 0.0
        %1233 = vmatpush1.msra.mxu0 0.0
        %1234 = vmatprep.subr.mxu0 0.0
        %1235 = vmatpush1.msra.mxu0 0.0
        %1236 = vmatprep.subr.mxu0 0.0
        %1237 = vmatpush1.msra.mxu0 0.0
        %1238 = vmatprep.subr.mxu0 0.0
        %1239 = vmatpush1.msra.mxu0 0.0
        %1240 = vmatprep.subr.mxu0 0.0
        %1241 = vmatpush1.msra.mxu0 0.0
        %1242 = vmatprep.subr.mxu0 0.0
        %1243 = vmatpush1.msra.mxu0 0.0
        %1244 = vmatprep.subr.mxu0 0.0
        %1245 = vmatpush1.msra.mxu0 0.0
        %1246 = vmatprep.subr.mxu0 0.0
        %1247 = vmatpush1.msra.mxu0 0.0
        %1248 = vmatprep.subr.mxu0 0.0
        %1249 = vmatpush1.msra.mxu0 0.0
        %1250 = vmatprep.mubr.f32.mxu0 0.0
        %1251 = vmatmul.mubr.f32.gmra.mrb[0].mxu0 %v208
        %v1252 = vpop.f32.mrb[0].mxu0
        %v1253 = vadd.f32 %v1182, %v1252
        %v1254 = vpop.f32.mrb[0].mxu0
        %v1255 = vadd.f32 %v1184, %v1254
        %1256 = vdwg.mxu0
        %1257 = vmatprep.subr.mxu0 %v218
        %1258 = vmatpush1.msra.mxu0 %v217
        %1259 = vmatprep.subr.mxu0 %v228
        %1260 = vmatpush1.msra.mxu0 %v227
        %1261 = vmatprep.subr.mxu0 %v238
        %1262 = vmatpush1.msra.mxu0 %v237
        %1263 = vmatprep.subr.mxu0 %v248
        %1264 = vmatpush1.msra.mxu0 %v247
        %1265 = vmatprep.subr.mxu0 %v258
        %1266 = vmatpush1.msra.mxu0 %v257
        %1267 = vmatprep.subr.mxu0 %v268
        %1268 = vmatpush1.msra.mxu0 %v267
        %1269 = vmatprep.subr.mxu0 %v278
        %1270 = vmatpush1.msra.mxu0 %v277
        %1271 = vmatprep.subr.mxu0 %v288
        %1272 = vmatpush1.msra.mxu0 %v287
        %1273 = vmatprep.subr.mxu0 %v298
        %1274 = vmatpush1.msra.mxu0 %v297
        %1275 = vmatprep.subr.mxu0 %v308
        %1276 = vmatpush1.msra.mxu0 %v307
        %1277 = vmatprep.subr.mxu0 %v318
        %1278 = vmatpush1.msra.mxu0 %v317
        %1279 = vmatprep.subr.mxu0 %v328
        %1280 = vmatpush1.msra.mxu0 %v327
        %1281 = vmatprep.subr.mxu0 %v338
        %1282 = vmatpush1.msra.mxu0 %v337
        %1283 = vmatprep.subr.mxu0 %v348
        %1284 = vmatpush1.msra.mxu0 %v347
        %1285 = vmatprep.subr.mxu0 %v358
        %1286 = vmatpush1.msra.mxu0 %v357
        %1287 = vmatprep.subr.mxu0 %v368
        %1288 = vmatpush1.msra.mxu0 %v367
        %1289 = vmatprep.subr.mxu0 %v378
        %1290 = vmatpush1.msra.mxu0 %v377
        %1291 = vmatprep.subr.mxu0 %v388
        %1292 = vmatpush1.msra.mxu0 %v387
        %1293 = vmatprep.subr.mxu0 %v398
        %1294 = vmatpush1.msra.mxu0 %v397
        %1295 = vmatprep.subr.mxu0 %v408
        %1296 = vmatpush1.msra.mxu0 %v407
        %1297 = vmatprep.subr.mxu0 %v418
        %1298 = vmatpush1.msra.mxu0 %v417
        %1299 = vmatprep.subr.mxu0 %v428
        %1300 = vmatpush1.msra.mxu0 %v427
        %1301 = vmatprep.subr.mxu0 %v438
        %1302 = vmatpush1.msra.mxu0 %v437
        %1303 = vmatprep.subr.mxu0 %v448
        %1304 = vmatpush1.msra.mxu0 %v447
        %1305 = vmatprep.subr.mxu0 %v458
        %1306 = vmatpush1.msra.mxu0 %v457
        %1307 = vmatprep.subr.mxu0 %v468
        %1308 = vmatpush1.msra.mxu0 %v467
        %1309 = vmatprep.subr.mxu0 %v478
        %1310 = vmatpush1.msra.mxu0 %v477
        %1311 = vmatprep.subr.mxu0 %v488
        %1312 = vmatpush1.msra.mxu0 %v487
        %1313 = vmatprep.subr.mxu0 %v498
        %1314 = vmatpush1.msra.mxu0 %v497
        %1315 = vmatprep.subr.mxu0 %v508
        %1316 = vmatpush1.msra.mxu0 %v507
        %1317 = vmatprep.subr.mxu0 %v518
        %1318 = vmatpush1.msra.mxu0 %v517
        %1319 = vmatprep.subr.mxu0 %v528
        %1320 = vmatpush1.msra.mxu0 %v527
        %1321 = vmatprep.mubr.f32.mxu0 %v207
        %1322 = vmatmul.mubr.f32.gmra.mrb[0].mxu0 %v206
        %v1323 = vpop.f32.mrb[0].mxu0
        %v1324 = vadd.f32 0.0, %v1323
        %v1325 = vpop.f32.mrb[0].mxu0
        %v1326 = vadd.f32 0.0, %v1325
        %1327 = vdwg.mxu0
        %1328 = vmatprep.subr.mxu0 %v538
        %1329 = vmatpush1.msra.mxu0 %v537
        %1330 = vmatprep.subr.mxu0 %v548
        %1331 = vmatpush1.msra.mxu0 %v547
        %1332 = vmatprep.subr.mxu0 %v558
        %1333 = vmatpush1.msra.mxu0 %v557
        %1334 = vmatprep.subr.mxu0 %v568
        %1335 = vmatpush1.msra.mxu0 %v567
        %1336 = vmatprep.subr.mxu0 %v578
        %1337 = vmatpush1.msra.mxu0 %v577
        %1338 = vmatprep.subr.mxu0 %v588
        %1339 = vmatpush1.msra.mxu0 %v587
        %1340 = vmatprep.subr.mxu0 %v598
        %1341 = vmatpush1.msra.mxu0 %v597
        %1342 = vmatprep.subr.mxu0 %v608
        %1343 = vmatpush1.msra.mxu0 %v607
        %1344 = vmatprep.subr.mxu0 %v618
        %1345 = vmatpush1.msra.mxu0 %v617
        %1346 = vmatprep.subr.mxu0 %v628
        %1347 = vmatpush1.msra.mxu0 %v627
        %1348 = vmatprep.subr.mxu0 %v638
        %1349 = vmatpush1.msra.mxu0 %v637
        %1350 = vmatprep.subr.mxu0 %v648
        %1351 = vmatpush1.msra.mxu0 %v647
        %1352 = vmatprep.subr.mxu0 %v658
        %1353 = vmatpush1.msra.mxu0 %v657
        %1354 = vmatprep.subr.mxu0 %v668
        %1355 = vmatpush1.msra.mxu0 %v667
        %1356 = vmatprep.subr.mxu0 %v678
        %1357 = vmatpush1.msra.mxu0 %v677
        %1358 = vmatprep.subr.mxu0 %v688
        %1359 = vmatpush1.msra.mxu0 %v687
        %1360 = vmatprep.subr.mxu0 0.0
        %1361 = vmatpush1.msra.mxu0 0.0
        %1362 = vmatprep.subr.mxu0 0.0
        %1363 = vmatpush1.msra.mxu0 0.0
        %1364 = vmatprep.subr.mxu0 0.0
        %1365 = vmatpush1.msra.mxu0 0.0
        %1366 = vmatprep.subr.mxu0 0.0
        %1367 = vmatpush1.msra.mxu0 0.0
        %1368 = vmatprep.subr.mxu0 0.0
        %1369 = vmatpush1.msra.mxu0 0.0
        %1370 = vmatprep.subr.mxu0 0.0
        %1371 = vmatpush1.msra.mxu0 0.0
        %1372 = vmatprep.subr.mxu0 0.0
        %1373 = vmatpush1.msra.mxu0 0.0
        %1374 = vmatprep.subr.mxu0 0.0
        %1375 = vmatpush1.msra.mxu0 0.0
        %1376 = vmatprep.subr.mxu0 0.0
        %1377 = vmatpush1.msra.mxu0 0.0
        %1378 = vmatprep.subr.mxu0 0.0
        %1379 = vmatpush1.msra.mxu0 0.0
        %1380 = vmatprep.subr.mxu0 0.0
        %1381 = vmatpush1.msra.mxu0 0.0
        %1382 = vmatprep.subr.mxu0 0.0
        %1383 = vmatpush1.msra.mxu0 0.0
        %1384 = vmatprep.subr.mxu0 0.0
        %1385 = vmatpush1.msra.mxu0 0.0
        %1386 = vmatprep.subr.mxu0 0.0
        %1387 = vmatpush1.msra.mxu0 0.0
        %1388 = vmatprep.subr.mxu0 0.0
        %1389 = vmatpush1.msra.mxu0 0.0
        %1390 = vmatprep.subr.mxu0 0.0
        %1391 = vmatpush1.msra.mxu0 0.0
        %1392 = vmatprep.mubr.f32.mxu0 0.0
        %1393 = vmatmul.mubr.f32.gmra.mrb[0].mxu0 %v208
        %v1394 = vpop.f32.mrb[0].mxu0
        %v1395 = vadd.f32 %v1324, %v1394
        %v1396 = vpop.f32.mrb[0].mxu0
        %v1397 = vadd.f32 %v1326, %v1396
        %1398 = vdwg.mxu0
        %p1399 = scmp.eq.s32.totalorder %s21, 0
        // Predicated region
        $region33: #{deepcube_a_core.3} parent=27 // pred_check
          %p1400 = pneg %p1399
        $region34: #{deepcube_a_core.3} parent=27 // pred_check_branch
          %1402 = sbr.rel (%p1400) target = $region36
        $region35: #{deepcube_a_core.3} parent=27 // pred_region
          %1403 = vst [vmem:[%s204] sm:$0xff] %v827
          %1404 = vst [vmem:[%s204 + $0x8] sm:$0xff] %v829
          %1405 = vst [vmem:[%s204 + $0x10] sm:$0xff] %v969
          %1406 = vst [vmem:[%s204 + $0x18] sm:$0xff] %v971
          %1407 = vst [vmem:[%s204 + $0x20] sm:$0xff] %v1111
          %1408 = vst [vmem:[%s204 + $0x28] sm:$0xff] %v1113
          %1409 = vst [vmem:[%s204 + $0x30] sm:$0xff] %v1253
          %1410 = vst [vmem:[%s204 + $0x38] sm:$0xff] %v1255
          %1411 = vst [vmem:[%s204 + $0x40] sm:$0xff] %v1395
          %1412 = vst [vmem:[%s204 + $0x48] sm:$0xff] %v1397
        $region36: #{deepcube_a_core.3} parent=27 // pred_fallthru
          _
        %p1413 = scmp.gt.s32.totalorder %s21, 0
        // Predicated region
        $region37: #{deepcube_a_core.3} parent=27 // pred_check
          %p1414 = pneg %p1413
        $region38: #{deepcube_a_core.3} parent=27 // pred_check_branch
          %1416 = sbr.rel (%p1414) target = $region40
        $region39: #{deepcube_a_core.3} parent=27 // pred_region
          %v1417 = vld [vmem:[%s204] sm:$0xff]
          %v1418 = vld [vmem:[%s204 + $0x8] sm:$0xff]
          %v1419 = vld [vmem:[%s204 + $0x10] sm:$0xff]
          %v1420 = vld [vmem:[%s204 + $0x18] sm:$0xff]
          %v1421 = vld [vmem:[%s204 + $0x20] sm:$0xff]
          %v1422 = vld [vmem:[%s204 + $0x28] sm:$0xff]
          %v1423 = vld [vmem:[%s204 + $0x30] sm:$0xff]
          %v1424 = vld [vmem:[%s204 + $0x38] sm:$0xff]
          %v1425 = vld [vmem:[%s204 + $0x40] sm:$0xff]
          %v1426 = vld [vmem:[%s204 + $0x48] sm:$0xff]
          %v1427 = vadd.f32 %v1417, %v827
          %v1428 = vadd.f32 %v1418, %v829
          %v1429 = vadd.f32 %v1419, %v969
          %v1430 = vadd.f32 %v1420, %v971
          %v1431 = vadd.f32 %v1421, %v1111
          %v1432 = vadd.f32 %v1422, %v1113
          %v1433 = vadd.f32 %v1423, %v1253
          %v1434 = vadd.f32 %v1424, %v1255
          %v1435 = vadd.f32 %v1425, %v1395
          %v1436 = vadd.f32 %v1426, %v1397
          %1437 = vst [vmem:[%s204] sm:$0xff] %v1427
          %1438 = vst [vmem:[%s204 + $0x8] sm:$0xff] %v1428
          %1439 = vst [vmem:[%s204 + $0x10] sm:$0xff] %v1429
          %1440 = vst [vmem:[%s204 + $0x18] sm:$0xff] %v1430
          %1441 = vst [vmem:[%s204 + $0x20] sm:$0xff] %v1431
          %1442 = vst [vmem:[%s204 + $0x28] sm:$0xff] %v1432
          %1443 = vst [vmem:[%s204 + $0x30] sm:$0xff] %v1433
          %1444 = vst [vmem:[%s204 + $0x38] sm:$0xff] %v1434
          %1445 = vst [vmem:[%s204 + $0x40] sm:$0xff] %v1435
          %1446 = vst [vmem:[%s204 + $0x48] sm:$0xff] %v1436
        $region40: #{deepcube_a_core.3} parent=27 // pred_fallthru
          _
        // Predicated region
        $region41: #{deepcube_a_core.3} parent=27 // pred_check
          %p1447 = pneg %p1399
        $region42: #{deepcube_a_core.3} parent=27 // pred_check_branch
          %1449 = sbr.rel (%p1447) target = $region44
        $region43: #{deepcube_a_core.3} parent=27 // pred_region
          %v1450 = vld [vmem:[%s204] sm:$0xff]
          %v1451 = vld [vmem:[%s204 + $0x8] sm:$0xff]
          %v1452 = vld [vmem:[%s204 + $0x10] sm:$0xff]
          %v1453 = vld [vmem:[%s204 + $0x18] sm:$0xff]
          %v1454 = vld [vmem:[%s204 + $0x20] sm:$0xff]
          %v1455 = vld [vmem:[%s204 + $0x28] sm:$0xff]
          %v1456 = vld [vmem:[%s204 + $0x30] sm:$0xff]
          %v1457 = vld [vmem:[%s204 + $0x38] sm:$0xff]
          %v1458 = vld [vmem:[%s204 + $0x40] sm:$0xff]
          %v1459 = vld [vmem:[%s204 + $0x48] sm:$0xff]
          %v1460 = vmax.f32 %v1450, 0.0
          %v1461 = vmax.f32 %v1451, 0.0
          %v1462 = vmax.f32 %v1452, 0.0
          %v1463 = vmax.f32 %v1453, 0.0
          %v1464 = vmax.f32 %v1454, 0.0
          %v1465 = vmax.f32 %v1455, 0.0
          %v1466 = vmax.f32 %v1456, 0.0
          %v1467 = vmax.f32 %v1457, 0.0
          %v1468 = vmax.f32 %v1458, 0.0
          %v1469 = vmax.f32 %v1459, 0.0
          %1470 = vst [vmem:[%s204] sm:$0xff] %v1460
          %1471 = vst [vmem:[%s204 + $0x8] sm:$0xff] %v1461
          %1472 = vst [vmem:[%s204 + $0x10] sm:$0xff] %v1462
          %1473 = vst [vmem:[%s204 + $0x18] sm:$0xff] %v1463
          %1474 = vst [vmem:[%s204 + $0x20] sm:$0xff] %v1464
          %1475 = vst [vmem:[%s204 + $0x28] sm:$0xff] %v1465
          %1476 = vst [vmem:[%s204 + $0x30] sm:$0xff] %v1466
          %1477 = vst [vmem:[%s204 + $0x38] sm:$0xff] %v1467
          %1478 = vst [vmem:[%s204 + $0x40] sm:$0xff] %v1468
          %1479 = vst [vmem:[%s204 + $0x48] sm:$0xff] %v1469
        $region44: #{deepcube_a_core.3} parent=27 // pred_fallthru
          _
        %s1480 = smul.u32 10, %s20
        %p1481 = scmp.lt.s32.totalorder %s1480, 39
        %s1482 = scalar_select %p1481, %s1480, 39
        %s1483 = smul.addr %s1482, 8
        %s1484 = scalar_lea.vmem %s2, %s1483
        // Predicated region
        $region45: #{deepcube_a_core.3} parent=27 // pred_check
          %p1485 = pneg %p100
        $region46: #{deepcube_a_core.3} parent=27 // pred_check_branch
          %1487 = sbr.rel (%p1485) target = $region48
        $region47: #{deepcube_a_core.3} parent=27 // pred_region
          %s1488 = smul.u32 10, %s20
        $region48: #{deepcube_a_core.3} parent=27 // pred_fallthru
          _
      $region28: #{deepcube_a_core.3} parent=5 // pred_fallthru
        _
      %p1489 = scmp.le.s32.totalorder 2, %s11
      // Predicated region
      $region49: #{deepcube_a_core.3} parent=5 // pred_check
        %p1490 = pneg %p1489
      $region50: #{deepcube_a_core.3} parent=5 // pred_check_branch
        %1492 = sbr.rel (%p1490) target = $region52
      $region51: #{deepcube_a_core.3} parent=5 // pred_region
        %s1493 = ssub.s32 %s11, 2
        // Predicated region
        $region53: #{deepcube_a_core.3} parent=51 // pred_check
          %p1494 = pneg %p106
        $region54: #{deepcube_a_core.3} parent=51 // pred_check_branch
          %1496 = sbr.rel (%p1494) target = $region56
        $region55: #{deepcube_a_core.3} parent=51 // pred_region
          %s1497 = smul.u32 10, %s22
          %p1498 = scmp.lt.s32.totalorder %s1497, 39
          %s1499 = scalar_select %p1498, %s1497, 39
          %s1500 = smul.addr %s1499, 8
          %s1501 = scalar_lea.vmem %s2, %s1500
        $region56: #{deepcube_a_core.3} parent=51 // pred_fallthru
          _
      $region52: #{deepcube_a_core.3} parent=5 // pred_fallthru
        _
    $region6: #{deepcube_a_core.3} parent=1 // loop_footer
      %s15 = sadd.s32 1, %s11
    $region7: #{deepcube_a_core.3} parent=1 // loop_footer_branch
      %10 = sbr.rel target = $region3
    $region8: #{deepcube_a_core.3} parent=1 // loop_exit
      _
    %1502 = vsyncpa [#allocation3], 1
    %s1503 = scalar_lea.sflag [#allocation3], 1
    %1504 = vsyncpa %s1503, 1

// kernel: deepcube_a_core.4
$region0: #{deepcube_a_core.4}
  #allocation0 [shape = 'u32[]', space=smem, size = 0x4, offset = 0x4, fixed_abs, tag = 'smem constant byte address 0x4 - core index']
  #allocation1 [shape = 'u32[144,128]{1,0:T(1,128)}', space=vmem, size = 0x12000, scoped, tag = 'internal scratch']
  %s0 = inlined_call_operand.vmem [shape: f32[8,5120], index: 0, kind: input, shape index: {}]
  %s1 = inlined_call_operand.hbm [shape: f32[5120,1024], index: 1, kind: input, shape index: {}]
  %s2 = inlined_call_operand.vmem [shape: f32[8,1024], index: 2, kind: output, shape index: {}]
  %s3 = sld [smem:[#allocation0]]
  $region57: #{deepcube_a_core.4} parent=0
    _
  %s5 = ssub.s32 1, %s3
  %s6 = scalar_select 0, %s5, %s3
  $region1: #{deepcube_a_core.4} parent=0
    #allocation2 [shape = 'u8[5242880]{0}', space=vmem, size = 0x500000, scoped, tag = 'input window, operand 1']
    #allocation3 [shape = 's32[2]{0}', space=sflag, size = 0x8, scoped, tag = 'scoped memory for deepcube_a_core.4']
    %7 = vsyncpa [#allocation3], 0
    %s8 = scalar_lea.sflag [#allocation3], 1
    %9 = vsyncpa %s8, 0
    loop: start=0, step=1, limit=10
    $region2: #{deepcube_a_core.4} parent=1 // loop_pre_header
      _
    $region3: #{deepcube_a_core.4} parent=1 // loop_header
      %s11 = sphi 0, %s15
      %p12 = scmp.ge.s32.totalorder %s11, 10
      %s18 = sphi 0, %s30
      %s19 = sphi 0, %s26
      %s20 = sphi 0, %s18
      %s21 = sphi 0, %s19
      %s22 = sphi 0, %s20
      %s23 = sphi 0, %s21
      %s33 = sphi 0, %s35
      %s36 = sphi 0, %s33
      %s37 = sphi 0, %s36
      %s53 = sphi 0, %s37
      %s61 = sphi 0, %s63
      %s64 = sphi 0, %s61
      %s65 = sphi 0, %s64
      %s81 = sphi 0, %s65
      %s87 = sphi 0, %s89
      %s90 = sphi 0, %s87
      %s91 = sphi 0, %s90
      %s107 = sphi 0, %s91
    $region4: #{deepcube_a_core.4} parent=1 // loop_header_branch
      %14 = sbr.rel (%p12) target = $region8
    $region5: #{deepcube_a_core.4} parent=1 // loop_body
      %s16 = ssub.s32 %s11, 1
      %s17 = ssub.s32 %s11, 2
      %s24 = sadd.s32 1, %s19
      %p25 = scmp.ge.s32.totalorder %s24, 4
      %s26 = scalar_select %p25, 0, %s24
      %s27 = sadd.s32 1, %s18
      %s28 = scalar_select %p25, %s27, %s18
      %p29 = scmp.ge.s32.totalorder %s28, 2
      %s30 = scalar_select %p29, 0, %s28
      %s31 = ssub.s32 %s19, %s26
      %p32 = scmp.eq.s32.totalorder %s31, 0
      %s34 = sadd.s32 %s33, 1
      %s35 = scalar_select %p32, %s33, %s34
      %p38 = pneg %p32
      %p39 = scmp.eq.s32.totalorder %s11, 7
      %p40 = por %p38, %p39
      %p41 = scmp.ne.s32.totalorder %s33, %s36
      %p42 = scmp.eq.s32.totalorder %s11, 0
      %p43 = por %p41, %p42
      %p44 = scmp.ne.s32.totalorder %s33, %s36
      %p45 = scmp.eq.s32.totalorder %s16, 7
      %p46 = por %p44, %p45
      %p47 = scmp.ne.s32.totalorder %s36, %s37
      %p48 = scmp.eq.s32.totalorder %s16, 0
      %p49 = por %p47, %p48
      %p50 = scmp.ne.s32.totalorder %s36, %s37
      %p51 = scmp.eq.s32.totalorder %s17, 7
      %p52 = por %p50, %p51
      %p54 = scmp.ne.s32.totalorder %s37, %s53
      %p55 = scmp.eq.s32.totalorder %s17, 0
      %p56 = por %p54, %p55
      %s57 = ssub.s32 %s19, %s26
      %s58 = ssub.s32 %s18, %s30
      %s59 = sor.u32 %s57, %s58
      %p60 = scmp.eq.s32.totalorder %s59, 0
      %s62 = sadd.s32 %s61, 1
      %s63 = scalar_select %p60, %s61, %s62
      %p66 = pneg %p60
      %p67 = scmp.eq.s32.totalorder %s11, 7
      %p68 = por %p66, %p67
      %p69 = scmp.ne.s32.totalorder %s61, %s64
      %p70 = scmp.eq.s32.totalorder %s11, 0
      %p71 = por %p69, %p70
      %p72 = scmp.ne.s32.totalorder %s61, %s64
      %p73 = scmp.eq.s32.totalorder %s16, 7
      %p74 = por %p72, %p73
      %p75 = scmp.ne.s32.totalorder %s64, %s65
      %p76 = scmp.eq.s32.totalorder %s16, 0
      %p77 = por %p75, %p76
      %p78 = scmp.ne.s32.totalorder %s64, %s65
      %p79 = scmp.eq.s32.totalorder %s17, 7
      %p80 = por %p78, %p79
      %p82 = scmp.ne.s32.totalorder %s65, %s81
      %p83 = scmp.eq.s32.totalorder %s17, 0
      %p84 = por %p82, %p83
      %s85 = ssub.s32 %s18, %s30
      %p86 = scmp.eq.s32.totalorder %s85, 0
      %s88 = sadd.s32 %s87, 1
      %s89 = scalar_select %p86, %s87, %s88
      %p92 = pneg %p86
      %p93 = scmp.eq.s32.totalorder %s11, 7
      %p94 = por %p92, %p93
      %p95 = scmp.ne.s32.totalorder %s87, %s90
      %p96 = scmp.eq.s32.totalorder %s11, 0
      %p97 = por %p95, %p96
      %p98 = scmp.ne.s32.totalorder %s87, %s90
      %p99 = scmp.eq.s32.totalorder %s16, 7
      %p100 = por %p98, %p99
      %p101 = scmp.ne.s32.totalorder %s90, %s91
      %p102 = scmp.eq.s32.totalorder %s16, 0
      %p103 = por %p101, %p102
      %p104 = scmp.ne.s32.totalorder %s90, %s91
      %p105 = scmp.eq.s32.totalorder %s17, 7
      %p106 = por %p104, %p105
      %p108 = scmp.ne.s32.totalorder %s91, %s107
      %p109 = scmp.eq.s32.totalorder %s17, 0
      %p110 = por %p108, %p109
      %p111 = scmp.le.s32.totalorder 1, %s11
      %p112 = scmp.lt.s32.totalorder %s11, 9
      %p113 = pnand %p111, %p112
      %p114 = pneg %p113
      // Predicated region
      $region9: #{deepcube_a_core.4} parent=5 // pred_check
        _
      $region10: #{deepcube_a_core.4} parent=5 // pred_check_branch
        %116 = sbr.rel (%p113) target = $region12
      $region11: #{deepcube_a_core.4} parent=5 // pred_region
        %s117 = ssub.s32 %s11, 1
      $region12: #{deepcube_a_core.4} parent=5 // pred_fallthru
        _
      %p118 = scmp.lt.s32.totalorder %s11, 8
      // Predicated region
      $region13: #{deepcube_a_core.4} parent=5 // pred_check
        %p119 = pneg %p118
      $region14: #{deepcube_a_core.4} parent=5 // pred_check_branch
        %121 = sbr.rel (%p119) target = $region16
      $region15: #{deepcube_a_core.4} parent=5 // pred_region
        // Predicated region
        $region17: #{deepcube_a_core.4} parent=15 // pred_check
          %p122 = pneg %p43
        $region18: #{deepcube_a_core.4} parent=15 // pred_check_branch
          %124 = sbr.rel (%p122) target = $region20
        $region19: #{deepcube_a_core.4} parent=15 // pred_region
          %s125 = smul.u32 10, %s19
          %p126 = scmp.lt.s32.totalorder %s125, 39
          %s127 = scalar_select %p126, %s125, 39
          %s128 = smul.addr %s127, 8
          %s129 = scalar_lea.vmem %s0, %s128
          %s130 = smul.u32 10, %s19
        $region20: #{deepcube_a_core.4} parent=15 // pred_fallthru
          _
        // Predicated region
        $region21: #{deepcube_a_core.4} parent=15 // pred_check
          %p131 = pneg %p71
        $region22: #{deepcube_a_core.4} parent=15 // pred_check_branch
          %133 = sbr.rel (%p131) target = $region24
        $region23: #{deepcube_a_core.4} parent=15 // pred_region
          %s134 = sand.u32 %s61, 1
          %s135 = scalar_lea.sflag [#allocation3], %s134
          %s136 = sand.u32 %s61, 1
          %s137 = smul.addr %s136, 5120
          %s138 = scalar_lea.vmem [#allocation2], %s137
          %s139 = smul.u32 160, %s19
          %s140 = smul.u32 4, %s18
          %s142 = ssub.s32 81920, 81920
          %143 = vsyncadd %s135, %s142
          %s144 = smul.addr %s139, 8
          %s145 = sadd.s32 %s140, %s144
          %s146 = smul.addr %s145, 128
          %s147 = scalar_lea.hbm %s1, %s146
          %s148 = sshll.u32 %s138, 4
          %s149 = int_to_ptr.vmem [resolvable:$true] %s148
          %154 = dma.hbm_to_vmem [thread:$0]  %s147, 81920, %s149, %s135, 1024, 512, 32
        $region24: #{deepcube_a_core.4} parent=15 // pred_fallthru
          _
      $region16: #{deepcube_a_core.4} parent=5 // pred_fallthru
        _
      %p155 = scmp.le.s32.totalorder 1, %s11
      %p156 = scmp.lt.s32.totalorder %s11, 9
      %p157 = pnand %p155, %p156
      %p158 = pneg %p157
      // Predicated region
      $region25: #{deepcube_a_core.4} parent=5 // pred_check
        _
      $region26: #{deepcube_a_core.4} parent=5 // pred_check_branch
        %160 = sbr.rel (%p157) target = $region28
      $region27: #{deepcube_a_core.4} parent=5 // pred_region
        %s161 = ssub.s32 %s11, 1
        %s162 = sand.u32 %s64, 1
        %s163 = scalar_lea.sflag [#allocation3], %s162
        %s164 = sand.u32 %s64, 1
        %s165 = smul.addr %s164, 5120
        %s166 = scalar_lea.vmem [#allocation2], %s165
        // Predicated region
        $region29: #{deepcube_a_core.4} parent=27 // pred_check
          %p167 = pneg %p77
        $region30: #{deepcube_a_core.4} parent=27 // pred_check_branch
          %169 = sbr.rel (%p167) target = $region32
        $region31: #{deepcube_a_core.4} parent=27 // pred_region
          %170 = dma.done %s163, 81920
        $region32: #{deepcube_a_core.4} parent=27 // pred_fallthru
          _
        %s171 = smul.u32 10, %s21
        %p172 = scmp.lt.s32.totalorder %s171, 39
        %s173 = scalar_select %p172, %s171, 39
        %s174 = smul.addr %s173, 8
        %s175 = scalar_lea.vmem %s0, %s174
        %p176 = pneg %p49
        %p177 = pneg %p46
        %s178 = sand.u32 %s64, 1
        %s179 = scalar_lea.sflag [#allocation3], %s178
        %s180 = sand.u32 %s64, 1
        %s181 = smul.addr %s180, 5120
        %s182 = scalar_lea.vmem [#allocation2], %s181
        %p183 = pneg %p77
        %p184 = pneg %p74
        %p185 = pneg %p103
        %p186 = pneg %p100
        %s187 = smul.u32 4, %s20
        %p188 = scmp.lt.s32.totalorder %s187, 7
        %s189 = scalar_select %p188, %s187, 7
        %s190 = smul.addr %s189, 8
        %s191 = scalar_lea.vmem %s2, %s190
        %s192 = smul.u32 10, %s21
        %p193 = scmp.lt.s32.totalorder %s192, 39
        %s194 = scalar_select %p193, %s192, 39
        %s195 = smul.addr %s194, 8
        %s196 = scalar_lea.vmem %s0, %s195
        %s197 = smul.u32 10, %s21
        %s198 = smul.u32 160, %s21
        %s199 = smul.u32 4, %s20
        %s200 = smul.u32 4, %s20
        %p201 = scmp.lt.s32.totalorder %s200, 7
        %s202 = scalar_select %p201, %s200, 7
        %s203 = smul.addr %s202, 8
        %s204 = scalar_lea.vmem %s2, %s203
        %s205 = smul.u32 4, %s20
        %v206 = vld [vmem:[%s196] sm:$0xff]
        %v207 = vld [vmem:[%s196 + $0x8] sm:$0xff]
        %v208 = vld [vmem:[%s196 + $0x10] sm:$0xff]
        %v209 = vld [vmem:[%s196 + $0x18] sm:$0xff]
        %v210 = vld [vmem:[%s196 + $0x20] sm:$0xff]
        %v211 = vld [vmem:[%s196 + $0x28] sm:$0xff]
        %v212 = vld [vmem:[%s196 + $0x30] sm:$0xff]
        %v213 = vld [vmem:[%s196 + $0x38] sm:$0xff]
        %v214 = vld [vmem:[%s196 + $0x40] sm:$0xff]
        %v215 = vld [vmem:[%s196 + $0x48] sm:$0xff]
        %v216 = vld [vmem:[%s166] sm:$0xff]
        %v217 = vld [vmem:[%s166 + $0x8] sm:$0xff]
        %v218 = vld [vmem:[%s166 + $0x10] sm:$0xff]
        %v219 = vld [vmem:[%s166 + $0x18] sm:$0xff]
        %v220 = vld [vmem:[%s166 + $0x20] sm:$0xff]
        %v221 = vld [vmem:[%s166 + $0x28] sm:$0xff]
        %v222 = vld [vmem:[%s166 + $0x30] sm:$0xff]
        %v223 = vld [vmem:[%s166 + $0x38] sm:$0xff]
        %v224 = vld [vmem:[%s166 + $0x40] sm:$0xff]
        %v225 = vld [vmem:[%s166 + $0x48] sm:$0xff]
        %v226 = vld [vmem:[%s166 + $0x50] sm:$0xff]
        %v227 = vld [vmem:[%s166 + $0x58] sm:$0xff]
        %v228 = vld [vmem:[%s166 + $0x60] sm:$0xff]
        %v229 = vld [vmem:[%s166 + $0x68] sm:$0xff]
        %v230 = vld [vmem:[%s166 + $0x70] sm:$0xff]
        %v231 = vld [vmem:[%s166 + $0x78] sm:$0xff]
        %v232 = vld [vmem:[%s166 + $0x80] sm:$0xff]
        %v233 = vld [vmem:[%s166 + $0x88] sm:$0xff]
        %v234 = vld [vmem:[%s166 + $0x90] sm:$0xff]
        %v235 = vld [vmem:[%s166 + $0x98] sm:$0xff]
        %v236 = vld [vmem:[%s166 + $0xa0] sm:$0xff]
        %v237 = vld [vmem:[%s166 + $0xa8] sm:$0xff]
        %v238 = vld [vmem:[%s166 + $0xb0] sm:$0xff]
        %v239 = vld [vmem:[%s166 + $0xb8] sm:$0xff]
        %v240 = vld [vmem:[%s166 + $0xc0] sm:$0xff]
        %v241 = vld [vmem:[%s166 + $0xc8] sm:$0xff]
        %v242 = vld [vmem:[%s166 + $0xd0] sm:$0xff]
        %v243 = vld [vmem:[%s166 + $0xd8] sm:$0xff]
        %v244 = vld [vmem:[%s166 + $0xe0] sm:$0xff]
        %v245 = vld [vmem:[%s166 + $0xe8] sm:$0xff]
        %v246 = vld [vmem:[%s166 + $0xf0] sm:$0xff]
        %v247 = vld [vmem:[%s166 + $0xf8] sm:$0xff]
        %v248 = vld [vmem:[%s166 + $0x100] sm:$0xff]
        %v249 = vld [vmem:[%s166 + $0x108] sm:$0xff]
        %v250 = vld [vmem:[%s166 + $0x110] sm:$0xff]
        %v251 = vld [vmem:[%s166 + $0x118] sm:$0xff]
        %v252 = vld [vmem:[%s166 + $0x120] sm:$0xff]
        %v253 = vld [vmem:[%s166 + $0x128] sm:$0xff]
        %v254 = vld [vmem:[%s166 + $0x130] sm:$0xff]
        %v255 = vld [vmem:[%s166 + $0x138] sm:$0xff]
        %v256 = vld [vmem:[%s166 + $0x140] sm:$0xff]
        %v257 = vld [vmem:[%s166 + $0x148] sm:$0xff]
        %v258 = vld [vmem:[%s166 + $0x150] sm:$0xff]
        %v259 = vld [vmem:[%s166 + $0x158] sm:$0xff]
        %v260 = vld [vmem:[%s166 + $0x160] sm:$0xff]
        %v261 = vld [vmem:[%s166 + $0x168] sm:$0xff]
        %v262 = vld [vmem:[%s166 + $0x170] sm:$0xff]
        %v263 = vld [vmem:[%s166 + $0x178] sm:$0xff]
        %v264 = vld [vmem:[%s166 + $0x180] sm:$0xff]
        %v265 = vld [vmem:[%s166 + $0x188] sm:$0xff]
        %v266 = vld [vmem:[%s166 + $0x190] sm:$0xff]
        %v267 = vld [vmem:[%s166 + $0x198] sm:$0xff]
        %v268 = vld [vmem:[%s166 + $0x1a0] sm:$0xff]
        %v269 = vld [vmem:[%s166 + $0x1a8] sm:$0xff]
        %v270 = vld [vmem:[%s166 + $0x1b0] sm:$0xff]
        %v271 = vld [vmem:[%s166 + $0x1b8] sm:$0xff]
        %v272 = vld [vmem:[%s166 + $0x1c0] sm:$0xff]
        %v273 = vld [vmem:[%s166 + $0x1c8] sm:$0xff]
        %v274 = vld [vmem:[%s166 + $0x1d0] sm:$0xff]
        %v275 = vld [vmem:[%s166 + $0x1d8] sm:$0xff]
        %v276 = vld [vmem:[%s166 + $0x1e0] sm:$0xff]
        %v277 = vld [vmem:[%s166 + $0x1e8] sm:$0xff]
        %v278 = vld [vmem:[%s166 + $0x1f0] sm:$0xff]
        %v279 = vld [vmem:[%s166 + $0x1f8] sm:$0xff]
        %v280 = vld [vmem:[%s166 + $0x200] sm:$0xff]
        %v281 = vld [vmem:[%s166 + $0x208] sm:$0xff]
        %v282 = vld [vmem:[%s166 + $0x210] sm:$0xff]
        %v283 = vld [vmem:[%s166 + $0x218] sm:$0xff]
        %v284 = vld [vmem:[%s166 + $0x220] sm:$0xff]
        %v285 = vld [vmem:[%s166 + $0x228] sm:$0xff]
        %v286 = vld [vmem:[%s166 + $0x230] sm:$0xff]
        %v287 = vld [vmem:[%s166 + $0x238] sm:$0xff]
        %v288 = vld [vmem:[%s166 + $0x240] sm:$0xff]
        %v289 = vld [vmem:[%s166 + $0x248] sm:$0xff]
        %v290 = vld [vmem:[%s166 + $0x250] sm:$0xff]
        %v291 = vld [vmem:[%s166 + $0x258] sm:$0xff]
        %v292 = vld [vmem:[%s166 + $0x260] sm:$0xff]
        %v293 = vld [vmem:[%s166 + $0x268] sm:$0xff]
        %v294 = vld [vmem:[%s166 + $0x270] sm:$0xff]
        %v295 = vld [vmem:[%s166 + $0x278] sm:$0xff]
        %v296 = vld [vmem:[%s166 + $0x280] sm:$0xff]
        %v297 = vld [vmem:[%s166 + $0x288] sm:$0xff]
        %v298 = vld [vmem:[%s166 + $0x290] sm:$0xff]
        %v299 = vld [vmem:[%s166 + $0x298] sm:$0xff]
        %v300 = vld [vmem:[%s166 + $0x2a0] sm:$0xff]
        %v301 = vld [vmem:[%s166 + $0x2a8] sm:$0xff]
        %v302 = vld [vmem:[%s166 + $0x2b0] sm:$0xff]
        %v303 = vld [vmem:[%s166 + $0x2b8] sm:$0xff]
        %v304 = vld [vmem:[%s166 + $0x2c0] sm:$0xff]
        %v305 = vld [vmem:[%s166 + $0x2c8] sm:$0xff]
        %v306 = vld [vmem:[%s166 + $0x2d0] sm:$0xff]
        %v307 = vld [vmem:[%s166 + $0x2d8] sm:$0xff]
        %v308 = vld [vmem:[%s166 + $0x2e0] sm:$0xff]
        %v309 = vld [vmem:[%s166 + $0x2e8] sm:$0xff]
        %v310 = vld [vmem:[%s166 + $0x2f0] sm:$0xff]
        %v311 = vld [vmem:[%s166 + $0x2f8] sm:$0xff]
        %v312 = vld [vmem:[%s166 + $0x300] sm:$0xff]
        %v313 = vld [vmem:[%s166 + $0x308] sm:$0xff]
        %v314 = vld [vmem:[%s166 + $0x310] sm:$0xff]
        %v315 = vld [vmem:[%s166 + $0x318] sm:$0xff]
        %v316 = vld [vmem:[%s166 + $0x320] sm:$0xff]
        %v317 = vld [vmem:[%s166 + $0x328] sm:$0xff]
        %v318 = vld [vmem:[%s166 + $0x330] sm:$0xff]
        %v319 = vld [vmem:[%s166 + $0x338] sm:$0xff]
        %v320 = vld [vmem:[%s166 + $0x340] sm:$0xff]
        %v321 = vld [vmem:[%s166 + $0x348] sm:$0xff]
        %v322 = vld [vmem:[%s166 + $0x350] sm:$0xff]
        %v323 = vld [vmem:[%s166 + $0x358] sm:$0xff]
        %v324 = vld [vmem:[%s166 + $0x360] sm:$0xff]
        %v325 = vld [vmem:[%s166 + $0x368] sm:$0xff]
        %v326 = vld [vmem:[%s166 + $0x370] sm:$0xff]
        %v327 = vld [vmem:[%s166 + $0x378] sm:$0xff]
        %v328 = vld [vmem:[%s166 + $0x380] sm:$0xff]
        %v329 = vld [vmem:[%s166 + $0x388] sm:$0xff]
        %v330 = vld [vmem:[%s166 + $0x390] sm:$0xff]
        %v331 = vld [vmem:[%s166 + $0x398] sm:$0xff]
        %v332 = vld [vmem:[%s166 + $0x3a0] sm:$0xff]
        %v333 = vld [vmem:[%s166 + $0x3a8] sm:$0xff]
        %v334 = vld [vmem:[%s166 + $0x3b0] sm:$0xff]
        %v335 = vld [vmem:[%s166 + $0x3b8] sm:$0xff]
        %v336 = vld [vmem:[%s166 + $0x3c0] sm:$0xff]
        %v337 = vld [vmem:[%s166 + $0x3c8] sm:$0xff]
        %v338 = vld [vmem:[%s166 + $0x3d0] sm:$0xff]
        %v339 = vld [vmem:[%s166 + $0x3d8] sm:$0xff]
        %v340 = vld [vmem:[%s166 + $0x3e0] sm:$0xff]
        %v341 = vld [vmem:[%s166 + $0x3e8] sm:$0xff]
        %v342 = vld [vmem:[%s166 + $0x3f0] sm:$0xff]
        %v343 = vld [vmem:[%s166 + $0x3f8] sm:$0xff]
        %v344 = vld [vmem:[%s166 + $0x400] sm:$0xff]
        %v345 = vld [vmem:[%s166 + $0x408] sm:$0xff]
        %v346 = vld [vmem:[%s166 + $0x410] sm:$0xff]
        %v347 = vld [vmem:[%s166 + $0x418] sm:$0xff]
        %v348 = vld [vmem:[%s166 + $0x420] sm:$0xff]
        %v349 = vld [vmem:[%s166 + $0x428] sm:$0xff]
        %v350 = vld [vmem:[%s166 + $0x430] sm:$0xff]
        %v351 = vld [vmem:[%s166 + $0x438] sm:$0xff]
        %v352 = vld [vmem:[%s166 + $0x440] sm:$0xff]
        %v353 = vld [vmem:[%s166 + $0x448] sm:$0xff]
        %v354 = vld [vmem:[%s166 + $0x450] sm:$0xff]
        %v355 = vld [vmem:[%s166 + $0x458] sm:$0xff]
        %v356 = vld [vmem:[%s166 + $0x460] sm:$0xff]
        %v357 = vld [vmem:[%s166 + $0x468] sm:$0xff]
        %v358 = vld [vmem:[%s166 + $0x470] sm:$0xff]
        %v359 = vld [vmem:[%s166 + $0x478] sm:$0xff]
        %v360 = vld [vmem:[%s166 + $0x480] sm:$0xff]
        %v361 = vld [vmem:[%s166 + $0x488] sm:$0xff]
        %v362 = vld [vmem:[%s166 + $0x490] sm:$0xff]
        %v363 = vld [vmem:[%s166 + $0x498] sm:$0xff]
        %v364 = vld [vmem:[%s166 + $0x4a0] sm:$0xff]
        %v365 = vld [vmem:[%s166 + $0x4a8] sm:$0xff]
        %v366 = vld [vmem:[%s166 + $0x4b0] sm:$0xff]
        %v367 = vld [vmem:[%s166 + $0x4b8] sm:$0xff]
        %v368 = vld [vmem:[%s166 + $0x4c0] sm:$0xff]
        %v369 = vld [vmem:[%s166 + $0x4c8] sm:$0xff]
        %v370 = vld [vmem:[%s166 + $0x4d0] sm:$0xff]
        %v371 = vld [vmem:[%s166 + $0x4d8] sm:$0xff]
        %v372 = vld [vmem:[%s166 + $0x4e0] sm:$0xff]
        %v373 = vld [vmem:[%s166 + $0x4e8] sm:$0xff]
        %v374 = vld [vmem:[%s166 + $0x4f0] sm:$0xff]
        %v375 = vld [vmem:[%s166 + $0x4f8] sm:$0xff]
        %v376 = vld [vmem:[%s166 + $0x500] sm:$0xff]
        %v377 = vld [vmem:[%s166 + $0x508] sm:$0xff]
        %v378 = vld [vmem:[%s166 + $0x510] sm:$0xff]
        %v379 = vld [vmem:[%s166 + $0x518] sm:$0xff]
        %v380 = vld [vmem:[%s166 + $0x520] sm:$0xff]
        %v381 = vld [vmem:[%s166 + $0x528] sm:$0xff]
        %v382 = vld [vmem:[%s166 + $0x530] sm:$0xff]
        %v383 = vld [vmem:[%s166 + $0x538] sm:$0xff]
        %v384 = vld [vmem:[%s166 + $0x540] sm:$0xff]
        %v385 = vld [vmem:[%s166 + $0x548] sm:$0xff]
        %v386 = vld [vmem:[%s166 + $0x550] sm:$0xff]
        %v387 = vld [vmem:[%s166 + $0x558] sm:$0xff]
        %v388 = vld [vmem:[%s166 + $0x560] sm:$0xff]
        %v389 = vld [vmem:[%s166 + $0x568] sm:$0xff]
        %v390 = vld [vmem:[%s166 + $0x570] sm:$0xff]
        %v391 = vld [vmem:[%s166 + $0x578] sm:$0xff]
        %v392 = vld [vmem:[%s166 + $0x580] sm:$0xff]
        %v393 = vld [vmem:[%s166 + $0x588] sm:$0xff]
        %v394 = vld [vmem:[%s166 + $0x590] sm:$0xff]
        %v395 = vld [vmem:[%s166 + $0x598] sm:$0xff]
        %v396 = vld [vmem:[%s166 + $0x5a0] sm:$0xff]
        %v397 = vld [vmem:[%s166 + $0x5a8] sm:$0xff]
        %v398 = vld [vmem:[%s166 + $0x5b0] sm:$0xff]
        %v399 = vld [vmem:[%s166 + $0x5b8] sm:$0xff]
        %v400 = vld [vmem:[%s166 + $0x5c0] sm:$0xff]
        %v401 = vld [vmem:[%s166 + $0x5c8] sm:$0xff]
        %v402 = vld [vmem:[%s166 + $0x5d0] sm:$0xff]
        %v403 = vld [vmem:[%s166 + $0x5d8] sm:$0xff]
        %v404 = vld [vmem:[%s166 + $0x5e0] sm:$0xff]
        %v405 = vld [vmem:[%s166 + $0x5e8] sm:$0xff]
        %v406 = vld [vmem:[%s166 + $0x5f0] sm:$0xff]
        %v407 = vld [vmem:[%s166 + $0x5f8] sm:$0xff]
        %v408 = vld [vmem:[%s166 + $0x600] sm:$0xff]
        %v409 = vld [vmem:[%s166 + $0x608] sm:$0xff]
        %v410 = vld [vmem:[%s166 + $0x610] sm:$0xff]
        %v411 = vld [vmem:[%s166 + $0x618] sm:$0xff]
        %v412 = vld [vmem:[%s166 + $0x620] sm:$0xff]
        %v413 = vld [vmem:[%s166 + $0x628] sm:$0xff]
        %v414 = vld [vmem:[%s166 + $0x630] sm:$0xff]
        %v415 = vld [vmem:[%s166 + $0x638] sm:$0xff]
        %v416 = vld [vmem:[%s166 + $0x640] sm:$0xff]
        %v417 = vld [vmem:[%s166 + $0x648] sm:$0xff]
        %v418 = vld [vmem:[%s166 + $0x650] sm:$0xff]
        %v419 = vld [vmem:[%s166 + $0x658] sm:$0xff]
        %v420 = vld [vmem:[%s166 + $0x660] sm:$0xff]
        %v421 = vld [vmem:[%s166 + $0x668] sm:$0xff]
        %v422 = vld [vmem:[%s166 + $0x670] sm:$0xff]
        %v423 = vld [vmem:[%s166 + $0x678] sm:$0xff]
        %v424 = vld [vmem:[%s166 + $0x680] sm:$0xff]
        %v425 = vld [vmem:[%s166 + $0x688] sm:$0xff]
        %v426 = vld [vmem:[%s166 + $0x690] sm:$0xff]
        %v427 = vld [vmem:[%s166 + $0x698] sm:$0xff]
        %v428 = vld [vmem:[%s166 + $0x6a0] sm:$0xff]
        %v429 = vld [vmem:[%s166 + $0x6a8] sm:$0xff]
        %v430 = vld [vmem:[%s166 + $0x6b0] sm:$0xff]
        %v431 = vld [vmem:[%s166 + $0x6b8] sm:$0xff]
        %v432 = vld [vmem:[%s166 + $0x6c0] sm:$0xff]
        %v433 = vld [vmem:[%s166 + $0x6c8] sm:$0xff]
        %v434 = vld [vmem:[%s166 + $0x6d0] sm:$0xff]
        %v435 = vld [vmem:[%s166 + $0x6d8] sm:$0xff]
        %v436 = vld [vmem:[%s166 + $0x6e0] sm:$0xff]
        %v437 = vld [vmem:[%s166 + $0x6e8] sm:$0xff]
        %v438 = vld [vmem:[%s166 + $0x6f0] sm:$0xff]
        %v439 = vld [vmem:[%s166 + $0x6f8] sm:$0xff]
        %v440 = vld [vmem:[%s166 + $0x700] sm:$0xff]
        %v441 = vld [vmem:[%s166 + $0x708] sm:$0xff]
        %v442 = vld [vmem:[%s166 + $0x710] sm:$0xff]
        %v443 = vld [vmem:[%s166 + $0x718] sm:$0xff]
        %v444 = vld [vmem:[%s166 + $0x720] sm:$0xff]
        %v445 = vld [vmem:[%s166 + $0x728] sm:$0xff]
        %v446 = vld [vmem:[%s166 + $0x730] sm:$0xff]
        %v447 = vld [vmem:[%s166 + $0x738] sm:$0xff]
        %v448 = vld [vmem:[%s166 + $0x740] sm:$0xff]
        %v449 = vld [vmem:[%s166 + $0x748] sm:$0xff]
        %v450 = vld [vmem:[%s166 + $0x750] sm:$0xff]
        %v451 = vld [vmem:[%s166 + $0x758] sm:$0xff]
        %v452 = vld [vmem:[%s166 + $0x760] sm:$0xff]
        %v453 = vld [vmem:[%s166 + $0x768] sm:$0xff]
        %v454 = vld [vmem:[%s166 + $0x770] sm:$0xff]
        %v455 = vld [vmem:[%s166 + $0x778] sm:$0xff]
        %v456 = vld [vmem:[%s166 + $0x780] sm:$0xff]
        %v457 = vld [vmem:[%s166 + $0x788] sm:$0xff]
        %v458 = vld [vmem:[%s166 + $0x790] sm:$0xff]
        %v459 = vld [vmem:[%s166 + $0x798] sm:$0xff]
        %v460 = vld [vmem:[%s166 + $0x7a0] sm:$0xff]
        %v461 = vld [vmem:[%s166 + $0x7a8] sm:$0xff]
        %v462 = vld [vmem:[%s166 + $0x7b0] sm:$0xff]
        %v463 = vld [vmem:[%s166 + $0x7b8] sm:$0xff]
        %v464 = vld [vmem:[%s166 + $0x7c0] sm:$0xff]
        %v465 = vld [vmem:[%s166 + $0x7c8] sm:$0xff]
        %v466 = vld [vmem:[%s166 + $0x7d0] sm:$0xff]
        %v467 = vld [vmem:[%s166 + $0x7d8] sm:$0xff]
        %v468 = vld [vmem:[%s166 + $0x7e0] sm:$0xff]
        %v469 = vld [vmem:[%s166 + $0x7e8] sm:$0xff]
        %v470 = vld [vmem:[%s166 + $0x7f0] sm:$0xff]
        %v471 = vld [vmem:[%s166 + $0x7f8] sm:$0xff]
        %v472 = vld [vmem:[%s166 + $0x800] sm:$0xff]
        %v473 = vld [vmem:[%s166 + $0x808] sm:$0xff]
        %v474 = vld [vmem:[%s166 + $0x810] sm:$0xff]
        %v475 = vld [vmem:[%s166 + $0x818] sm:$0xff]
        %v476 = vld [vmem:[%s166 + $0x820] sm:$0xff]
        %v477 = vld [vmem:[%s166 + $0x828] sm:$0xff]
        %v478 = vld [vmem:[%s166 + $0x830] sm:$0xff]
        %v479 = vld [vmem:[%s166 + $0x838] sm:$0xff]
        %v480 = vld [vmem:[%s166 + $0x840] sm:$0xff]
        %v481 = vld [vmem:[%s166 + $0x848] sm:$0xff]
        %v482 = vld [vmem:[%s166 + $0x850] sm:$0xff]
        %v483 = vld [vmem:[%s166 + $0x858] sm:$0xff]
        %v484 = vld [vmem:[%s166 + $0x860] sm:$0xff]
        %v485 = vld [vmem:[%s166 + $0x868] sm:$0xff]
        %v486 = vld [vmem:[%s166 + $0x870] sm:$0xff]
        %v487 = vld [vmem:[%s166 + $0x878] sm:$0xff]
        %v488 = vld [vmem:[%s166 + $0x880] sm:$0xff]
        %v489 = vld [vmem:[%s166 + $0x888] sm:$0xff]
        %v490 = vld [vmem:[%s166 + $0x890] sm:$0xff]
        %v491 = vld [vmem:[%s166 + $0x898] sm:$0xff]
        %v492 = vld [vmem:[%s166 + $0x8a0] sm:$0xff]
        %v493 = vld [vmem:[%s166 + $0x8a8] sm:$0xff]
        %v494 = vld [vmem:[%s166 + $0x8b0] sm:$0xff]
        %v495 = vld [vmem:[%s166 + $0x8b8] sm:$0xff]
        %v496 = vld [vmem:[%s166 + $0x8c0] sm:$0xff]
        %v497 = vld [vmem:[%s166 + $0x8c8] sm:$0xff]
        %v498 = vld [vmem:[%s166 + $0x8d0] sm:$0xff]
        %v499 = vld [vmem:[%s166 + $0x8d8] sm:$0xff]
        %v500 = vld [vmem:[%s166 + $0x8e0] sm:$0xff]
        %v501 = vld [vmem:[%s166 + $0x8e8] sm:$0xff]
        %v502 = vld [vmem:[%s166 + $0x8f0] sm:$0xff]
        %v503 = vld [vmem:[%s166 + $0x8f8] sm:$0xff]
        %v504 = vld [vmem:[%s166 + $0x900] sm:$0xff]
        %v505 = vld [vmem:[%s166 + $0x908] sm:$0xff]
        %v506 = vld [vmem:[%s166 + $0x910] sm:$0xff]
        %v507 = vld [vmem:[%s166 + $0x918] sm:$0xff]
        %v508 = vld [vmem:[%s166 + $0x920] sm:$0xff]
        %v509 = vld [vmem:[%s166 + $0x928] sm:$0xff]
        %v510 = vld [vmem:[%s166 + $0x930] sm:$0xff]
        %v511 = vld [vmem:[%s166 + $0x938] sm:$0xff]
        %v512 = vld [vmem:[%s166 + $0x940] sm:$0xff]
        %v513 = vld [vmem:[%s166 + $0x948] sm:$0xff]
        %v514 = vld [vmem:[%s166 + $0x950] sm:$0xff]
        %v515 = vld [vmem:[%s166 + $0x958] sm:$0xff]
        %v516 = vld [vmem:[%s166 + $0x960] sm:$0xff]
        %v517 = vld [vmem:[%s166 + $0x968] sm:$0xff]
        %v518 = vld [vmem:[%s166 + $0x970] sm:$0xff]
        %v519 = vld [vmem:[%s166 + $0x978] sm:$0xff]
        %v520 = vld [vmem:[%s166 + $0x980] sm:$0xff]
        %v521 = vld [vmem:[%s166 + $0x988] sm:$0xff]
        %v522 = vld [vmem:[%s166 + $0x990] sm:$0xff]
        %v523 = vld [vmem:[%s166 + $0x998] sm:$0xff]
        %v524 = vld [vmem:[%s166 + $0x9a0] sm:$0xff]
        %v525 = vld [vmem:[%s166 + $0x9a8] sm:$0xff]
        %v526 = vld [vmem:[%s166 + $0x9b0] sm:$0xff]
        %v527 = vld [vmem:[%s166 + $0x9b8] sm:$0xff]
        %v528 = vld [vmem:[%s166 + $0x9c0] sm:$0xff]
        %v529 = vld [vmem:[%s166 + $0x9c8] sm:$0xff]
        %v530 = vld [vmem:[%s166 + $0x9d0] sm:$0xff]
        %v531 = vld [vmem:[%s166 + $0x9d8] sm:$0xff]
        %v532 = vld [vmem:[%s166 + $0x9e0] sm:$0xff]
        %v533 = vld [vmem:[%s166 + $0x9e8] sm:$0xff]
        %v534 = vld [vmem:[%s166 + $0x9f0] sm:$0xff]
        %v535 = vld [vmem:[%s166 + $0x9f8] sm:$0xff]
        %v536 = vld [vmem:[%s166 + $0xa00] sm:$0xff]
        %v537 = vld [vmem:[%s166 + $0xa08] sm:$0xff]
        %v538 = vld [vmem:[%s166 + $0xa10] sm:$0xff]
        %v539 = vld [vmem:[%s166 + $0xa18] sm:$0xff]
        %v540 = vld [vmem:[%s166 + $0xa20] sm:$0xff]
        %v541 = vld [vmem:[%s166 + $0xa28] sm:$0xff]
        %v542 = vld [vmem:[%s166 + $0xa30] sm:$0xff]
        %v543 = vld [vmem:[%s166 + $0xa38] sm:$0xff]
        %v544 = vld [vmem:[%s166 + $0xa40] sm:$0xff]
        %v545 = vld [vmem:[%s166 + $0xa48] sm:$0xff]
        %v546 = vld [vmem:[%s166 + $0xa50] sm:$0xff]
        %v547 = vld [vmem:[%s166 + $0xa58] sm:$0xff]
        %v548 = vld [vmem:[%s166 + $0xa60] sm:$0xff]
        %v549 = vld [vmem:[%s166 + $0xa68] sm:$0xff]
        %v550 = vld [vmem:[%s166 + $0xa70] sm:$0xff]
        %v551 = vld [vmem:[%s166 + $0xa78] sm:$0xff]
        %v552 = vld [vmem:[%s166 + $0xa80] sm:$0xff]
        %v553 = vld [vmem:[%s166 + $0xa88] sm:$0xff]
        %v554 = vld [vmem:[%s166 + $0xa90] sm:$0xff]
        %v555 = vld [vmem:[%s166 + $0xa98] sm:$0xff]
        %v556 = vld [vmem:[%s166 + $0xaa0] sm:$0xff]
        %v557 = vld [vmem:[%s166 + $0xaa8] sm:$0xff]
        %v558 = vld [vmem:[%s166 + $0xab0] sm:$0xff]
        %v559 = vld [vmem:[%s166 + $0xab8] sm:$0xff]
        %v560 = vld [vmem:[%s166 + $0xac0] sm:$0xff]
        %v561 = vld [vmem:[%s166 + $0xac8] sm:$0xff]
        %v562 = vld [vmem:[%s166 + $0xad0] sm:$0xff]
        %v563 = vld [vmem:[%s166 + $0xad8] sm:$0xff]
        %v564 = vld [vmem:[%s166 + $0xae0] sm:$0xff]
        %v565 = vld [vmem:[%s166 + $0xae8] sm:$0xff]
        %v566 = vld [vmem:[%s166 + $0xaf0] sm:$0xff]
        %v567 = vld [vmem:[%s166 + $0xaf8] sm:$0xff]
        %v568 = vld [vmem:[%s166 + $0xb00] sm:$0xff]
        %v569 = vld [vmem:[%s166 + $0xb08] sm:$0xff]
        %v570 = vld [vmem:[%s166 + $0xb10] sm:$0xff]
        %v571 = vld [vmem:[%s166 + $0xb18] sm:$0xff]
        %v572 = vld [vmem:[%s166 + $0xb20] sm:$0xff]
        %v573 = vld [vmem:[%s166 + $0xb28] sm:$0xff]
        %v574 = vld [vmem:[%s166 + $0xb30] sm:$0xff]
        %v575 = vld [vmem:[%s166 + $0xb38] sm:$0xff]
        %v576 = vld [vmem:[%s166 + $0xb40] sm:$0xff]
        %v577 = vld [vmem:[%s166 + $0xb48] sm:$0xff]
        %v578 = vld [vmem:[%s166 + $0xb50] sm:$0xff]
        %v579 = vld [vmem:[%s166 + $0xb58] sm:$0xff]
        %v580 = vld [vmem:[%s166 + $0xb60] sm:$0xff]
        %v581 = vld [vmem:[%s166 + $0xb68] sm:$0xff]
        %v582 = vld [vmem:[%s166 + $0xb70] sm:$0xff]
        %v583 = vld [vmem:[%s166 + $0xb78] sm:$0xff]
        %v584 = vld [vmem:[%s166 + $0xb80] sm:$0xff]
        %v585 = vld [vmem:[%s166 + $0xb88] sm:$0xff]
        %v586 = vld [vmem:[%s166 + $0xb90] sm:$0xff]
        %v587 = vld [vmem:[%s166 + $0xb98] sm:$0xff]
        %v588 = vld [vmem:[%s166 + $0xba0] sm:$0xff]
        %v589 = vld [vmem:[%s166 + $0xba8] sm:$0xff]
        %v590 = vld [vmem:[%s166 + $0xbb0] sm:$0xff]
        %v591 = vld [vmem:[%s166 + $0xbb8] sm:$0xff]
        %v592 = vld [vmem:[%s166 + $0xbc0] sm:$0xff]
        %v593 = vld [vmem:[%s166 + $0xbc8] sm:$0xff]
        %v594 = vld [vmem:[%s166 + $0xbd0] sm:$0xff]
        %v595 = vld [vmem:[%s166 + $0xbd8] sm:$0xff]
        %v596 = vld [vmem:[%s166 + $0xbe0] sm:$0xff]
        %v597 = vld [vmem:[%s166 + $0xbe8] sm:$0xff]
        %v598 = vld [vmem:[%s166 + $0xbf0] sm:$0xff]
        %v599 = vld [vmem:[%s166 + $0xbf8] sm:$0xff]
        %v600 = vld [vmem:[%s166 + $0xc00] sm:$0xff]
        %v601 = vld [vmem:[%s166 + $0xc08] sm:$0xff]
        %v602 = vld [vmem:[%s166 + $0xc10] sm:$0xff]
        %v603 = vld [vmem:[%s166 + $0xc18] sm:$0xff]
        %v604 = vld [vmem:[%s166 + $0xc20] sm:$0xff]
        %v605 = vld [vmem:[%s166 + $0xc28] sm:$0xff]
        %v606 = vld [vmem:[%s166 + $0xc30] sm:$0xff]
        %v607 = vld [vmem:[%s166 + $0xc38] sm:$0xff]
        %v608 = vld [vmem:[%s166 + $0xc40] sm:$0xff]
        %v609 = vld [vmem:[%s166 + $0xc48] sm:$0xff]
        %v610 = vld [vmem:[%s166 + $0xc50] sm:$0xff]
        %v611 = vld [vmem:[%s166 + $0xc58] sm:$0xff]
        %v612 = vld [vmem:[%s166 + $0xc60] sm:$0xff]
        %v613 = vld [vmem:[%s166 + $0xc68] sm:$0xff]
        %v614 = vld [vmem:[%s166 + $0xc70] sm:$0xff]
        %v615 = vld [vmem:[%s166 + $0xc78] sm:$0xff]
        %v616 = vld [vmem:[%s166 + $0xc80] sm:$0xff]
        %v617 = vld [vmem:[%s166 + $0xc88] sm:$0xff]
        %v618 = vld [vmem:[%s166 + $0xc90] sm:$0xff]
        %v619 = vld [vmem:[%s166 + $0xc98] sm:$0xff]
        %v620 = vld [vmem:[%s166 + $0xca0] sm:$0xff]
        %v621 = vld [vmem:[%s166 + $0xca8] sm:$0xff]
        %v622 = vld [vmem:[%s166 + $0xcb0] sm:$0xff]
        %v623 = vld [vmem:[%s166 + $0xcb8] sm:$0xff]
        %v624 = vld [vmem:[%s166 + $0xcc0] sm:$0xff]
        %v625 = vld [vmem:[%s166 + $0xcc8] sm:$0xff]
        %v626 = vld [vmem:[%s166 + $0xcd0] sm:$0xff]
        %v627 = vld [vmem:[%s166 + $0xcd8] sm:$0xff]
        %v628 = vld [vmem:[%s166 + $0xce0] sm:$0xff]
        %v629 = vld [vmem:[%s166 + $0xce8] sm:$0xff]
        %v630 = vld [vmem:[%s166 + $0xcf0] sm:$0xff]
        %v631 = vld [vmem:[%s166 + $0xcf8] sm:$0xff]
        %v632 = vld [vmem:[%s166 + $0xd00] sm:$0xff]
        %v633 = vld [vmem:[%s166 + $0xd08] sm:$0xff]
        %v634 = vld [vmem:[%s166 + $0xd10] sm:$0xff]
        %v635 = vld [vmem:[%s166 + $0xd18] sm:$0xff]
        %v636 = vld [vmem:[%s166 + $0xd20] sm:$0xff]
        %v637 = vld [vmem:[%s166 + $0xd28] sm:$0xff]
        %v638 = vld [vmem:[%s166 + $0xd30] sm:$0xff]
        %v639 = vld [vmem:[%s166 + $0xd38] sm:$0xff]
        %v640 = vld [vmem:[%s166 + $0xd40] sm:$0xff]
        %v641 = vld [vmem:[%s166 + $0xd48] sm:$0xff]
        %v642 = vld [vmem:[%s166 + $0xd50] sm:$0xff]
        %v643 = vld [vmem:[%s166 + $0xd58] sm:$0xff]
        %v644 = vld [vmem:[%s166 + $0xd60] sm:$0xff]
        %v645 = vld [vmem:[%s166 + $0xd68] sm:$0xff]
        %v646 = vld [vmem:[%s166 + $0xd70] sm:$0xff]
        %v647 = vld [vmem:[%s166 + $0xd78] sm:$0xff]
        %v648 = vld [vmem:[%s166 + $0xd80] sm:$0xff]
        %v649 = vld [vmem:[%s166 + $0xd88] sm:$0xff]
        %v650 = vld [vmem:[%s166 + $0xd90] sm:$0xff]
        %v651 = vld [vmem:[%s166 + $0xd98] sm:$0xff]
        %v652 = vld [vmem:[%s166 + $0xda0] sm:$0xff]
        %v653 = vld [vmem:[%s166 + $0xda8] sm:$0xff]
        %v654 = vld [vmem:[%s166 + $0xdb0] sm:$0xff]
        %v655 = vld [vmem:[%s166 + $0xdb8] sm:$0xff]
        %v656 = vld [vmem:[%s166 + $0xdc0] sm:$0xff]
        %v657 = vld [vmem:[%s166 + $0xdc8] sm:$0xff]
        %v658 = vld [vmem:[%s166 + $0xdd0] sm:$0xff]
        %v659 = vld [vmem:[%s166 + $0xdd8] sm:$0xff]
        %v660 = vld [vmem:[%s166 + $0xde0] sm:$0xff]
        %v661 = vld [vmem:[%s166 + $0xde8] sm:$0xff]
        %v662 = vld [vmem:[%s166 + $0xdf0] sm:$0xff]
        %v663 = vld [vmem:[%s166 + $0xdf8] sm:$0xff]
        %v664 = vld [vmem:[%s166 + $0xe00] sm:$0xff]
        %v665 = vld [vmem:[%s166 + $0xe08] sm:$0xff]
        %v666 = vld [vmem:[%s166 + $0xe10] sm:$0xff]
        %v667 = vld [vmem:[%s166 + $0xe18] sm:$0xff]
        %v668 = vld [vmem:[%s166 + $0xe20] sm:$0xff]
        %v669 = vld [vmem:[%s166 + $0xe28] sm:$0xff]
        %v670 = vld [vmem:[%s166 + $0xe30] sm:$0xff]
        %v671 = vld [vmem:[%s166 + $0xe38] sm:$0xff]
        %v672 = vld [vmem:[%s166 + $0xe40] sm:$0xff]
        %v673 = vld [vmem:[%s166 + $0xe48] sm:$0xff]
        %v674 = vld [vmem:[%s166 + $0xe50] sm:$0xff]
        %v675 = vld [vmem:[%s166 + $0xe58] sm:$0xff]
        %v676 = vld [vmem:[%s166 + $0xe60] sm:$0xff]
        %v677 = vld [vmem:[%s166 + $0xe68] sm:$0xff]
        %v678 = vld [vmem:[%s166 + $0xe70] sm:$0xff]
        %v679 = vld [vmem:[%s166 + $0xe78] sm:$0xff]
        %v680 = vld [vmem:[%s166 + $0xe80] sm:$0xff]
        %v681 = vld [vmem:[%s166 + $0xe88] sm:$0xff]
        %v682 = vld [vmem:[%s166 + $0xe90] sm:$0xff]
        %v683 = vld [vmem:[%s166 + $0xe98] sm:$0xff]
        %v684 = vld [vmem:[%s166 + $0xea0] sm:$0xff]
        %v685 = vld [vmem:[%s166 + $0xea8] sm:$0xff]
        %v686 = vld [vmem:[%s166 + $0xeb0] sm:$0xff]
        %v687 = vld [vmem:[%s166 + $0xeb8] sm:$0xff]
        %v688 = vld [vmem:[%s166 + $0xec0] sm:$0xff]
        %v689 = vld [vmem:[%s166 + $0xec8] sm:$0xff]
        %v690 = vld [vmem:[%s166 + $0xed0] sm:$0xff]
        %v691 = vld [vmem:[%s166 + $0xed8] sm:$0xff]
        %v692 = vld [vmem:[%s166 + $0xee0] sm:$0xff]
        %v693 = vld [vmem:[%s166 + $0xee8] sm:$0xff]
        %v694 = vld [vmem:[%s166 + $0xef0] sm:$0xff]
        %v695 = vld [vmem:[%s166 + $0xef8] sm:$0xff]
        %v696 = vld [vmem:[%s166 + $0xf00] sm:$0xff]
        %v697 = vld [vmem:[%s166 + $0xf08] sm:$0xff]
        %v698 = vld [vmem:[%s166 + $0xf10] sm:$0xff]
        %v699 = vld [vmem:[%s166 + $0xf18] sm:$0xff]
        %v700 = vld [vmem:[%s166 + $0xf20] sm:$0xff]
        %v701 = vld [vmem:[%s166 + $0xf28] sm:$0xff]
        %v702 = vld [vmem:[%s166 + $0xf30] sm:$0xff]
        %v703 = vld [vmem:[%s166 + $0xf38] sm:$0xff]
        %v704 = vld [vmem:[%s166 + $0xf40] sm:$0xff]
        %v705 = vld [vmem:[%s166 + $0xf48] sm:$0xff]
        %v706 = vld [vmem:[%s166 + $0xf50] sm:$0xff]
        %v707 = vld [vmem:[%s166 + $0xf58] sm:$0xff]
        %v708 = vld [vmem:[%s166 + $0xf60] sm:$0xff]
        %v709 = vld [vmem:[%s166 + $0xf68] sm:$0xff]
        %v710 = vld [vmem:[%s166 + $0xf70] sm:$0xff]
        %v711 = vld [vmem:[%s166 + $0xf78] sm:$0xff]
        %v712 = vld [vmem:[%s166 + $0xf80] sm:$0xff]
        %v713 = vld [vmem:[%s166 + $0xf88] sm:$0xff]
        %v714 = vld [vmem:[%s166 + $0xf90] sm:$0xff]
        %v715 = vld [vmem:[%s166 + $0xf98] sm:$0xff]
        %v716 = vld [vmem:[%s166 + $0xfa0] sm:$0xff]
        %v717 = vld [vmem:[%s166 + $0xfa8] sm:$0xff]
        %v718 = vld [vmem:[%s166 + $0xfb0] sm:$0xff]
        %v719 = vld [vmem:[%s166 + $0xfb8] sm:$0xff]
        %v720 = vld [vmem:[%s166 + $0xfc0] sm:$0xff]
        %v721 = vld [vmem:[%s166 + $0xfc8] sm:$0xff]
        %v722 = vld [vmem:[%s166 + $0xfd0] sm:$0xff]
        %v723 = vld [vmem:[%s166 + $0xfd8] sm:$0xff]
        %v724 = vld [vmem:[%s166 + $0xfe0] sm:$0xff]
        %v725 = vld [vmem:[%s166 + $0xfe8] sm:$0xff]
        %v726 = vld [vmem:[%s166 + $0xff0] sm:$0xff]
        %v727 = vld [vmem:[%s166 + $0xff8] sm:$0xff]
        %v728 = vld [vmem:[%s166 + $0x1000] sm:$0xff]
        %v729 = vld [vmem:[%s166 + $0x1008] sm:$0xff]
        %v730 = vld [vmem:[%s166 + $0x1010] sm:$0xff]
        %v731 = vld [vmem:[%s166 + $0x1018] sm:$0xff]
        %v732 = vld [vmem:[%s166 + $0x1020] sm:$0xff]
        %v733 = vld [vmem:[%s166 + $0x1028] sm:$0xff]
        %v734 = vld [vmem:[%s166 + $0x1030] sm:$0xff]
        %v735 = vld [vmem:[%s166 + $0x1038] sm:$0xff]
        %v736 = vld [vmem:[%s166 + $0x1040] sm:$0xff]
        %v737 = vld [vmem:[%s166 + $0x1048] sm:$0xff]
        %v738 = vld [vmem:[%s166 + $0x1050] sm:$0xff]
        %v739 = vld [vmem:[%s166 + $0x1058] sm:$0xff]
        %v740 = vld [vmem:[%s166 + $0x1060] sm:$0xff]
        %v741 = vld [vmem:[%s166 + $0x1068] sm:$0xff]
        %v742 = vld [vmem:[%s166 + $0x1070] sm:$0xff]
        %v743 = vld [vmem:[%s166 + $0x1078] sm:$0xff]
        %v744 = vld [vmem:[%s166 + $0x1080] sm:$0xff]
        %v745 = vld [vmem:[%s166 + $0x1088] sm:$0xff]
        %v746 = vld [vmem:[%s166 + $0x1090] sm:$0xff]
        %v747 = vld [vmem:[%s166 + $0x1098] sm:$0xff]
        %v748 = vld [vmem:[%s166 + $0x10a0] sm:$0xff]
        %v749 = vld [vmem:[%s166 + $0x10a8] sm:$0xff]
        %v750 = vld [vmem:[%s166 + $0x10b0] sm:$0xff]
        %v751 = vld [vmem:[%s166 + $0x10b8] sm:$0xff]
        %v752 = vld [vmem:[%s166 + $0x10c0] sm:$0xff]
        %v753 = vld [vmem:[%s166 + $0x10c8] sm:$0xff]
        %v754 = vld [vmem:[%s166 + $0x10d0] sm:$0xff]
        %v755 = vld [vmem:[%s166 + $0x10d8] sm:$0xff]
        %v756 = vld [vmem:[%s166 + $0x10e0] sm:$0xff]
        %v757 = vld [vmem:[%s166 + $0x10e8] sm:$0xff]
        %v758 = vld [vmem:[%s166 + $0x10f0] sm:$0xff]
        %v759 = vld [vmem:[%s166 + $0x10f8] sm:$0xff]
        %v760 = vld [vmem:[%s166 + $0x1100] sm:$0xff]
        %v761 = vld [vmem:[%s166 + $0x1108] sm:$0xff]
        %v762 = vld [vmem:[%s166 + $0x1110] sm:$0xff]
        %v763 = vld [vmem:[%s166 + $0x1118] sm:$0xff]
        %v764 = vld [vmem:[%s166 + $0x1120] sm:$0xff]
        %v765 = vld [vmem:[%s166 + $0x1128] sm:$0xff]
        %v766 = vld [vmem:[%s166 + $0x1130] sm:$0xff]
        %v767 = vld [vmem:[%s166 + $0x1138] sm:$0xff]
        %v768 = vld [vmem:[%s166 + $0x1140] sm:$0xff]
        %v769 = vld [vmem:[%s166 + $0x1148] sm:$0xff]
        %v770 = vld [vmem:[%s166 + $0x1150] sm:$0xff]
        %v771 = vld [vmem:[%s166 + $0x1158] sm:$0xff]
        %v772 = vld [vmem:[%s166 + $0x1160] sm:$0xff]
        %v773 = vld [vmem:[%s166 + $0x1168] sm:$0xff]
        %v774 = vld [vmem:[%s166 + $0x1170] sm:$0xff]
        %v775 = vld [vmem:[%s166 + $0x1178] sm:$0xff]
        %v776 = vld [vmem:[%s166 + $0x1180] sm:$0xff]
        %v777 = vld [vmem:[%s166 + $0x1188] sm:$0xff]
        %v778 = vld [vmem:[%s166 + $0x1190] sm:$0xff]
        %v779 = vld [vmem:[%s166 + $0x1198] sm:$0xff]
        %v780 = vld [vmem:[%s166 + $0x11a0] sm:$0xff]
        %v781 = vld [vmem:[%s166 + $0x11a8] sm:$0xff]
        %v782 = vld [vmem:[%s166 + $0x11b0] sm:$0xff]
        %v783 = vld [vmem:[%s166 + $0x11b8] sm:$0xff]
        %v784 = vld [vmem:[%s166 + $0x11c0] sm:$0xff]
        %v785 = vld [vmem:[%s166 + $0x11c8] sm:$0xff]
        %v786 = vld [vmem:[%s166 + $0x11d0] sm:$0xff]
        %v787 = vld [vmem:[%s166 + $0x11d8] sm:$0xff]
        %v788 = vld [vmem:[%s166 + $0x11e0] sm:$0xff]
        %v789 = vld [vmem:[%s166 + $0x11e8] sm:$0xff]
        %v790 = vld [vmem:[%s166 + $0x11f0] sm:$0xff]
        %v791 = vld [vmem:[%s166 + $0x11f8] sm:$0xff]
        %v792 = vld [vmem:[%s166 + $0x1200] sm:$0xff]
        %v793 = vld [vmem:[%s166 + $0x1208] sm:$0xff]
        %v794 = vld [vmem:[%s166 + $0x1210] sm:$0xff]
        %v795 = vld [vmem:[%s166 + $0x1218] sm:$0xff]
        %v796 = vld [vmem:[%s166 + $0x1220] sm:$0xff]
        %v797 = vld [vmem:[%s166 + $0x1228] sm:$0xff]
        %v798 = vld [vmem:[%s166 + $0x1230] sm:$0xff]
        %v799 = vld [vmem:[%s166 + $0x1238] sm:$0xff]
        %v800 = vld [vmem:[%s166 + $0x1240] sm:$0xff]
        %v801 = vld [vmem:[%s166 + $0x1248] sm:$0xff]
        %v802 = vld [vmem:[%s166 + $0x1250] sm:$0xff]
        %v803 = vld [vmem:[%s166 + $0x1258] sm:$0xff]
        %v804 = vld [vmem:[%s166 + $0x1260] sm:$0xff]
        %v805 = vld [vmem:[%s166 + $0x1268] sm:$0xff]
        %v806 = vld [vmem:[%s166 + $0x1270] sm:$0xff]
        %v807 = vld [vmem:[%s166 + $0x1278] sm:$0xff]
        %v808 = vld [vmem:[%s166 + $0x1280] sm:$0xff]
        %v809 = vld [vmem:[%s166 + $0x1288] sm:$0xff]
        %v810 = vld [vmem:[%s166 + $0x1290] sm:$0xff]
        %v811 = vld [vmem:[%s166 + $0x1298] sm:$0xff]
        %v812 = vld [vmem:[%s166 + $0x12a0] sm:$0xff]
        %v813 = vld [vmem:[%s166 + $0x12a8] sm:$0xff]
        %v814 = vld [vmem:[%s166 + $0x12b0] sm:$0xff]
        %v815 = vld [vmem:[%s166 + $0x12b8] sm:$0xff]
        %v816 = vld [vmem:[%s166 + $0x12c0] sm:$0xff]
        %v817 = vld [vmem:[%s166 + $0x12c8] sm:$0xff]
        %v818 = vld [vmem:[%s166 + $0x12d0] sm:$0xff]
        %v819 = vld [vmem:[%s166 + $0x12d8] sm:$0xff]
        %v820 = vld [vmem:[%s166 + $0x12e0] sm:$0xff]
        %v821 = vld [vmem:[%s166 + $0x12e8] sm:$0xff]
        %v822 = vld [vmem:[%s166 + $0x12f0] sm:$0xff]
        %v823 = vld [vmem:[%s166 + $0x12f8] sm:$0xff]
        %v824 = vld [vmem:[%s166 + $0x1300] sm:$0xff]
        %v825 = vld [vmem:[%s166 + $0x1308] sm:$0xff]
        %v826 = vld [vmem:[%s166 + $0x1310] sm:$0xff]
        %v827 = vld [vmem:[%s166 + $0x1318] sm:$0xff]
        %v828 = vld [vmem:[%s166 + $0x1320] sm:$0xff]
        %v829 = vld [vmem:[%s166 + $0x1328] sm:$0xff]
        %v830 = vld [vmem:[%s166 + $0x1330] sm:$0xff]
        %v831 = vld [vmem:[%s166 + $0x1338] sm:$0xff]
        %v832 = vld [vmem:[%s166 + $0x1340] sm:$0xff]
        %v833 = vld [vmem:[%s166 + $0x1348] sm:$0xff]
        %v834 = vld [vmem:[%s166 + $0x1350] sm:$0xff]
        %v835 = vld [vmem:[%s166 + $0x1358] sm:$0xff]
        %v836 = vld [vmem:[%s166 + $0x1360] sm:$0xff]
        %v837 = vld [vmem:[%s166 + $0x1368] sm:$0xff]
        %v838 = vld [vmem:[%s166 + $0x1370] sm:$0xff]
        %v839 = vld [vmem:[%s166 + $0x1378] sm:$0xff]
        %v840 = vld [vmem:[%s166 + $0x1380] sm:$0xff]
        %v841 = vld [vmem:[%s166 + $0x1388] sm:$0xff]
        %v842 = vld [vmem:[%s166 + $0x1390] sm:$0xff]
        %v843 = vld [vmem:[%s166 + $0x1398] sm:$0xff]
        %v844 = vld [vmem:[%s166 + $0x13a0] sm:$0xff]
        %v845 = vld [vmem:[%s166 + $0x13a8] sm:$0xff]
        %v846 = vld [vmem:[%s166 + $0x13b0] sm:$0xff]
        %v847 = vld [vmem:[%s166 + $0x13b8] sm:$0xff]
        %v848 = vld [vmem:[%s166 + $0x13c0] sm:$0xff]
        %v849 = vld [vmem:[%s166 + $0x13c8] sm:$0xff]
        %v850 = vld [vmem:[%s166 + $0x13d0] sm:$0xff]
        %v851 = vld [vmem:[%s166 + $0x13d8] sm:$0xff]
        %v852 = vld [vmem:[%s166 + $0x13e0] sm:$0xff]
        %v853 = vld [vmem:[%s166 + $0x13e8] sm:$0xff]
        %v854 = vld [vmem:[%s166 + $0x13f0] sm:$0xff]
        %v855 = vld [vmem:[%s166 + $0x13f8] sm:$0xff]
        %856 = vmatprep.subr.mxu0 %v217
        %857 = vmatpush1.msra.mxu0 %v216
        %858 = vmatprep.subr.mxu0 %v221
        %859 = vmatpush1.msra.mxu0 %v220
        %860 = vmatprep.subr.mxu0 %v225
        %861 = vmatpush1.msra.mxu0 %v224
        %862 = vmatprep.subr.mxu0 %v229
        %863 = vmatpush1.msra.mxu0 %v228
        %864 = vmatprep.subr.mxu0 %v233
        %865 = vmatpush1.msra.mxu0 %v232
        %866 = vmatprep.subr.mxu0 %v237
        %867 = vmatpush1.msra.mxu0 %v236
        %868 = vmatprep.subr.mxu0 %v241
        %869 = vmatpush1.msra.mxu0 %v240
        %870 = vmatprep.subr.mxu0 %v245
        %871 = vmatpush1.msra.mxu0 %v244
        %872 = vmatprep.subr.mxu0 %v249
        %873 = vmatpush1.msra.mxu0 %v248
        %874 = vmatprep.subr.mxu0 %v253
        %875 = vmatpush1.msra.mxu0 %v252
        %876 = vmatprep.subr.mxu0 %v257
        %877 = vmatpush1.msra.mxu0 %v256
        %878 = vmatprep.subr.mxu0 %v261
        %879 = vmatpush1.msra.mxu0 %v260
        %880 = vmatprep.subr.mxu0 %v265
        %881 = vmatpush1.msra.mxu0 %v264
        %882 = vmatprep.subr.mxu0 %v269
        %883 = vmatpush1.msra.mxu0 %v268
        %884 = vmatprep.subr.mxu0 %v273
        %885 = vmatpush1.msra.mxu0 %v272
        %886 = vmatprep.subr.mxu0 %v277
        %887 = vmatpush1.msra.mxu0 %v276
        %888 = vmatprep.subr.mxu0 %v281
        %889 = vmatpush1.msra.mxu0 %v280
        %890 = vmatprep.subr.mxu0 %v285
        %891 = vmatpush1.msra.mxu0 %v284
        %892 = vmatprep.subr.mxu0 %v289
        %893 = vmatpush1.msra.mxu0 %v288
        %894 = vmatprep.subr.mxu0 %v293
        %895 = vmatpush1.msra.mxu0 %v292
        %896 = vmatprep.subr.mxu0 %v297
        %897 = vmatpush1.msra.mxu0 %v296
        %898 = vmatprep.subr.mxu0 %v301
        %899 = vmatpush1.msra.mxu0 %v300
        %900 = vmatprep.subr.mxu0 %v305
        %901 = vmatpush1.msra.mxu0 %v304
        %902 = vmatprep.subr.mxu0 %v309
        %903 = vmatpush1.msra.mxu0 %v308
        %904 = vmatprep.subr.mxu0 %v313
        %905 = vmatpush1.msra.mxu0 %v312
        %906 = vmatprep.subr.mxu0 %v317
        %907 = vmatpush1.msra.mxu0 %v316
        %908 = vmatprep.subr.mxu0 %v321
        %909 = vmatpush1.msra.mxu0 %v320
        %910 = vmatprep.subr.mxu0 %v325
        %911 = vmatpush1.msra.mxu0 %v324
        %912 = vmatprep.subr.mxu0 %v329
        %913 = vmatpush1.msra.mxu0 %v328
        %914 = vmatprep.subr.mxu0 %v333
        %915 = vmatpush1.msra.mxu0 %v332
        %916 = vmatprep.subr.mxu0 %v337
        %917 = vmatpush1.msra.mxu0 %v336
        %918 = vmatprep.subr.mxu0 %v341
        %919 = vmatpush1.msra.mxu0 %v340
        %920 = vmatprep.mubr.f32.mxu0 %v207
        %921 = vmatmul.mubr.f32.gmra.mrb[0].mxu0 %v206
        %v922 = vpop.f32.mrb[0].mxu0
        %v923 = vadd.f32 0.0, %v922
        %v924 = vpop.f32.mrb[0].mxu0
        %v925 = vadd.f32 0.0, %v924
        %926 = vdwg.mxu0
        %927 = vmatprep.subr.mxu0 %v345
        %928 = vmatpush1.msra.mxu0 %v344
        %929 = vmatprep.subr.mxu0 %v349
        %930 = vmatpush1.msra.mxu0 %v348
        %931 = vmatprep.subr.mxu0 %v353
        %932 = vmatpush1.msra.mxu0 %v352
        %933 = vmatprep.subr.mxu0 %v357
        %934 = vmatpush1.msra.mxu0 %v356
        %935 = vmatprep.subr.mxu0 %v361
        %936 = vmatpush1.msra.mxu0 %v360
        %937 = vmatprep.subr.mxu0 %v365
        %938 = vmatpush1.msra.mxu0 %v364
        %939 = vmatprep.subr.mxu0 %v369
        %940 = vmatpush1.msra.mxu0 %v368
        %941 = vmatprep.subr.mxu0 %v373
        %942 = vmatpush1.msra.mxu0 %v372
        %943 = vmatprep.subr.mxu0 %v377
        %944 = vmatpush1.msra.mxu0 %v376
        %945 = vmatprep.subr.mxu0 %v381
        %946 = vmatpush1.msra.mxu0 %v380
        %947 = vmatprep.subr.mxu0 %v385
        %948 = vmatpush1.msra.mxu0 %v384
        %949 = vmatprep.subr.mxu0 %v389
        %950 = vmatpush1.msra.mxu0 %v388
        %951 = vmatprep.subr.mxu0 %v393
        %952 = vmatpush1.msra.mxu0 %v392
        %953 = vmatprep.subr.mxu0 %v397
        %954 = vmatpush1.msra.mxu0 %v396
        %955 = vmatprep.subr.mxu0 %v401
        %956 = vmatpush1.msra.mxu0 %v400
        %957 = vmatprep.subr.mxu0 %v405
        %958 = vmatpush1.msra.mxu0 %v404
        %959 = vmatprep.subr.mxu0 %v409
        %960 = vmatpush1.msra.mxu0 %v408
        %961 = vmatprep.subr.mxu0 %v413
        %962 = vmatpush1.msra.mxu0 %v412
        %963 = vmatprep.subr.mxu0 %v417
        %964 = vmatpush1.msra.mxu0 %v416
        %965 = vmatprep.subr.mxu0 %v421
        %966 = vmatpush1.msra.mxu0 %v420
        %967 = vmatprep.subr.mxu0 %v425
        %968 = vmatpush1.msra.mxu0 %v424
        %969 = vmatprep.subr.mxu0 %v429
        %970 = vmatpush1.msra.mxu0 %v428
        %971 = vmatprep.subr.mxu0 %v433
        %972 = vmatpush1.msra.mxu0 %v432
        %973 = vmatprep.subr.mxu0 %v437
        %974 = vmatpush1.msra.mxu0 %v436
        %975 = vmatprep.subr.mxu0 %v441
        %976 = vmatpush1.msra.mxu0 %v440
        %977 = vmatprep.subr.mxu0 %v445
        %978 = vmatpush1.msra.mxu0 %v444
        %979 = vmatprep.subr.mxu0 %v449
        %980 = vmatpush1.msra.mxu0 %v448
        %981 = vmatprep.subr.mxu0 %v453
        %982 = vmatpush1.msra.mxu0 %v452
        %983 = vmatprep.subr.mxu0 %v457
        %984 = vmatpush1.msra.mxu0 %v456
        %985 = vmatprep.subr.mxu0 %v461
        %986 = vmatpush1.msra.mxu0 %v460
        %987 = vmatprep.subr.mxu0 %v465
        %988 = vmatpush1.msra.mxu0 %v464
        %989 = vmatprep.subr.mxu0 %v469
        %990 = vmatpush1.msra.mxu0 %v468
        %991 = vmatprep.mubr.f32.mxu0 %v209
        %992 = vmatmul.mubr.f32.gmra.mrb[0].mxu0 %v208
        %v993 = vpop.f32.mrb[0].mxu0
        %v994 = vadd.f32 %v923, %v993
        %v995 = vpop.f32.mrb[0].mxu0
        %v996 = vadd.f32 %v925, %v995
        %997 = vdwg.mxu0
        %998 = vmatprep.subr.mxu0 %v473
        %999 = vmatpush1.msra.mxu0 %v472
        %1000 = vmatprep.subr.mxu0 %v477
        %1001 = vmatpush1.msra.mxu0 %v476
        %1002 = vmatprep.subr.mxu0 %v481
        %1003 = vmatpush1.msra.mxu0 %v480
        %1004 = vmatprep.subr.mxu0 %v485
        %1005 = vmatpush1.msra.mxu0 %v484
        %1006 = vmatprep.subr.mxu0 %v489
        %1007 = vmatpush1.msra.mxu0 %v488
        %1008 = vmatprep.subr.mxu0 %v493
        %1009 = vmatpush1.msra.mxu0 %v492
        %1010 = vmatprep.subr.mxu0 %v497
        %1011 = vmatpush1.msra.mxu0 %v496
        %1012 = vmatprep.subr.mxu0 %v501
        %1013 = vmatpush1.msra.mxu0 %v500
        %1014 = vmatprep.subr.mxu0 %v505
        %1015 = vmatpush1.msra.mxu0 %v504
        %1016 = vmatprep.subr.mxu0 %v509
        %1017 = vmatpush1.msra.mxu0 %v508
        %1018 = vmatprep.subr.mxu0 %v513
        %1019 = vmatpush1.msra.mxu0 %v512
        %1020 = vmatprep.subr.mxu0 %v517
        %1021 = vmatpush1.msra.mxu0 %v516
        %1022 = vmatprep.subr.mxu0 %v521
        %1023 = vmatpush1.msra.mxu0 %v520
        %1024 = vmatprep.subr.mxu0 %v525
        %1025 = vmatpush1.msra.mxu0 %v524
        %1026 = vmatprep.subr.mxu0 %v529
        %1027 = vmatpush1.msra.mxu0 %v528
        %1028 = vmatprep.subr.mxu0 %v533
        %1029 = vmatpush1.msra.mxu0 %v532
        %1030 = vmatprep.subr.mxu0 %v537
        %1031 = vmatpush1.msra.mxu0 %v536
        %1032 = vmatprep.subr.mxu0 %v541
        %1033 = vmatpush1.msra.mxu0 %v540
        %1034 = vmatprep.subr.mxu0 %v545
        %1035 = vmatpush1.msra.mxu0 %v544
        %1036 = vmatprep.subr.mxu0 %v549
        %1037 = vmatpush1.msra.mxu0 %v548
        %1038 = vmatprep.subr.mxu0 %v553
        %1039 = vmatpush1.msra.mxu0 %v552
        %1040 = vmatprep.subr.mxu0 %v557
        %1041 = vmatpush1.msra.mxu0 %v556
        %1042 = vmatprep.subr.mxu0 %v561
        %1043 = vmatpush1.msra.mxu0 %v560
        %1044 = vmatprep.subr.mxu0 %v565
        %1045 = vmatpush1.msra.mxu0 %v564
        %1046 = vmatprep.subr.mxu0 %v569
        %1047 = vmatpush1.msra.mxu0 %v568
        %1048 = vmatprep.subr.mxu0 %v573
        %1049 = vmatpush1.msra.mxu0 %v572
        %1050 = vmatprep.subr.mxu0 %v577
        %1051 = vmatpush1.msra.mxu0 %v576
        %1052 = vmatprep.subr.mxu0 %v581
        %1053 = vmatpush1.msra.mxu0 %v580
        %1054 = vmatprep.subr.mxu0 %v585
        %1055 = vmatpush1.msra.mxu0 %v584
        %1056 = vmatprep.subr.mxu0 %v589
        %1057 = vmatpush1.msra.mxu0 %v588
        %1058 = vmatprep.subr.mxu0 %v593
        %1059 = vmatpush1.msra.mxu0 %v592
        %1060 = vmatprep.subr.mxu0 %v597
        %1061 = vmatpush1.msra.mxu0 %v596
        %1062 = vmatprep.mubr.f32.mxu0 %v211
        %1063 = vmatmul.mubr.f32.gmra.mrb[0].mxu0 %v210
        %v1064 = vpop.f32.mrb[0].mxu0
        %v1065 = vadd.f32 %v994, %v1064
        %v1066 = vpop.f32.mrb[0].mxu0
        %v1067 = vadd.f32 %v996, %v1066
        %1068 = vdwg.mxu0
        %1069 = vmatprep.subr.mxu0 %v601
        %1070 = vmatpush1.msra.mxu0 %v600
        %1071 = vmatprep.subr.mxu0 %v605
        %1072 = vmatpush1.msra.mxu0 %v604
        %1073 = vmatprep.subr.mxu0 %v609
        %1074 = vmatpush1.msra.mxu0 %v608
        %1075 = vmatprep.subr.mxu0 %v613
        %1076 = vmatpush1.msra.mxu0 %v612
        %1077 = vmatprep.subr.mxu0 %v617
        %1078 = vmatpush1.msra.mxu0 %v616
        %1079 = vmatprep.subr.mxu0 %v621
        %1080 = vmatpush1.msra.mxu0 %v620
        %1081 = vmatprep.subr.mxu0 %v625
        %1082 = vmatpush1.msra.mxu0 %v624
        %1083 = vmatprep.subr.mxu0 %v629
        %1084 = vmatpush1.msra.mxu0 %v628
        %1085 = vmatprep.subr.mxu0 %v633
        %1086 = vmatpush1.msra.mxu0 %v632
        %1087 = vmatprep.subr.mxu0 %v637
        %1088 = vmatpush1.msra.mxu0 %v636
        %1089 = vmatprep.subr.mxu0 %v641
        %1090 = vmatpush1.msra.mxu0 %v640
        %1091 = vmatprep.subr.mxu0 %v645
        %1092 = vmatpush1.msra.mxu0 %v644
        %1093 = vmatprep.subr.mxu0 %v649
        %1094 = vmatpush1.msra.mxu0 %v648
        %1095 = vmatprep.subr.mxu0 %v653
        %1096 = vmatpush1.msra.mxu0 %v652
        %1097 = vmatprep.subr.mxu0 %v657
        %1098 = vmatpush1.msra.mxu0 %v656
        %1099 = vmatprep.subr.mxu0 %v661
        %1100 = vmatpush1.msra.mxu0 %v660
        %1101 = vmatprep.subr.mxu0 %v665
        %1102 = vmatpush1.msra.mxu0 %v664
        %1103 = vmatprep.subr.mxu0 %v669
        %1104 = vmatpush1.msra.mxu0 %v668
        %1105 = vmatprep.subr.mxu0 %v673
        %1106 = vmatpush1.msra.mxu0 %v672
        %1107 = vmatprep.subr.mxu0 %v677
        %1108 = vmatpush1.msra.mxu0 %v676
        %1109 = vmatprep.subr.mxu0 %v681
        %1110 = vmatpush1.msra.mxu0 %v680
        %1111 = vmatprep.subr.mxu0 %v685
        %1112 = vmatpush1.msra.mxu0 %v684
        %1113 = vmatprep.subr.mxu0 %v689
        %1114 = vmatpush1.msra.mxu0 %v688
        %1115 = vmatprep.subr.mxu0 %v693
        %1116 = vmatpush1.msra.mxu0 %v692
        %1117 = vmatprep.subr.mxu0 %v697
        %1118 = vmatpush1.msra.mxu0 %v696
        %1119 = vmatprep.subr.mxu0 %v701
        %1120 = vmatpush1.msra.mxu0 %v700
        %1121 = vmatprep.subr.mxu0 %v705
        %1122 = vmatpush1.msra.mxu0 %v704
        %1123 = vmatprep.subr.mxu0 %v709
        %1124 = vmatpush1.msra.mxu0 %v708
        %1125 = vmatprep.subr.mxu0 %v713
        %1126 = vmatpush1.msra.mxu0 %v712
        %1127 = vmatprep.subr.mxu0 %v717
        %1128 = vmatpush1.msra.mxu0 %v716
        %1129 = vmatprep.subr.mxu0 %v721
        %1130 = vmatpush1.msra.mxu0 %v720
        %1131 = vmatprep.subr.mxu0 %v725
        %1132 = vmatpush1.msra.mxu0 %v724
        %1133 = vmatprep.mubr.f32.mxu0 %v213
        %1134 = vmatmul.mubr.f32.gmra.mrb[0].mxu0 %v212
        %v1135 = vpop.f32.mrb[0].mxu0
        %v1136 = vadd.f32 %v1065, %v1135
        %v1137 = vpop.f32.mrb[0].mxu0
        %v1138 = vadd.f32 %v1067, %v1137
        %1139 = vdwg.mxu0
        %1140 = vmatprep.subr.mxu0 %v729
        %1141 = vmatpush1.msra.mxu0 %v728
        %1142 = vmatprep.subr.mxu0 %v733
        %1143 = vmatpush1.msra.mxu0 %v732
        %1144 = vmatprep.subr.mxu0 %v737
        %1145 = vmatpush1.msra.mxu0 %v736
        %1146 = vmatprep.subr.mxu0 %v741
        %1147 = vmatpush1.msra.mxu0 %v740
        %1148 = vmatprep.subr.mxu0 %v745
        %1149 = vmatpush1.msra.mxu0 %v744
        %1150 = vmatprep.subr.mxu0 %v749
        %1151 = vmatpush1.msra.mxu0 %v748
        %1152 = vmatprep.subr.mxu0 %v753
        %1153 = vmatpush1.msra.mxu0 %v752
        %1154 = vmatprep.subr.mxu0 %v757
        %1155 = vmatpush1.msra.mxu0 %v756
        %1156 = vmatprep.subr.mxu0 %v761
        %1157 = vmatpush1.msra.mxu0 %v760
        %1158 = vmatprep.subr.mxu0 %v765
        %1159 = vmatpush1.msra.mxu0 %v764
        %1160 = vmatprep.subr.mxu0 %v769
        %1161 = vmatpush1.msra.mxu0 %v768
        %1162 = vmatprep.subr.mxu0 %v773
        %1163 = vmatpush1.msra.mxu0 %v772
        %1164 = vmatprep.subr.mxu0 %v777
        %1165 = vmatpush1.msra.mxu0 %v776
        %1166 = vmatprep.subr.mxu0 %v781
        %1167 = vmatpush1.msra.mxu0 %v780
        %1168 = vmatprep.subr.mxu0 %v785
        %1169 = vmatpush1.msra.mxu0 %v784
        %1170 = vmatprep.subr.mxu0 %v789
        %1171 = vmatpush1.msra.mxu0 %v788
        %1172 = vmatprep.subr.mxu0 %v793
        %1173 = vmatpush1.msra.mxu0 %v792
        %1174 = vmatprep.subr.mxu0 %v797
        %1175 = vmatpush1.msra.mxu0 %v796
        %1176 = vmatprep.subr.mxu0 %v801
        %1177 = vmatpush1.msra.mxu0 %v800
        %1178 = vmatprep.subr.mxu0 %v805
        %1179 = vmatpush1.msra.mxu0 %v804
        %1180 = vmatprep.subr.mxu0 %v809
        %1181 = vmatpush1.msra.mxu0 %v808
        %1182 = vmatprep.subr.mxu0 %v813
        %1183 = vmatpush1.msra.mxu0 %v812
        %1184 = vmatprep.subr.mxu0 %v817
        %1185 = vmatpush1.msra.mxu0 %v816
        %1186 = vmatprep.subr.mxu0 %v821
        %1187 = vmatpush1.msra.mxu0 %v820
        %1188 = vmatprep.subr.mxu0 %v825
        %1189 = vmatpush1.msra.mxu0 %v824
        %1190 = vmatprep.subr.mxu0 %v829
        %1191 = vmatpush1.msra.mxu0 %v828
        %1192 = vmatprep.subr.mxu0 %v833
        %1193 = vmatpush1.msra.mxu0 %v832
        %1194 = vmatprep.subr.mxu0 %v837
        %1195 = vmatpush1.msra.mxu0 %v836
        %1196 = vmatprep.subr.mxu0 %v841
        %1197 = vmatpush1.msra.mxu0 %v840
        %1198 = vmatprep.subr.mxu0 %v845
        %1199 = vmatpush1.msra.mxu0 %v844
        %1200 = vmatprep.subr.mxu0 %v849
        %1201 = vmatpush1.msra.mxu0 %v848
        %1202 = vmatprep.subr.mxu0 %v853
        %1203 = vmatpush1.msra.mxu0 %v852
        %1204 = vmatprep.mubr.f32.mxu0 %v215
        %1205 = vmatmul.mubr.f32.gmra.mrb[0].mxu0 %v214
        %v1206 = vpop.f32.mrb[0].mxu0
        %v1207 = vadd.f32 %v1136, %v1206
        %v1208 = vpop.f32.mrb[0].mxu0
        %v1209 = vadd.f32 %v1138, %v1208
        %1210 = vdwg.mxu0
        %1211 = vmatprep.subr.mxu0 %v219
        %1212 = vmatpush1.msra.mxu0 %v218
        %1213 = vmatprep.subr.mxu0 %v223
        %1214 = vmatpush1.msra.mxu0 %v222
        %1215 = vmatprep.subr.mxu0 %v227
        %1216 = vmatpush1.msra.mxu0 %v226
        %1217 = vmatprep.subr.mxu0 %v231
        %1218 = vmatpush1.msra.mxu0 %v230
        %1219 = vmatprep.subr.mxu0 %v235
        %1220 = vmatpush1.msra.mxu0 %v234
        %1221 = vmatprep.subr.mxu0 %v239
        %1222 = vmatpush1.msra.mxu0 %v238
        %1223 = vmatprep.subr.mxu0 %v243
        %1224 = vmatpush1.msra.mxu0 %v242
        %1225 = vmatprep.subr.mxu0 %v247
        %1226 = vmatpush1.msra.mxu0 %v246
        %1227 = vmatprep.subr.mxu0 %v251
        %1228 = vmatpush1.msra.mxu0 %v250
        %1229 = vmatprep.subr.mxu0 %v255
        %1230 = vmatpush1.msra.mxu0 %v254
        %1231 = vmatprep.subr.mxu0 %v259
        %1232 = vmatpush1.msra.mxu0 %v258
        %1233 = vmatprep.subr.mxu0 %v263
        %1234 = vmatpush1.msra.mxu0 %v262
        %1235 = vmatprep.subr.mxu0 %v267
        %1236 = vmatpush1.msra.mxu0 %v266
        %1237 = vmatprep.subr.mxu0 %v271
        %1238 = vmatpush1.msra.mxu0 %v270
        %1239 = vmatprep.subr.mxu0 %v275
        %1240 = vmatpush1.msra.mxu0 %v274
        %1241 = vmatprep.subr.mxu0 %v279
        %1242 = vmatpush1.msra.mxu0 %v278
        %1243 = vmatprep.subr.mxu0 %v283
        %1244 = vmatpush1.msra.mxu0 %v282
        %1245 = vmatprep.subr.mxu0 %v287
        %1246 = vmatpush1.msra.mxu0 %v286
        %1247 = vmatprep.subr.mxu0 %v291
        %1248 = vmatpush1.msra.mxu0 %v290
        %1249 = vmatprep.subr.mxu0 %v295
        %1250 = vmatpush1.msra.mxu0 %v294
        %1251 = vmatprep.subr.mxu0 %v299
        %1252 = vmatpush1.msra.mxu0 %v298
        %1253 = vmatprep.subr.mxu0 %v303
        %1254 = vmatpush1.msra.mxu0 %v302
        %1255 = vmatprep.subr.mxu0 %v307
        %1256 = vmatpush1.msra.mxu0 %v306
        %1257 = vmatprep.subr.mxu0 %v311
        %1258 = vmatpush1.msra.mxu0 %v310
        %1259 = vmatprep.subr.mxu0 %v315
        %1260 = vmatpush1.msra.mxu0 %v314
        %1261 = vmatprep.subr.mxu0 %v319
        %1262 = vmatpush1.msra.mxu0 %v318
        %1263 = vmatprep.subr.mxu0 %v323
        %1264 = vmatpush1.msra.mxu0 %v322
        %1265 = vmatprep.subr.mxu0 %v327
        %1266 = vmatpush1.msra.mxu0 %v326
        %1267 = vmatprep.subr.mxu0 %v331
        %1268 = vmatpush1.msra.mxu0 %v330
        %1269 = vmatprep.subr.mxu0 %v335
        %1270 = vmatpush1.msra.mxu0 %v334
        %1271 = vmatprep.subr.mxu0 %v339
        %1272 = vmatpush1.msra.mxu0 %v338
        %1273 = vmatprep.subr.mxu0 %v343
        %1274 = vmatpush1.msra.mxu0 %v342
        %1275 = vmatprep.mubr.f32.mxu0 %v207
        %1276 = vmatmul.mubr.f32.gmra.mrb[0].mxu0 %v206
        %v1277 = vpop.f32.mrb[0].mxu0
        %v1278 = vadd.f32 0.0, %v1277
        %v1279 = vpop.f32.mrb[0].mxu0
        %v1280 = vadd.f32 0.0, %v1279
        %1281 = vdwg.mxu0
        %1282 = vmatprep.subr.mxu0 %v347
        %1283 = vmatpush1.msra.mxu0 %v346
        %1284 = vmatprep.subr.mxu0 %v351
        %1285 = vmatpush1.msra.mxu0 %v350
        %1286 = vmatprep.subr.mxu0 %v355
        %1287 = vmatpush1.msra.mxu0 %v354
        %1288 = vmatprep.subr.mxu0 %v359
        %1289 = vmatpush1.msra.mxu0 %v358
        %1290 = vmatprep.subr.mxu0 %v363
        %1291 = vmatpush1.msra.mxu0 %v362
        %1292 = vmatprep.subr.mxu0 %v367
        %1293 = vmatpush1.msra.mxu0 %v366
        %1294 = vmatprep.subr.mxu0 %v371
        %1295 = vmatpush1.msra.mxu0 %v370
        %1296 = vmatprep.subr.mxu0 %v375
        %1297 = vmatpush1.msra.mxu0 %v374
        %1298 = vmatprep.subr.mxu0 %v379
        %1299 = vmatpush1.msra.mxu0 %v378
        %1300 = vmatprep.subr.mxu0 %v383
        %1301 = vmatpush1.msra.mxu0 %v382
        %1302 = vmatprep.subr.mxu0 %v387
        %1303 = vmatpush1.msra.mxu0 %v386
        %1304 = vmatprep.subr.mxu0 %v391
        %1305 = vmatpush1.msra.mxu0 %v390
        %1306 = vmatprep.subr.mxu0 %v395
        %1307 = vmatpush1.msra.mxu0 %v394
        %1308 = vmatprep.subr.mxu0 %v399
        %1309 = vmatpush1.msra.mxu0 %v398
        %1310 = vmatprep.subr.mxu0 %v403
        %1311 = vmatpush1.msra.mxu0 %v402
        %1312 = vmatprep.subr.mxu0 %v407
        %1313 = vmatpush1.msra.mxu0 %v406
        %1314 = vmatprep.subr.mxu0 %v411
        %1315 = vmatpush1.msra.mxu0 %v410
        %1316 = vmatprep.subr.mxu0 %v415
        %1317 = vmatpush1.msra.mxu0 %v414
        %1318 = vmatprep.subr.mxu0 %v419
        %1319 = vmatpush1.msra.mxu0 %v418
        %1320 = vmatprep.subr.mxu0 %v423
        %1321 = vmatpush1.msra.mxu0 %v422
        %1322 = vmatprep.subr.mxu0 %v427
        %1323 = vmatpush1.msra.mxu0 %v426
        %1324 = vmatprep.subr.mxu0 %v431
        %1325 = vmatpush1.msra.mxu0 %v430
        %1326 = vmatprep.subr.mxu0 %v435
        %1327 = vmatpush1.msra.mxu0 %v434
        %1328 = vmatprep.subr.mxu0 %v439
        %1329 = vmatpush1.msra.mxu0 %v438
        %1330 = vmatprep.subr.mxu0 %v443
        %1331 = vmatpush1.msra.mxu0 %v442
        %1332 = vmatprep.subr.mxu0 %v447
        %1333 = vmatpush1.msra.mxu0 %v446
        %1334 = vmatprep.subr.mxu0 %v451
        %1335 = vmatpush1.msra.mxu0 %v450
        %1336 = vmatprep.subr.mxu0 %v455
        %1337 = vmatpush1.msra.mxu0 %v454
        %1338 = vmatprep.subr.mxu0 %v459
        %1339 = vmatpush1.msra.mxu0 %v458
        %1340 = vmatprep.subr.mxu0 %v463
        %1341 = vmatpush1.msra.mxu0 %v462
        %1342 = vmatprep.subr.mxu0 %v467
        %1343 = vmatpush1.msra.mxu0 %v466
        %1344 = vmatprep.subr.mxu0 %v471
        %1345 = vmatpush1.msra.mxu0 %v470
        %1346 = vmatprep.mubr.f32.mxu0 %v209
        %1347 = vmatmul.mubr.f32.gmra.mrb[0].mxu0 %v208
        %v1348 = vpop.f32.mrb[0].mxu0
        %v1349 = vadd.f32 %v1278, %v1348
        %v1350 = vpop.f32.mrb[0].mxu0
        %v1351 = vadd.f32 %v1280, %v1350
        %1352 = vdwg.mxu0
        %1353 = vmatprep.subr.mxu0 %v475
        %1354 = vmatpush1.msra.mxu0 %v474
        %1355 = vmatprep.subr.mxu0 %v479
        %1356 = vmatpush1.msra.mxu0 %v478
        %1357 = vmatprep.subr.mxu0 %v483
        %1358 = vmatpush1.msra.mxu0 %v482
        %1359 = vmatprep.subr.mxu0 %v487
        %1360 = vmatpush1.msra.mxu0 %v486
        %1361 = vmatprep.subr.mxu0 %v491
        %1362 = vmatpush1.msra.mxu0 %v490
        %1363 = vmatprep.subr.mxu0 %v495
        %1364 = vmatpush1.msra.mxu0 %v494
        %1365 = vmatprep.subr.mxu0 %v499
        %1366 = vmatpush1.msra.mxu0 %v498
        %1367 = vmatprep.subr.mxu0 %v503
        %1368 = vmatpush1.msra.mxu0 %v502
        %1369 = vmatprep.subr.mxu0 %v507
        %1370 = vmatpush1.msra.mxu0 %v506
        %1371 = vmatprep.subr.mxu0 %v511
        %1372 = vmatpush1.msra.mxu0 %v510
        %1373 = vmatprep.subr.mxu0 %v515
        %1374 = vmatpush1.msra.mxu0 %v514
        %1375 = vmatprep.subr.mxu0 %v519
        %1376 = vmatpush1.msra.mxu0 %v518
        %1377 = vmatprep.subr.mxu0 %v523
        %1378 = vmatpush1.msra.mxu0 %v522
        %1379 = vmatprep.subr.mxu0 %v527
        %1380 = vmatpush1.msra.mxu0 %v526
        %1381 = vmatprep.subr.mxu0 %v531
        %1382 = vmatpush1.msra.mxu0 %v530
        %1383 = vmatprep.subr.mxu0 %v535
        %1384 = vmatpush1.msra.mxu0 %v534
        %1385 = vmatprep.subr.mxu0 %v539
        %1386 = vmatpush1.msra.mxu0 %v538
        %1387 = vmatprep.subr.mxu0 %v543
        %1388 = vmatpush1.msra.mxu0 %v542
        %1389 = vmatprep.subr.mxu0 %v547
        %1390 = vmatpush1.msra.mxu0 %v546
        %1391 = vmatprep.subr.mxu0 %v551
        %1392 = vmatpush1.msra.mxu0 %v550
        %1393 = vmatprep.subr.mxu0 %v555
        %1394 = vmatpush1.msra.mxu0 %v554
        %1395 = vmatprep.subr.mxu0 %v559
        %1396 = vmatpush1.msra.mxu0 %v558
        %1397 = vmatprep.subr.mxu0 %v563
        %1398 = vmatpush1.msra.mxu0 %v562
        %1399 = vmatprep.subr.mxu0 %v567
        %1400 = vmatpush1.msra.mxu0 %v566
        %1401 = vmatprep.subr.mxu0 %v571
        %1402 = vmatpush1.msra.mxu0 %v570
        %1403 = vmatprep.subr.mxu0 %v575
        %1404 = vmatpush1.msra.mxu0 %v574
        %1405 = vmatprep.subr.mxu0 %v579
        %1406 = vmatpush1.msra.mxu0 %v578
        %1407 = vmatprep.subr.mxu0 %v583
        %1408 = vmatpush1.msra.mxu0 %v582
        %1409 = vmatprep.subr.mxu0 %v587
        %1410 = vmatpush1.msra.mxu0 %v586
        %1411 = vmatprep.subr.mxu0 %v591
        %1412 = vmatpush1.msra.mxu0 %v590
        %1413 = vmatprep.subr.mxu0 %v595
        %1414 = vmatpush1.msra.mxu0 %v594
        %1415 = vmatprep.subr.mxu0 %v599
        %1416 = vmatpush1.msra.mxu0 %v598
        %1417 = vmatprep.mubr.f32.mxu0 %v211
        %1418 = vmatmul.mubr.f32.gmra.mrb[0].mxu0 %v210
        %v1419 = vpop.f32.mrb[0].mxu0
        %v1420 = vadd.f32 %v1349, %v1419
        %v1421 = vpop.f32.mrb[0].mxu0
        %v1422 = vadd.f32 %v1351, %v1421
        %1423 = vdwg.mxu0
        %1424 = vmatprep.subr.mxu0 %v603
        %1425 = vmatpush1.msra.mxu0 %v602
        %1426 = vmatprep.subr.mxu0 %v607
        %1427 = vmatpush1.msra.mxu0 %v606
        %1428 = vmatprep.subr.mxu0 %v611
        %1429 = vmatpush1.msra.mxu0 %v610
        %1430 = vmatprep.subr.mxu0 %v615
        %1431 = vmatpush1.msra.mxu0 %v614
        %1432 = vmatprep.subr.mxu0 %v619
        %1433 = vmatpush1.msra.mxu0 %v618
        %1434 = vmatprep.subr.mxu0 %v623
        %1435 = vmatpush1.msra.mxu0 %v622
        %1436 = vmatprep.subr.mxu0 %v627
        %1437 = vmatpush1.msra.mxu0 %v626
        %1438 = vmatprep.subr.mxu0 %v631
        %1439 = vmatpush1.msra.mxu0 %v630
        %1440 = vmatprep.subr.mxu0 %v635
        %1441 = vmatpush1.msra.mxu0 %v634
        %1442 = vmatprep.subr.mxu0 %v639
        %1443 = vmatpush1.msra.mxu0 %v638
        %1444 = vmatprep.subr.mxu0 %v643
        %1445 = vmatpush1.msra.mxu0 %v642
        %1446 = vmatprep.subr.mxu0 %v647
        %1447 = vmatpush1.msra.mxu0 %v646
        %1448 = vmatprep.subr.mxu0 %v651
        %1449 = vmatpush1.msra.mxu0 %v650
        %1450 = vmatprep.subr.mxu0 %v655
        %1451 = vmatpush1.msra.mxu0 %v654
        %1452 = vmatprep.subr.mxu0 %v659
        %1453 = vmatpush1.msra.mxu0 %v658
        %1454 = vmatprep.subr.mxu0 %v663
        %1455 = vmatpush1.msra.mxu0 %v662
        %1456 = vmatprep.subr.mxu0 %v667
        %1457 = vmatpush1.msra.mxu0 %v666
        %1458 = vmatprep.subr.mxu0 %v671
        %1459 = vmatpush1.msra.mxu0 %v670
        %1460 = vmatprep.subr.mxu0 %v675
        %1461 = vmatpush1.msra.mxu0 %v674
        %1462 = vmatprep.subr.mxu0 %v679
        %1463 = vmatpush1.msra.mxu0 %v678
        %1464 = vmatprep.subr.mxu0 %v683
        %1465 = vmatpush1.msra.mxu0 %v682
        %1466 = vmatprep.subr.mxu0 %v687
        %1467 = vmatpush1.msra.mxu0 %v686
        %1468 = vmatprep.subr.mxu0 %v691
        %1469 = vmatpush1.msra.mxu0 %v690
        %1470 = vmatprep.subr.mxu0 %v695
        %1471 = vmatpush1.msra.mxu0 %v694
        %1472 = vmatprep.subr.mxu0 %v699
        %1473 = vmatpush1.msra.mxu0 %v698
        %1474 = vmatprep.subr.mxu0 %v703
        %1475 = vmatpush1.msra.mxu0 %v702
        %1476 = vmatprep.subr.mxu0 %v707
        %1477 = vmatpush1.msra.mxu0 %v706
        %1478 = vmatprep.subr.mxu0 %v711
        %1479 = vmatpush1.msra.mxu0 %v710
        %1480 = vmatprep.subr.mxu0 %v715
        %1481 = vmatpush1.msra.mxu0 %v714
        %1482 = vmatprep.subr.mxu0 %v719
        %1483 = vmatpush1.msra.mxu0 %v718
        %1484 = vmatprep.subr.mxu0 %v723
        %1485 = vmatpush1.msra.mxu0 %v722
        %1486 = vmatprep.subr.mxu0 %v727
        %1487 = vmatpush1.msra.mxu0 %v726
        %1488 = vmatprep.mubr.f32.mxu0 %v213
        %1489 = vmatmul.mubr.f32.gmra.mrb[0].mxu0 %v212
        %v1490 = vpop.f32.mrb[0].mxu0
        %v1491 = vadd.f32 %v1420, %v1490
        %v1492 = vpop.f32.mrb[0].mxu0
        %v1493 = vadd.f32 %v1422, %v1492
        %1494 = vdwg.mxu0
        %1495 = vmatprep.subr.mxu0 %v731
        %1496 = vmatpush1.msra.mxu0 %v730
        %1497 = vmatprep.subr.mxu0 %v735
        %1498 = vmatpush1.msra.mxu0 %v734
        %1499 = vmatprep.subr.mxu0 %v739
        %1500 = vmatpush1.msra.mxu0 %v738
        %1501 = vmatprep.subr.mxu0 %v743
        %1502 = vmatpush1.msra.mxu0 %v742
        %1503 = vmatprep.subr.mxu0 %v747
        %1504 = vmatpush1.msra.mxu0 %v746
        %1505 = vmatprep.subr.mxu0 %v751
        %1506 = vmatpush1.msra.mxu0 %v750
        %1507 = vmatprep.subr.mxu0 %v755
        %1508 = vmatpush1.msra.mxu0 %v754
        %1509 = vmatprep.subr.mxu0 %v759
        %1510 = vmatpush1.msra.mxu0 %v758
        %1511 = vmatprep.subr.mxu0 %v763
        %1512 = vmatpush1.msra.mxu0 %v762
        %1513 = vmatprep.subr.mxu0 %v767
        %1514 = vmatpush1.msra.mxu0 %v766
        %1515 = vmatprep.subr.mxu0 %v771
        %1516 = vmatpush1.msra.mxu0 %v770
        %1517 = vmatprep.subr.mxu0 %v775
        %1518 = vmatpush1.msra.mxu0 %v774
        %1519 = vmatprep.subr.mxu0 %v779
        %1520 = vmatpush1.msra.mxu0 %v778
        %1521 = vmatprep.subr.mxu0 %v783
        %1522 = vmatpush1.msra.mxu0 %v782
        %1523 = vmatprep.subr.mxu0 %v787
        %1524 = vmatpush1.msra.mxu0 %v786
        %1525 = vmatprep.subr.mxu0 %v791
        %1526 = vmatpush1.msra.mxu0 %v790
        %1527 = vmatprep.subr.mxu0 %v795
        %1528 = vmatpush1.msra.mxu0 %v794
        %1529 = vmatprep.subr.mxu0 %v799
        %1530 = vmatpush1.msra.mxu0 %v798
        %1531 = vmatprep.subr.mxu0 %v803
        %1532 = vmatpush1.msra.mxu0 %v802
        %1533 = vmatprep.subr.mxu0 %v807
        %1534 = vmatpush1.msra.mxu0 %v806
        %1535 = vmatprep.subr.mxu0 %v811
        %1536 = vmatpush1.msra.mxu0 %v810
        %1537 = vmatprep.subr.mxu0 %v815
        %1538 = vmatpush1.msra.mxu0 %v814
        %1539 = vmatprep.subr.mxu0 %v819
        %1540 = vmatpush1.msra.mxu0 %v818
        %1541 = vmatprep.subr.mxu0 %v823
        %1542 = vmatpush1.msra.mxu0 %v822
        %1543 = vmatprep.subr.mxu0 %v827
        %1544 = vmatpush1.msra.mxu0 %v826
        %1545 = vmatprep.subr.mxu0 %v831
        %1546 = vmatpush1.msra.mxu0 %v830
        %1547 = vmatprep.subr.mxu0 %v835
        %1548 = vmatpush1.msra.mxu0 %v834
        %1549 = vmatprep.subr.mxu0 %v839
        %1550 = vmatpush1.msra.mxu0 %v838
        %1551 = vmatprep.subr.mxu0 %v843
        %1552 = vmatpush1.msra.mxu0 %v842
        %1553 = vmatprep.subr.mxu0 %v847
        %1554 = vmatpush1.msra.mxu0 %v846
        %1555 = vmatprep.subr.mxu0 %v851
        %1556 = vmatpush1.msra.mxu0 %v850
        %1557 = vmatprep.subr.mxu0 %v855
        %1558 = vmatpush1.msra.mxu0 %v854
        %1559 = vmatprep.mubr.f32.mxu0 %v215
        %1560 = vmatmul.mubr.f32.gmra.mrb[0].mxu0 %v214
        %v1561 = vpop.f32.mrb[0].mxu0
        %v1562 = vadd.f32 %v1491, %v1561
        %v1563 = vpop.f32.mrb[0].mxu0
        %v1564 = vadd.f32 %v1493, %v1563
        %1565 = vdwg.mxu0
        %p1566 = scmp.eq.s32.totalorder %s21, 0
        // Predicated region
        $region33: #{deepcube_a_core.4} parent=27 // pred_check
          %p1567 = pneg %p1566
        $region34: #{deepcube_a_core.4} parent=27 // pred_check_branch
          %1569 = sbr.rel (%p1567) target = $region36
        $region35: #{deepcube_a_core.4} parent=27 // pred_region
          %1570 = vst [vmem:[%s204] sm:$0xff] %v1207
          %1571 = vst [vmem:[%s204 + $0x8] sm:$0xff] %v1209
          %1572 = vst [vmem:[%s204 + $0x10] sm:$0xff] %v1562
          %1573 = vst [vmem:[%s204 + $0x18] sm:$0xff] %v1564
        $region36: #{deepcube_a_core.4} parent=27 // pred_fallthru
          _
        %p1574 = scmp.gt.s32.totalorder %s21, 0
        // Predicated region
        $region37: #{deepcube_a_core.4} parent=27 // pred_check
          %p1575 = pneg %p1574
        $region38: #{deepcube_a_core.4} parent=27 // pred_check_branch
          %1577 = sbr.rel (%p1575) target = $region40
        $region39: #{deepcube_a_core.4} parent=27 // pred_region
          %v1578 = vld [vmem:[%s204] sm:$0xff]
          %v1579 = vld [vmem:[%s204 + $0x8] sm:$0xff]
          %v1580 = vld [vmem:[%s204 + $0x10] sm:$0xff]
          %v1581 = vld [vmem:[%s204 + $0x18] sm:$0xff]
          %v1582 = vadd.f32 %v1578, %v1207
          %v1583 = vadd.f32 %v1579, %v1209
          %v1584 = vadd.f32 %v1580, %v1562
          %v1585 = vadd.f32 %v1581, %v1564
          %1586 = vst [vmem:[%s204] sm:$0xff] %v1582
          %1587 = vst [vmem:[%s204 + $0x8] sm:$0xff] %v1583
          %1588 = vst [vmem:[%s204 + $0x10] sm:$0xff] %v1584
          %1589 = vst [vmem:[%s204 + $0x18] sm:$0xff] %v1585
        $region40: #{deepcube_a_core.4} parent=27 // pred_fallthru
          _
        %p1590 = scmp.eq.s32.totalorder %s21, 3
        // Predicated region
        $region41: #{deepcube_a_core.4} parent=27 // pred_check
          %p1591 = pneg %p1590
        $region42: #{deepcube_a_core.4} parent=27 // pred_check_branch
          %1593 = sbr.rel (%p1591) target = $region44
        $region43: #{deepcube_a_core.4} parent=27 // pred_region
          %v1594 = vld [vmem:[%s204] sm:$0xff]
          %v1595 = vld [vmem:[%s204 + $0x8] sm:$0xff]
          %v1596 = vld [vmem:[%s204 + $0x10] sm:$0xff]
          %v1597 = vld [vmem:[%s204 + $0x18] sm:$0xff]
          %v1598 = vmax.f32 %v1594, 0.0
          %v1599 = vmax.f32 %v1595, 0.0
          %v1600 = vmax.f32 %v1596, 0.0
          %v1601 = vmax.f32 %v1597, 0.0
          %1602 = vst [vmem:[%s204] sm:$0xff] %v1598
          %1603 = vst [vmem:[%s204 + $0x8] sm:$0xff] %v1599
          %1604 = vst [vmem:[%s204 + $0x10] sm:$0xff] %v1600
          %1605 = vst [vmem:[%s204 + $0x18] sm:$0xff] %v1601
        $region44: #{deepcube_a_core.4} parent=27 // pred_fallthru
          _
        %s1606 = smul.u32 4, %s20
        %p1607 = scmp.lt.s32.totalorder %s1606, 7
        %s1608 = scalar_select %p1607, %s1606, 7
        %s1609 = smul.addr %s1608, 8
        %s1610 = scalar_lea.vmem %s2, %s1609
        // Predicated region
        $region45: #{deepcube_a_core.4} parent=27 // pred_check
          %p1611 = pneg %p100
        $region46: #{deepcube_a_core.4} parent=27 // pred_check_branch
          %1613 = sbr.rel (%p1611) target = $region48
        $region47: #{deepcube_a_core.4} parent=27 // pred_region
          %s1614 = smul.u32 4, %s20
        $region48: #{deepcube_a_core.4} parent=27 // pred_fallthru
          _
      $region28: #{deepcube_a_core.4} parent=5 // pred_fallthru
        _
      %p1615 = scmp.le.s32.totalorder 2, %s11
      // Predicated region
      $region49: #{deepcube_a_core.4} parent=5 // pred_check
        %p1616 = pneg %p1615
      $region50: #{deepcube_a_core.4} parent=5 // pred_check_branch
        %1618 = sbr.rel (%p1616) target = $region52
      $region51: #{deepcube_a_core.4} parent=5 // pred_region
        %s1619 = ssub.s32 %s11, 2
        // Predicated region
        $region53: #{deepcube_a_core.4} parent=51 // pred_check
          %p1620 = pneg %p106
        $region54: #{deepcube_a_core.4} parent=51 // pred_check_branch
          %1622 = sbr.rel (%p1620) target = $region56
        $region55: #{deepcube_a_core.4} parent=51 // pred_region
          %s1623 = smul.u32 4, %s22
          %p1624 = scmp.lt.s32.totalorder %s1623, 7
          %s1625 = scalar_select %p1624, %s1623, 7
          %s1626 = smul.addr %s1625, 8
          %s1627 = scalar_lea.vmem %s2, %s1626
        $region56: #{deepcube_a_core.4} parent=51 // pred_fallthru
          _
      $region52: #{deepcube_a_core.4} parent=5 // pred_fallthru
        _
    $region6: #{deepcube_a_core.4} parent=1 // loop_footer
      %s15 = sadd.s32 1, %s11
    $region7: #{deepcube_a_core.4} parent=1 // loop_footer_branch
      %10 = sbr.rel target = $region3
    $region8: #{deepcube_a_core.4} parent=1 // loop_exit
      _
    %1628 = vsyncpa [#allocation3], 1
    %s1629 = scalar_lea.sflag [#allocation3], 1
    %1630 = vsyncpa %s1629, 1

</llo_original>
